<compile_context>
chip_gen: v6e
topology: v6e:2x2x1
jax: 0.10.0
libtpu: 0.0.40
codegen_flags: <defaults>
</compile_context>

<pallas_src>
from functools import partial

import jax
import jax.numpy as jnp
from jax.experimental import pallas as pl
from jax.experimental.pallas import tpu as pltpu

# ----- model constants (from the PyTorch module) -----
IN_C = 3
OUT_C = 3
K = 5                         # kernel_size
PAD = 2
H = W = 11                    # pommerman board
CONV_OUT = IN_C * H * W       # 363 (= convolution_out_size)
N_INPUTS = 372                # ffn input size
N_OTHER = N_INPUTS - CONV_OUT # 9 non-board features
N_HIDDEN = 500
N_OUTPUTS = 6                 # pommerman action space

# ----- lane-padded sizes used inside the kernel -----
CONV_PAD = 384                # 363 -> 384
OTHER_PAD = 16                # 9  -> 16
HID_PAD = 512                 # 500 -> 512
OUT_PAD = 128                 # 6  -> 128 (lane-dense output store)
NEG_BIG = -1.0e30             # bias for padded logit columns (softmax ignores)


def _bf16_elementwise_supported():
    """bf16 bias/ReLU/activations only where the VPU supports bf16 (v6e/v7x).
    v5e (and unknown/CPU backends) keep elementwise math in f32."""
    try:
        kind = jax.devices()[0].device_kind.lower()
    except Exception:
        return False
    return ("v6" in kind) or ("v7" in kind)


BF16_ELEMENTWISE = _bf16_elementwise_supported()


# ---------------------------------------------------------------------------
# Conv -> matmul lowering: build M (363x363) and a bias row (1x363) such that
#   conv_out.view(B, 363) == board.view(B, 363) @ M + bias_row
# for a 5x5, stride-1, pad-2, 3->3 conv with OIHW weights (exact math).
# ---------------------------------------------------------------------------
def conv_as_matmul(w, b):
    yi = jnp.arange(H)
    yo = jnp.arange(H)
    xi = jnp.arange(W)
    xo = jnp.arange(W)
    ky = yi[:, None] - yo[None, :] + PAD          # [yi, yo]
    kx = xi[:, None] - xo[None, :] + PAD          # [xi, xo]
    vy = (ky >= 0) & (ky < K)
    vx = (kx >= 0) & (kx < K)
    kyc = jnp.clip(ky, 0, K - 1)
    kxc = jnp.clip(kx, 0, K - 1)

    ci_idx = jnp.arange(IN_C)[:, None, None, None, None, None]
    co_idx = jnp.arange(OUT_C)[None, None, None, :, None, None]
    ky_idx = kyc[None, :, None, None, :, None]
    kx_idx = kxc[None, None, :, None, None, :]
    valid = vy[None, :, None, None, :, None] & vx[None, None, :, None, None, :]
    # m6[ci, yi, xi, co, yo, xo] = w[co, ci, yi-yo+2, xi-xo+2] (0 outside kernel)
    m6 = w[co_idx, ci_idx, ky_idx, kx_idx] * valid
    m = m6.reshape(IN_C * H * W, OUT_C * H * W)   # [363, 363]
    bias_row = jnp.repeat(b, H * W)[None, :]      # [1, 363], channel-major
    return m.astype(jnp.float32), bias_row.astype(jnp.float32)


# ---------------------------------------------------------------------------
# Fused forward kernel (one batch tile per grid step).
# All matmuls: bf16 operands, f32 accumulation on the MXU.
# Elementwise chain in bf16 (v6e/v7x) or f32 (v5e); softmax always f32.
# ---------------------------------------------------------------------------
def _fused_dqn_kernel(bf16_elem, x_ref, oth_ref,
                      a1_ref, a2_ref, a3_ref, cb1_ref, cb2_ref, cb3_ref,
                      w1a_ref, w1b_ref, w2_ref, w3_ref, w4_ref, w5_ref,
                      b1_ref, b2_ref, b3_ref, b4_ref, b5_ref,
                      o_ref):
    act_dt = jnp.bfloat16 if bf16_elem else jnp.float32

    def mm(x, w_ref):
        return jnp.dot(x.astype(jnp.bfloat16), w_ref[...],
                       preferred_element_type=jnp.float32)

    def bias_relu(acc_f32, b_ref):
        a = acc_f32.astype(act_dt)
        return jnp.maximum(a + b_ref[...].astype(act_dt), 0)

    # conv path (each conv is a dense matmul against the precomputed matrix)
    h = bias_relu(mm(x_ref[...], a1_ref), cb1_ref)               # [TB, 384]
    h = bias_relu(mm(h, a2_ref), cb2_ref)
    h = bias_relu(mm(h, a3_ref), cb3_ref)

    # FFN; torch.cat([x2, other], dim=1) is folded into the first Linear:
    #   [x2, other] @ W1 == x2 @ W1[:363] + other @ W1[363:372]
    h = bias_relu(mm(h, w1a_ref) + mm(oth_ref[...], w1b_ref), b1_ref)
    h = bias_relu(mm(h, w2_ref), b2_ref)
    h = bias_relu(mm(h, w3_ref), b3_ref)
    h = bias_relu(mm(h, w4_ref), b4_ref)

    logits = mm(h, w5_ref) + b5_ref[...]                         # [TB, 128] f32
    # columns >= 6 carry a -1e30 bias -> exp() == 0, so the softmax only sees
    # the 6 real logits while the store stays lane dense.
    m = jnp.max(logits, axis=1, keepdims=True)
    e = jnp.exp(logits - m)
    s = jnp.sum(e, axis=1, keepdims=True)
    o_ref[...] = e / s            # exact divide: rows sum to 1 (f32 rounding)


def _pick_batch_tile(b):
    """Batch-tile rules (perf review):
       * multiples of 256 once the batch allows it (256-wide v6e/v7x MXU),
       * capped at 1024 (v7x has 64 MiB VMEM per TensorCore),
       * aim for >= 4 grid steps on big batches so the 'parallel' axis feeds
         both v7x TensorCores while each still pipelines,
       * tiny batches fall back to a single 128-row tile."""
    if b <= 128:
        return 128
    if b <= 256:
        return 256
    quarter = -(-b // 4)                 # ceil(b / 4)
    tb = -(-quarter // 256) * 256        # round up to a multiple of 256
    return max(256, min(1024, tb))


def _const_spec(shape):
    """Grid-invariant weight/bias operand: block index is always (0, 0), so
    single-buffer it (default pipelining would still allocate 2 buffers)."""
    try:
        return pl.BlockSpec(shape, lambda i: (0, 0), pipeline_mode=pl.Buffered(1))
    except TypeError:  # jax version without pipeline_mode on BlockSpec
        return pl.BlockSpec(shape, lambda i: (0, 0))


@jax.jit
def dqn_forward(board, other, params):
    """board: [B, 3, 11, 11] f32 (board / bomb_blast_strength / bomb_life),
       other: [B, 9] f32 (flatten_state_no_board features).
       Returns softmax action probabilities [B, 6]."""
    b = board.shape[0]
    tb = _pick_batch_tile(b)
    b_pad = -(-b // tb) * tb

    # torch .view(-1, 363) flatten order (NCHW); board values are small ints,
    # so the bf16 pre-cast is exact and halves input DMA / double-buffer VMEM.
    x = board.reshape(b, CONV_OUT).astype(jnp.float32)
    x = jnp.pad(x, ((0, b_pad - b), (0, CONV_PAD - CONV_OUT))).astype(jnp.bfloat16)
    oth = jnp.pad(other.astype(jnp.float32),
                  ((0, b_pad - b), (0, OTHER_PAD - N_OTHER))).astype(jnp.bfloat16)

    row_spec = lambda d: pl.BlockSpec((tb, d), lambda i: (i, 0))
    in_specs = ([row_spec(CONV_PAD), row_spec(OTHER_PAD)]
                + [_const_spec(p.shape) for p in params])

    out = pl.pallas_call(
        partial(_fused_dqn_kernel, BF16_ELEMENTWISE),
        out_shape=jax.ShapeDtypeStruct((b_pad, OUT_PAD), jnp.float32),
        grid=(b_pad // tb,),
        in_specs=in_specs,
        out_specs=pl.BlockSpec((tb, OUT_PAD), lambda i: (i, 0)),
        compiler_params=pltpu.CompilerParams(
            dimension_semantics=("parallel",),
            vmem_limit_bytes=32 * 1024 * 1024),
    )(x, oth, *params)
    return out[:b, :N_OUTPUTS]


# ---------------------------------------------------------------------------
# Parameter construction + packing.
# Linear weights: xavier-uniform, biases 0.01 (as in init_weights).
# Conv weights/biases: PyTorch default uniform(+-1/sqrt(fan_in)).
# ---------------------------------------------------------------------------
def init_params(key):
    keys = jax.random.split(key, 11)

    def xavier(k, fi, fo):
        bound = float(jnp.sqrt(6.0 / (fi + fo)))
        return jax.random.uniform(k, (fi, fo), jnp.float32, -bound, bound)

    conv_bound = 1.0 / float(jnp.sqrt(jnp.float32(IN_C * K * K)))
    conv_ws = [jax.random.uniform(keys[i], (OUT_C, IN_C, K, K), jnp.float32,
                                  -conv_bound, conv_bound) for i in range(3)]
    conv_bs = [jax.random.uniform(keys[3 + i], (OUT_C,), jnp.float32,
                                  -conv_bound, conv_bound) for i in range(3)]

    dims = [(N_INPUTS, N_HIDDEN), (N_HIDDEN, N_HIDDEN), (N_HIDDEN, N_HIDDEN),
            (N_HIDDEN, N_HIDDEN), (N_HIDDEN, N_OUTPUTS)]
    ffn_ws = [xavier(keys[6 + i], fi, fo) for i, (fi, fo) in enumerate(dims)]
    ffn_bs = [jnp.full((1, fo), 0.01, jnp.float32) for _, fo in dims]
    return conv_ws, conv_bs, ffn_ws, ffn_bs


def prepare_params(conv_ws, conv_bs, ffn_ws, ffn_bs):
    """Pre-pad / pre-pack everything into the kernel's operand layout.
    Weights -> bf16 (f32 accumulation happens in the kernel); biases stay f32.
    NOTE: bf16 weight quantization deviates ~1e-2 relative from the original
    f32 PyTorch conv/FFN; the end-to-end test below mirrors the same math."""
    a_mats, c_bias = [], []
    for w, b in zip(conv_ws, conv_bs):
        m, br = conv_as_matmul(w, b)
        m = jnp.pad(m, ((0, CONV_PAD - CONV_OUT), (0, CONV_PAD - CONV_OUT)))
        br = jnp.pad(br, ((0, 0), (0, CONV_PAD - CONV_OUT)))
        a_mats.append(m.astype(jnp.bfloat16))
        c_bias.append(br)

    w1, w2, w3, w4, w5 = ffn_ws
    b1, b2, b3, b4, b5 = ffn_bs
    w1a = jnp.pad(w1[:CONV_OUT], ((0, CONV_PAD - CONV_OUT), (0, HID_PAD - N_HIDDEN)))
    w1b = jnp.pad(w1[CONV_OUT:], ((0, OTHER_PAD - N_OTHER), (0, HID_PAD - N_HIDDEN)))
    w2p = jnp.pad(w2, ((0, HID_PAD - N_HIDDEN), (0, HID_PAD - N_HIDDEN)))
    w3p = jnp.pad(w3, ((0, HID_PAD - N_HIDDEN), (0, HID_PAD - N_HIDDEN)))
    w4p = jnp.pad(w4, ((0, HID_PAD - N_HIDDEN), (0, HID_PAD - N_HIDDEN)))
    w5p = jnp.pad(w5, ((0, HID_PAD - N_HIDDEN), (0, OUT_PAD - N_OUTPUTS)))

    b1p = jnp.pad(b1, ((0, 0), (0, HID_PAD - N_HIDDEN)))
    b2p = jnp.pad(b2, ((0, 0), (0, HID_PAD - N_HIDDEN)))
    b3p = jnp.pad(b3, ((0, 0), (0, HID_PAD - N_HIDDEN)))
    b4p = jnp.pad(b4, ((0, 0), (0, HID_PAD - N_HIDDEN)))
    b5p = jnp.pad(b5, ((0, 0), (0, OUT_PAD - N_OUTPUTS)), constant_values=NEG_BIG)

    return (a_mats[0], a_mats[1], a_mats[2], c_bias[0], c_bias[1], c_bias[2],
            w1a.astype(jnp.bfloat16), w1b.astype(jnp.bfloat16),
            w2p.astype(jnp.bfloat16), w3p.astype(jnp.bfloat16),
            w4p.astype(jnp.bfloat16), w5p.astype(jnp.bfloat16),
            b1p, b2p, b3p, b4p, b5p)


# ---------------------------------------------------------------------------
# Pure-JAX references for validation.
# ---------------------------------------------------------------------------
def dqn_reference(board, other, params, bf16_elem=None):
    """Mirrors the kernel math (bf16 weights, f32 MXU accumulation, same
    elementwise dtype as the kernel)."""
    (a1, a2, a3, cb1, cb2, cb3, w1a, w1b, w2, w3, w4, w5,
     b1, b2, b3, b4, b5) = params
    if bf16_elem is None:
        bf16_elem = BF16_ELEMENTWISE
    act_dt = jnp.bfloat16 if bf16_elem else jnp.float32

    def mm(x, w):
        return jnp.dot(x.astype(jnp.bfloat16), w, preferred_element_type=jnp.float32)

    def bias_relu(acc, bias):
        return jnp.maximum(acc.astype(act_dt) + bias.astype(act_dt), 0)

    b = board.shape[0]
    x = jnp.pad(board.reshape(b, CONV_OUT).astype(jnp.float32),
                ((0, 0), (0, CONV_PAD - CONV_OUT))).astype(jnp.bfloat16)
    oth = jnp.pad(other.astype(jnp.float32),
                  ((0, 0), (0, OTHER_PAD - N_OTHER))).astype(jnp.bfloat16)
    h = bias_relu(mm(x, a1), cb1)
    h = bias_relu(mm(h, a2), cb2)
    h = bias_relu(mm(h, a3), cb3)
    h = bias_relu(mm(h, w1a) + mm(oth, w1b), b1)
    h = bias_relu(mm(h, w2), b2)
    h = bias_relu(mm(h, w3), b3)
    h = bias_relu(mm(h, w4), b4)
    logits = mm(h, w5) + b5
    return jax.nn.softmax(logits[:, :N_OUTPUTS].astype(jnp.float32), axis=1)


def check_conv_lowering(board, conv_ws, conv_bs):
    """Validates the conv->matmul construction against lax.conv in pure f32."""
    hi = jax.lax.Precision.HIGHEST
    h = board.astype(jnp.float32)
    for w, b in zip(conv_ws, conv_bs):
        m, br = conv_as_matmul(w, b)
        direct = jax.lax.conv_general_dilated(
            h, w, window_strides=(1, 1), padding=((PAD, PAD), (PAD, PAD)),
            dimension_numbers=("NCHW", "OIHW", "NCHW"),
            precision=hi) + b[None, :, None, None]
        via_mat = jnp.dot(h.reshape(h.shape[0], -1), m, precision=hi) + br
        assert bool(jnp.allclose(direct.reshape(h.shape[0], -1), via_mat,
                                 atol=5e-3, rtol=1e-4)), "conv-as-matmul mismatch"
        h = jnp.maximum(direct, 0.0)


if __name__ == "__main__":
    key = jax.random.PRNGKey(0)
    k_board, k_other, k_param = jax.random.split(key, 3)

    B = 2
    # board-like integer planes cast to float (as the torch code does)
    board = jax.random.randint(k_board, (B, IN_C, H, W), 0, 14).astype(jnp.float32)
    other = jax.random.uniform(k_other, (B, N_OTHER), jnp.float32)

    conv_ws, conv_bs, ffn_ws, ffn_bs = init_params(k_param)

    # 1) the conv->matmul lowering is exact (up to f32 rounding)
    check_conv_lowering(board, conv_ws, conv_bs)

    packed = prepare_params(conv_ws, conv_bs, ffn_ws, ffn_bs)

    # 2) run the fused kernel
    probs = jax.block_until_ready(dqn_forward(board, other, packed))

    # 3) validate against the pure-JAX mirror reference
    ref = dqn_reference(board, other, packed)
    assert probs.shape == (B, N_OUTPUTS)
    assert bool(jnp.all(jnp.isfinite(probs)))
    assert bool(jnp.allclose(jnp.sum(probs, axis=1), 1.0, atol=1e-3))
    assert bool(jnp.allclose(probs, ref, atol=5e-3)), "kernel/reference mismatch"

    print("KERNEL_OK")
</pallas_src>

<mosaic_0001>
module attributes {stable_mosaic.version = 11 : i64} {
  func.func @_fused_dqn_kernel(%arg0: i32, %arg1: memref<128x384xbf16, #tpu.memory_space<vmem>>, %arg2: memref<128x16xbf16, #tpu.memory_space<vmem>>, %arg3: memref<384x384xbf16, #tpu.memory_space<vmem>>, %arg4: memref<384x384xbf16, #tpu.memory_space<vmem>>, %arg5: memref<384x384xbf16, #tpu.memory_space<vmem>>, %arg6: memref<1x384xf32, #tpu.memory_space<vmem>>, %arg7: memref<1x384xf32, #tpu.memory_space<vmem>>, %arg8: memref<1x384xf32, #tpu.memory_space<vmem>>, %arg9: memref<384x512xbf16, #tpu.memory_space<vmem>>, %arg10: memref<16x512xbf16, #tpu.memory_space<vmem>>, %arg11: memref<512x512xbf16, #tpu.memory_space<vmem>>, %arg12: memref<512x512xbf16, #tpu.memory_space<vmem>>, %arg13: memref<512x512xbf16, #tpu.memory_space<vmem>>, %arg14: memref<512x128xbf16, #tpu.memory_space<vmem>>, %arg15: memref<1x512xf32, #tpu.memory_space<vmem>>, %arg16: memref<1x512xf32, #tpu.memory_space<vmem>>, %arg17: memref<1x512xf32, #tpu.memory_space<vmem>>, %arg18: memref<1x512xf32, #tpu.memory_space<vmem>>, %arg19: memref<1x128xf32, #tpu.memory_space<vmem>>, %arg20: memref<128x128xf32, #tpu.memory_space<vmem>>) attributes {dimension_semantics = [#tpu.dimension_semantics<parallel>], iteration_bounds = array<i64: 1>, scalar_prefetch = 0 : i64, scratch_operands = 0 : i64, tpu.core_type = #tpu.core_type<tc>, window_params = [{transform_indices = @transform_0, window_bounds = array<i64: 128, 384>}, {transform_indices = @transform_1, window_bounds = array<i64: 128, 16>}, {pipeline_mode = #tpu.pipeline_mode<synchronous>, transform_indices = @transform_2, window_bounds = array<i64: 384, 384>}, {pipeline_mode = #tpu.pipeline_mode<synchronous>, transform_indices = @transform_3, window_bounds = array<i64: 384, 384>}, {pipeline_mode = #tpu.pipeline_mode<synchronous>, transform_indices = @transform_4, window_bounds = array<i64: 384, 384>}, {pipeline_mode = #tpu.pipeline_mode<synchronous>, transform_indices = @transform_5, window_bounds = array<i64: 1, 384>}, {pipeline_mode = #tpu.pipeline_mode<synchronous>, transform_indices = @transform_6, window_bounds = array<i64: 1, 384>}, {pipeline_mode = #tpu.pipeline_mode<synchronous>, transform_indices = @transform_7, window_bounds = array<i64: 1, 384>}, {pipeline_mode = #tpu.pipeline_mode<synchronous>, transform_indices = @transform_8, window_bounds = array<i64: 384, 512>}, {pipeline_mode = #tpu.pipeline_mode<synchronous>, transform_indices = @transform_9, window_bounds = array<i64: 16, 512>}, {pipeline_mode = #tpu.pipeline_mode<synchronous>, transform_indices = @transform_10, window_bounds = array<i64: 512, 512>}, {pipeline_mode = #tpu.pipeline_mode<synchronous>, transform_indices = @transform_11, window_bounds = array<i64: 512, 512>}, {pipeline_mode = #tpu.pipeline_mode<synchronous>, transform_indices = @transform_12, window_bounds = array<i64: 512, 512>}, {pipeline_mode = #tpu.pipeline_mode<synchronous>, transform_indices = @transform_13, window_bounds = array<i64: 512, 128>}, {pipeline_mode = #tpu.pipeline_mode<synchronous>, transform_indices = @transform_14, window_bounds = array<i64: 1, 512>}, {pipeline_mode = #tpu.pipeline_mode<synchronous>, transform_indices = @transform_15, window_bounds = array<i64: 1, 512>}, {pipeline_mode = #tpu.pipeline_mode<synchronous>, transform_indices = @transform_16, window_bounds = array<i64: 1, 512>}, {pipeline_mode = #tpu.pipeline_mode<synchronous>, transform_indices = @transform_17, window_bounds = array<i64: 1, 512>}, {pipeline_mode = #tpu.pipeline_mode<synchronous>, transform_indices = @transform_18, window_bounds = array<i64: 1, 128>}, {transform_indices = @transform_19, window_bounds = array<i64: 128, 128>}]} {
    %c0 = arith.constant 0 : index
    %c0_0 = arith.constant 0 : index
    %0 = vector.load %arg1[%c0, %c0_0] : memref<128x384xbf16, #tpu.memory_space<vmem>>, vector<128x384xbf16>
    %c0_1 = arith.constant 0 : index
    %c0_2 = arith.constant 0 : index
    %1 = vector.load %arg3[%c0_1, %c0_2] : memref<384x384xbf16, #tpu.memory_space<vmem>>, vector<384x384xbf16>
    %cst = arith.constant dense<0.000000e+00> : vector<128x384xf32>
    %2 = tpu.matmul %0, %1, %cst {dimension_numbers = #tpu.dot_dimension_numbers<[1], [0], [0], [1], [0, 0, 1, 1], [], []>} : vector<128x384xbf16>, vector<384x384xbf16>, vector<128x384xf32> -> vector<128x384xf32>
    %c0_3 = arith.constant 0 : index
    %c0_4 = arith.constant 0 : index
    %3 = vector.load %arg6[%c0_3, %c0_4] : memref<1x384xf32, #tpu.memory_space<vmem>>, vector<1x384xf32>
    %4 = vector.broadcast %3 : vector<1x384xf32> to vector<128x384xf32>
    %5 = arith.addf %2, %4 : vector<128x384xf32>
    %cst_5 = arith.constant 0.000000e+00 : f32
    %6 = vector.broadcast %cst_5 : f32 to vector<128x384xf32>
    %7 = arith.maximumf %5, %6 : vector<128x384xf32>
    %8 = arith.truncf %7 : vector<128x384xf32> to vector<128x384xbf16>
    %c0_6 = arith.constant 0 : index
    %c0_7 = arith.constant 0 : index
    %9 = vector.load %arg4[%c0_6, %c0_7] : memref<384x384xbf16, #tpu.memory_space<vmem>>, vector<384x384xbf16>
    %cst_8 = arith.constant dense<0.000000e+00> : vector<128x384xf32>
    %10 = tpu.matmul %8, %9, %cst_8 {dimension_numbers = #tpu.dot_dimension_numbers<[1], [0], [0], [1], [0, 0, 1, 1], [], []>} : vector<128x384xbf16>, vector<384x384xbf16>, vector<128x384xf32> -> vector<128x384xf32>
    %c0_9 = arith.constant 0 : index
    %c0_10 = arith.constant 0 : index
    %11 = vector.load %arg7[%c0_9, %c0_10] : memref<1x384xf32, #tpu.memory_space<vmem>>, vector<1x384xf32>
    %12 = vector.broadcast %11 : vector<1x384xf32> to vector<128x384xf32>
    %13 = arith.addf %10, %12 : vector<128x384xf32>
    %cst_11 = arith.constant 0.000000e+00 : f32
    %14 = vector.broadcast %cst_11 : f32 to vector<128x384xf32>
    %15 = arith.maximumf %13, %14 : vector<128x384xf32>
    %16 = arith.truncf %15 : vector<128x384xf32> to vector<128x384xbf16>
    %c0_12 = arith.constant 0 : index
    %c0_13 = arith.constant 0 : index
    %17 = vector.load %arg5[%c0_12, %c0_13] : memref<384x384xbf16, #tpu.memory_space<vmem>>, vector<384x384xbf16>
    %cst_14 = arith.constant dense<0.000000e+00> : vector<128x384xf32>
    %18 = tpu.matmul %16, %17, %cst_14 {dimension_numbers = #tpu.dot_dimension_numbers<[1], [0], [0], [1], [0, 0, 1, 1], [], []>} : vector<128x384xbf16>, vector<384x384xbf16>, vector<128x384xf32> -> vector<128x384xf32>
    %c0_15 = arith.constant 0 : index
    %c0_16 = arith.constant 0 : index
    %19 = vector.load %arg8[%c0_15, %c0_16] : memref<1x384xf32, #tpu.memory_space<vmem>>, vector<1x384xf32>
    %20 = vector.broadcast %19 : vector<1x384xf32> to vector<128x384xf32>
    %21 = arith.addf %18, %20 : vector<128x384xf32>
    %cst_17 = arith.constant 0.000000e+00 : f32
    %22 = vector.broadcast %cst_17 : f32 to vector<128x384xf32>
    %23 = arith.maximumf %21, %22 : vector<128x384xf32>
    %24 = arith.truncf %23 : vector<128x384xf32> to vector<128x384xbf16>
    %c0_18 = arith.constant 0 : index
    %c0_19 = arith.constant 0 : index
    %25 = vector.load %arg9[%c0_18, %c0_19] : memref<384x512xbf16, #tpu.memory_space<vmem>>, vector<384x512xbf16>
    %cst_20 = arith.constant dense<0.000000e+00> : vector<128x512xf32>
    %26 = tpu.matmul %24, %25, %cst_20 {dimension_numbers = #tpu.dot_dimension_numbers<[1], [0], [0], [1], [0, 0, 1, 1], [], []>} : vector<128x384xbf16>, vector<384x512xbf16>, vector<128x512xf32> -> vector<128x512xf32>
    %c0_21 = arith.constant 0 : index
    %c0_22 = arith.constant 0 : index
    %27 = vector.load %arg2[%c0_21, %c0_22] : memref<128x16xbf16, #tpu.memory_space<vmem>>, vector<128x16xbf16>
    %c0_23 = arith.constant 0 : index
    %c0_24 = arith.constant 0 : index
    %28 = vector.load %arg10[%c0_23, %c0_24] : memref<16x512xbf16, #tpu.memory_space<vmem>>, vector<16x512xbf16>
    %cst_25 = arith.constant dense<0.000000e+00> : vector<128x512xf32>
    %29 = tpu.matmul %27, %28, %cst_25 {dimension_numbers = #tpu.dot_dimension_numbers<[1], [0], [0], [1], [0, 0, 1, 1], [], []>} : vector<128x16xbf16>, vector<16x512xbf16>, vector<128x512xf32> -> vector<128x512xf32>
    %30 = arith.addf %26, %29 : vector<128x512xf32>
    %c0_26 = arith.constant 0 : index
    %c0_27 = arith.constant 0 : index
    %31 = vector.load %arg15[%c0_26, %c0_27] : memref<1x512xf32, #tpu.memory_space<vmem>>, vector<1x512xf32>
    %32 = vector.broadcast %31 : vector<1x512xf32> to vector<128x512xf32>
    %33 = arith.addf %30, %32 : vector<128x512xf32>
    %cst_28 = arith.constant 0.000000e+00 : f32
    %34 = vector.broadcast %cst_28 : f32 to vector<128x512xf32>
    %35 = arith.maximumf %33, %34 : vector<128x512xf32>
    %36 = arith.truncf %35 : vector<128x512xf32> to vector<128x512xbf16>
    %c0_29 = arith.constant 0 : index
    %c0_30 = arith.constant 0 : index
    %37 = vector.load %arg11[%c0_29, %c0_30] : memref<512x512xbf16, #tpu.memory_space<vmem>>, vector<512x512xbf16>
    %cst_31 = arith.constant dense<0.000000e+00> : vector<128x512xf32>
    %38 = tpu.matmul %36, %37, %cst_31 {dimension_numbers = #tpu.dot_dimension_numbers<[1], [0], [0], [1], [0, 0, 1, 1], [], []>} : vector<128x512xbf16>, vector<512x512xbf16>, vector<128x512xf32> -> vector<128x512xf32>
    %c0_32 = arith.constant 0 : index
    %c0_33 = arith.constant 0 : index
    %39 = vector.load %arg16[%c0_32, %c0_33] : memref<1x512xf32, #tpu.memory_space<vmem>>, vector<1x512xf32>
    %40 = vector.broadcast %39 : vector<1x512xf32> to vector<128x512xf32>
    %41 = arith.addf %38, %40 : vector<128x512xf32>
    %cst_34 = arith.constant 0.000000e+00 : f32
    %42 = vector.broadcast %cst_34 : f32 to vector<128x512xf32>
    %43 = arith.maximumf %41, %42 : vector<128x512xf32>
    %44 = arith.truncf %43 : vector<128x512xf32> to vector<128x512xbf16>
    %c0_35 = arith.constant 0 : index
    %c0_36 = arith.constant 0 : index
    %45 = vector.load %arg12[%c0_35, %c0_36] : memref<512x512xbf16, #tpu.memory_space<vmem>>, vector<512x512xbf16>
    %cst_37 = arith.constant dense<0.000000e+00> : vector<128x512xf32>
    %46 = tpu.matmul %44, %45, %cst_37 {dimension_numbers = #tpu.dot_dimension_numbers<[1], [0], [0], [1], [0, 0, 1, 1], [], []>} : vector<128x512xbf16>, vector<512x512xbf16>, vector<128x512xf32> -> vector<128x512xf32>
    %c0_38 = arith.constant 0 : index
    %c0_39 = arith.constant 0 : index
    %47 = vector.load %arg17[%c0_38, %c0_39] : memref<1x512xf32, #tpu.memory_space<vmem>>, vector<1x512xf32>
    %48 = vector.broadcast %47 : vector<1x512xf32> to vector<128x512xf32>
    %49 = arith.addf %46, %48 : vector<128x512xf32>
    %cst_40 = arith.constant 0.000000e+00 : f32
    %50 = vector.broadcast %cst_40 : f32 to vector<128x512xf32>
    %51 = arith.maximumf %49, %50 : vector<128x512xf32>
    %52 = arith.truncf %51 : vector<128x512xf32> to vector<128x512xbf16>
    %c0_41 = arith.constant 0 : index
    %c0_42 = arith.constant 0 : index
    %53 = vector.load %arg13[%c0_41, %c0_42] : memref<512x512xbf16, #tpu.memory_space<vmem>>, vector<512x512xbf16>
    %cst_43 = arith.constant dense<0.000000e+00> : vector<128x512xf32>
    %54 = tpu.matmul %52, %53, %cst_43 {dimension_numbers = #tpu.dot_dimension_numbers<[1], [0], [0], [1], [0, 0, 1, 1], [], []>} : vector<128x512xbf16>, vector<512x512xbf16>, vector<128x512xf32> -> vector<128x512xf32>
    %c0_44 = arith.constant 0 : index
    %c0_45 = arith.constant 0 : index
    %55 = vector.load %arg18[%c0_44, %c0_45] : memref<1x512xf32, #tpu.memory_space<vmem>>, vector<1x512xf32>
    %56 = vector.broadcast %55 : vector<1x512xf32> to vector<128x512xf32>
    %57 = arith.addf %54, %56 : vector<128x512xf32>
    %cst_46 = arith.constant 0.000000e+00 : f32
    %58 = vector.broadcast %cst_46 : f32 to vector<128x512xf32>
    %59 = arith.maximumf %57, %58 : vector<128x512xf32>
    %60 = arith.truncf %59 : vector<128x512xf32> to vector<128x512xbf16>
    %c0_47 = arith.constant 0 : index
    %c0_48 = arith.constant 0 : index
    %61 = vector.load %arg14[%c0_47, %c0_48] : memref<512x128xbf16, #tpu.memory_space<vmem>>, vector<512x128xbf16>
    %cst_49 = arith.constant dense<0.000000e+00> : vector<128x128xf32>
    %62 = tpu.matmul %60, %61, %cst_49 {dimension_numbers = #tpu.dot_dimension_numbers<[1], [0], [0], [1], [0, 0, 1, 1], [], []>} : vector<128x512xbf16>, vector<512x128xbf16>, vector<128x128xf32> -> vector<128x128xf32>
    %c0_50 = arith.constant 0 : index
    %c0_51 = arith.constant 0 : index
    %63 = vector.load %arg19[%c0_50, %c0_51] : memref<1x128xf32, #tpu.memory_space<vmem>>, vector<1x128xf32>
    %64 = vector.broadcast %63 : vector<1x128xf32> to vector<128x128xf32>
    %65 = arith.addf %62, %64 : vector<128x128xf32>
    %cst_52 = arith.constant dense<0xFF800000> : vector<128xf32>
    %66 = vector.multi_reduction <maximumf>, %65, %cst_52 [1] : vector<128x128xf32> to vector<128xf32>
    %67 = vector.shape_cast %66 : vector<128xf32> to vector<128x1xf32>
    %68 = vector.broadcast %67 : vector<128x1xf32> to vector<128x128xf32>
    %69 = arith.subf %65, %68 : vector<128x128xf32>
    %70 = math.exp %69 : vector<128x128xf32>
    %cst_53 = arith.constant dense<0.000000e+00> : vector<128xf32>
    %71 = vector.multi_reduction <add>, %70, %cst_53 [1] : vector<128x128xf32> to vector<128xf32>
    %72 = vector.shape_cast %71 : vector<128xf32> to vector<128x1xf32>
    %73 = vector.broadcast %72 : vector<128x1xf32> to vector<128x128xf32>
    %74 = arith.divf %70, %73 : vector<128x128xf32>
    %c0_54 = arith.constant 0 : index
    %c0_55 = arith.constant 0 : index
    %75 = vector.load %arg20[%c0_54, %c0_55] : memref<128x128xf32, #tpu.memory_space<vmem>>, vector<128x128xf32>
    tpu.vector_store %arg20[%c0_54, %c0_55], %74 {strides = array<i32>} : memref<128x128xf32, #tpu.memory_space<vmem>>, vector<128x128xf32>,
    return
  }
  func.func @transform_0(%arg0: i32) -> (i32, i32) {
    %c0_i32 = arith.constant 0 : i32
    %c0_i32_0 = arith.constant 0 : i32
    return %arg0, %c0_i32 : i32, i32
  }
  func.func @transform_1(%arg0: i32) -> (i32, i32) {
    %c0_i32 = arith.constant 0 : i32
    %c0_i32_0 = arith.constant 0 : i32
    return %arg0, %c0_i32 : i32, i32
  }
  func.func @transform_2(%arg0: i32) -> (i32, i32) {
    %c0_i32 = arith.constant 0 : i32
    %c0_i32_0 = arith.constant 0 : i32
    %c0_i32_1 = arith.constant 0 : i32
    return %c0_i32, %c0_i32_0 : i32, i32
  }
  func.func @transform_3(%arg0: i32) -> (i32, i32) {
    %c0_i32 = arith.constant 0 : i32
    %c0_i32_0 = arith.constant 0 : i32
    %c0_i32_1 = arith.constant 0 : i32
    return %c0_i32, %c0_i32_0 : i32, i32
  }
  func.func @transform_4(%arg0: i32) -> (i32, i32) {
    %c0_i32 = arith.constant 0 : i32
    %c0_i32_0 = arith.constant 0 : i32
    %c0_i32_1 = arith.constant 0 : i32
    return %c0_i32, %c0_i32_0 : i32, i32
  }
  func.func @transform_5(%arg0: i32) -> (i32, i32) {
    %c0_i32 = arith.constant 0 : i32
    %c0_i32_0 = arith.constant 0 : i32
    %c0_i32_1 = arith.constant 0 : i32
    return %c0_i32, %c0_i32_0 : i32, i32
  }
  func.func @transform_6(%arg0: i32) -> (i32, i32) {
    %c0_i32 = arith.constant 0 : i32
    %c0_i32_0 = arith.constant 0 : i32
    %c0_i32_1 = arith.constant 0 : i32
    return %c0_i32, %c0_i32_0 : i32, i32
  }
  func.func @transform_7(%arg0: i32) -> (i32, i32) {
    %c0_i32 = arith.constant 0 : i32
    %c0_i32_0 = arith.constant 0 : i32
    %c0_i32_1 = arith.constant 0 : i32
    return %c0_i32, %c0_i32_0 : i32, i32
  }
  func.func @transform_8(%arg0: i32) -> (i32, i32) {
    %c0_i32 = arith.constant 0 : i32
    %c0_i32_0 = arith.constant 0 : i32
    %c0_i32_1 = arith.constant 0 : i32
    return %c0_i32, %c0_i32_0 : i32, i32
  }
  func.func @transform_9(%arg0: i32) -> (i32, i32) {
    %c0_i32 = arith.constant 0 : i32
    %c0_i32_0 = arith.constant 0 : i32
    %c0_i32_1 = arith.constant 0 : i32
    return %c0_i32, %c0_i32_0 : i32, i32
  }
  func.func @transform_10(%arg0: i32) -> (i32, i32) {
    %c0_i32 = arith.constant 0 : i32
    %c0_i32_0 = arith.constant 0 : i32
    %c0_i32_1 = arith.constant 0 : i32
    return %c0_i32, %c0_i32_0 : i32, i32
  }
  func.func @transform_11(%arg0: i32) -> (i32, i32) {
    %c0_i32 = arith.constant 0 : i32
    %c0_i32_0 = arith.constant 0 : i32
    %c0_i32_1 = arith.constant 0 : i32
    return %c0_i32, %c0_i32_0 : i32, i32
  }
  func.func @transform_12(%arg0: i32) -> (i32, i32) {
    %c0_i32 = arith.constant 0 : i32
    %c0_i32_0 = arith.constant 0 : i32
    %c0_i32_1 = arith.constant 0 : i32
    return %c0_i32, %c0_i32_0 : i32, i32
  }
  func.func @transform_13(%arg0: i32) -> (i32, i32) {
    %c0_i32 = arith.constant 0 : i32
    %c0_i32_0 = arith.constant 0 : i32
    %c0_i32_1 = arith.constant 0 : i32
    return %c0_i32, %c0_i32_0 : i32, i32
  }
  func.func @transform_14(%arg0: i32) -> (i32, i32) {
    %c0_i32 = arith.constant 0 : i32
    %c0_i32_0 = arith.constant 0 : i32
    %c0_i32_1 = arith.constant 0 : i32
    return %c0_i32, %c0_i32_0 : i32, i32
  }
  func.func @transform_15(%arg0: i32) -> (i32, i32) {
    %c0_i32 = arith.constant 0 : i32
    %c0_i32_0 = arith.constant 0 : i32
    %c0_i32_1 = arith.constant 0 : i32
    return %c0_i32, %c0_i32_0 : i32, i32
  }
  func.func @transform_16(%arg0: i32) -> (i32, i32) {
    %c0_i32 = arith.constant 0 : i32
    %c0_i32_0 = arith.constant 0 : i32
    %c0_i32_1 = arith.constant 0 : i32
    return %c0_i32, %c0_i32_0 : i32, i32
  }
  func.func @transform_17(%arg0: i32) -> (i32, i32) {
    %c0_i32 = arith.constant 0 : i32
    %c0_i32_0 = arith.constant 0 : i32
    %c0_i32_1 = arith.constant 0 : i32
    return %c0_i32, %c0_i32_0 : i32, i32
  }
  func.func @transform_18(%arg0: i32) -> (i32, i32) {
    %c0_i32 = arith.constant 0 : i32
    %c0_i32_0 = arith.constant 0 : i32
    %c0_i32_1 = arith.constant 0 : i32
    return %c0_i32, %c0_i32_0 : i32, i32
  }
  func.func @transform_19(%arg0: i32) -> (i32, i32) {
    %c0_i32 = arith.constant 0 : i32
    %c0_i32_0 = arith.constant 0 : i32
    return %arg0, %c0_i32 : i32, i32
  }
}

</mosaic_0001>

<llo_original>
// kernel: dqn_forward.1
$region0: #{dqn_forward.1}
  #allocation0 [shape = 'u32[]', space=smem, size = 0x4, offset = 0x4, fixed_abs, tag = 'smem constant byte address 0x4 - core index']
  #allocation1 [shape = 'u32[144,128]{1,0:T(1,128)}', space=vmem, size = 0x12000, scoped, tag = 'internal scratch']
  %s0 = inlined_call_operand.vmem [shape: bf16[128,384], index: 0, kind: input, shape index: {}]
  %s1 = inlined_call_operand.vmem [shape: bf16[128,16], index: 1, kind: input, shape index: {}]
  %s2 = inlined_call_operand.hbm [shape: bf16[384,384], index: 2, kind: input, shape index: {}]
  %s3 = inlined_call_operand.hbm [shape: bf16[384,384], index: 3, kind: input, shape index: {}]
  %s4 = inlined_call_operand.hbm [shape: bf16[384,384], index: 4, kind: input, shape index: {}]
  %s5 = inlined_call_operand.vmem [shape: f32[1,384], index: 5, kind: input, shape index: {}]
  %s6 = inlined_call_operand.vmem [shape: f32[1,384], index: 6, kind: input, shape index: {}]
  %s7 = inlined_call_operand.vmem [shape: f32[1,384], index: 7, kind: input, shape index: {}]
  %s8 = inlined_call_operand.hbm [shape: bf16[384,512], index: 8, kind: input, shape index: {}]
  %s9 = inlined_call_operand.vmem [shape: bf16[16,512], index: 9, kind: input, shape index: {}]
  %s10 = inlined_call_operand.hbm [shape: bf16[512,512], index: 10, kind: input, shape index: {}]
  %s11 = inlined_call_operand.hbm [shape: bf16[512,512], index: 11, kind: input, shape index: {}]
  %s12 = inlined_call_operand.hbm [shape: bf16[512,512], index: 12, kind: input, shape index: {}]
  %s13 = inlined_call_operand.vmem [shape: bf16[512,128], index: 13, kind: input, shape index: {}]
  %s14 = inlined_call_operand.vmem [shape: f32[1,512], index: 14, kind: input, shape index: {}]
  %s15 = inlined_call_operand.vmem [shape: f32[1,512], index: 15, kind: input, shape index: {}]
  %s16 = inlined_call_operand.vmem [shape: f32[1,512], index: 16, kind: input, shape index: {}]
  %s17 = inlined_call_operand.vmem [shape: f32[1,512], index: 17, kind: input, shape index: {}]
  %s18 = inlined_call_operand.vmem [shape: f32[1,128], index: 18, kind: input, shape index: {}]
  %s19 = inlined_call_operand.vmem [shape: f32[128,128], index: 19, kind: output, shape index: {}]
  %s20 = sld [smem:[#allocation0]]
  $region114: #{dqn_forward.1} parent=0
    _
  %s22 = ssub.s32 1, %s20
  %s23 = scalar_select 0, %s22, %s20
  $region1: #{dqn_forward.1} parent=0
    #allocation2 [shape = 'u8[294912]{0}', space=vmem, size = 0x48000, scoped, tag = 'input window, operand 2, single buffered']
    #allocation3 [shape = 's32[1]{0}', space=sflag, size = 0x4, scoped, tag = 'scoped memory for dqn_forward.1']
    #allocation4 [shape = 'u8[294912]{0}', space=vmem, size = 0x48000, scoped, tag = 'input window, operand 3, single buffered']
    #allocation5 [shape = 's32[1]{0}', space=sflag, size = 0x4, scoped, tag = 'scoped memory for dqn_forward.1']
    #allocation6 [shape = 'u8[294912]{0}', space=vmem, size = 0x48000, scoped, tag = 'input window, operand 4, single buffered']
    #allocation7 [shape = 'u8[393216]{0}', space=vmem, size = 0x60000, scoped, tag = 'input window, operand 8, single buffered']
    #allocation8 [shape = 's32[1]{0}', space=sflag, size = 0x4, scoped, tag = 'scoped memory for dqn_forward.1']
    #allocation9 [shape = 'u8[524288]{0}', space=vmem, size = 0x80000, scoped, tag = 'input window, operand 10, single buffered']
    #allocation10 [shape = 'u8[524288]{0}', space=vmem, size = 0x80000, scoped, tag = 'input window, operand 11, single buffered']
    #allocation11 [shape = 's32[1]{0}', space=sflag, size = 0x4, scoped, tag = 'scoped memory for dqn_forward.1']
    #allocation12 [shape = 'u8[524288]{0}', space=vmem, size = 0x80000, scoped, tag = 'input window, operand 12, single buffered']
    %24 = vsyncpa [#allocation3], 0
    %25 = vsyncpa [#allocation5], 0
    %26 = vsyncpa [#allocation8], 0
    %27 = vsyncpa [#allocation11], 0
    // Predicated region
    $region2: #{dqn_forward.1} parent=1 // pred_check
      _
    $region3: #{dqn_forward.1} parent=1 // pred_check_branch
      %29 = sbr.rel (0) target = $region5
    $region4: #{dqn_forward.1} parent=1 // pred_region
      _
    $region5: #{dqn_forward.1} parent=1 // pred_fallthru
      _
    // Predicated region
    $region6: #{dqn_forward.1} parent=1 // pred_check
      _
    $region7: #{dqn_forward.1} parent=1 // pred_check_branch
      %31 = sbr.rel (0) target = $region9
    $region8: #{dqn_forward.1} parent=1 // pred_region
      _
    $region9: #{dqn_forward.1} parent=1 // pred_fallthru
      _
    // Predicated region
    $region10: #{dqn_forward.1} parent=1 // pred_check
      _
    $region11: #{dqn_forward.1} parent=1 // pred_check_branch
      %33 = sbr.rel (0) target = $region13
    $region12: #{dqn_forward.1} parent=1 // pred_region
      %s35 = ssub.s32 9216, 9216
      %36 = vsyncadd [#allocation3], %s35
      %s37 = sshll.u32 [#allocation2], 4
      %s38 = int_to_ptr.vmem [resolvable:$true] %s37
      %43 = dma.hbm_to_vmem [thread:$0]  %s2, 9216, %s38, [#allocation3], 192, 192, 12
    $region13: #{dqn_forward.1} parent=1 // pred_fallthru
      _
    // Predicated region
    $region14: #{dqn_forward.1} parent=1 // pred_check
      _
    $region15: #{dqn_forward.1} parent=1 // pred_check_branch
      %45 = sbr.rel (0) target = $region17
    $region16: #{dqn_forward.1} parent=1 // pred_region
      %s47 = ssub.s32 9216, 9216
      %48 = vsyncadd [#allocation5], %s47
      %s49 = sshll.u32 [#allocation4], 4
      %s50 = int_to_ptr.vmem [resolvable:$true] %s49
      %55 = dma.hbm_to_vmem [thread:$0]  %s3, 9216, %s50, [#allocation5], 192, 192, 12
    $region17: #{dqn_forward.1} parent=1 // pred_fallthru
      _
    // Predicated region
    $region18: #{dqn_forward.1} parent=1 // pred_check
      _
    $region19: #{dqn_forward.1} parent=1 // pred_check_branch
      %57 = sbr.rel (0) target = $region21
    $region20: #{dqn_forward.1} parent=1 // pred_region
      %s59 = ssub.s32 9216, 9216
      %60 = vsyncadd [#allocation5], %s59
      %s61 = sshll.u32 [#allocation6], 4
      %s62 = int_to_ptr.vmem [resolvable:$true] %s61
      %67 = dma.hbm_to_vmem [thread:$0]  %s4, 9216, %s62, [#allocation5], 192, 192, 12
    $region21: #{dqn_forward.1} parent=1 // pred_fallthru
      _
    // Predicated region
    $region22: #{dqn_forward.1} parent=1 // pred_check
      _
    $region23: #{dqn_forward.1} parent=1 // pred_check_branch
      %69 = sbr.rel (0) target = $region25
    $region24: #{dqn_forward.1} parent=1 // pred_region
      _
    $region25: #{dqn_forward.1} parent=1 // pred_fallthru
      _
    // Predicated region
    $region26: #{dqn_forward.1} parent=1 // pred_check
      _
    $region27: #{dqn_forward.1} parent=1 // pred_check_branch
      %71 = sbr.rel (0) target = $region29
    $region28: #{dqn_forward.1} parent=1 // pred_region
      _
    $region29: #{dqn_forward.1} parent=1 // pred_fallthru
      _
    // Predicated region
    $region30: #{dqn_forward.1} parent=1 // pred_check
      _
    $region31: #{dqn_forward.1} parent=1 // pred_check_branch
      %73 = sbr.rel (0) target = $region33
    $region32: #{dqn_forward.1} parent=1 // pred_region
      _
    $region33: #{dqn_forward.1} parent=1 // pred_fallthru
      _
    // Predicated region
    $region34: #{dqn_forward.1} parent=1 // pred_check
      _
    $region35: #{dqn_forward.1} parent=1 // pred_check_branch
      %75 = sbr.rel (0) target = $region37
    $region36: #{dqn_forward.1} parent=1 // pred_region
      %s77 = ssub.s32 12288, 12288
      %78 = vsyncadd [#allocation8], %s77
      %s79 = sshll.u32 [#allocation7], 4
      %s80 = int_to_ptr.vmem [resolvable:$true] %s79
      %85 = dma.hbm_to_vmem [thread:$0]  %s8, 12288, %s80, [#allocation8], 256, 256, 16
    $region37: #{dqn_forward.1} parent=1 // pred_fallthru
      _
    // Predicated region
    $region38: #{dqn_forward.1} parent=1 // pred_check
      _
    $region39: #{dqn_forward.1} parent=1 // pred_check_branch
      %87 = sbr.rel (0) target = $region41
    $region40: #{dqn_forward.1} parent=1 // pred_region
      _
    $region41: #{dqn_forward.1} parent=1 // pred_fallthru
      _
    // Predicated region
    $region42: #{dqn_forward.1} parent=1 // pred_check
      _
    $region43: #{dqn_forward.1} parent=1 // pred_check_branch
      %89 = sbr.rel (0) target = $region45
    $region44: #{dqn_forward.1} parent=1 // pred_region
      %s91 = ssub.s32 16384, 16384
      %92 = vsyncadd [#allocation8], %s91
      %s93 = sshll.u32 [#allocation9], 4
      %s94 = int_to_ptr.vmem [resolvable:$true] %s93
      %99 = dma.hbm_to_vmem [thread:$0]  %s10, 16384, %s94, [#allocation8], 256, 256, 16
    $region45: #{dqn_forward.1} parent=1 // pred_fallthru
      _
    // Predicated region
    $region46: #{dqn_forward.1} parent=1 // pred_check
      _
    $region47: #{dqn_forward.1} parent=1 // pred_check_branch
      %101 = sbr.rel (0) target = $region49
    $region48: #{dqn_forward.1} parent=1 // pred_region
      %s103 = ssub.s32 16384, 16384
      %104 = vsyncadd [#allocation11], %s103
      %s105 = sshll.u32 [#allocation10], 4
      %s106 = int_to_ptr.vmem [resolvable:$true] %s105
      %111 = dma.hbm_to_vmem [thread:$0]  %s11, 16384, %s106, [#allocation11], 256, 256, 16
    $region49: #{dqn_forward.1} parent=1 // pred_fallthru
      _
    // Predicated region
    $region50: #{dqn_forward.1} parent=1 // pred_check
      _
    $region51: #{dqn_forward.1} parent=1 // pred_check_branch
      %113 = sbr.rel (0) target = $region53
    $region52: #{dqn_forward.1} parent=1 // pred_region
      %s115 = ssub.s32 16384, 16384
      %116 = vsyncadd [#allocation11], %s115
      %s117 = sshll.u32 [#allocation12], 4
      %s118 = int_to_ptr.vmem [resolvable:$true] %s117
      %123 = dma.hbm_to_vmem [thread:$0]  %s12, 16384, %s118, [#allocation11], 256, 256, 16
    $region53: #{dqn_forward.1} parent=1 // pred_fallthru
      _
    // Predicated region
    $region54: #{dqn_forward.1} parent=1 // pred_check
      _
    $region55: #{dqn_forward.1} parent=1 // pred_check_branch
      %125 = sbr.rel (0) target = $region57
    $region56: #{dqn_forward.1} parent=1 // pred_region
      _
    $region57: #{dqn_forward.1} parent=1 // pred_fallthru
      _
    // Predicated region
    $region58: #{dqn_forward.1} parent=1 // pred_check
      _
    $region59: #{dqn_forward.1} parent=1 // pred_check_branch
      %127 = sbr.rel (0) target = $region61
    $region60: #{dqn_forward.1} parent=1 // pred_region
      _
    $region61: #{dqn_forward.1} parent=1 // pred_fallthru
      _
    // Predicated region
    $region62: #{dqn_forward.1} parent=1 // pred_check
      _
    $region63: #{dqn_forward.1} parent=1 // pred_check_branch
      %129 = sbr.rel (0) target = $region65
    $region64: #{dqn_forward.1} parent=1 // pred_region
      _
    $region65: #{dqn_forward.1} parent=1 // pred_fallthru
      _
    // Predicated region
    $region66: #{dqn_forward.1} parent=1 // pred_check
      _
    $region67: #{dqn_forward.1} parent=1 // pred_check_branch
      %131 = sbr.rel (0) target = $region69
    $region68: #{dqn_forward.1} parent=1 // pred_region
      _
    $region69: #{dqn_forward.1} parent=1 // pred_fallthru
      _
    // Predicated region
    $region70: #{dqn_forward.1} parent=1 // pred_check
      _
    $region71: #{dqn_forward.1} parent=1 // pred_check_branch
      %133 = sbr.rel (0) target = $region73
    $region72: #{dqn_forward.1} parent=1 // pred_region
      _
    $region73: #{dqn_forward.1} parent=1 // pred_fallthru
      _
    // Predicated region
    $region74: #{dqn_forward.1} parent=1 // pred_check
      _
    $region75: #{dqn_forward.1} parent=1 // pred_check_branch
      %135 = sbr.rel (0) target = $region77
    $region76: #{dqn_forward.1} parent=1 // pred_region
      _
    $region77: #{dqn_forward.1} parent=1 // pred_fallthru
      _
    // Predicated region
    $region78: #{dqn_forward.1} parent=1 // pred_check
      _
    $region79: #{dqn_forward.1} parent=1 // pred_check_branch
      %137 = sbr.rel (0) target = $region81
    $region80: #{dqn_forward.1} parent=1 // pred_region
      %138 = dma.done [#allocation3], 9216
    $region81: #{dqn_forward.1} parent=1 // pred_fallthru
      _
    // Predicated region
    $region82: #{dqn_forward.1} parent=1 // pred_check
      _
    $region83: #{dqn_forward.1} parent=1 // pred_check_branch
      %140 = sbr.rel (0) target = $region85
    $region84: #{dqn_forward.1} parent=1 // pred_region
      %141 = dma.done [#allocation5], 9216
    $region85: #{dqn_forward.1} parent=1 // pred_fallthru
      _
    // Predicated region
    $region86: #{dqn_forward.1} parent=1 // pred_check
      _
    $region87: #{dqn_forward.1} parent=1 // pred_check_branch
      %143 = sbr.rel (0) target = $region89
    $region88: #{dqn_forward.1} parent=1 // pred_region
      %144 = dma.done [#allocation5], 9216
    $region89: #{dqn_forward.1} parent=1 // pred_fallthru
      _
    // Predicated region
    $region90: #{dqn_forward.1} parent=1 // pred_check
      _
    $region91: #{dqn_forward.1} parent=1 // pred_check_branch
      %146 = sbr.rel (0) target = $region93
    $region92: #{dqn_forward.1} parent=1 // pred_region
      %147 = dma.done [#allocation8], 12288
    $region93: #{dqn_forward.1} parent=1 // pred_fallthru
      _
    // Predicated region
    $region94: #{dqn_forward.1} parent=1 // pred_check
      _
    $region95: #{dqn_forward.1} parent=1 // pred_check_branch
      %149 = sbr.rel (0) target = $region97
    $region96: #{dqn_forward.1} parent=1 // pred_region
      %150 = dma.done [#allocation8], 16384
    $region97: #{dqn_forward.1} parent=1 // pred_fallthru
      _
    // Predicated region
    $region98: #{dqn_forward.1} parent=1 // pred_check
      _
    $region99: #{dqn_forward.1} parent=1 // pred_check_branch
      %152 = sbr.rel (0) target = $region101
    $region100: #{dqn_forward.1} parent=1 // pred_region
      %153 = dma.done [#allocation11], 16384
    $region101: #{dqn_forward.1} parent=1 // pred_fallthru
      _
    // Predicated region
    $region102: #{dqn_forward.1} parent=1 // pred_check
      _
    $region103: #{dqn_forward.1} parent=1 // pred_check_branch
      %155 = sbr.rel (0) target = $region105
    $region104: #{dqn_forward.1} parent=1 // pred_region
      %156 = dma.done [#allocation11], 16384
    $region105: #{dqn_forward.1} parent=1 // pred_fallthru
      _
    %v158 = vld [vmem:[%s0] sm:$0xff]
    %v159 = vld [vmem:[%s0 + $0x8] sm:$0xf]
    %v160 = vld [vmem:[%s0 + $0xc] sm:$0xff]
    %v161 = vld [vmem:[%s0 + $0x14] sm:$0xf]
    %v162 = vld [vmem:[%s0 + $0x18] sm:$0xff]
    %v163 = vld [vmem:[%s0 + $0x20] sm:$0xf]
    %v164 = vld [vmem:[%s0 + $0x24] sm:$0xff]
    %v165 = vld [vmem:[%s0 + $0x2c] sm:$0xf]
    %v166 = vld [vmem:[%s0 + $0x30] sm:$0xff]
    %v167 = vld [vmem:[%s0 + $0x38] sm:$0xf]
    %v168 = vld [vmem:[%s0 + $0x3c] sm:$0xff]
    %v169 = vld [vmem:[%s0 + $0x44] sm:$0xf]
    %v170 = vld [vmem:[%s0 + $0x48] sm:$0xff]
    %v171 = vld [vmem:[%s0 + $0x50] sm:$0xf]
    %v172 = vld [vmem:[%s0 + $0x54] sm:$0xff]
    %v173 = vld [vmem:[%s0 + $0x5c] sm:$0xf]
    %v174 = vld [vmem:[%s0 + $0x60] sm:$0xff]
    %v175 = vld [vmem:[%s0 + $0x68] sm:$0xf]
    %v176 = vld [vmem:[%s0 + $0x6c] sm:$0xff]
    %v177 = vld [vmem:[%s0 + $0x74] sm:$0xf]
    %v178 = vld [vmem:[%s0 + $0x78] sm:$0xff]
    %v179 = vld [vmem:[%s0 + $0x80] sm:$0xf]
    %v180 = vld [vmem:[%s0 + $0x84] sm:$0xff]
    %v181 = vld [vmem:[%s0 + $0x8c] sm:$0xf]
    %v182 = vld [vmem:[%s0 + $0x90] sm:$0xff]
    %v183 = vld [vmem:[%s0 + $0x98] sm:$0xf]
    %v184 = vld [vmem:[%s0 + $0x9c] sm:$0xff]
    %v185 = vld [vmem:[%s0 + $0xa4] sm:$0xf]
    %v186 = vld [vmem:[%s0 + $0xa8] sm:$0xff]
    %v187 = vld [vmem:[%s0 + $0xb0] sm:$0xf]
    %v188 = vld [vmem:[%s0 + $0xb4] sm:$0xff]
    %v189 = vld [vmem:[%s0 + $0xbc] sm:$0xf]
    %v190 = vld [vmem:[#allocation2] sm:$0xff]
    %v191 = vld [vmem:[#allocation2 + $0x8] sm:$0xf]
    %v192 = vld [vmem:[#allocation2 + $0xc] sm:$0xff]
    %v193 = vld [vmem:[#allocation2 + $0x14] sm:$0xf]
    %v194 = vld [vmem:[#allocation2 + $0x18] sm:$0xff]
    %v195 = vld [vmem:[#allocation2 + $0x20] sm:$0xf]
    %v196 = vld [vmem:[#allocation2 + $0x24] sm:$0xff]
    %v197 = vld [vmem:[#allocation2 + $0x2c] sm:$0xf]
    %v198 = vld [vmem:[#allocation2 + $0x30] sm:$0xff]
    %v199 = vld [vmem:[#allocation2 + $0x38] sm:$0xf]
    %v200 = vld [vmem:[#allocation2 + $0x3c] sm:$0xff]
    %v201 = vld [vmem:[#allocation2 + $0x44] sm:$0xf]
    %v202 = vld [vmem:[#allocation2 + $0x48] sm:$0xff]
    %v203 = vld [vmem:[#allocation2 + $0x50] sm:$0xf]
    %v204 = vld [vmem:[#allocation2 + $0x54] sm:$0xff]
    %v205 = vld [vmem:[#allocation2 + $0x5c] sm:$0xf]
    %v206 = vld [vmem:[#allocation2 + $0x60] sm:$0xff]
    %v207 = vld [vmem:[#allocation2 + $0x68] sm:$0xf]
    %v208 = vld [vmem:[#allocation2 + $0x6c] sm:$0xff]
    %v209 = vld [vmem:[#allocation2 + $0x74] sm:$0xf]
    %v210 = vld [vmem:[#allocation2 + $0x78] sm:$0xff]
    %v211 = vld [vmem:[#allocation2 + $0x80] sm:$0xf]
    %v212 = vld [vmem:[#allocation2 + $0x84] sm:$0xff]
    %v213 = vld [vmem:[#allocation2 + $0x8c] sm:$0xf]
    %v214 = vld [vmem:[#allocation2 + $0x90] sm:$0xff]
    %v215 = vld [vmem:[#allocation2 + $0x98] sm:$0xf]
    %v216 = vld [vmem:[#allocation2 + $0x9c] sm:$0xff]
    %v217 = vld [vmem:[#allocation2 + $0xa4] sm:$0xf]
    %v218 = vld [vmem:[#allocation2 + $0xa8] sm:$0xff]
    %v219 = vld [vmem:[#allocation2 + $0xb0] sm:$0xf]
    %v220 = vld [vmem:[#allocation2 + $0xb4] sm:$0xff]
    %v221 = vld [vmem:[#allocation2 + $0xbc] sm:$0xf]
    %v222 = vld [vmem:[#allocation2 + $0xc0] sm:$0xff]
    %v223 = vld [vmem:[#allocation2 + $0xc8] sm:$0xf]
    %v224 = vld [vmem:[#allocation2 + $0xcc] sm:$0xff]
    %v225 = vld [vmem:[#allocation2 + $0xd4] sm:$0xf]
    %v226 = vld [vmem:[#allocation2 + $0xd8] sm:$0xff]
    %v227 = vld [vmem:[#allocation2 + $0xe0] sm:$0xf]
    %v228 = vld [vmem:[#allocation2 + $0xe4] sm:$0xff]
    %v229 = vld [vmem:[#allocation2 + $0xec] sm:$0xf]
    %v230 = vld [vmem:[#allocation2 + $0xf0] sm:$0xff]
    %v231 = vld [vmem:[#allocation2 + $0xf8] sm:$0xf]
    %v232 = vld [vmem:[#allocation2 + $0xfc] sm:$0xff]
    %v233 = vld [vmem:[#allocation2 + $0x104] sm:$0xf]
    %v234 = vld [vmem:[#allocation2 + $0x108] sm:$0xff]
    %v235 = vld [vmem:[#allocation2 + $0x110] sm:$0xf]
    %v236 = vld [vmem:[#allocation2 + $0x114] sm:$0xff]
    %v237 = vld [vmem:[#allocation2 + $0x11c] sm:$0xf]
    %v238 = vld [vmem:[#allocation2 + $0x120] sm:$0xff]
    %v239 = vld [vmem:[#allocation2 + $0x128] sm:$0xf]
    %v240 = vld [vmem:[#allocation2 + $0x12c] sm:$0xff]
    %v241 = vld [vmem:[#allocation2 + $0x134] sm:$0xf]
    %v242 = vld [vmem:[#allocation2 + $0x138] sm:$0xff]
    %v243 = vld [vmem:[#allocation2 + $0x140] sm:$0xf]
    %v244 = vld [vmem:[#allocation2 + $0x144] sm:$0xff]
    %v245 = vld [vmem:[#allocation2 + $0x14c] sm:$0xf]
    %v246 = vld [vmem:[#allocation2 + $0x150] sm:$0xff]
    %v247 = vld [vmem:[#allocation2 + $0x158] sm:$0xf]
    %v248 = vld [vmem:[#allocation2 + $0x15c] sm:$0xff]
    %v249 = vld [vmem:[#allocation2 + $0x164] sm:$0xf]
    %v250 = vld [vmem:[#allocation2 + $0x168] sm:$0xff]
    %v251 = vld [vmem:[#allocation2 + $0x170] sm:$0xf]
    %v252 = vld [vmem:[#allocation2 + $0x174] sm:$0xff]
    %v253 = vld [vmem:[#allocation2 + $0x17c] sm:$0xf]
    %v254 = vld [vmem:[#allocation2 + $0x180] sm:$0xff]
    %v255 = vld [vmem:[#allocation2 + $0x188] sm:$0xf]
    %v256 = vld [vmem:[#allocation2 + $0x18c] sm:$0xff]
    %v257 = vld [vmem:[#allocation2 + $0x194] sm:$0xf]
    %v258 = vld [vmem:[#allocation2 + $0x198] sm:$0xff]
    %v259 = vld [vmem:[#allocation2 + $0x1a0] sm:$0xf]
    %v260 = vld [vmem:[#allocation2 + $0x1a4] sm:$0xff]
    %v261 = vld [vmem:[#allocation2 + $0x1ac] sm:$0xf]
    %v262 = vld [vmem:[#allocation2 + $0x1b0] sm:$0xff]
    %v263 = vld [vmem:[#allocation2 + $0x1b8] sm:$0xf]
    %v264 = vld [vmem:[#allocation2 + $0x1bc] sm:$0xff]
    %v265 = vld [vmem:[#allocation2 + $0x1c4] sm:$0xf]
    %v266 = vld [vmem:[#allocation2 + $0x1c8] sm:$0xff]
    %v267 = vld [vmem:[#allocation2 + $0x1d0] sm:$0xf]
    %v268 = vld [vmem:[#allocation2 + $0x1d4] sm:$0xff]
    %v269 = vld [vmem:[#allocation2 + $0x1dc] sm:$0xf]
    %v270 = vld [vmem:[#allocation2 + $0x1e0] sm:$0xff]
    %v271 = vld [vmem:[#allocation2 + $0x1e8] sm:$0xf]
    %v272 = vld [vmem:[#allocation2 + $0x1ec] sm:$0xff]
    %v273 = vld [vmem:[#allocation2 + $0x1f4] sm:$0xf]
    %v274 = vld [vmem:[#allocation2 + $0x1f8] sm:$0xff]
    %v275 = vld [vmem:[#allocation2 + $0x200] sm:$0xf]
    %v276 = vld [vmem:[#allocation2 + $0x204] sm:$0xff]
    %v277 = vld [vmem:[#allocation2 + $0x20c] sm:$0xf]
    %v278 = vld [vmem:[#allocation2 + $0x210] sm:$0xff]
    %v279 = vld [vmem:[#allocation2 + $0x218] sm:$0xf]
    %v280 = vld [vmem:[#allocation2 + $0x21c] sm:$0xff]
    %v281 = vld [vmem:[#allocation2 + $0x224] sm:$0xf]
    %v282 = vld [vmem:[#allocation2 + $0x228] sm:$0xff]
    %v283 = vld [vmem:[#allocation2 + $0x230] sm:$0xf]
    %v284 = vld [vmem:[#allocation2 + $0x234] sm:$0xff]
    %v285 = vld [vmem:[#allocation2 + $0x23c] sm:$0xf]
    %v286 = vld [vmem:[%s5] sm:$0x7]
    %v288 = vlaneseq
    %v289 = vshrl.u32 %v288, 7
    %v290 = vsub.s32 0, %v289
    %v291 = vrot.slane %v286, %v290
    %v292 = vlaneseq
    %v293 = vshrl.u32 %v292, 7
    %v294 = vsub.s32 1, %v293
    %v295 = vrot.slane %v286, %v294
    %v296 = vlaneseq
    %v297 = vshrl.u32 %v296, 7
    %v298 = vsub.s32 2, %v297
    %v299 = vrot.slane %v286, %v298
    %v335 = vunpack.c.l.b16 %v158
    %v336 = vunpack.c.h.b16 %v158
    %v337 = vunpack.c.l.b16 %v159
    %v338 = vunpack.c.l.b16 %v160
    %v339 = vunpack.c.h.b16 %v160
    %v340 = vunpack.c.l.b16 %v161
    %v341 = vunpack.c.l.b16 %v162
    %v342 = vunpack.c.h.b16 %v162
    %v343 = vunpack.c.l.b16 %v163
    %v344 = vunpack.c.l.b16 %v164
    %v345 = vunpack.c.h.b16 %v164
    %v346 = vunpack.c.l.b16 %v165
    %v347 = vunpack.c.l.b16 %v166
    %v348 = vunpack.c.h.b16 %v166
    %v349 = vunpack.c.l.b16 %v167
    %v350 = vunpack.c.l.b16 %v168
    %v351 = vunpack.c.h.b16 %v168
    %v352 = vunpack.c.l.b16 %v169
    %v353 = vunpack.c.l.b16 %v170
    %v354 = vunpack.c.h.b16 %v170
    %v355 = vunpack.c.l.b16 %v171
    %v356 = vunpack.c.l.b16 %v172
    %v357 = vunpack.c.h.b16 %v172
    %v358 = vunpack.c.l.b16 %v173
    %v359 = vunpack.c.l.b16 %v174
    %v360 = vunpack.c.h.b16 %v174
    %v361 = vunpack.c.l.b16 %v175
    %v362 = vunpack.c.l.b16 %v176
    %v363 = vunpack.c.h.b16 %v176
    %v364 = vunpack.c.l.b16 %v177
    %v365 = vunpack.c.l.b16 %v178
    %v366 = vunpack.c.h.b16 %v178
    %v367 = vunpack.c.l.b16 %v179
    %v368 = vunpack.c.l.b16 %v180
    %v369 = vunpack.c.h.b16 %v180
    %v370 = vunpack.c.l.b16 %v181
    %v371 = vunpack.c.l.b16 %v182
    %v372 = vunpack.c.h.b16 %v182
    %v373 = vunpack.c.l.b16 %v183
    %v374 = vunpack.c.l.b16 %v184
    %v375 = vunpack.c.h.b16 %v184
    %v376 = vunpack.c.l.b16 %v185
    %v377 = vunpack.c.l.b16 %v186
    %v378 = vunpack.c.h.b16 %v186
    %v379 = vunpack.c.l.b16 %v187
    %v380 = vunpack.c.l.b16 %v188
    %v381 = vunpack.c.h.b16 %v188
    %v382 = vunpack.c.l.b16 %v189
    %v383 = vpack.c.b16 %v338, %v335
    %v384 = vpack.c.b16 %v339, %v336
    %v385 = vpack.c.b16 %v340, %v337
    %v386 = vpack.c.b16 %v344, %v341
    %v387 = vpack.c.b16 %v345, %v342
    %v388 = vpack.c.b16 %v346, %v343
    %v389 = vpack.c.b16 %v350, %v347
    %v390 = vpack.c.b16 %v351, %v348
    %v391 = vpack.c.b16 %v352, %v349
    %v392 = vpack.c.b16 %v356, %v353
    %v393 = vpack.c.b16 %v357, %v354
    %v394 = vpack.c.b16 %v358, %v355
    %v395 = vpack.c.b16 %v362, %v359
    %v396 = vpack.c.b16 %v363, %v360
    %v397 = vpack.c.b16 %v364, %v361
    %v398 = vpack.c.b16 %v368, %v365
    %v399 = vpack.c.b16 %v369, %v366
    %v400 = vpack.c.b16 %v370, %v367
    %v401 = vpack.c.b16 %v374, %v371
    %v402 = vpack.c.b16 %v375, %v372
    %v403 = vpack.c.b16 %v376, %v373
    %v404 = vpack.c.b16 %v380, %v377
    %v405 = vpack.c.b16 %v381, %v378
    %v406 = vpack.c.b16 %v382, %v379
    %v527 = vunpack.c.l.b16 %v190
    %v528 = vunpack.c.h.b16 %v190
    %v529 = vunpack.c.l.b16 %v191
    %v530 = vunpack.c.l.b16 %v192
    %v531 = vunpack.c.h.b16 %v192
    %v532 = vunpack.c.l.b16 %v193
    %v533 = vunpack.c.l.b16 %v194
    %v534 = vunpack.c.h.b16 %v194
    %v535 = vunpack.c.l.b16 %v195
    %v536 = vunpack.c.l.b16 %v196
    %v537 = vunpack.c.h.b16 %v196
    %v538 = vunpack.c.l.b16 %v197
    %v539 = vunpack.c.l.b16 %v198
    %v540 = vunpack.c.h.b16 %v198
    %v541 = vunpack.c.l.b16 %v199
    %v542 = vunpack.c.l.b16 %v200
    %v543 = vunpack.c.h.b16 %v200
    %v544 = vunpack.c.l.b16 %v201
    %v545 = vunpack.c.l.b16 %v202
    %v546 = vunpack.c.h.b16 %v202
    %v547 = vunpack.c.l.b16 %v203
    %v548 = vunpack.c.l.b16 %v204
    %v549 = vunpack.c.h.b16 %v204
    %v550 = vunpack.c.l.b16 %v205
    %v551 = vunpack.c.l.b16 %v206
    %v552 = vunpack.c.h.b16 %v206
    %v553 = vunpack.c.l.b16 %v207
    %v554 = vunpack.c.l.b16 %v208
    %v555 = vunpack.c.h.b16 %v208
    %v556 = vunpack.c.l.b16 %v209
    %v557 = vunpack.c.l.b16 %v210
    %v558 = vunpack.c.h.b16 %v210
    %v559 = vunpack.c.l.b16 %v211
    %v560 = vunpack.c.l.b16 %v212
    %v561 = vunpack.c.h.b16 %v212
    %v562 = vunpack.c.l.b16 %v213
    %v563 = vunpack.c.l.b16 %v214
    %v564 = vunpack.c.h.b16 %v214
    %v565 = vunpack.c.l.b16 %v215
    %v566 = vunpack.c.l.b16 %v216
    %v567 = vunpack.c.h.b16 %v216
    %v568 = vunpack.c.l.b16 %v217
    %v569 = vunpack.c.l.b16 %v218
    %v570 = vunpack.c.h.b16 %v218
    %v571 = vunpack.c.l.b16 %v219
    %v572 = vunpack.c.l.b16 %v220
    %v573 = vunpack.c.h.b16 %v220
    %v574 = vunpack.c.l.b16 %v221
    %v575 = vunpack.c.l.b16 %v222
    %v576 = vunpack.c.h.b16 %v222
    %v577 = vunpack.c.l.b16 %v223
    %v578 = vunpack.c.l.b16 %v224
    %v579 = vunpack.c.h.b16 %v224
    %v580 = vunpack.c.l.b16 %v225
    %v581 = vunpack.c.l.b16 %v226
    %v582 = vunpack.c.h.b16 %v226
    %v583 = vunpack.c.l.b16 %v227
    %v584 = vunpack.c.l.b16 %v228
    %v585 = vunpack.c.h.b16 %v228
    %v586 = vunpack.c.l.b16 %v229
    %v587 = vunpack.c.l.b16 %v230
    %v588 = vunpack.c.h.b16 %v230
    %v589 = vunpack.c.l.b16 %v231
    %v590 = vunpack.c.l.b16 %v232
    %v591 = vunpack.c.h.b16 %v232
    %v592 = vunpack.c.l.b16 %v233
    %v593 = vunpack.c.l.b16 %v234
    %v594 = vunpack.c.h.b16 %v234
    %v595 = vunpack.c.l.b16 %v235
    %v596 = vunpack.c.l.b16 %v236
    %v597 = vunpack.c.h.b16 %v236
    %v598 = vunpack.c.l.b16 %v237
    %v599 = vunpack.c.l.b16 %v238
    %v600 = vunpack.c.h.b16 %v238
    %v601 = vunpack.c.l.b16 %v239
    %v602 = vunpack.c.l.b16 %v240
    %v603 = vunpack.c.h.b16 %v240
    %v604 = vunpack.c.l.b16 %v241
    %v605 = vunpack.c.l.b16 %v242
    %v606 = vunpack.c.h.b16 %v242
    %v607 = vunpack.c.l.b16 %v243
    %v608 = vunpack.c.l.b16 %v244
    %v609 = vunpack.c.h.b16 %v244
    %v610 = vunpack.c.l.b16 %v245
    %v611 = vunpack.c.l.b16 %v246
    %v612 = vunpack.c.h.b16 %v246
    %v613 = vunpack.c.l.b16 %v247
    %v614 = vunpack.c.l.b16 %v248
    %v615 = vunpack.c.h.b16 %v248
    %v616 = vunpack.c.l.b16 %v249
    %v617 = vunpack.c.l.b16 %v250
    %v618 = vunpack.c.h.b16 %v250
    %v619 = vunpack.c.l.b16 %v251
    %v620 = vunpack.c.l.b16 %v252
    %v621 = vunpack.c.h.b16 %v252
    %v622 = vunpack.c.l.b16 %v253
    %v623 = vunpack.c.l.b16 %v254
    %v624 = vunpack.c.h.b16 %v254
    %v625 = vunpack.c.l.b16 %v255
    %v626 = vunpack.c.l.b16 %v256
    %v627 = vunpack.c.h.b16 %v256
    %v628 = vunpack.c.l.b16 %v257
    %v629 = vunpack.c.l.b16 %v258
    %v630 = vunpack.c.h.b16 %v258
    %v631 = vunpack.c.l.b16 %v259
    %v632 = vunpack.c.l.b16 %v260
    %v633 = vunpack.c.h.b16 %v260
    %v634 = vunpack.c.l.b16 %v261
    %v635 = vunpack.c.l.b16 %v262
    %v636 = vunpack.c.h.b16 %v262
    %v637 = vunpack.c.l.b16 %v263
    %v638 = vunpack.c.l.b16 %v264
    %v639 = vunpack.c.h.b16 %v264
    %v640 = vunpack.c.l.b16 %v265
    %v641 = vunpack.c.l.b16 %v266
    %v642 = vunpack.c.h.b16 %v266
    %v643 = vunpack.c.l.b16 %v267
    %v644 = vunpack.c.l.b16 %v268
    %v645 = vunpack.c.h.b16 %v268
    %v646 = vunpack.c.l.b16 %v269
    %v647 = vunpack.c.l.b16 %v270
    %v648 = vunpack.c.h.b16 %v270
    %v649 = vunpack.c.l.b16 %v271
    %v650 = vunpack.c.l.b16 %v272
    %v651 = vunpack.c.h.b16 %v272
    %v652 = vunpack.c.l.b16 %v273
    %v653 = vunpack.c.l.b16 %v274
    %v654 = vunpack.c.h.b16 %v274
    %v655 = vunpack.c.l.b16 %v275
    %v656 = vunpack.c.l.b16 %v276
    %v657 = vunpack.c.h.b16 %v276
    %v658 = vunpack.c.l.b16 %v277
    %v659 = vunpack.c.l.b16 %v278
    %v660 = vunpack.c.h.b16 %v278
    %v661 = vunpack.c.l.b16 %v279
    %v662 = vunpack.c.l.b16 %v280
    %v663 = vunpack.c.h.b16 %v280
    %v664 = vunpack.c.l.b16 %v281
    %v665 = vunpack.c.l.b16 %v282
    %v666 = vunpack.c.h.b16 %v282
    %v667 = vunpack.c.l.b16 %v283
    %v668 = vunpack.c.l.b16 %v284
    %v669 = vunpack.c.h.b16 %v284
    %v670 = vunpack.c.l.b16 %v285
    %v671 = vpack.c.b16 %v530, %v527
    %v672 = vpack.c.b16 %v531, %v528
    %v673 = vpack.c.b16 %v532, %v529
    %v674 = vpack.c.b16 %v536, %v533
    %v675 = vpack.c.b16 %v537, %v534
    %v676 = vpack.c.b16 %v538, %v535
    %v677 = vpack.c.b16 %v542, %v539
    %v678 = vpack.c.b16 %v543, %v540
    %v679 = vpack.c.b16 %v544, %v541
    %v680 = vpack.c.b16 %v548, %v545
    %v681 = vpack.c.b16 %v549, %v546
    %v682 = vpack.c.b16 %v550, %v547
    %v683 = vpack.c.b16 %v554, %v551
    %v684 = vpack.c.b16 %v555, %v552
    %v685 = vpack.c.b16 %v556, %v553
    %v686 = vpack.c.b16 %v560, %v557
    %v687 = vpack.c.b16 %v561, %v558
    %v688 = vpack.c.b16 %v562, %v559
    %v689 = vpack.c.b16 %v566, %v563
    %v690 = vpack.c.b16 %v567, %v564
    %v691 = vpack.c.b16 %v568, %v565
    %v692 = vpack.c.b16 %v572, %v569
    %v693 = vpack.c.b16 %v573, %v570
    %v694 = vpack.c.b16 %v574, %v571
    %v695 = vpack.c.b16 %v578, %v575
    %v696 = vpack.c.b16 %v579, %v576
    %v697 = vpack.c.b16 %v580, %v577
    %v698 = vpack.c.b16 %v584, %v581
    %v699 = vpack.c.b16 %v585, %v582
    %v700 = vpack.c.b16 %v586, %v583
    %v701 = vpack.c.b16 %v590, %v587
    %v702 = vpack.c.b16 %v591, %v588
    %v703 = vpack.c.b16 %v592, %v589
    %v704 = vpack.c.b16 %v596, %v593
    %v705 = vpack.c.b16 %v597, %v594
    %v706 = vpack.c.b16 %v598, %v595
    %v707 = vpack.c.b16 %v602, %v599
    %v708 = vpack.c.b16 %v603, %v600
    %v709 = vpack.c.b16 %v604, %v601
    %v710 = vpack.c.b16 %v608, %v605
    %v711 = vpack.c.b16 %v609, %v606
    %v712 = vpack.c.b16 %v610, %v607
    %v713 = vpack.c.b16 %v614, %v611
    %v714 = vpack.c.b16 %v615, %v612
    %v715 = vpack.c.b16 %v616, %v613
    %v716 = vpack.c.b16 %v620, %v617
    %v717 = vpack.c.b16 %v621, %v618
    %v718 = vpack.c.b16 %v622, %v619
    %v719 = vpack.c.b16 %v626, %v623
    %v720 = vpack.c.b16 %v627, %v624
    %v721 = vpack.c.b16 %v628, %v625
    %v722 = vpack.c.b16 %v632, %v629
    %v723 = vpack.c.b16 %v633, %v630
    %v724 = vpack.c.b16 %v634, %v631
    %v725 = vpack.c.b16 %v638, %v635
    %v726 = vpack.c.b16 %v639, %v636
    %v727 = vpack.c.b16 %v640, %v637
    %v728 = vpack.c.b16 %v644, %v641
    %v729 = vpack.c.b16 %v645, %v642
    %v730 = vpack.c.b16 %v646, %v643
    %v731 = vpack.c.b16 %v650, %v647
    %v732 = vpack.c.b16 %v651, %v648
    %v733 = vpack.c.b16 %v652, %v649
    %v734 = vpack.c.b16 %v656, %v653
    %v735 = vpack.c.b16 %v657, %v654
    %v736 = vpack.c.b16 %v658, %v655
    %v737 = vpack.c.b16 %v662, %v659
    %v738 = vpack.c.b16 %v663, %v660
    %v739 = vpack.c.b16 %v664, %v661
    %v740 = vpack.c.b16 %v668, %v665
    %v741 = vpack.c.b16 %v669, %v666
    %v742 = vpack.c.b16 %v670, %v667
    %815 = vmatprep.subr.bf16.mxu0 %v693
    %816 = vmatpush1.bf16.msra.mxu0 %v692
    %817 = vmatprep.subr.bf16.mxu0 %v690
    %818 = vmatpush1.bf16.msra.mxu0 %v689
    %819 = vmatprep.subr.bf16.mxu0 %v687
    %820 = vmatpush1.bf16.msra.mxu0 %v686
    %821 = vmatprep.subr.bf16.mxu0 %v684
    %822 = vmatpush1.bf16.msra.mxu0 %v683
    %823 = vmatprep.subr.bf16.mxu0 %v681
    %824 = vmatpush1.bf16.msra.mxu0 %v680
    %825 = vmatprep.subr.bf16.mxu0 %v678
    %826 = vmatpush1.bf16.msra.mxu0 %v677
    %827 = vmatprep.subr.bf16.mxu0 %v675
    %828 = vmatpush1.bf16.msra.mxu0 %v674
    %829 = vmatprep.subr.bf16.mxu0 %v672
    %830 = vmatpush1.bf16.msra.mxu0 %v671
    %831 = vmatprep.subr.bf16.mxu0 %v717
    %832 = vmatpush2.bf16.msra.mxu0 %v716
    %833 = vmatprep.subr.bf16.mxu0 %v714
    %834 = vmatpush2.bf16.msra.mxu0 %v713
    %835 = vmatprep.subr.bf16.mxu0 %v711
    %836 = vmatpush2.bf16.msra.mxu0 %v710
    %837 = vmatprep.subr.bf16.mxu0 %v708
    %838 = vmatpush2.bf16.msra.mxu0 %v707
    %839 = vmatprep.subr.bf16.mxu0 %v705
    %840 = vmatpush2.bf16.msra.mxu0 %v704
    %841 = vmatprep.subr.bf16.mxu0 %v702
    %842 = vmatpush2.bf16.msra.mxu0 %v701
    %843 = vmatprep.subr.bf16.mxu0 %v699
    %844 = vmatpush2.bf16.msra.mxu0 %v698
    %845 = vmatprep.subr.bf16.mxu0 %v696
    %846 = vmatpush2.bf16.msra.mxu0 %v695
    %847 = vmatprep.mubr.bf16.mxu0 %v384
    %848 = vmatmul.mubr.bf16.gmra.mxu0 %v383
    %v849 = vpop.f32.mrf.mxu0
    %v850 = vadd.f32 %v291, %v849
    %v851 = vpop.f32.mrf.mxu0
    %v852 = vadd.f32 %v295, %v851
    %v853 = vpop.f32.mrf.mxu0
    %v854 = vadd.f32 %v291, %v853
    %v855 = vpop.f32.mrf.mxu0
    %v856 = vadd.f32 %v295, %v855
    %857 = vmatprep.mubr.bf16.mxu0 %v387
    %858 = vmatmul.mubr.bf16.gmra.mxu0 %v386
    %v859 = vpop.f32.mrf.mxu0
    %v860 = vadd.f32 %v291, %v859
    %v861 = vpop.f32.mrf.mxu0
    %v862 = vadd.f32 %v295, %v861
    %v863 = vpop.f32.mrf.mxu0
    %v864 = vadd.f32 %v291, %v863
    %v865 = vpop.f32.mrf.mxu0
    %v866 = vadd.f32 %v295, %v865
    %867 = vmatprep.mubr.bf16.mxu0 %v390
    %868 = vmatmul.mubr.bf16.gmra.mxu0 %v389
    %v869 = vpop.f32.mrf.mxu0
    %v870 = vadd.f32 %v291, %v869
    %v871 = vpop.f32.mrf.mxu0
    %v872 = vadd.f32 %v295, %v871
    %v873 = vpop.f32.mrf.mxu0
    %v874 = vadd.f32 %v291, %v873
    %v875 = vpop.f32.mrf.mxu0
    %v876 = vadd.f32 %v295, %v875
    %877 = vmatprep.mubr.bf16.mxu0 %v393
    %878 = vmatmul.mubr.bf16.gmra.mxu0 %v392
    %v879 = vpop.f32.mrf.mxu0
    %v880 = vadd.f32 %v291, %v879
    %v881 = vpop.f32.mrf.mxu0
    %v882 = vadd.f32 %v295, %v881
    %v883 = vpop.f32.mrf.mxu0
    %v884 = vadd.f32 %v291, %v883
    %v885 = vpop.f32.mrf.mxu0
    %v886 = vadd.f32 %v295, %v885
    %887 = vmatprep.mubr.bf16.mxu0 %v396
    %888 = vmatmul.mubr.bf16.gmra.mxu0 %v395
    %v889 = vpop.f32.mrf.mxu0
    %v890 = vadd.f32 %v291, %v889
    %v891 = vpop.f32.mrf.mxu0
    %v892 = vadd.f32 %v295, %v891
    %v893 = vpop.f32.mrf.mxu0
    %v894 = vadd.f32 %v291, %v893
    %v895 = vpop.f32.mrf.mxu0
    %v896 = vadd.f32 %v295, %v895
    %897 = vmatprep.mubr.bf16.mxu0 %v399
    %898 = vmatmul.mubr.bf16.gmra.mxu0 %v398
    %v899 = vpop.f32.mrf.mxu0
    %v900 = vadd.f32 %v291, %v899
    %v901 = vpop.f32.mrf.mxu0
    %v902 = vadd.f32 %v295, %v901
    %v903 = vpop.f32.mrf.mxu0
    %v904 = vadd.f32 %v291, %v903
    %v905 = vpop.f32.mrf.mxu0
    %v906 = vadd.f32 %v295, %v905
    %907 = vmatprep.mubr.bf16.mxu0 %v402
    %908 = vmatmul.mubr.bf16.gmra.mxu0 %v401
    %v909 = vpop.f32.mrf.mxu0
    %v910 = vadd.f32 %v291, %v909
    %v911 = vpop.f32.mrf.mxu0
    %v912 = vadd.f32 %v295, %v911
    %v913 = vpop.f32.mrf.mxu0
    %v914 = vadd.f32 %v291, %v913
    %v915 = vpop.f32.mrf.mxu0
    %v916 = vadd.f32 %v295, %v915
    %917 = vmatprep.mubr.bf16.mxu0 %v405
    %918 = vmatmul.mubr.bf16.gmra.mxu0 %v404
    %v919 = vpop.f32.mrf.mxu0
    %v920 = vadd.f32 %v291, %v919
    %v921 = vpop.f32.mrf.mxu0
    %v922 = vadd.f32 %v295, %v921
    %v923 = vpop.f32.mrf.mxu0
    %v924 = vadd.f32 %v291, %v923
    %v925 = vpop.f32.mrf.mxu0
    %v926 = vadd.f32 %v295, %v925
    %927 = vdwg.mxu0
    %928 = vmatprep.subr.bf16.mxu0 %v741
    %929 = vmatpush1.bf16.msra.mxu0 %v740
    %930 = vmatprep.subr.bf16.mxu0 %v738
    %931 = vmatpush1.bf16.msra.mxu0 %v737
    %932 = vmatprep.subr.bf16.mxu0 %v735
    %933 = vmatpush1.bf16.msra.mxu0 %v734
    %934 = vmatprep.subr.bf16.mxu0 %v732
    %935 = vmatpush1.bf16.msra.mxu0 %v731
    %936 = vmatprep.subr.bf16.mxu0 %v729
    %937 = vmatpush1.bf16.msra.mxu0 %v728
    %938 = vmatprep.subr.bf16.mxu0 %v726
    %939 = vmatpush1.bf16.msra.mxu0 %v725
    %940 = vmatprep.subr.bf16.mxu0 %v723
    %941 = vmatpush1.bf16.msra.mxu0 %v722
    %942 = vmatprep.subr.bf16.mxu0 %v720
    %943 = vmatpush1.bf16.msra.mxu0 %v719
    %944 = vmatprep.subr.bf16.mxu0 0
    %945 = vmatpush2.bf16.msra.mxu0 0
    %946 = vmatprep.subr.bf16.mxu0 0
    %947 = vmatpush2.bf16.msra.mxu0 0
    %948 = vmatprep.subr.bf16.mxu0 0
    %949 = vmatpush2.bf16.msra.mxu0 0
    %950 = vmatprep.subr.bf16.mxu0 0
    %951 = vmatpush2.bf16.msra.mxu0 0
    %952 = vmatprep.subr.bf16.mxu0 0
    %953 = vmatpush2.bf16.msra.mxu0 0
    %954 = vmatprep.subr.bf16.mxu0 0
    %955 = vmatpush2.bf16.msra.mxu0 0
    %956 = vmatprep.subr.bf16.mxu0 0
    %957 = vmatpush2.bf16.msra.mxu0 0
    %958 = vmatprep.subr.bf16.mxu0 0
    %959 = vmatpush2.bf16.msra.mxu0 0
    %960 = vmatprep.mubr.bf16.mxu0 0
    %961 = vmatmul.mubr.bf16.gmra.mxu0 %v385
    %v962 = vpop.f32.mrf.mxu0
    %v963 = vadd.f32 %v850, %v962
    %v964 = vpop.f32.mrf.mxu0
    %v965 = vadd.f32 %v852, %v964
    %v966 = vpop.f32.mrf.mxu0
    %v967 = vadd.f32 %v854, %v966
    %v968 = vpop.f32.mrf.mxu0
    %v969 = vadd.f32 %v856, %v968
    %970 = vmatprep.mubr.bf16.mxu0 0
    %971 = vmatmul.mubr.bf16.gmra.mxu0 %v388
    %v972 = vpop.f32.mrf.mxu0
    %v973 = vadd.f32 %v860, %v972
    %v974 = vpop.f32.mrf.mxu0
    %v975 = vadd.f32 %v862, %v974
    %v976 = vpop.f32.mrf.mxu0
    %v977 = vadd.f32 %v864, %v976
    %v978 = vpop.f32.mrf.mxu0
    %v979 = vadd.f32 %v866, %v978
    %980 = vmatprep.mubr.bf16.mxu0 0
    %981 = vmatmul.mubr.bf16.gmra.mxu0 %v391
    %v982 = vpop.f32.mrf.mxu0
    %v983 = vadd.f32 %v870, %v982
    %v984 = vpop.f32.mrf.mxu0
    %v985 = vadd.f32 %v872, %v984
    %v986 = vpop.f32.mrf.mxu0
    %v987 = vadd.f32 %v874, %v986
    %v988 = vpop.f32.mrf.mxu0
    %v989 = vadd.f32 %v876, %v988
    %990 = vmatprep.mubr.bf16.mxu0 0
    %991 = vmatmul.mubr.bf16.gmra.mxu0 %v394
    %v992 = vpop.f32.mrf.mxu0
    %v993 = vadd.f32 %v880, %v992
    %v994 = vpop.f32.mrf.mxu0
    %v995 = vadd.f32 %v882, %v994
    %v996 = vpop.f32.mrf.mxu0
    %v997 = vadd.f32 %v884, %v996
    %v998 = vpop.f32.mrf.mxu0
    %v999 = vadd.f32 %v886, %v998
    %1000 = vmatprep.mubr.bf16.mxu0 0
    %1001 = vmatmul.mubr.bf16.gmra.mxu0 %v397
    %v1002 = vpop.f32.mrf.mxu0
    %v1003 = vadd.f32 %v890, %v1002
    %v1004 = vpop.f32.mrf.mxu0
    %v1005 = vadd.f32 %v892, %v1004
    %v1006 = vpop.f32.mrf.mxu0
    %v1007 = vadd.f32 %v894, %v1006
    %v1008 = vpop.f32.mrf.mxu0
    %v1009 = vadd.f32 %v896, %v1008
    %1010 = vmatprep.mubr.bf16.mxu0 0
    %1011 = vmatmul.mubr.bf16.gmra.mxu0 %v400
    %v1012 = vpop.f32.mrf.mxu0
    %v1013 = vadd.f32 %v900, %v1012
    %v1014 = vpop.f32.mrf.mxu0
    %v1015 = vadd.f32 %v902, %v1014
    %v1016 = vpop.f32.mrf.mxu0
    %v1017 = vadd.f32 %v904, %v1016
    %v1018 = vpop.f32.mrf.mxu0
    %v1019 = vadd.f32 %v906, %v1018
    %1020 = vmatprep.mubr.bf16.mxu0 0
    %1021 = vmatmul.mubr.bf16.gmra.mxu0 %v403
    %v1022 = vpop.f32.mrf.mxu0
    %v1023 = vadd.f32 %v910, %v1022
    %v1024 = vpop.f32.mrf.mxu0
    %v1025 = vadd.f32 %v912, %v1024
    %v1026 = vpop.f32.mrf.mxu0
    %v1027 = vadd.f32 %v914, %v1026
    %v1028 = vpop.f32.mrf.mxu0
    %v1029 = vadd.f32 %v916, %v1028
    %1030 = vmatprep.mubr.bf16.mxu0 0
    %1031 = vmatmul.mubr.bf16.gmra.mxu0 %v406
    %v1032 = vpop.f32.mrf.mxu0
    %v1033 = vadd.f32 %v920, %v1032
    %v1034 = vpop.f32.mrf.mxu0
    %v1035 = vadd.f32 %v922, %v1034
    %v1036 = vpop.f32.mrf.mxu0
    %v1037 = vadd.f32 %v924, %v1036
    %v1038 = vpop.f32.mrf.mxu0
    %v1039 = vadd.f32 %v926, %v1038
    %1040 = vdwg.mxu0
    %1041 = vmatprep.subr.bf16.mxu0 0
    %1042 = vmatpush1.bf16.msra.mxu0 %v694
    %1043 = vmatprep.subr.bf16.mxu0 0
    %1044 = vmatpush1.bf16.msra.mxu0 %v691
    %1045 = vmatprep.subr.bf16.mxu0 0
    %1046 = vmatpush1.bf16.msra.mxu0 %v688
    %1047 = vmatprep.subr.bf16.mxu0 0
    %1048 = vmatpush1.bf16.msra.mxu0 %v685
    %1049 = vmatprep.subr.bf16.mxu0 0
    %1050 = vmatpush1.bf16.msra.mxu0 %v682
    %1051 = vmatprep.subr.bf16.mxu0 0
    %1052 = vmatpush1.bf16.msra.mxu0 %v679
    %1053 = vmatprep.subr.bf16.mxu0 0
    %1054 = vmatpush1.bf16.msra.mxu0 %v676
    %1055 = vmatprep.subr.bf16.mxu0 0
    %1056 = vmatpush1.bf16.msra.mxu0 %v673
    %1057 = vmatprep.subr.bf16.mxu0 0
    %1058 = vmatpush2.bf16.msra.mxu0 %v718
    %1059 = vmatprep.subr.bf16.mxu0 0
    %1060 = vmatpush2.bf16.msra.mxu0 %v715
    %1061 = vmatprep.subr.bf16.mxu0 0
    %1062 = vmatpush2.bf16.msra.mxu0 %v712
    %1063 = vmatprep.subr.bf16.mxu0 0
    %1064 = vmatpush2.bf16.msra.mxu0 %v709
    %1065 = vmatprep.subr.bf16.mxu0 0
    %1066 = vmatpush2.bf16.msra.mxu0 %v706
    %1067 = vmatprep.subr.bf16.mxu0 0
    %1068 = vmatpush2.bf16.msra.mxu0 %v703
    %1069 = vmatprep.subr.bf16.mxu0 0
    %1070 = vmatpush2.bf16.msra.mxu0 %v700
    %1071 = vmatprep.subr.bf16.mxu0 0
    %1072 = vmatpush2.bf16.msra.mxu0 %v697
    %1073 = vmatprep.mubr.bf16.mxu0 %v384
    %1074 = vmatmul.mubr.bf16.gmra.mxu0 %v383
    %v1075 = vpop.f32.mrf.mxu0
    %v1076 = vadd.f32 %v299, %v1075
    %v1077 = vpop.f32.mrf.mxu0
    %v1078 = vpop.f32.mrf.mxu0
    %v1079 = vadd.f32 %v299, %v1078
    %v1080 = vpop.f32.mrf.mxu0
    %1081 = vmatprep.mubr.bf16.mxu0 %v387
    %1082 = vmatmul.mubr.bf16.gmra.mxu0 %v386
    %v1083 = vpop.f32.mrf.mxu0
    %v1084 = vadd.f32 %v299, %v1083
    %v1085 = vpop.f32.mrf.mxu0
    %v1086 = vpop.f32.mrf.mxu0
    %v1087 = vadd.f32 %v299, %v1086
    %v1088 = vpop.f32.mrf.mxu0
    %1089 = vmatprep.mubr.bf16.mxu0 %v390
    %1090 = vmatmul.mubr.bf16.gmra.mxu0 %v389
    %v1091 = vpop.f32.mrf.mxu0
    %v1092 = vadd.f32 %v299, %v1091
    %v1093 = vpop.f32.mrf.mxu0
    %v1094 = vpop.f32.mrf.mxu0
    %v1095 = vadd.f32 %v299, %v1094
    %v1096 = vpop.f32.mrf.mxu0
    %1097 = vmatprep.mubr.bf16.mxu0 %v393
    %1098 = vmatmul.mubr.bf16.gmra.mxu0 %v392
    %v1099 = vpop.f32.mrf.mxu0
    %v1100 = vadd.f32 %v299, %v1099
    %v1101 = vpop.f32.mrf.mxu0
    %v1102 = vpop.f32.mrf.mxu0
    %v1103 = vadd.f32 %v299, %v1102
    %v1104 = vpop.f32.mrf.mxu0
    %1105 = vmatprep.mubr.bf16.mxu0 %v396
    %1106 = vmatmul.mubr.bf16.gmra.mxu0 %v395
    %v1107 = vpop.f32.mrf.mxu0
    %v1108 = vadd.f32 %v299, %v1107
    %v1109 = vpop.f32.mrf.mxu0
    %v1110 = vpop.f32.mrf.mxu0
    %v1111 = vadd.f32 %v299, %v1110
    %v1112 = vpop.f32.mrf.mxu0
    %1113 = vmatprep.mubr.bf16.mxu0 %v399
    %1114 = vmatmul.mubr.bf16.gmra.mxu0 %v398
    %v1115 = vpop.f32.mrf.mxu0
    %v1116 = vadd.f32 %v299, %v1115
    %v1117 = vpop.f32.mrf.mxu0
    %v1118 = vpop.f32.mrf.mxu0
    %v1119 = vadd.f32 %v299, %v1118
    %v1120 = vpop.f32.mrf.mxu0
    %1121 = vmatprep.mubr.bf16.mxu0 %v402
    %1122 = vmatmul.mubr.bf16.gmra.mxu0 %v401
    %v1123 = vpop.f32.mrf.mxu0
    %v1124 = vadd.f32 %v299, %v1123
    %v1125 = vpop.f32.mrf.mxu0
    %v1126 = vpop.f32.mrf.mxu0
    %v1127 = vadd.f32 %v299, %v1126
    %v1128 = vpop.f32.mrf.mxu0
    %1129 = vmatprep.mubr.bf16.mxu0 %v405
    %1130 = vmatmul.mubr.bf16.gmra.mxu0 %v404
    %v1131 = vpop.f32.mrf.mxu0
    %v1132 = vadd.f32 %v299, %v1131
    %v1133 = vpop.f32.mrf.mxu0
    %v1134 = vpop.f32.mrf.mxu0
    %v1135 = vadd.f32 %v299, %v1134
    %v1136 = vpop.f32.mrf.mxu0
    %1137 = vdwg.mxu0
    %1138 = vmatprep.subr.bf16.mxu0 0
    %1139 = vmatpush1.bf16.msra.mxu0 %v742
    %1140 = vmatprep.subr.bf16.mxu0 0
    %1141 = vmatpush1.bf16.msra.mxu0 %v739
    %1142 = vmatprep.subr.bf16.mxu0 0
    %1143 = vmatpush1.bf16.msra.mxu0 %v736
    %1144 = vmatprep.subr.bf16.mxu0 0
    %1145 = vmatpush1.bf16.msra.mxu0 %v733
    %1146 = vmatprep.subr.bf16.mxu0 0
    %1147 = vmatpush1.bf16.msra.mxu0 %v730
    %1148 = vmatprep.subr.bf16.mxu0 0
    %1149 = vmatpush1.bf16.msra.mxu0 %v727
    %1150 = vmatprep.subr.bf16.mxu0 0
    %1151 = vmatpush1.bf16.msra.mxu0 %v724
    %1152 = vmatprep.subr.bf16.mxu0 0
    %1153 = vmatpush1.bf16.msra.mxu0 %v721
    %1154 = vmatprep.subr.bf16.mxu0 0
    %1155 = vmatpush2.bf16.msra.mxu0 0
    %1156 = vmatprep.subr.bf16.mxu0 0
    %1157 = vmatpush2.bf16.msra.mxu0 0
    %1158 = vmatprep.subr.bf16.mxu0 0
    %1159 = vmatpush2.bf16.msra.mxu0 0
    %1160 = vmatprep.subr.bf16.mxu0 0
    %1161 = vmatpush2.bf16.msra.mxu0 0
    %1162 = vmatprep.subr.bf16.mxu0 0
    %1163 = vmatpush2.bf16.msra.mxu0 0
    %1164 = vmatprep.subr.bf16.mxu0 0
    %1165 = vmatpush2.bf16.msra.mxu0 0
    %1166 = vmatprep.subr.bf16.mxu0 0
    %1167 = vmatpush2.bf16.msra.mxu0 0
    %1168 = vmatprep.subr.bf16.mxu0 0
    %1169 = vmatpush2.bf16.msra.mxu0 0
    %1170 = vmatprep.mubr.bf16.mxu0 0
    %1171 = vmatmul.mubr.bf16.gmra.mxu0 %v385
    %v1172 = vpop.f32.mrf.mxu0
    %v1173 = vadd.f32 %v1076, %v1172
    %v1174 = vpop.f32.mrf.mxu0
    %v1175 = vpop.f32.mrf.mxu0
    %v1176 = vadd.f32 %v1079, %v1175
    %v1177 = vpop.f32.mrf.mxu0
    %1178 = vmatprep.mubr.bf16.mxu0 0
    %1179 = vmatmul.mubr.bf16.gmra.mxu0 %v388
    %v1180 = vpop.f32.mrf.mxu0
    %v1181 = vadd.f32 %v1084, %v1180
    %v1182 = vpop.f32.mrf.mxu0
    %v1183 = vpop.f32.mrf.mxu0
    %v1184 = vadd.f32 %v1087, %v1183
    %v1185 = vpop.f32.mrf.mxu0
    %1186 = vmatprep.mubr.bf16.mxu0 0
    %1187 = vmatmul.mubr.bf16.gmra.mxu0 %v391
    %v1188 = vpop.f32.mrf.mxu0
    %v1189 = vadd.f32 %v1092, %v1188
    %v1190 = vpop.f32.mrf.mxu0
    %v1191 = vpop.f32.mrf.mxu0
    %v1192 = vadd.f32 %v1095, %v1191
    %v1193 = vpop.f32.mrf.mxu0
    %1194 = vmatprep.mubr.bf16.mxu0 0
    %1195 = vmatmul.mubr.bf16.gmra.mxu0 %v394
    %v1196 = vpop.f32.mrf.mxu0
    %v1197 = vadd.f32 %v1100, %v1196
    %v1198 = vpop.f32.mrf.mxu0
    %v1199 = vpop.f32.mrf.mxu0
    %v1200 = vadd.f32 %v1103, %v1199
    %v1201 = vpop.f32.mrf.mxu0
    %1202 = vmatprep.mubr.bf16.mxu0 0
    %1203 = vmatmul.mubr.bf16.gmra.mxu0 %v397
    %v1204 = vpop.f32.mrf.mxu0
    %v1205 = vadd.f32 %v1108, %v1204
    %v1206 = vpop.f32.mrf.mxu0
    %v1207 = vpop.f32.mrf.mxu0
    %v1208 = vadd.f32 %v1111, %v1207
    %v1209 = vpop.f32.mrf.mxu0
    %1210 = vmatprep.mubr.bf16.mxu0 0
    %1211 = vmatmul.mubr.bf16.gmra.mxu0 %v400
    %v1212 = vpop.f32.mrf.mxu0
    %v1213 = vadd.f32 %v1116, %v1212
    %v1214 = vpop.f32.mrf.mxu0
    %v1215 = vpop.f32.mrf.mxu0
    %v1216 = vadd.f32 %v1119, %v1215
    %v1217 = vpop.f32.mrf.mxu0
    %1218 = vmatprep.mubr.bf16.mxu0 0
    %1219 = vmatmul.mubr.bf16.gmra.mxu0 %v403
    %v1220 = vpop.f32.mrf.mxu0
    %v1221 = vadd.f32 %v1124, %v1220
    %v1222 = vpop.f32.mrf.mxu0
    %v1223 = vpop.f32.mrf.mxu0
    %v1224 = vadd.f32 %v1127, %v1223
    %v1225 = vpop.f32.mrf.mxu0
    %1226 = vmatprep.mubr.bf16.mxu0 0
    %1227 = vmatmul.mubr.bf16.gmra.mxu0 %v406
    %v1228 = vpop.f32.mrf.mxu0
    %v1229 = vadd.f32 %v1132, %v1228
    %v1230 = vpop.f32.mrf.mxu0
    %v1231 = vpop.f32.mrf.mxu0
    %v1232 = vadd.f32 %v1135, %v1231
    %v1233 = vpop.f32.mrf.mxu0
    %1234 = vdwg.mxu0
    %v1235 = vmax.f32 %v963, 0.0
    %v1236 = vmax.f32 %v965, 0.0
    %v1237 = vmax.f32 %v1173, 0.0
    %v1238 = vmax.f32 %v967, 0.0
    %v1239 = vmax.f32 %v969, 0.0
    %v1240 = vmax.f32 %v1176, 0.0
    %v1241 = vmax.f32 %v973, 0.0
    %v1242 = vmax.f32 %v975, 0.0
    %v1243 = vmax.f32 %v1181, 0.0
    %v1244 = vmax.f32 %v977, 0.0
    %v1245 = vmax.f32 %v979, 0.0
    %v1246 = vmax.f32 %v1184, 0.0
    %v1247 = vmax.f32 %v983, 0.0
    %v1248 = vmax.f32 %v985, 0.0
    %v1249 = vmax.f32 %v1189, 0.0
    %v1250 = vmax.f32 %v987, 0.0
    %v1251 = vmax.f32 %v989, 0.0
    %v1252 = vmax.f32 %v1192, 0.0
    %v1253 = vmax.f32 %v993, 0.0
    %v1254 = vmax.f32 %v995, 0.0
    %v1255 = vmax.f32 %v1197, 0.0
    %v1256 = vmax.f32 %v997, 0.0
    %v1257 = vmax.f32 %v999, 0.0
    %v1258 = vmax.f32 %v1200, 0.0
    %v1259 = vmax.f32 %v1003, 0.0
    %v1260 = vmax.f32 %v1005, 0.0
    %v1261 = vmax.f32 %v1205, 0.0
    %v1262 = vmax.f32 %v1007, 0.0
    %v1263 = vmax.f32 %v1009, 0.0
    %v1264 = vmax.f32 %v1208, 0.0
    %v1265 = vmax.f32 %v1013, 0.0
    %v1266 = vmax.f32 %v1015, 0.0
    %v1267 = vmax.f32 %v1213, 0.0
    %v1268 = vmax.f32 %v1017, 0.0
    %v1269 = vmax.f32 %v1019, 0.0
    %v1270 = vmax.f32 %v1216, 0.0
    %v1271 = vmax.f32 %v1023, 0.0
    %v1272 = vmax.f32 %v1025, 0.0
    %v1273 = vmax.f32 %v1221, 0.0
    %v1274 = vmax.f32 %v1027, 0.0
    %v1275 = vmax.f32 %v1029, 0.0
    %v1276 = vmax.f32 %v1224, 0.0
    %v1277 = vmax.f32 %v1033, 0.0
    %v1278 = vmax.f32 %v1035, 0.0
    %v1279 = vmax.f32 %v1229, 0.0
    %v1280 = vmax.f32 %v1037, 0.0
    %v1281 = vmax.f32 %v1039, 0.0
    %v1282 = vmax.f32 %v1232, 0.0
    %v1283 = vpack.c.bf16 %v1238, %v1235
    %v1284 = vpack.c.bf16 %v1239, %v1236
    %v1285 = vpack.c.bf16 %v1240, %v1237
    %v1286 = vpack.c.bf16 %v1244, %v1241
    %v1287 = vpack.c.bf16 %v1245, %v1242
    %v1288 = vpack.c.bf16 %v1246, %v1243
    %v1289 = vpack.c.bf16 %v1250, %v1247
    %v1290 = vpack.c.bf16 %v1251, %v1248
    %v1291 = vpack.c.bf16 %v1252, %v1249
    %v1292 = vpack.c.bf16 %v1256, %v1253
    %v1293 = vpack.c.bf16 %v1257, %v1254
    %v1294 = vpack.c.bf16 %v1258, %v1255
    %v1295 = vpack.c.bf16 %v1262, %v1259
    %v1296 = vpack.c.bf16 %v1263, %v1260
    %v1297 = vpack.c.bf16 %v1264, %v1261
    %v1298 = vpack.c.bf16 %v1268, %v1265
    %v1299 = vpack.c.bf16 %v1269, %v1266
    %v1300 = vpack.c.bf16 %v1270, %v1267
    %v1301 = vpack.c.bf16 %v1274, %v1271
    %v1302 = vpack.c.bf16 %v1275, %v1272
    %v1303 = vpack.c.bf16 %v1276, %v1273
    %v1304 = vpack.c.bf16 %v1280, %v1277
    %v1305 = vpack.c.bf16 %v1281, %v1278
    %v1306 = vpack.c.bf16 %v1282, %v1279
    %v1307 = vld [vmem:[#allocation4] sm:$0xff]
    %v1308 = vld [vmem:[#allocation4 + $0x8] sm:$0xf]
    %v1309 = vld [vmem:[#allocation4 + $0xc] sm:$0xff]
    %v1310 = vld [vmem:[#allocation4 + $0x14] sm:$0xf]
    %v1311 = vld [vmem:[#allocation4 + $0x18] sm:$0xff]
    %v1312 = vld [vmem:[#allocation4 + $0x20] sm:$0xf]
    %v1313 = vld [vmem:[#allocation4 + $0x24] sm:$0xff]
    %v1314 = vld [vmem:[#allocation4 + $0x2c] sm:$0xf]
    %v1315 = vld [vmem:[#allocation4 + $0x30] sm:$0xff]
    %v1316 = vld [vmem:[#allocation4 + $0x38] sm:$0xf]
    %v1317 = vld [vmem:[#allocation4 + $0x3c] sm:$0xff]
    %v1318 = vld [vmem:[#allocation4 + $0x44] sm:$0xf]
    %v1319 = vld [vmem:[#allocation4 + $0x48] sm:$0xff]
    %v1320 = vld [vmem:[#allocation4 + $0x50] sm:$0xf]
    %v1321 = vld [vmem:[#allocation4 + $0x54] sm:$0xff]
    %v1322 = vld [vmem:[#allocation4 + $0x5c] sm:$0xf]
    %v1323 = vld [vmem:[#allocation4 + $0x60] sm:$0xff]
    %v1324 = vld [vmem:[#allocation4 + $0x68] sm:$0xf]
    %v1325 = vld [vmem:[#allocation4 + $0x6c] sm:$0xff]
    %v1326 = vld [vmem:[#allocation4 + $0x74] sm:$0xf]
    %v1327 = vld [vmem:[#allocation4 + $0x78] sm:$0xff]
    %v1328 = vld [vmem:[#allocation4 + $0x80] sm:$0xf]
    %v1329 = vld [vmem:[#allocation4 + $0x84] sm:$0xff]
    %v1330 = vld [vmem:[#allocation4 + $0x8c] sm:$0xf]
    %v1331 = vld [vmem:[#allocation4 + $0x90] sm:$0xff]
    %v1332 = vld [vmem:[#allocation4 + $0x98] sm:$0xf]
    %v1333 = vld [vmem:[#allocation4 + $0x9c] sm:$0xff]
    %v1334 = vld [vmem:[#allocation4 + $0xa4] sm:$0xf]
    %v1335 = vld [vmem:[#allocation4 + $0xa8] sm:$0xff]
    %v1336 = vld [vmem:[#allocation4 + $0xb0] sm:$0xf]
    %v1337 = vld [vmem:[#allocation4 + $0xb4] sm:$0xff]
    %v1338 = vld [vmem:[#allocation4 + $0xbc] sm:$0xf]
    %v1339 = vld [vmem:[#allocation4 + $0xc0] sm:$0xff]
    %v1340 = vld [vmem:[#allocation4 + $0xc8] sm:$0xf]
    %v1341 = vld [vmem:[#allocation4 + $0xcc] sm:$0xff]
    %v1342 = vld [vmem:[#allocation4 + $0xd4] sm:$0xf]
    %v1343 = vld [vmem:[#allocation4 + $0xd8] sm:$0xff]
    %v1344 = vld [vmem:[#allocation4 + $0xe0] sm:$0xf]
    %v1345 = vld [vmem:[#allocation4 + $0xe4] sm:$0xff]
    %v1346 = vld [vmem:[#allocation4 + $0xec] sm:$0xf]
    %v1347 = vld [vmem:[#allocation4 + $0xf0] sm:$0xff]
    %v1348 = vld [vmem:[#allocation4 + $0xf8] sm:$0xf]
    %v1349 = vld [vmem:[#allocation4 + $0xfc] sm:$0xff]
    %v1350 = vld [vmem:[#allocation4 + $0x104] sm:$0xf]
    %v1351 = vld [vmem:[#allocation4 + $0x108] sm:$0xff]
    %v1352 = vld [vmem:[#allocation4 + $0x110] sm:$0xf]
    %v1353 = vld [vmem:[#allocation4 + $0x114] sm:$0xff]
    %v1354 = vld [vmem:[#allocation4 + $0x11c] sm:$0xf]
    %v1355 = vld [vmem:[#allocation4 + $0x120] sm:$0xff]
    %v1356 = vld [vmem:[#allocation4 + $0x128] sm:$0xf]
    %v1357 = vld [vmem:[#allocation4 + $0x12c] sm:$0xff]
    %v1358 = vld [vmem:[#allocation4 + $0x134] sm:$0xf]
    %v1359 = vld [vmem:[#allocation4 + $0x138] sm:$0xff]
    %v1360 = vld [vmem:[#allocation4 + $0x140] sm:$0xf]
    %v1361 = vld [vmem:[#allocation4 + $0x144] sm:$0xff]
    %v1362 = vld [vmem:[#allocation4 + $0x14c] sm:$0xf]
    %v1363 = vld [vmem:[#allocation4 + $0x150] sm:$0xff]
    %v1364 = vld [vmem:[#allocation4 + $0x158] sm:$0xf]
    %v1365 = vld [vmem:[#allocation4 + $0x15c] sm:$0xff]
    %v1366 = vld [vmem:[#allocation4 + $0x164] sm:$0xf]
    %v1367 = vld [vmem:[#allocation4 + $0x168] sm:$0xff]
    %v1368 = vld [vmem:[#allocation4 + $0x170] sm:$0xf]
    %v1369 = vld [vmem:[#allocation4 + $0x174] sm:$0xff]
    %v1370 = vld [vmem:[#allocation4 + $0x17c] sm:$0xf]
    %v1371 = vld [vmem:[#allocation4 + $0x180] sm:$0xff]
    %v1372 = vld [vmem:[#allocation4 + $0x188] sm:$0xf]
    %v1373 = vld [vmem:[#allocation4 + $0x18c] sm:$0xff]
    %v1374 = vld [vmem:[#allocation4 + $0x194] sm:$0xf]
    %v1375 = vld [vmem:[#allocation4 + $0x198] sm:$0xff]
    %v1376 = vld [vmem:[#allocation4 + $0x1a0] sm:$0xf]
    %v1377 = vld [vmem:[#allocation4 + $0x1a4] sm:$0xff]
    %v1378 = vld [vmem:[#allocation4 + $0x1ac] sm:$0xf]
    %v1379 = vld [vmem:[#allocation4 + $0x1b0] sm:$0xff]
    %v1380 = vld [vmem:[#allocation4 + $0x1b8] sm:$0xf]
    %v1381 = vld [vmem:[#allocation4 + $0x1bc] sm:$0xff]
    %v1382 = vld [vmem:[#allocation4 + $0x1c4] sm:$0xf]
    %v1383 = vld [vmem:[#allocation4 + $0x1c8] sm:$0xff]
    %v1384 = vld [vmem:[#allocation4 + $0x1d0] sm:$0xf]
    %v1385 = vld [vmem:[#allocation4 + $0x1d4] sm:$0xff]
    %v1386 = vld [vmem:[#allocation4 + $0x1dc] sm:$0xf]
    %v1387 = vld [vmem:[#allocation4 + $0x1e0] sm:$0xff]
    %v1388 = vld [vmem:[#allocation4 + $0x1e8] sm:$0xf]
    %v1389 = vld [vmem:[#allocation4 + $0x1ec] sm:$0xff]
    %v1390 = vld [vmem:[#allocation4 + $0x1f4] sm:$0xf]
    %v1391 = vld [vmem:[#allocation4 + $0x1f8] sm:$0xff]
    %v1392 = vld [vmem:[#allocation4 + $0x200] sm:$0xf]
    %v1393 = vld [vmem:[#allocation4 + $0x204] sm:$0xff]
    %v1394 = vld [vmem:[#allocation4 + $0x20c] sm:$0xf]
    %v1395 = vld [vmem:[#allocation4 + $0x210] sm:$0xff]
    %v1396 = vld [vmem:[#allocation4 + $0x218] sm:$0xf]
    %v1397 = vld [vmem:[#allocation4 + $0x21c] sm:$0xff]
    %v1398 = vld [vmem:[#allocation4 + $0x224] sm:$0xf]
    %v1399 = vld [vmem:[#allocation4 + $0x228] sm:$0xff]
    %v1400 = vld [vmem:[#allocation4 + $0x230] sm:$0xf]
    %v1401 = vld [vmem:[#allocation4 + $0x234] sm:$0xff]
    %v1402 = vld [vmem:[#allocation4 + $0x23c] sm:$0xf]
    %v1403 = vld [vmem:[%s6] sm:$0x7]
    %v1405 = vlaneseq
    %v1406 = vshrl.u32 %v1405, 7
    %v1407 = vsub.s32 0, %v1406
    %v1408 = vrot.slane %v1403, %v1407
    %v1409 = vlaneseq
    %v1410 = vshrl.u32 %v1409, 7
    %v1411 = vsub.s32 1, %v1410
    %v1412 = vrot.slane %v1403, %v1411
    %v1413 = vlaneseq
    %v1414 = vshrl.u32 %v1413, 7
    %v1415 = vsub.s32 2, %v1414
    %v1416 = vrot.slane %v1403, %v1415
    %v1516 = vunpack.c.l.b16 %v1307
    %v1517 = vunpack.c.h.b16 %v1307
    %v1518 = vunpack.c.l.b16 %v1308
    %v1519 = vunpack.c.l.b16 %v1309
    %v1520 = vunpack.c.h.b16 %v1309
    %v1521 = vunpack.c.l.b16 %v1310
    %v1522 = vunpack.c.l.b16 %v1311
    %v1523 = vunpack.c.h.b16 %v1311
    %v1524 = vunpack.c.l.b16 %v1312
    %v1525 = vunpack.c.l.b16 %v1313
    %v1526 = vunpack.c.h.b16 %v1313
    %v1527 = vunpack.c.l.b16 %v1314
    %v1528 = vunpack.c.l.b16 %v1315
    %v1529 = vunpack.c.h.b16 %v1315
    %v1530 = vunpack.c.l.b16 %v1316
    %v1531 = vunpack.c.l.b16 %v1317
    %v1532 = vunpack.c.h.b16 %v1317
    %v1533 = vunpack.c.l.b16 %v1318
    %v1534 = vunpack.c.l.b16 %v1319
    %v1535 = vunpack.c.h.b16 %v1319
    %v1536 = vunpack.c.l.b16 %v1320
    %v1537 = vunpack.c.l.b16 %v1321
    %v1538 = vunpack.c.h.b16 %v1321
    %v1539 = vunpack.c.l.b16 %v1322
    %v1540 = vunpack.c.l.b16 %v1323
    %v1541 = vunpack.c.h.b16 %v1323
    %v1542 = vunpack.c.l.b16 %v1324
    %v1543 = vunpack.c.l.b16 %v1325
    %v1544 = vunpack.c.h.b16 %v1325
    %v1545 = vunpack.c.l.b16 %v1326
    %v1546 = vunpack.c.l.b16 %v1327
    %v1547 = vunpack.c.h.b16 %v1327
    %v1548 = vunpack.c.l.b16 %v1328
    %v1549 = vunpack.c.l.b16 %v1329
    %v1550 = vunpack.c.h.b16 %v1329
    %v1551 = vunpack.c.l.b16 %v1330
    %v1552 = vunpack.c.l.b16 %v1331
    %v1553 = vunpack.c.h.b16 %v1331
    %v1554 = vunpack.c.l.b16 %v1332
    %v1555 = vunpack.c.l.b16 %v1333
    %v1556 = vunpack.c.h.b16 %v1333
    %v1557 = vunpack.c.l.b16 %v1334
    %v1558 = vunpack.c.l.b16 %v1335
    %v1559 = vunpack.c.h.b16 %v1335
    %v1560 = vunpack.c.l.b16 %v1336
    %v1561 = vunpack.c.l.b16 %v1337
    %v1562 = vunpack.c.h.b16 %v1337
    %v1563 = vunpack.c.l.b16 %v1338
    %v1564 = vunpack.c.l.b16 %v1339
    %v1565 = vunpack.c.h.b16 %v1339
    %v1566 = vunpack.c.l.b16 %v1340
    %v1567 = vunpack.c.l.b16 %v1341
    %v1568 = vunpack.c.h.b16 %v1341
    %v1569 = vunpack.c.l.b16 %v1342
    %v1570 = vunpack.c.l.b16 %v1343
    %v1571 = vunpack.c.h.b16 %v1343
    %v1572 = vunpack.c.l.b16 %v1344
    %v1573 = vunpack.c.l.b16 %v1345
    %v1574 = vunpack.c.h.b16 %v1345
    %v1575 = vunpack.c.l.b16 %v1346
    %v1576 = vunpack.c.l.b16 %v1347
    %v1577 = vunpack.c.h.b16 %v1347
    %v1578 = vunpack.c.l.b16 %v1348
    %v1579 = vunpack.c.l.b16 %v1349
    %v1580 = vunpack.c.h.b16 %v1349
    %v1581 = vunpack.c.l.b16 %v1350
    %v1582 = vunpack.c.l.b16 %v1351
    %v1583 = vunpack.c.h.b16 %v1351
    %v1584 = vunpack.c.l.b16 %v1352
    %v1585 = vunpack.c.l.b16 %v1353
    %v1586 = vunpack.c.h.b16 %v1353
    %v1587 = vunpack.c.l.b16 %v1354
    %v1588 = vunpack.c.l.b16 %v1355
    %v1589 = vunpack.c.h.b16 %v1355
    %v1590 = vunpack.c.l.b16 %v1356
    %v1591 = vunpack.c.l.b16 %v1357
    %v1592 = vunpack.c.h.b16 %v1357
    %v1593 = vunpack.c.l.b16 %v1358
    %v1594 = vunpack.c.l.b16 %v1359
    %v1595 = vunpack.c.h.b16 %v1359
    %v1596 = vunpack.c.l.b16 %v1360
    %v1597 = vunpack.c.l.b16 %v1361
    %v1598 = vunpack.c.h.b16 %v1361
    %v1599 = vunpack.c.l.b16 %v1362
    %v1600 = vunpack.c.l.b16 %v1363
    %v1601 = vunpack.c.h.b16 %v1363
    %v1602 = vunpack.c.l.b16 %v1364
    %v1603 = vunpack.c.l.b16 %v1365
    %v1604 = vunpack.c.h.b16 %v1365
    %v1605 = vunpack.c.l.b16 %v1366
    %v1606 = vunpack.c.l.b16 %v1367
    %v1607 = vunpack.c.h.b16 %v1367
    %v1608 = vunpack.c.l.b16 %v1368
    %v1609 = vunpack.c.l.b16 %v1369
    %v1610 = vunpack.c.h.b16 %v1369
    %v1611 = vunpack.c.l.b16 %v1370
    %v1612 = vunpack.c.l.b16 %v1371
    %v1613 = vunpack.c.h.b16 %v1371
    %v1614 = vunpack.c.l.b16 %v1372
    %v1615 = vunpack.c.l.b16 %v1373
    %v1616 = vunpack.c.h.b16 %v1373
    %v1617 = vunpack.c.l.b16 %v1374
    %v1618 = vunpack.c.l.b16 %v1375
    %v1619 = vunpack.c.h.b16 %v1375
    %v1620 = vunpack.c.l.b16 %v1376
    %v1621 = vunpack.c.l.b16 %v1377
    %v1622 = vunpack.c.h.b16 %v1377
    %v1623 = vunpack.c.l.b16 %v1378
    %v1624 = vunpack.c.l.b16 %v1379
    %v1625 = vunpack.c.h.b16 %v1379
    %v1626 = vunpack.c.l.b16 %v1380
    %v1627 = vunpack.c.l.b16 %v1381
    %v1628 = vunpack.c.h.b16 %v1381
    %v1629 = vunpack.c.l.b16 %v1382
    %v1630 = vunpack.c.l.b16 %v1383
    %v1631 = vunpack.c.h.b16 %v1383
    %v1632 = vunpack.c.l.b16 %v1384
    %v1633 = vunpack.c.l.b16 %v1385
    %v1634 = vunpack.c.h.b16 %v1385
    %v1635 = vunpack.c.l.b16 %v1386
    %v1636 = vunpack.c.l.b16 %v1387
    %v1637 = vunpack.c.h.b16 %v1387
    %v1638 = vunpack.c.l.b16 %v1388
    %v1639 = vunpack.c.l.b16 %v1389
    %v1640 = vunpack.c.h.b16 %v1389
    %v1641 = vunpack.c.l.b16 %v1390
    %v1642 = vunpack.c.l.b16 %v1391
    %v1643 = vunpack.c.h.b16 %v1391
    %v1644 = vunpack.c.l.b16 %v1392
    %v1645 = vunpack.c.l.b16 %v1393
    %v1646 = vunpack.c.h.b16 %v1393
    %v1647 = vunpack.c.l.b16 %v1394
    %v1648 = vunpack.c.l.b16 %v1395
    %v1649 = vunpack.c.h.b16 %v1395
    %v1650 = vunpack.c.l.b16 %v1396
    %v1651 = vunpack.c.l.b16 %v1397
    %v1652 = vunpack.c.h.b16 %v1397
    %v1653 = vunpack.c.l.b16 %v1398
    %v1654 = vunpack.c.l.b16 %v1399
    %v1655 = vunpack.c.h.b16 %v1399
    %v1656 = vunpack.c.l.b16 %v1400
    %v1657 = vunpack.c.l.b16 %v1401
    %v1658 = vunpack.c.h.b16 %v1401
    %v1659 = vunpack.c.l.b16 %v1402
    %v1660 = vpack.c.b16 %v1519, %v1516
    %v1661 = vpack.c.b16 %v1520, %v1517
    %v1662 = vpack.c.b16 %v1521, %v1518
    %v1663 = vpack.c.b16 %v1525, %v1522
    %v1664 = vpack.c.b16 %v1526, %v1523
    %v1665 = vpack.c.b16 %v1527, %v1524
    %v1666 = vpack.c.b16 %v1531, %v1528
    %v1667 = vpack.c.b16 %v1532, %v1529
    %v1668 = vpack.c.b16 %v1533, %v1530
    %v1669 = vpack.c.b16 %v1537, %v1534
    %v1670 = vpack.c.b16 %v1538, %v1535
    %v1671 = vpack.c.b16 %v1539, %v1536
    %v1672 = vpack.c.b16 %v1543, %v1540
    %v1673 = vpack.c.b16 %v1544, %v1541
    %v1674 = vpack.c.b16 %v1545, %v1542
    %v1675 = vpack.c.b16 %v1549, %v1546
    %v1676 = vpack.c.b16 %v1550, %v1547
    %v1677 = vpack.c.b16 %v1551, %v1548
    %v1678 = vpack.c.b16 %v1555, %v1552
    %v1679 = vpack.c.b16 %v1556, %v1553
    %v1680 = vpack.c.b16 %v1557, %v1554
    %v1681 = vpack.c.b16 %v1561, %v1558
    %v1682 = vpack.c.b16 %v1562, %v1559
    %v1683 = vpack.c.b16 %v1563, %v1560
    %v1684 = vpack.c.b16 %v1567, %v1564
    %v1685 = vpack.c.b16 %v1568, %v1565
    %v1686 = vpack.c.b16 %v1569, %v1566
    %v1687 = vpack.c.b16 %v1573, %v1570
    %v1688 = vpack.c.b16 %v1574, %v1571
    %v1689 = vpack.c.b16 %v1575, %v1572
    %v1690 = vpack.c.b16 %v1579, %v1576
    %v1691 = vpack.c.b16 %v1580, %v1577
    %v1692 = vpack.c.b16 %v1581, %v1578
    %v1693 = vpack.c.b16 %v1585, %v1582
    %v1694 = vpack.c.b16 %v1586, %v1583
    %v1695 = vpack.c.b16 %v1587, %v1584
    %v1696 = vpack.c.b16 %v1591, %v1588
    %v1697 = vpack.c.b16 %v1592, %v1589
    %v1698 = vpack.c.b16 %v1593, %v1590
    %v1699 = vpack.c.b16 %v1597, %v1594
    %v1700 = vpack.c.b16 %v1598, %v1595
    %v1701 = vpack.c.b16 %v1599, %v1596
    %v1702 = vpack.c.b16 %v1603, %v1600
    %v1703 = vpack.c.b16 %v1604, %v1601
    %v1704 = vpack.c.b16 %v1605, %v1602
    %v1705 = vpack.c.b16 %v1609, %v1606
    %v1706 = vpack.c.b16 %v1610, %v1607
    %v1707 = vpack.c.b16 %v1611, %v1608
    %v1708 = vpack.c.b16 %v1615, %v1612
    %v1709 = vpack.c.b16 %v1616, %v1613
    %v1710 = vpack.c.b16 %v1617, %v1614
    %v1711 = vpack.c.b16 %v1621, %v1618
    %v1712 = vpack.c.b16 %v1622, %v1619
    %v1713 = vpack.c.b16 %v1623, %v1620
    %v1714 = vpack.c.b16 %v1627, %v1624
    %v1715 = vpack.c.b16 %v1628, %v1625
    %v1716 = vpack.c.b16 %v1629, %v1626
    %v1717 = vpack.c.b16 %v1633, %v1630
    %v1718 = vpack.c.b16 %v1634, %v1631
    %v1719 = vpack.c.b16 %v1635, %v1632
    %v1720 = vpack.c.b16 %v1639, %v1636
    %v1721 = vpack.c.b16 %v1640, %v1637
    %v1722 = vpack.c.b16 %v1641, %v1638
    %v1723 = vpack.c.b16 %v1645, %v1642
    %v1724 = vpack.c.b16 %v1646, %v1643
    %v1725 = vpack.c.b16 %v1647, %v1644
    %v1726 = vpack.c.b16 %v1651, %v1648
    %v1727 = vpack.c.b16 %v1652, %v1649
    %v1728 = vpack.c.b16 %v1653, %v1650
    %v1729 = vpack.c.b16 %v1657, %v1654
    %v1730 = vpack.c.b16 %v1658, %v1655
    %v1731 = vpack.c.b16 %v1659, %v1656
    %1804 = vmatprep.subr.bf16.mxu0 %v1682
    %1805 = vmatpush1.bf16.msra.mxu0 %v1681
    %1806 = vmatprep.subr.bf16.mxu0 %v1679
    %1807 = vmatpush1.bf16.msra.mxu0 %v1678
    %1808 = vmatprep.subr.bf16.mxu0 %v1676
    %1809 = vmatpush1.bf16.msra.mxu0 %v1675
    %1810 = vmatprep.subr.bf16.mxu0 %v1673
    %1811 = vmatpush1.bf16.msra.mxu0 %v1672
    %1812 = vmatprep.subr.bf16.mxu0 %v1670
    %1813 = vmatpush1.bf16.msra.mxu0 %v1669
    %1814 = vmatprep.subr.bf16.mxu0 %v1667
    %1815 = vmatpush1.bf16.msra.mxu0 %v1666
    %1816 = vmatprep.subr.bf16.mxu0 %v1664
    %1817 = vmatpush1.bf16.msra.mxu0 %v1663
    %1818 = vmatprep.subr.bf16.mxu0 %v1661
    %1819 = vmatpush1.bf16.msra.mxu0 %v1660
    %1820 = vmatprep.subr.bf16.mxu0 %v1706
    %1821 = vmatpush2.bf16.msra.mxu0 %v1705
    %1822 = vmatprep.subr.bf16.mxu0 %v1703
    %1823 = vmatpush2.bf16.msra.mxu0 %v1702
    %1824 = vmatprep.subr.bf16.mxu0 %v1700
    %1825 = vmatpush2.bf16.msra.mxu0 %v1699
    %1826 = vmatprep.subr.bf16.mxu0 %v1697
    %1827 = vmatpush2.bf16.msra.mxu0 %v1696
    %1828 = vmatprep.subr.bf16.mxu0 %v1694
    %1829 = vmatpush2.bf16.msra.mxu0 %v1693
    %1830 = vmatprep.subr.bf16.mxu0 %v1691
    %1831 = vmatpush2.bf16.msra.mxu0 %v1690
    %1832 = vmatprep.subr.bf16.mxu0 %v1688
    %1833 = vmatpush2.bf16.msra.mxu0 %v1687
    %1834 = vmatprep.subr.bf16.mxu0 %v1685
    %1835 = vmatpush2.bf16.msra.mxu0 %v1684
    %1836 = vmatprep.mubr.bf16.mxu0 %v1284
    %1837 = vmatmul.mubr.bf16.gmra.mxu0 %v1283
    %v1838 = vpop.f32.mrf.mxu0
    %v1839 = vadd.f32 %v1408, %v1838
    %v1840 = vpop.f32.mrf.mxu0
    %v1841 = vadd.f32 %v1412, %v1840
    %v1842 = vpop.f32.mrf.mxu0
    %v1843 = vadd.f32 %v1408, %v1842
    %v1844 = vpop.f32.mrf.mxu0
    %v1845 = vadd.f32 %v1412, %v1844
    %1846 = vmatprep.mubr.bf16.mxu0 %v1287
    %1847 = vmatmul.mubr.bf16.gmra.mxu0 %v1286
    %v1848 = vpop.f32.mrf.mxu0
    %v1849 = vadd.f32 %v1408, %v1848
    %v1850 = vpop.f32.mrf.mxu0
    %v1851 = vadd.f32 %v1412, %v1850
    %v1852 = vpop.f32.mrf.mxu0
    %v1853 = vadd.f32 %v1408, %v1852
    %v1854 = vpop.f32.mrf.mxu0
    %v1855 = vadd.f32 %v1412, %v1854
    %1856 = vmatprep.mubr.bf16.mxu0 %v1290
    %1857 = vmatmul.mubr.bf16.gmra.mxu0 %v1289
    %v1858 = vpop.f32.mrf.mxu0
    %v1859 = vadd.f32 %v1408, %v1858
    %v1860 = vpop.f32.mrf.mxu0
    %v1861 = vadd.f32 %v1412, %v1860
    %v1862 = vpop.f32.mrf.mxu0
    %v1863 = vadd.f32 %v1408, %v1862
    %v1864 = vpop.f32.mrf.mxu0
    %v1865 = vadd.f32 %v1412, %v1864
    %1866 = vmatprep.mubr.bf16.mxu0 %v1293
    %1867 = vmatmul.mubr.bf16.gmra.mxu0 %v1292
    %v1868 = vpop.f32.mrf.mxu0
    %v1869 = vadd.f32 %v1408, %v1868
    %v1870 = vpop.f32.mrf.mxu0
    %v1871 = vadd.f32 %v1412, %v1870
    %v1872 = vpop.f32.mrf.mxu0
    %v1873 = vadd.f32 %v1408, %v1872
    %v1874 = vpop.f32.mrf.mxu0
    %v1875 = vadd.f32 %v1412, %v1874
    %1876 = vmatprep.mubr.bf16.mxu0 %v1296
    %1877 = vmatmul.mubr.bf16.gmra.mxu0 %v1295
    %v1878 = vpop.f32.mrf.mxu0
    %v1879 = vadd.f32 %v1408, %v1878
    %v1880 = vpop.f32.mrf.mxu0
    %v1881 = vadd.f32 %v1412, %v1880
    %v1882 = vpop.f32.mrf.mxu0
    %v1883 = vadd.f32 %v1408, %v1882
    %v1884 = vpop.f32.mrf.mxu0
    %v1885 = vadd.f32 %v1412, %v1884
    %1886 = vmatprep.mubr.bf16.mxu0 %v1299
    %1887 = vmatmul.mubr.bf16.gmra.mxu0 %v1298
    %v1888 = vpop.f32.mrf.mxu0
    %v1889 = vadd.f32 %v1408, %v1888
    %v1890 = vpop.f32.mrf.mxu0
    %v1891 = vadd.f32 %v1412, %v1890
    %v1892 = vpop.f32.mrf.mxu0
    %v1893 = vadd.f32 %v1408, %v1892
    %v1894 = vpop.f32.mrf.mxu0
    %v1895 = vadd.f32 %v1412, %v1894
    %1896 = vmatprep.mubr.bf16.mxu0 %v1302
    %1897 = vmatmul.mubr.bf16.gmra.mxu0 %v1301
    %v1898 = vpop.f32.mrf.mxu0
    %v1899 = vadd.f32 %v1408, %v1898
    %v1900 = vpop.f32.mrf.mxu0
    %v1901 = vadd.f32 %v1412, %v1900
    %v1902 = vpop.f32.mrf.mxu0
    %v1903 = vadd.f32 %v1408, %v1902
    %v1904 = vpop.f32.mrf.mxu0
    %v1905 = vadd.f32 %v1412, %v1904
    %1906 = vmatprep.mubr.bf16.mxu0 %v1305
    %1907 = vmatmul.mubr.bf16.gmra.mxu0 %v1304
    %v1908 = vpop.f32.mrf.mxu0
    %v1909 = vadd.f32 %v1408, %v1908
    %v1910 = vpop.f32.mrf.mxu0
    %v1911 = vadd.f32 %v1412, %v1910
    %v1912 = vpop.f32.mrf.mxu0
    %v1913 = vadd.f32 %v1408, %v1912
    %v1914 = vpop.f32.mrf.mxu0
    %v1915 = vadd.f32 %v1412, %v1914
    %1916 = vdwg.mxu0
    %1917 = vmatprep.subr.bf16.mxu0 %v1730
    %1918 = vmatpush1.bf16.msra.mxu0 %v1729
    %1919 = vmatprep.subr.bf16.mxu0 %v1727
    %1920 = vmatpush1.bf16.msra.mxu0 %v1726
    %1921 = vmatprep.subr.bf16.mxu0 %v1724
    %1922 = vmatpush1.bf16.msra.mxu0 %v1723
    %1923 = vmatprep.subr.bf16.mxu0 %v1721
    %1924 = vmatpush1.bf16.msra.mxu0 %v1720
    %1925 = vmatprep.subr.bf16.mxu0 %v1718
    %1926 = vmatpush1.bf16.msra.mxu0 %v1717
    %1927 = vmatprep.subr.bf16.mxu0 %v1715
    %1928 = vmatpush1.bf16.msra.mxu0 %v1714
    %1929 = vmatprep.subr.bf16.mxu0 %v1712
    %1930 = vmatpush1.bf16.msra.mxu0 %v1711
    %1931 = vmatprep.subr.bf16.mxu0 %v1709
    %1932 = vmatpush1.bf16.msra.mxu0 %v1708
    %1933 = vmatprep.subr.bf16.mxu0 0
    %1934 = vmatpush2.bf16.msra.mxu0 0
    %1935 = vmatprep.subr.bf16.mxu0 0
    %1936 = vmatpush2.bf16.msra.mxu0 0
    %1937 = vmatprep.subr.bf16.mxu0 0
    %1938 = vmatpush2.bf16.msra.mxu0 0
    %1939 = vmatprep.subr.bf16.mxu0 0
    %1940 = vmatpush2.bf16.msra.mxu0 0
    %1941 = vmatprep.subr.bf16.mxu0 0
    %1942 = vmatpush2.bf16.msra.mxu0 0
    %1943 = vmatprep.subr.bf16.mxu0 0
    %1944 = vmatpush2.bf16.msra.mxu0 0
    %1945 = vmatprep.subr.bf16.mxu0 0
    %1946 = vmatpush2.bf16.msra.mxu0 0
    %1947 = vmatprep.subr.bf16.mxu0 0
    %1948 = vmatpush2.bf16.msra.mxu0 0
    %1949 = vmatprep.mubr.bf16.mxu0 0
    %1950 = vmatmul.mubr.bf16.gmra.mxu0 %v1285
    %v1951 = vpop.f32.mrf.mxu0
    %v1952 = vadd.f32 %v1839, %v1951
    %v1953 = vpop.f32.mrf.mxu0
    %v1954 = vadd.f32 %v1841, %v1953
    %v1955 = vpop.f32.mrf.mxu0
    %v1956 = vadd.f32 %v1843, %v1955
    %v1957 = vpop.f32.mrf.mxu0
    %v1958 = vadd.f32 %v1845, %v1957
    %1959 = vmatprep.mubr.bf16.mxu0 0
    %1960 = vmatmul.mubr.bf16.gmra.mxu0 %v1288
    %v1961 = vpop.f32.mrf.mxu0
    %v1962 = vadd.f32 %v1849, %v1961
    %v1963 = vpop.f32.mrf.mxu0
    %v1964 = vadd.f32 %v1851, %v1963
    %v1965 = vpop.f32.mrf.mxu0
    %v1966 = vadd.f32 %v1853, %v1965
    %v1967 = vpop.f32.mrf.mxu0
    %v1968 = vadd.f32 %v1855, %v1967
    %1969 = vmatprep.mubr.bf16.mxu0 0
    %1970 = vmatmul.mubr.bf16.gmra.mxu0 %v1291
    %v1971 = vpop.f32.mrf.mxu0
    %v1972 = vadd.f32 %v1859, %v1971
    %v1973 = vpop.f32.mrf.mxu0
    %v1974 = vadd.f32 %v1861, %v1973
    %v1975 = vpop.f32.mrf.mxu0
    %v1976 = vadd.f32 %v1863, %v1975
    %v1977 = vpop.f32.mrf.mxu0
    %v1978 = vadd.f32 %v1865, %v1977
    %1979 = vmatprep.mubr.bf16.mxu0 0
    %1980 = vmatmul.mubr.bf16.gmra.mxu0 %v1294
    %v1981 = vpop.f32.mrf.mxu0
    %v1982 = vadd.f32 %v1869, %v1981
    %v1983 = vpop.f32.mrf.mxu0
    %v1984 = vadd.f32 %v1871, %v1983
    %v1985 = vpop.f32.mrf.mxu0
    %v1986 = vadd.f32 %v1873, %v1985
    %v1987 = vpop.f32.mrf.mxu0
    %v1988 = vadd.f32 %v1875, %v1987
    %1989 = vmatprep.mubr.bf16.mxu0 0
    %1990 = vmatmul.mubr.bf16.gmra.mxu0 %v1297
    %v1991 = vpop.f32.mrf.mxu0
    %v1992 = vadd.f32 %v1879, %v1991
    %v1993 = vpop.f32.mrf.mxu0
    %v1994 = vadd.f32 %v1881, %v1993
    %v1995 = vpop.f32.mrf.mxu0
    %v1996 = vadd.f32 %v1883, %v1995
    %v1997 = vpop.f32.mrf.mxu0
    %v1998 = vadd.f32 %v1885, %v1997
    %1999 = vmatprep.mubr.bf16.mxu0 0
    %2000 = vmatmul.mubr.bf16.gmra.mxu0 %v1300
    %v2001 = vpop.f32.mrf.mxu0
    %v2002 = vadd.f32 %v1889, %v2001
    %v2003 = vpop.f32.mrf.mxu0
    %v2004 = vadd.f32 %v1891, %v2003
    %v2005 = vpop.f32.mrf.mxu0
    %v2006 = vadd.f32 %v1893, %v2005
    %v2007 = vpop.f32.mrf.mxu0
    %v2008 = vadd.f32 %v1895, %v2007
    %2009 = vmatprep.mubr.bf16.mxu0 0
    %2010 = vmatmul.mubr.bf16.gmra.mxu0 %v1303
    %v2011 = vpop.f32.mrf.mxu0
    %v2012 = vadd.f32 %v1899, %v2011
    %v2013 = vpop.f32.mrf.mxu0
    %v2014 = vadd.f32 %v1901, %v2013
    %v2015 = vpop.f32.mrf.mxu0
    %v2016 = vadd.f32 %v1903, %v2015
    %v2017 = vpop.f32.mrf.mxu0
    %v2018 = vadd.f32 %v1905, %v2017
    %2019 = vmatprep.mubr.bf16.mxu0 0
    %2020 = vmatmul.mubr.bf16.gmra.mxu0 %v1306
    %v2021 = vpop.f32.mrf.mxu0
    %v2022 = vadd.f32 %v1909, %v2021
    %v2023 = vpop.f32.mrf.mxu0
    %v2024 = vadd.f32 %v1911, %v2023
    %v2025 = vpop.f32.mrf.mxu0
    %v2026 = vadd.f32 %v1913, %v2025
    %v2027 = vpop.f32.mrf.mxu0
    %v2028 = vadd.f32 %v1915, %v2027
    %2029 = vdwg.mxu0
    %2030 = vmatprep.subr.bf16.mxu0 0
    %2031 = vmatpush1.bf16.msra.mxu0 %v1683
    %2032 = vmatprep.subr.bf16.mxu0 0
    %2033 = vmatpush1.bf16.msra.mxu0 %v1680
    %2034 = vmatprep.subr.bf16.mxu0 0
    %2035 = vmatpush1.bf16.msra.mxu0 %v1677
    %2036 = vmatprep.subr.bf16.mxu0 0
    %2037 = vmatpush1.bf16.msra.mxu0 %v1674
    %2038 = vmatprep.subr.bf16.mxu0 0
    %2039 = vmatpush1.bf16.msra.mxu0 %v1671
    %2040 = vmatprep.subr.bf16.mxu0 0
    %2041 = vmatpush1.bf16.msra.mxu0 %v1668
    %2042 = vmatprep.subr.bf16.mxu0 0
    %2043 = vmatpush1.bf16.msra.mxu0 %v1665
    %2044 = vmatprep.subr.bf16.mxu0 0
    %2045 = vmatpush1.bf16.msra.mxu0 %v1662
    %2046 = vmatprep.subr.bf16.mxu0 0
    %2047 = vmatpush2.bf16.msra.mxu0 %v1707
    %2048 = vmatprep.subr.bf16.mxu0 0
    %2049 = vmatpush2.bf16.msra.mxu0 %v1704
    %2050 = vmatprep.subr.bf16.mxu0 0
    %2051 = vmatpush2.bf16.msra.mxu0 %v1701
    %2052 = vmatprep.subr.bf16.mxu0 0
    %2053 = vmatpush2.bf16.msra.mxu0 %v1698
    %2054 = vmatprep.subr.bf16.mxu0 0
    %2055 = vmatpush2.bf16.msra.mxu0 %v1695
    %2056 = vmatprep.subr.bf16.mxu0 0
    %2057 = vmatpush2.bf16.msra.mxu0 %v1692
    %2058 = vmatprep.subr.bf16.mxu0 0
    %2059 = vmatpush2.bf16.msra.mxu0 %v1689
    %2060 = vmatprep.subr.bf16.mxu0 0
    %2061 = vmatpush2.bf16.msra.mxu0 %v1686
    %2062 = vmatprep.mubr.bf16.mxu0 %v1284
    %2063 = vmatmul.mubr.bf16.gmra.mxu0 %v1283
    %v2064 = vpop.f32.mrf.mxu0
    %v2065 = vadd.f32 %v1416, %v2064
    %v2066 = vpop.f32.mrf.mxu0
    %v2067 = vpop.f32.mrf.mxu0
    %v2068 = vadd.f32 %v1416, %v2067
    %v2069 = vpop.f32.mrf.mxu0
    %2070 = vmatprep.mubr.bf16.mxu0 %v1287
    %2071 = vmatmul.mubr.bf16.gmra.mxu0 %v1286
    %v2072 = vpop.f32.mrf.mxu0
    %v2073 = vadd.f32 %v1416, %v2072
    %v2074 = vpop.f32.mrf.mxu0
    %v2075 = vpop.f32.mrf.mxu0
    %v2076 = vadd.f32 %v1416, %v2075
    %v2077 = vpop.f32.mrf.mxu0
    %2078 = vmatprep.mubr.bf16.mxu0 %v1290
    %2079 = vmatmul.mubr.bf16.gmra.mxu0 %v1289
    %v2080 = vpop.f32.mrf.mxu0
    %v2081 = vadd.f32 %v1416, %v2080
    %v2082 = vpop.f32.mrf.mxu0
    %v2083 = vpop.f32.mrf.mxu0
    %v2084 = vadd.f32 %v1416, %v2083
    %v2085 = vpop.f32.mrf.mxu0
    %2086 = vmatprep.mubr.bf16.mxu0 %v1293
    %2087 = vmatmul.mubr.bf16.gmra.mxu0 %v1292
    %v2088 = vpop.f32.mrf.mxu0
    %v2089 = vadd.f32 %v1416, %v2088
    %v2090 = vpop.f32.mrf.mxu0
    %v2091 = vpop.f32.mrf.mxu0
    %v2092 = vadd.f32 %v1416, %v2091
    %v2093 = vpop.f32.mrf.mxu0
    %2094 = vmatprep.mubr.bf16.mxu0 %v1296
    %2095 = vmatmul.mubr.bf16.gmra.mxu0 %v1295
    %v2096 = vpop.f32.mrf.mxu0
    %v2097 = vadd.f32 %v1416, %v2096
    %v2098 = vpop.f32.mrf.mxu0
    %v2099 = vpop.f32.mrf.mxu0
    %v2100 = vadd.f32 %v1416, %v2099
    %v2101 = vpop.f32.mrf.mxu0
    %2102 = vmatprep.mubr.bf16.mxu0 %v1299
    %2103 = vmatmul.mubr.bf16.gmra.mxu0 %v1298
    %v2104 = vpop.f32.mrf.mxu0
    %v2105 = vadd.f32 %v1416, %v2104
    %v2106 = vpop.f32.mrf.mxu0
    %v2107 = vpop.f32.mrf.mxu0
    %v2108 = vadd.f32 %v1416, %v2107
    %v2109 = vpop.f32.mrf.mxu0
    %2110 = vmatprep.mubr.bf16.mxu0 %v1302
    %2111 = vmatmul.mubr.bf16.gmra.mxu0 %v1301
    %v2112 = vpop.f32.mrf.mxu0
    %v2113 = vadd.f32 %v1416, %v2112
    %v2114 = vpop.f32.mrf.mxu0
    %v2115 = vpop.f32.mrf.mxu0
    %v2116 = vadd.f32 %v1416, %v2115
    %v2117 = vpop.f32.mrf.mxu0
    %2118 = vmatprep.mubr.bf16.mxu0 %v1305
    %2119 = vmatmul.mubr.bf16.gmra.mxu0 %v1304
    %v2120 = vpop.f32.mrf.mxu0
    %v2121 = vadd.f32 %v1416, %v2120
    %v2122 = vpop.f32.mrf.mxu0
    %v2123 = vpop.f32.mrf.mxu0
    %v2124 = vadd.f32 %v1416, %v2123
    %v2125 = vpop.f32.mrf.mxu0
    %2126 = vdwg.mxu0
    %2127 = vmatprep.subr.bf16.mxu0 0
    %2128 = vmatpush1.bf16.msra.mxu0 %v1731
    %2129 = vmatprep.subr.bf16.mxu0 0
    %2130 = vmatpush1.bf16.msra.mxu0 %v1728
    %2131 = vmatprep.subr.bf16.mxu0 0
    %2132 = vmatpush1.bf16.msra.mxu0 %v1725
    %2133 = vmatprep.subr.bf16.mxu0 0
    %2134 = vmatpush1.bf16.msra.mxu0 %v1722
    %2135 = vmatprep.subr.bf16.mxu0 0
    %2136 = vmatpush1.bf16.msra.mxu0 %v1719
    %2137 = vmatprep.subr.bf16.mxu0 0
    %2138 = vmatpush1.bf16.msra.mxu0 %v1716
    %2139 = vmatprep.subr.bf16.mxu0 0
    %2140 = vmatpush1.bf16.msra.mxu0 %v1713
    %2141 = vmatprep.subr.bf16.mxu0 0
    %2142 = vmatpush1.bf16.msra.mxu0 %v1710
    %2143 = vmatprep.subr.bf16.mxu0 0
    %2144 = vmatpush2.bf16.msra.mxu0 0
    %2145 = vmatprep.subr.bf16.mxu0 0
    %2146 = vmatpush2.bf16.msra.mxu0 0
    %2147 = vmatprep.subr.bf16.mxu0 0
    %2148 = vmatpush2.bf16.msra.mxu0 0
    %2149 = vmatprep.subr.bf16.mxu0 0
    %2150 = vmatpush2.bf16.msra.mxu0 0
    %2151 = vmatprep.subr.bf16.mxu0 0
    %2152 = vmatpush2.bf16.msra.mxu0 0
    %2153 = vmatprep.subr.bf16.mxu0 0
    %2154 = vmatpush2.bf16.msra.mxu0 0
    %2155 = vmatprep.subr.bf16.mxu0 0
    %2156 = vmatpush2.bf16.msra.mxu0 0
    %2157 = vmatprep.subr.bf16.mxu0 0
    %2158 = vmatpush2.bf16.msra.mxu0 0
    %2159 = vmatprep.mubr.bf16.mxu0 0
    %2160 = vmatmul.mubr.bf16.gmra.mxu0 %v1285
    %v2161 = vpop.f32.mrf.mxu0
    %v2162 = vadd.f32 %v2065, %v2161
    %v2163 = vpop.f32.mrf.mxu0
    %v2164 = vpop.f32.mrf.mxu0
    %v2165 = vadd.f32 %v2068, %v2164
    %v2166 = vpop.f32.mrf.mxu0
    %2167 = vmatprep.mubr.bf16.mxu0 0
    %2168 = vmatmul.mubr.bf16.gmra.mxu0 %v1288
    %v2169 = vpop.f32.mrf.mxu0
    %v2170 = vadd.f32 %v2073, %v2169
    %v2171 = vpop.f32.mrf.mxu0
    %v2172 = vpop.f32.mrf.mxu0
    %v2173 = vadd.f32 %v2076, %v2172
    %v2174 = vpop.f32.mrf.mxu0
    %2175 = vmatprep.mubr.bf16.mxu0 0
    %2176 = vmatmul.mubr.bf16.gmra.mxu0 %v1291
    %v2177 = vpop.f32.mrf.mxu0
    %v2178 = vadd.f32 %v2081, %v2177
    %v2179 = vpop.f32.mrf.mxu0
    %v2180 = vpop.f32.mrf.mxu0
    %v2181 = vadd.f32 %v2084, %v2180
    %v2182 = vpop.f32.mrf.mxu0
    %2183 = vmatprep.mubr.bf16.mxu0 0
    %2184 = vmatmul.mubr.bf16.gmra.mxu0 %v1294
    %v2185 = vpop.f32.mrf.mxu0
    %v2186 = vadd.f32 %v2089, %v2185
    %v2187 = vpop.f32.mrf.mxu0
    %v2188 = vpop.f32.mrf.mxu0
    %v2189 = vadd.f32 %v2092, %v2188
    %v2190 = vpop.f32.mrf.mxu0
    %2191 = vmatprep.mubr.bf16.mxu0 0
    %2192 = vmatmul.mubr.bf16.gmra.mxu0 %v1297
    %v2193 = vpop.f32.mrf.mxu0
    %v2194 = vadd.f32 %v2097, %v2193
    %v2195 = vpop.f32.mrf.mxu0
    %v2196 = vpop.f32.mrf.mxu0
    %v2197 = vadd.f32 %v2100, %v2196
    %v2198 = vpop.f32.mrf.mxu0
    %2199 = vmatprep.mubr.bf16.mxu0 0
    %2200 = vmatmul.mubr.bf16.gmra.mxu0 %v1300
    %v2201 = vpop.f32.mrf.mxu0
    %v2202 = vadd.f32 %v2105, %v2201
    %v2203 = vpop.f32.mrf.mxu0
    %v2204 = vpop.f32.mrf.mxu0
    %v2205 = vadd.f32 %v2108, %v2204
    %v2206 = vpop.f32.mrf.mxu0
    %2207 = vmatprep.mubr.bf16.mxu0 0
    %2208 = vmatmul.mubr.bf16.gmra.mxu0 %v1303
    %v2209 = vpop.f32.mrf.mxu0
    %v2210 = vadd.f32 %v2113, %v2209
    %v2211 = vpop.f32.mrf.mxu0
    %v2212 = vpop.f32.mrf.mxu0
    %v2213 = vadd.f32 %v2116, %v2212
    %v2214 = vpop.f32.mrf.mxu0
    %2215 = vmatprep.mubr.bf16.mxu0 0
    %2216 = vmatmul.mubr.bf16.gmra.mxu0 %v1306
    %v2217 = vpop.f32.mrf.mxu0
    %v2218 = vadd.f32 %v2121, %v2217
    %v2219 = vpop.f32.mrf.mxu0
    %v2220 = vpop.f32.mrf.mxu0
    %v2221 = vadd.f32 %v2124, %v2220
    %v2222 = vpop.f32.mrf.mxu0
    %2223 = vdwg.mxu0
    %v2224 = vmax.f32 %v1952, 0.0
    %v2225 = vmax.f32 %v1954, 0.0
    %v2226 = vmax.f32 %v2162, 0.0
    %v2227 = vmax.f32 %v1956, 0.0
    %v2228 = vmax.f32 %v1958, 0.0
    %v2229 = vmax.f32 %v2165, 0.0
    %v2230 = vmax.f32 %v1962, 0.0
    %v2231 = vmax.f32 %v1964, 0.0
    %v2232 = vmax.f32 %v2170, 0.0
    %v2233 = vmax.f32 %v1966, 0.0
    %v2234 = vmax.f32 %v1968, 0.0
    %v2235 = vmax.f32 %v2173, 0.0
    %v2236 = vmax.f32 %v1972, 0.0
    %v2237 = vmax.f32 %v1974, 0.0
    %v2238 = vmax.f32 %v2178, 0.0
    %v2239 = vmax.f32 %v1976, 0.0
    %v2240 = vmax.f32 %v1978, 0.0
    %v2241 = vmax.f32 %v2181, 0.0
    %v2242 = vmax.f32 %v1982, 0.0
    %v2243 = vmax.f32 %v1984, 0.0
    %v2244 = vmax.f32 %v2186, 0.0
    %v2245 = vmax.f32 %v1986, 0.0
    %v2246 = vmax.f32 %v1988, 0.0
    %v2247 = vmax.f32 %v2189, 0.0
    %v2248 = vmax.f32 %v1992, 0.0
    %v2249 = vmax.f32 %v1994, 0.0
    %v2250 = vmax.f32 %v2194, 0.0
    %v2251 = vmax.f32 %v1996, 0.0
    %v2252 = vmax.f32 %v1998, 0.0
    %v2253 = vmax.f32 %v2197, 0.0
    %v2254 = vmax.f32 %v2002, 0.0
    %v2255 = vmax.f32 %v2004, 0.0
    %v2256 = vmax.f32 %v2202, 0.0
    %v2257 = vmax.f32 %v2006, 0.0
    %v2258 = vmax.f32 %v2008, 0.0
    %v2259 = vmax.f32 %v2205, 0.0
    %v2260 = vmax.f32 %v2012, 0.0
    %v2261 = vmax.f32 %v2014, 0.0
    %v2262 = vmax.f32 %v2210, 0.0
    %v2263 = vmax.f32 %v2016, 0.0
    %v2264 = vmax.f32 %v2018, 0.0
    %v2265 = vmax.f32 %v2213, 0.0
    %v2266 = vmax.f32 %v2022, 0.0
    %v2267 = vmax.f32 %v2024, 0.0
    %v2268 = vmax.f32 %v2218, 0.0
    %v2269 = vmax.f32 %v2026, 0.0
    %v2270 = vmax.f32 %v2028, 0.0
    %v2271 = vmax.f32 %v2221, 0.0
    %v2272 = vpack.c.bf16 %v2227, %v2224
    %v2273 = vpack.c.bf16 %v2228, %v2225
    %v2274 = vpack.c.bf16 %v2229, %v2226
    %v2275 = vpack.c.bf16 %v2233, %v2230
    %v2276 = vpack.c.bf16 %v2234, %v2231
    %v2277 = vpack.c.bf16 %v2235, %v2232
    %v2278 = vpack.c.bf16 %v2239, %v2236
    %v2279 = vpack.c.bf16 %v2240, %v2237
    %v2280 = vpack.c.bf16 %v2241, %v2238
    %v2281 = vpack.c.bf16 %v2245, %v2242
    %v2282 = vpack.c.bf16 %v2246, %v2243
    %v2283 = vpack.c.bf16 %v2247, %v2244
    %v2284 = vpack.c.bf16 %v2251, %v2248
    %v2285 = vpack.c.bf16 %v2252, %v2249
    %v2286 = vpack.c.bf16 %v2253, %v2250
    %v2287 = vpack.c.bf16 %v2257, %v2254
    %v2288 = vpack.c.bf16 %v2258, %v2255
    %v2289 = vpack.c.bf16 %v2259, %v2256
    %v2290 = vpack.c.bf16 %v2263, %v2260
    %v2291 = vpack.c.bf16 %v2264, %v2261
    %v2292 = vpack.c.bf16 %v2265, %v2262
    %v2293 = vpack.c.bf16 %v2269, %v2266
    %v2294 = vpack.c.bf16 %v2270, %v2267
    %v2295 = vpack.c.bf16 %v2271, %v2268
    %v2296 = vld [vmem:[#allocation6] sm:$0xff]
    %v2297 = vld [vmem:[#allocation6 + $0x8] sm:$0xf]
    %v2298 = vld [vmem:[#allocation6 + $0xc] sm:$0xff]
    %v2299 = vld [vmem:[#allocation6 + $0x14] sm:$0xf]
    %v2300 = vld [vmem:[#allocation6 + $0x18] sm:$0xff]
    %v2301 = vld [vmem:[#allocation6 + $0x20] sm:$0xf]
    %v2302 = vld [vmem:[#allocation6 + $0x24] sm:$0xff]
    %v2303 = vld [vmem:[#allocation6 + $0x2c] sm:$0xf]
    %v2304 = vld [vmem:[#allocation6 + $0x30] sm:$0xff]
    %v2305 = vld [vmem:[#allocation6 + $0x38] sm:$0xf]
    %v2306 = vld [vmem:[#allocation6 + $0x3c] sm:$0xff]
    %v2307 = vld [vmem:[#allocation6 + $0x44] sm:$0xf]
    %v2308 = vld [vmem:[#allocation6 + $0x48] sm:$0xff]
    %v2309 = vld [vmem:[#allocation6 + $0x50] sm:$0xf]
    %v2310 = vld [vmem:[#allocation6 + $0x54] sm:$0xff]
    %v2311 = vld [vmem:[#allocation6 + $0x5c] sm:$0xf]
    %v2312 = vld [vmem:[#allocation6 + $0x60] sm:$0xff]
    %v2313 = vld [vmem:[#allocation6 + $0x68] sm:$0xf]
    %v2314 = vld [vmem:[#allocation6 + $0x6c] sm:$0xff]
    %v2315 = vld [vmem:[#allocation6 + $0x74] sm:$0xf]
    %v2316 = vld [vmem:[#allocation6 + $0x78] sm:$0xff]
    %v2317 = vld [vmem:[#allocation6 + $0x80] sm:$0xf]
    %v2318 = vld [vmem:[#allocation6 + $0x84] sm:$0xff]
    %v2319 = vld [vmem:[#allocation6 + $0x8c] sm:$0xf]
    %v2320 = vld [vmem:[#allocation6 + $0x90] sm:$0xff]
    %v2321 = vld [vmem:[#allocation6 + $0x98] sm:$0xf]
    %v2322 = vld [vmem:[#allocation6 + $0x9c] sm:$0xff]
    %v2323 = vld [vmem:[#allocation6 + $0xa4] sm:$0xf]
    %v2324 = vld [vmem:[#allocation6 + $0xa8] sm:$0xff]
    %v2325 = vld [vmem:[#allocation6 + $0xb0] sm:$0xf]
    %v2326 = vld [vmem:[#allocation6 + $0xb4] sm:$0xff]
    %v2327 = vld [vmem:[#allocation6 + $0xbc] sm:$0xf]
    %v2328 = vld [vmem:[#allocation6 + $0xc0] sm:$0xff]
    %v2329 = vld [vmem:[#allocation6 + $0xc8] sm:$0xf]
    %v2330 = vld [vmem:[#allocation6 + $0xcc] sm:$0xff]
    %v2331 = vld [vmem:[#allocation6 + $0xd4] sm:$0xf]
    %v2332 = vld [vmem:[#allocation6 + $0xd8] sm:$0xff]
    %v2333 = vld [vmem:[#allocation6 + $0xe0] sm:$0xf]
    %v2334 = vld [vmem:[#allocation6 + $0xe4] sm:$0xff]
    %v2335 = vld [vmem:[#allocation6 + $0xec] sm:$0xf]
    %v2336 = vld [vmem:[#allocation6 + $0xf0] sm:$0xff]
    %v2337 = vld [vmem:[#allocation6 + $0xf8] sm:$0xf]
    %v2338 = vld [vmem:[#allocation6 + $0xfc] sm:$0xff]
    %v2339 = vld [vmem:[#allocation6 + $0x104] sm:$0xf]
    %v2340 = vld [vmem:[#allocation6 + $0x108] sm:$0xff]
    %v2341 = vld [vmem:[#allocation6 + $0x110] sm:$0xf]
    %v2342 = vld [vmem:[#allocation6 + $0x114] sm:$0xff]
    %v2343 = vld [vmem:[#allocation6 + $0x11c] sm:$0xf]
    %v2344 = vld [vmem:[#allocation6 + $0x120] sm:$0xff]
    %v2345 = vld [vmem:[#allocation6 + $0x128] sm:$0xf]
    %v2346 = vld [vmem:[#allocation6 + $0x12c] sm:$0xff]
    %v2347 = vld [vmem:[#allocation6 + $0x134] sm:$0xf]
    %v2348 = vld [vmem:[#allocation6 + $0x138] sm:$0xff]
    %v2349 = vld [vmem:[#allocation6 + $0x140] sm:$0xf]
    %v2350 = vld [vmem:[#allocation6 + $0x144] sm:$0xff]
    %v2351 = vld [vmem:[#allocation6 + $0x14c] sm:$0xf]
    %v2352 = vld [vmem:[#allocation6 + $0x150] sm:$0xff]
    %v2353 = vld [vmem:[#allocation6 + $0x158] sm:$0xf]
    %v2354 = vld [vmem:[#allocation6 + $0x15c] sm:$0xff]
    %v2355 = vld [vmem:[#allocation6 + $0x164] sm:$0xf]
    %v2356 = vld [vmem:[#allocation6 + $0x168] sm:$0xff]
    %v2357 = vld [vmem:[#allocation6 + $0x170] sm:$0xf]
    %v2358 = vld [vmem:[#allocation6 + $0x174] sm:$0xff]
    %v2359 = vld [vmem:[#allocation6 + $0x17c] sm:$0xf]
    %v2360 = vld [vmem:[#allocation6 + $0x180] sm:$0xff]
    %v2361 = vld [vmem:[#allocation6 + $0x188] sm:$0xf]
    %v2362 = vld [vmem:[#allocation6 + $0x18c] sm:$0xff]
    %v2363 = vld [vmem:[#allocation6 + $0x194] sm:$0xf]
    %v2364 = vld [vmem:[#allocation6 + $0x198] sm:$0xff]
    %v2365 = vld [vmem:[#allocation6 + $0x1a0] sm:$0xf]
    %v2366 = vld [vmem:[#allocation6 + $0x1a4] sm:$0xff]
    %v2367 = vld [vmem:[#allocation6 + $0x1ac] sm:$0xf]
    %v2368 = vld [vmem:[#allocation6 + $0x1b0] sm:$0xff]
    %v2369 = vld [vmem:[#allocation6 + $0x1b8] sm:$0xf]
    %v2370 = vld [vmem:[#allocation6 + $0x1bc] sm:$0xff]
    %v2371 = vld [vmem:[#allocation6 + $0x1c4] sm:$0xf]
    %v2372 = vld [vmem:[#allocation6 + $0x1c8] sm:$0xff]
    %v2373 = vld [vmem:[#allocation6 + $0x1d0] sm:$0xf]
    %v2374 = vld [vmem:[#allocation6 + $0x1d4] sm:$0xff]
    %v2375 = vld [vmem:[#allocation6 + $0x1dc] sm:$0xf]
    %v2376 = vld [vmem:[#allocation6 + $0x1e0] sm:$0xff]
    %v2377 = vld [vmem:[#allocation6 + $0x1e8] sm:$0xf]
    %v2378 = vld [vmem:[#allocation6 + $0x1ec] sm:$0xff]
    %v2379 = vld [vmem:[#allocation6 + $0x1f4] sm:$0xf]
    %v2380 = vld [vmem:[#allocation6 + $0x1f8] sm:$0xff]
    %v2381 = vld [vmem:[#allocation6 + $0x200] sm:$0xf]
    %v2382 = vld [vmem:[#allocation6 + $0x204] sm:$0xff]
    %v2383 = vld [vmem:[#allocation6 + $0x20c] sm:$0xf]
    %v2384 = vld [vmem:[#allocation6 + $0x210] sm:$0xff]
    %v2385 = vld [vmem:[#allocation6 + $0x218] sm:$0xf]
    %v2386 = vld [vmem:[#allocation6 + $0x21c] sm:$0xff]
    %v2387 = vld [vmem:[#allocation6 + $0x224] sm:$0xf]
    %v2388 = vld [vmem:[#allocation6 + $0x228] sm:$0xff]
    %v2389 = vld [vmem:[#allocation6 + $0x230] sm:$0xf]
    %v2390 = vld [vmem:[#allocation6 + $0x234] sm:$0xff]
    %v2391 = vld [vmem:[#allocation6 + $0x23c] sm:$0xf]
    %v2392 = vld [vmem:[%s7] sm:$0x7]
    %v2394 = vlaneseq
    %v2395 = vshrl.u32 %v2394, 7
    %v2396 = vsub.s32 0, %v2395
    %v2397 = vrot.slane %v2392, %v2396
    %v2398 = vlaneseq
    %v2399 = vshrl.u32 %v2398, 7
    %v2400 = vsub.s32 1, %v2399
    %v2401 = vrot.slane %v2392, %v2400
    %v2402 = vlaneseq
    %v2403 = vshrl.u32 %v2402, 7
    %v2404 = vsub.s32 2, %v2403
    %v2405 = vrot.slane %v2392, %v2404
    %v2505 = vunpack.c.l.b16 %v2296
    %v2506 = vunpack.c.h.b16 %v2296
    %v2507 = vunpack.c.l.b16 %v2297
    %v2508 = vunpack.c.l.b16 %v2298
    %v2509 = vunpack.c.h.b16 %v2298
    %v2510 = vunpack.c.l.b16 %v2299
    %v2511 = vunpack.c.l.b16 %v2300
    %v2512 = vunpack.c.h.b16 %v2300
    %v2513 = vunpack.c.l.b16 %v2301
    %v2514 = vunpack.c.l.b16 %v2302
    %v2515 = vunpack.c.h.b16 %v2302
    %v2516 = vunpack.c.l.b16 %v2303
    %v2517 = vunpack.c.l.b16 %v2304
    %v2518 = vunpack.c.h.b16 %v2304
    %v2519 = vunpack.c.l.b16 %v2305
    %v2520 = vunpack.c.l.b16 %v2306
    %v2521 = vunpack.c.h.b16 %v2306
    %v2522 = vunpack.c.l.b16 %v2307
    %v2523 = vunpack.c.l.b16 %v2308
    %v2524 = vunpack.c.h.b16 %v2308
    %v2525 = vunpack.c.l.b16 %v2309
    %v2526 = vunpack.c.l.b16 %v2310
    %v2527 = vunpack.c.h.b16 %v2310
    %v2528 = vunpack.c.l.b16 %v2311
    %v2529 = vunpack.c.l.b16 %v2312
    %v2530 = vunpack.c.h.b16 %v2312
    %v2531 = vunpack.c.l.b16 %v2313
    %v2532 = vunpack.c.l.b16 %v2314
    %v2533 = vunpack.c.h.b16 %v2314
    %v2534 = vunpack.c.l.b16 %v2315
    %v2535 = vunpack.c.l.b16 %v2316
    %v2536 = vunpack.c.h.b16 %v2316
    %v2537 = vunpack.c.l.b16 %v2317
    %v2538 = vunpack.c.l.b16 %v2318
    %v2539 = vunpack.c.h.b16 %v2318
    %v2540 = vunpack.c.l.b16 %v2319
    %v2541 = vunpack.c.l.b16 %v2320
    %v2542 = vunpack.c.h.b16 %v2320
    %v2543 = vunpack.c.l.b16 %v2321
    %v2544 = vunpack.c.l.b16 %v2322
    %v2545 = vunpack.c.h.b16 %v2322
    %v2546 = vunpack.c.l.b16 %v2323
    %v2547 = vunpack.c.l.b16 %v2324
    %v2548 = vunpack.c.h.b16 %v2324
    %v2549 = vunpack.c.l.b16 %v2325
    %v2550 = vunpack.c.l.b16 %v2326
    %v2551 = vunpack.c.h.b16 %v2326
    %v2552 = vunpack.c.l.b16 %v2327
    %v2553 = vunpack.c.l.b16 %v2328
    %v2554 = vunpack.c.h.b16 %v2328
    %v2555 = vunpack.c.l.b16 %v2329
    %v2556 = vunpack.c.l.b16 %v2330
    %v2557 = vunpack.c.h.b16 %v2330
    %v2558 = vunpack.c.l.b16 %v2331
    %v2559 = vunpack.c.l.b16 %v2332
    %v2560 = vunpack.c.h.b16 %v2332
    %v2561 = vunpack.c.l.b16 %v2333
    %v2562 = vunpack.c.l.b16 %v2334
    %v2563 = vunpack.c.h.b16 %v2334
    %v2564 = vunpack.c.l.b16 %v2335
    %v2565 = vunpack.c.l.b16 %v2336
    %v2566 = vunpack.c.h.b16 %v2336
    %v2567 = vunpack.c.l.b16 %v2337
    %v2568 = vunpack.c.l.b16 %v2338
    %v2569 = vunpack.c.h.b16 %v2338
    %v2570 = vunpack.c.l.b16 %v2339
    %v2571 = vunpack.c.l.b16 %v2340
    %v2572 = vunpack.c.h.b16 %v2340
    %v2573 = vunpack.c.l.b16 %v2341
    %v2574 = vunpack.c.l.b16 %v2342
    %v2575 = vunpack.c.h.b16 %v2342
    %v2576 = vunpack.c.l.b16 %v2343
    %v2577 = vunpack.c.l.b16 %v2344
    %v2578 = vunpack.c.h.b16 %v2344
    %v2579 = vunpack.c.l.b16 %v2345
    %v2580 = vunpack.c.l.b16 %v2346
    %v2581 = vunpack.c.h.b16 %v2346
    %v2582 = vunpack.c.l.b16 %v2347
    %v2583 = vunpack.c.l.b16 %v2348
    %v2584 = vunpack.c.h.b16 %v2348
    %v2585 = vunpack.c.l.b16 %v2349
    %v2586 = vunpack.c.l.b16 %v2350
    %v2587 = vunpack.c.h.b16 %v2350
    %v2588 = vunpack.c.l.b16 %v2351
    %v2589 = vunpack.c.l.b16 %v2352
    %v2590 = vunpack.c.h.b16 %v2352
    %v2591 = vunpack.c.l.b16 %v2353
    %v2592 = vunpack.c.l.b16 %v2354
    %v2593 = vunpack.c.h.b16 %v2354
    %v2594 = vunpack.c.l.b16 %v2355
    %v2595 = vunpack.c.l.b16 %v2356
    %v2596 = vunpack.c.h.b16 %v2356
    %v2597 = vunpack.c.l.b16 %v2357
    %v2598 = vunpack.c.l.b16 %v2358
    %v2599 = vunpack.c.h.b16 %v2358
    %v2600 = vunpack.c.l.b16 %v2359
    %v2601 = vunpack.c.l.b16 %v2360
    %v2602 = vunpack.c.h.b16 %v2360
    %v2603 = vunpack.c.l.b16 %v2361
    %v2604 = vunpack.c.l.b16 %v2362
    %v2605 = vunpack.c.h.b16 %v2362
    %v2606 = vunpack.c.l.b16 %v2363
    %v2607 = vunpack.c.l.b16 %v2364
    %v2608 = vunpack.c.h.b16 %v2364
    %v2609 = vunpack.c.l.b16 %v2365
    %v2610 = vunpack.c.l.b16 %v2366
    %v2611 = vunpack.c.h.b16 %v2366
    %v2612 = vunpack.c.l.b16 %v2367
    %v2613 = vunpack.c.l.b16 %v2368
    %v2614 = vunpack.c.h.b16 %v2368
    %v2615 = vunpack.c.l.b16 %v2369
    %v2616 = vunpack.c.l.b16 %v2370
    %v2617 = vunpack.c.h.b16 %v2370
    %v2618 = vunpack.c.l.b16 %v2371
    %v2619 = vunpack.c.l.b16 %v2372
    %v2620 = vunpack.c.h.b16 %v2372
    %v2621 = vunpack.c.l.b16 %v2373
    %v2622 = vunpack.c.l.b16 %v2374
    %v2623 = vunpack.c.h.b16 %v2374
    %v2624 = vunpack.c.l.b16 %v2375
    %v2625 = vunpack.c.l.b16 %v2376
    %v2626 = vunpack.c.h.b16 %v2376
    %v2627 = vunpack.c.l.b16 %v2377
    %v2628 = vunpack.c.l.b16 %v2378
    %v2629 = vunpack.c.h.b16 %v2378
    %v2630 = vunpack.c.l.b16 %v2379
    %v2631 = vunpack.c.l.b16 %v2380
    %v2632 = vunpack.c.h.b16 %v2380
    %v2633 = vunpack.c.l.b16 %v2381
    %v2634 = vunpack.c.l.b16 %v2382
    %v2635 = vunpack.c.h.b16 %v2382
    %v2636 = vunpack.c.l.b16 %v2383
    %v2637 = vunpack.c.l.b16 %v2384
    %v2638 = vunpack.c.h.b16 %v2384
    %v2639 = vunpack.c.l.b16 %v2385
    %v2640 = vunpack.c.l.b16 %v2386
    %v2641 = vunpack.c.h.b16 %v2386
    %v2642 = vunpack.c.l.b16 %v2387
    %v2643 = vunpack.c.l.b16 %v2388
    %v2644 = vunpack.c.h.b16 %v2388
    %v2645 = vunpack.c.l.b16 %v2389
    %v2646 = vunpack.c.l.b16 %v2390
    %v2647 = vunpack.c.h.b16 %v2390
    %v2648 = vunpack.c.l.b16 %v2391
    %v2649 = vpack.c.b16 %v2508, %v2505
    %v2650 = vpack.c.b16 %v2509, %v2506
    %v2651 = vpack.c.b16 %v2510, %v2507
    %v2652 = vpack.c.b16 %v2514, %v2511
    %v2653 = vpack.c.b16 %v2515, %v2512
    %v2654 = vpack.c.b16 %v2516, %v2513
    %v2655 = vpack.c.b16 %v2520, %v2517
    %v2656 = vpack.c.b16 %v2521, %v2518
    %v2657 = vpack.c.b16 %v2522, %v2519
    %v2658 = vpack.c.b16 %v2526, %v2523
    %v2659 = vpack.c.b16 %v2527, %v2524
    %v2660 = vpack.c.b16 %v2528, %v2525
    %v2661 = vpack.c.b16 %v2532, %v2529
    %v2662 = vpack.c.b16 %v2533, %v2530
    %v2663 = vpack.c.b16 %v2534, %v2531
    %v2664 = vpack.c.b16 %v2538, %v2535
    %v2665 = vpack.c.b16 %v2539, %v2536
    %v2666 = vpack.c.b16 %v2540, %v2537
    %v2667 = vpack.c.b16 %v2544, %v2541
    %v2668 = vpack.c.b16 %v2545, %v2542
    %v2669 = vpack.c.b16 %v2546, %v2543
    %v2670 = vpack.c.b16 %v2550, %v2547
    %v2671 = vpack.c.b16 %v2551, %v2548
    %v2672 = vpack.c.b16 %v2552, %v2549
    %v2673 = vpack.c.b16 %v2556, %v2553
    %v2674 = vpack.c.b16 %v2557, %v2554
    %v2675 = vpack.c.b16 %v2558, %v2555
    %v2676 = vpack.c.b16 %v2562, %v2559
    %v2677 = vpack.c.b16 %v2563, %v2560
    %v2678 = vpack.c.b16 %v2564, %v2561
    %v2679 = vpack.c.b16 %v2568, %v2565
    %v2680 = vpack.c.b16 %v2569, %v2566
    %v2681 = vpack.c.b16 %v2570, %v2567
    %v2682 = vpack.c.b16 %v2574, %v2571
    %v2683 = vpack.c.b16 %v2575, %v2572
    %v2684 = vpack.c.b16 %v2576, %v2573
    %v2685 = vpack.c.b16 %v2580, %v2577
    %v2686 = vpack.c.b16 %v2581, %v2578
    %v2687 = vpack.c.b16 %v2582, %v2579
    %v2688 = vpack.c.b16 %v2586, %v2583
    %v2689 = vpack.c.b16 %v2587, %v2584
    %v2690 = vpack.c.b16 %v2588, %v2585
    %v2691 = vpack.c.b16 %v2592, %v2589
    %v2692 = vpack.c.b16 %v2593, %v2590
    %v2693 = vpack.c.b16 %v2594, %v2591
    %v2694 = vpack.c.b16 %v2598, %v2595
    %v2695 = vpack.c.b16 %v2599, %v2596
    %v2696 = vpack.c.b16 %v2600, %v2597
    %v2697 = vpack.c.b16 %v2604, %v2601
    %v2698 = vpack.c.b16 %v2605, %v2602
    %v2699 = vpack.c.b16 %v2606, %v2603
    %v2700 = vpack.c.b16 %v2610, %v2607
    %v2701 = vpack.c.b16 %v2611, %v2608
    %v2702 = vpack.c.b16 %v2612, %v2609
    %v2703 = vpack.c.b16 %v2616, %v2613
    %v2704 = vpack.c.b16 %v2617, %v2614
    %v2705 = vpack.c.b16 %v2618, %v2615
    %v2706 = vpack.c.b16 %v2622, %v2619
    %v2707 = vpack.c.b16 %v2623, %v2620
    %v2708 = vpack.c.b16 %v2624, %v2621
    %v2709 = vpack.c.b16 %v2628, %v2625
    %v2710 = vpack.c.b16 %v2629, %v2626
    %v2711 = vpack.c.b16 %v2630, %v2627
    %v2712 = vpack.c.b16 %v2634, %v2631
    %v2713 = vpack.c.b16 %v2635, %v2632
    %v2714 = vpack.c.b16 %v2636, %v2633
    %v2715 = vpack.c.b16 %v2640, %v2637
    %v2716 = vpack.c.b16 %v2641, %v2638
    %v2717 = vpack.c.b16 %v2642, %v2639
    %v2718 = vpack.c.b16 %v2646, %v2643
    %v2719 = vpack.c.b16 %v2647, %v2644
    %v2720 = vpack.c.b16 %v2648, %v2645
    %2793 = vmatprep.subr.bf16.mxu0 %v2671
    %2794 = vmatpush1.bf16.msra.mxu0 %v2670
    %2795 = vmatprep.subr.bf16.mxu0 %v2668
    %2796 = vmatpush1.bf16.msra.mxu0 %v2667
    %2797 = vmatprep.subr.bf16.mxu0 %v2665
    %2798 = vmatpush1.bf16.msra.mxu0 %v2664
    %2799 = vmatprep.subr.bf16.mxu0 %v2662
    %2800 = vmatpush1.bf16.msra.mxu0 %v2661
    %2801 = vmatprep.subr.bf16.mxu0 %v2659
    %2802 = vmatpush1.bf16.msra.mxu0 %v2658
    %2803 = vmatprep.subr.bf16.mxu0 %v2656
    %2804 = vmatpush1.bf16.msra.mxu0 %v2655
    %2805 = vmatprep.subr.bf16.mxu0 %v2653
    %2806 = vmatpush1.bf16.msra.mxu0 %v2652
    %2807 = vmatprep.subr.bf16.mxu0 %v2650
    %2808 = vmatpush1.bf16.msra.mxu0 %v2649
    %2809 = vmatprep.subr.bf16.mxu0 %v2695
    %2810 = vmatpush2.bf16.msra.mxu0 %v2694
    %2811 = vmatprep.subr.bf16.mxu0 %v2692
    %2812 = vmatpush2.bf16.msra.mxu0 %v2691
    %2813 = vmatprep.subr.bf16.mxu0 %v2689
    %2814 = vmatpush2.bf16.msra.mxu0 %v2688
    %2815 = vmatprep.subr.bf16.mxu0 %v2686
    %2816 = vmatpush2.bf16.msra.mxu0 %v2685
    %2817 = vmatprep.subr.bf16.mxu0 %v2683
    %2818 = vmatpush2.bf16.msra.mxu0 %v2682
    %2819 = vmatprep.subr.bf16.mxu0 %v2680
    %2820 = vmatpush2.bf16.msra.mxu0 %v2679
    %2821 = vmatprep.subr.bf16.mxu0 %v2677
    %2822 = vmatpush2.bf16.msra.mxu0 %v2676
    %2823 = vmatprep.subr.bf16.mxu0 %v2674
    %2824 = vmatpush2.bf16.msra.mxu0 %v2673
    %2825 = vmatprep.mubr.bf16.mxu0 %v2273
    %2826 = vmatmul.mubr.bf16.gmra.mxu0 %v2272
    %v2827 = vpop.f32.mrf.mxu0
    %v2828 = vadd.f32 %v2397, %v2827
    %v2829 = vpop.f32.mrf.mxu0
    %v2830 = vadd.f32 %v2401, %v2829
    %v2831 = vpop.f32.mrf.mxu0
    %v2832 = vadd.f32 %v2397, %v2831
    %v2833 = vpop.f32.mrf.mxu0
    %v2834 = vadd.f32 %v2401, %v2833
    %2835 = vmatprep.mubr.bf16.mxu0 %v2276
    %2836 = vmatmul.mubr.bf16.gmra.mxu0 %v2275
    %v2837 = vpop.f32.mrf.mxu0
    %v2838 = vadd.f32 %v2397, %v2837
    %v2839 = vpop.f32.mrf.mxu0
    %v2840 = vadd.f32 %v2401, %v2839
    %v2841 = vpop.f32.mrf.mxu0
    %v2842 = vadd.f32 %v2397, %v2841
    %v2843 = vpop.f32.mrf.mxu0
    %v2844 = vadd.f32 %v2401, %v2843
    %2845 = vmatprep.mubr.bf16.mxu0 %v2279
    %2846 = vmatmul.mubr.bf16.gmra.mxu0 %v2278
    %v2847 = vpop.f32.mrf.mxu0
    %v2848 = vadd.f32 %v2397, %v2847
    %v2849 = vpop.f32.mrf.mxu0
    %v2850 = vadd.f32 %v2401, %v2849
    %v2851 = vpop.f32.mrf.mxu0
    %v2852 = vadd.f32 %v2397, %v2851
    %v2853 = vpop.f32.mrf.mxu0
    %v2854 = vadd.f32 %v2401, %v2853
    %2855 = vmatprep.mubr.bf16.mxu0 %v2282
    %2856 = vmatmul.mubr.bf16.gmra.mxu0 %v2281
    %v2857 = vpop.f32.mrf.mxu0
    %v2858 = vadd.f32 %v2397, %v2857
    %v2859 = vpop.f32.mrf.mxu0
    %v2860 = vadd.f32 %v2401, %v2859
    %v2861 = vpop.f32.mrf.mxu0
    %v2862 = vadd.f32 %v2397, %v2861
    %v2863 = vpop.f32.mrf.mxu0
    %v2864 = vadd.f32 %v2401, %v2863
    %2865 = vmatprep.mubr.bf16.mxu0 %v2285
    %2866 = vmatmul.mubr.bf16.gmra.mxu0 %v2284
    %v2867 = vpop.f32.mrf.mxu0
    %v2868 = vadd.f32 %v2397, %v2867
    %v2869 = vpop.f32.mrf.mxu0
    %v2870 = vadd.f32 %v2401, %v2869
    %v2871 = vpop.f32.mrf.mxu0
    %v2872 = vadd.f32 %v2397, %v2871
    %v2873 = vpop.f32.mrf.mxu0
    %v2874 = vadd.f32 %v2401, %v2873
    %2875 = vmatprep.mubr.bf16.mxu0 %v2288
    %2876 = vmatmul.mubr.bf16.gmra.mxu0 %v2287
    %v2877 = vpop.f32.mrf.mxu0
    %v2878 = vadd.f32 %v2397, %v2877
    %v2879 = vpop.f32.mrf.mxu0
    %v2880 = vadd.f32 %v2401, %v2879
    %v2881 = vpop.f32.mrf.mxu0
    %v2882 = vadd.f32 %v2397, %v2881
    %v2883 = vpop.f32.mrf.mxu0
    %v2884 = vadd.f32 %v2401, %v2883
    %2885 = vmatprep.mubr.bf16.mxu0 %v2291
    %2886 = vmatmul.mubr.bf16.gmra.mxu0 %v2290
    %v2887 = vpop.f32.mrf.mxu0
    %v2888 = vadd.f32 %v2397, %v2887
    %v2889 = vpop.f32.mrf.mxu0
    %v2890 = vadd.f32 %v2401, %v2889
    %v2891 = vpop.f32.mrf.mxu0
    %v2892 = vadd.f32 %v2397, %v2891
    %v2893 = vpop.f32.mrf.mxu0
    %v2894 = vadd.f32 %v2401, %v2893
    %2895 = vmatprep.mubr.bf16.mxu0 %v2294
    %2896 = vmatmul.mubr.bf16.gmra.mxu0 %v2293
    %v2897 = vpop.f32.mrf.mxu0
    %v2898 = vadd.f32 %v2397, %v2897
    %v2899 = vpop.f32.mrf.mxu0
    %v2900 = vadd.f32 %v2401, %v2899
    %v2901 = vpop.f32.mrf.mxu0
    %v2902 = vadd.f32 %v2397, %v2901
    %v2903 = vpop.f32.mrf.mxu0
    %v2904 = vadd.f32 %v2401, %v2903
    %2905 = vdwg.mxu0
    %2906 = vmatprep.subr.bf16.mxu0 %v2719
    %2907 = vmatpush1.bf16.msra.mxu0 %v2718
    %2908 = vmatprep.subr.bf16.mxu0 %v2716
    %2909 = vmatpush1.bf16.msra.mxu0 %v2715
    %2910 = vmatprep.subr.bf16.mxu0 %v2713
    %2911 = vmatpush1.bf16.msra.mxu0 %v2712
    %2912 = vmatprep.subr.bf16.mxu0 %v2710
    %2913 = vmatpush1.bf16.msra.mxu0 %v2709
    %2914 = vmatprep.subr.bf16.mxu0 %v2707
    %2915 = vmatpush1.bf16.msra.mxu0 %v2706
    %2916 = vmatprep.subr.bf16.mxu0 %v2704
    %2917 = vmatpush1.bf16.msra.mxu0 %v2703
    %2918 = vmatprep.subr.bf16.mxu0 %v2701
    %2919 = vmatpush1.bf16.msra.mxu0 %v2700
    %2920 = vmatprep.subr.bf16.mxu0 %v2698
    %2921 = vmatpush1.bf16.msra.mxu0 %v2697
    %2922 = vmatprep.subr.bf16.mxu0 0
    %2923 = vmatpush2.bf16.msra.mxu0 0
    %2924 = vmatprep.subr.bf16.mxu0 0
    %2925 = vmatpush2.bf16.msra.mxu0 0
    %2926 = vmatprep.subr.bf16.mxu0 0
    %2927 = vmatpush2.bf16.msra.mxu0 0
    %2928 = vmatprep.subr.bf16.mxu0 0
    %2929 = vmatpush2.bf16.msra.mxu0 0
    %2930 = vmatprep.subr.bf16.mxu0 0
    %2931 = vmatpush2.bf16.msra.mxu0 0
    %2932 = vmatprep.subr.bf16.mxu0 0
    %2933 = vmatpush2.bf16.msra.mxu0 0
    %2934 = vmatprep.subr.bf16.mxu0 0
    %2935 = vmatpush2.bf16.msra.mxu0 0
    %2936 = vmatprep.subr.bf16.mxu0 0
    %2937 = vmatpush2.bf16.msra.mxu0 0
    %2938 = vmatprep.mubr.bf16.mxu0 0
    %2939 = vmatmul.mubr.bf16.gmra.mxu0 %v2274
    %v2940 = vpop.f32.mrf.mxu0
    %v2941 = vadd.f32 %v2828, %v2940
    %v2942 = vpop.f32.mrf.mxu0
    %v2943 = vadd.f32 %v2830, %v2942
    %v2944 = vpop.f32.mrf.mxu0
    %v2945 = vadd.f32 %v2832, %v2944
    %v2946 = vpop.f32.mrf.mxu0
    %v2947 = vadd.f32 %v2834, %v2946
    %2948 = vmatprep.mubr.bf16.mxu0 0
    %2949 = vmatmul.mubr.bf16.gmra.mxu0 %v2277
    %v2950 = vpop.f32.mrf.mxu0
    %v2951 = vadd.f32 %v2838, %v2950
    %v2952 = vpop.f32.mrf.mxu0
    %v2953 = vadd.f32 %v2840, %v2952
    %v2954 = vpop.f32.mrf.mxu0
    %v2955 = vadd.f32 %v2842, %v2954
    %v2956 = vpop.f32.mrf.mxu0
    %v2957 = vadd.f32 %v2844, %v2956
    %2958 = vmatprep.mubr.bf16.mxu0 0
    %2959 = vmatmul.mubr.bf16.gmra.mxu0 %v2280
    %v2960 = vpop.f32.mrf.mxu0
    %v2961 = vadd.f32 %v2848, %v2960
    %v2962 = vpop.f32.mrf.mxu0
    %v2963 = vadd.f32 %v2850, %v2962
    %v2964 = vpop.f32.mrf.mxu0
    %v2965 = vadd.f32 %v2852, %v2964
    %v2966 = vpop.f32.mrf.mxu0
    %v2967 = vadd.f32 %v2854, %v2966
    %2968 = vmatprep.mubr.bf16.mxu0 0
    %2969 = vmatmul.mubr.bf16.gmra.mxu0 %v2283
    %v2970 = vpop.f32.mrf.mxu0
    %v2971 = vadd.f32 %v2858, %v2970
    %v2972 = vpop.f32.mrf.mxu0
    %v2973 = vadd.f32 %v2860, %v2972
    %v2974 = vpop.f32.mrf.mxu0
    %v2975 = vadd.f32 %v2862, %v2974
    %v2976 = vpop.f32.mrf.mxu0
    %v2977 = vadd.f32 %v2864, %v2976
    %2978 = vmatprep.mubr.bf16.mxu0 0
    %2979 = vmatmul.mubr.bf16.gmra.mxu0 %v2286
    %v2980 = vpop.f32.mrf.mxu0
    %v2981 = vadd.f32 %v2868, %v2980
    %v2982 = vpop.f32.mrf.mxu0
    %v2983 = vadd.f32 %v2870, %v2982
    %v2984 = vpop.f32.mrf.mxu0
    %v2985 = vadd.f32 %v2872, %v2984
    %v2986 = vpop.f32.mrf.mxu0
    %v2987 = vadd.f32 %v2874, %v2986
    %2988 = vmatprep.mubr.bf16.mxu0 0
    %2989 = vmatmul.mubr.bf16.gmra.mxu0 %v2289
    %v2990 = vpop.f32.mrf.mxu0
    %v2991 = vadd.f32 %v2878, %v2990
    %v2992 = vpop.f32.mrf.mxu0
    %v2993 = vadd.f32 %v2880, %v2992
    %v2994 = vpop.f32.mrf.mxu0
    %v2995 = vadd.f32 %v2882, %v2994
    %v2996 = vpop.f32.mrf.mxu0
    %v2997 = vadd.f32 %v2884, %v2996
    %2998 = vmatprep.mubr.bf16.mxu0 0
    %2999 = vmatmul.mubr.bf16.gmra.mxu0 %v2292
    %v3000 = vpop.f32.mrf.mxu0
    %v3001 = vadd.f32 %v2888, %v3000
    %v3002 = vpop.f32.mrf.mxu0
    %v3003 = vadd.f32 %v2890, %v3002
    %v3004 = vpop.f32.mrf.mxu0
    %v3005 = vadd.f32 %v2892, %v3004
    %v3006 = vpop.f32.mrf.mxu0
    %v3007 = vadd.f32 %v2894, %v3006
    %3008 = vmatprep.mubr.bf16.mxu0 0
    %3009 = vmatmul.mubr.bf16.gmra.mxu0 %v2295
    %v3010 = vpop.f32.mrf.mxu0
    %v3011 = vadd.f32 %v2898, %v3010
    %v3012 = vpop.f32.mrf.mxu0
    %v3013 = vadd.f32 %v2900, %v3012
    %v3014 = vpop.f32.mrf.mxu0
    %v3015 = vadd.f32 %v2902, %v3014
    %v3016 = vpop.f32.mrf.mxu0
    %v3017 = vadd.f32 %v2904, %v3016
    %3018 = vdwg.mxu0
    %3019 = vmatprep.subr.bf16.mxu0 0
    %3020 = vmatpush1.bf16.msra.mxu0 %v2672
    %3021 = vmatprep.subr.bf16.mxu0 0
    %3022 = vmatpush1.bf16.msra.mxu0 %v2669
    %3023 = vmatprep.subr.bf16.mxu0 0
    %3024 = vmatpush1.bf16.msra.mxu0 %v2666
    %3025 = vmatprep.subr.bf16.mxu0 0
    %3026 = vmatpush1.bf16.msra.mxu0 %v2663
    %3027 = vmatprep.subr.bf16.mxu0 0
    %3028 = vmatpush1.bf16.msra.mxu0 %v2660
    %3029 = vmatprep.subr.bf16.mxu0 0
    %3030 = vmatpush1.bf16.msra.mxu0 %v2657
    %3031 = vmatprep.subr.bf16.mxu0 0
    %3032 = vmatpush1.bf16.msra.mxu0 %v2654
    %3033 = vmatprep.subr.bf16.mxu0 0
    %3034 = vmatpush1.bf16.msra.mxu0 %v2651
    %3035 = vmatprep.subr.bf16.mxu0 0
    %3036 = vmatpush2.bf16.msra.mxu0 %v2696
    %3037 = vmatprep.subr.bf16.mxu0 0
    %3038 = vmatpush2.bf16.msra.mxu0 %v2693
    %3039 = vmatprep.subr.bf16.mxu0 0
    %3040 = vmatpush2.bf16.msra.mxu0 %v2690
    %3041 = vmatprep.subr.bf16.mxu0 0
    %3042 = vmatpush2.bf16.msra.mxu0 %v2687
    %3043 = vmatprep.subr.bf16.mxu0 0
    %3044 = vmatpush2.bf16.msra.mxu0 %v2684
    %3045 = vmatprep.subr.bf16.mxu0 0
    %3046 = vmatpush2.bf16.msra.mxu0 %v2681
    %3047 = vmatprep.subr.bf16.mxu0 0
    %3048 = vmatpush2.bf16.msra.mxu0 %v2678
    %3049 = vmatprep.subr.bf16.mxu0 0
    %3050 = vmatpush2.bf16.msra.mxu0 %v2675
    %3051 = vmatprep.mubr.bf16.mxu0 %v2273
    %3052 = vmatmul.mubr.bf16.gmra.mxu0 %v2272
    %v3053 = vpop.f32.mrf.mxu0
    %v3054 = vadd.f32 %v2405, %v3053
    %v3055 = vpop.f32.mrf.mxu0
    %v3056 = vpop.f32.mrf.mxu0
    %v3057 = vadd.f32 %v2405, %v3056
    %v3058 = vpop.f32.mrf.mxu0
    %3059 = vmatprep.mubr.bf16.mxu0 %v2276
    %3060 = vmatmul.mubr.bf16.gmra.mxu0 %v2275
    %v3061 = vpop.f32.mrf.mxu0
    %v3062 = vadd.f32 %v2405, %v3061
    %v3063 = vpop.f32.mrf.mxu0
    %v3064 = vpop.f32.mrf.mxu0
    %v3065 = vadd.f32 %v2405, %v3064
    %v3066 = vpop.f32.mrf.mxu0
    %3067 = vmatprep.mubr.bf16.mxu0 %v2279
    %3068 = vmatmul.mubr.bf16.gmra.mxu0 %v2278
    %v3069 = vpop.f32.mrf.mxu0
    %v3070 = vadd.f32 %v2405, %v3069
    %v3071 = vpop.f32.mrf.mxu0
    %v3072 = vpop.f32.mrf.mxu0
    %v3073 = vadd.f32 %v2405, %v3072
    %v3074 = vpop.f32.mrf.mxu0
    %3075 = vmatprep.mubr.bf16.mxu0 %v2282
    %3076 = vmatmul.mubr.bf16.gmra.mxu0 %v2281
    %v3077 = vpop.f32.mrf.mxu0
    %v3078 = vadd.f32 %v2405, %v3077
    %v3079 = vpop.f32.mrf.mxu0
    %v3080 = vpop.f32.mrf.mxu0
    %v3081 = vadd.f32 %v2405, %v3080
    %v3082 = vpop.f32.mrf.mxu0
    %3083 = vmatprep.mubr.bf16.mxu0 %v2285
    %3084 = vmatmul.mubr.bf16.gmra.mxu0 %v2284
    %v3085 = vpop.f32.mrf.mxu0
    %v3086 = vadd.f32 %v2405, %v3085
    %v3087 = vpop.f32.mrf.mxu0
    %v3088 = vpop.f32.mrf.mxu0
    %v3089 = vadd.f32 %v2405, %v3088
    %v3090 = vpop.f32.mrf.mxu0
    %3091 = vmatprep.mubr.bf16.mxu0 %v2288
    %3092 = vmatmul.mubr.bf16.gmra.mxu0 %v2287
    %v3093 = vpop.f32.mrf.mxu0
    %v3094 = vadd.f32 %v2405, %v3093
    %v3095 = vpop.f32.mrf.mxu0
    %v3096 = vpop.f32.mrf.mxu0
    %v3097 = vadd.f32 %v2405, %v3096
    %v3098 = vpop.f32.mrf.mxu0
    %3099 = vmatprep.mubr.bf16.mxu0 %v2291
    %3100 = vmatmul.mubr.bf16.gmra.mxu0 %v2290
    %v3101 = vpop.f32.mrf.mxu0
    %v3102 = vadd.f32 %v2405, %v3101
    %v3103 = vpop.f32.mrf.mxu0
    %v3104 = vpop.f32.mrf.mxu0
    %v3105 = vadd.f32 %v2405, %v3104
    %v3106 = vpop.f32.mrf.mxu0
    %3107 = vmatprep.mubr.bf16.mxu0 %v2294
    %3108 = vmatmul.mubr.bf16.gmra.mxu0 %v2293
    %v3109 = vpop.f32.mrf.mxu0
    %v3110 = vadd.f32 %v2405, %v3109
    %v3111 = vpop.f32.mrf.mxu0
    %v3112 = vpop.f32.mrf.mxu0
    %v3113 = vadd.f32 %v2405, %v3112
    %v3114 = vpop.f32.mrf.mxu0
    %3115 = vdwg.mxu0
    %3116 = vmatprep.subr.bf16.mxu0 0
    %3117 = vmatpush1.bf16.msra.mxu0 %v2720
    %3118 = vmatprep.subr.bf16.mxu0 0
    %3119 = vmatpush1.bf16.msra.mxu0 %v2717
    %3120 = vmatprep.subr.bf16.mxu0 0
    %3121 = vmatpush1.bf16.msra.mxu0 %v2714
    %3122 = vmatprep.subr.bf16.mxu0 0
    %3123 = vmatpush1.bf16.msra.mxu0 %v2711
    %3124 = vmatprep.subr.bf16.mxu0 0
    %3125 = vmatpush1.bf16.msra.mxu0 %v2708
    %3126 = vmatprep.subr.bf16.mxu0 0
    %3127 = vmatpush1.bf16.msra.mxu0 %v2705
    %3128 = vmatprep.subr.bf16.mxu0 0
    %3129 = vmatpush1.bf16.msra.mxu0 %v2702
    %3130 = vmatprep.subr.bf16.mxu0 0
    %3131 = vmatpush1.bf16.msra.mxu0 %v2699
    %3132 = vmatprep.subr.bf16.mxu0 0
    %3133 = vmatpush2.bf16.msra.mxu0 0
    %3134 = vmatprep.subr.bf16.mxu0 0
    %3135 = vmatpush2.bf16.msra.mxu0 0
    %3136 = vmatprep.subr.bf16.mxu0 0
    %3137 = vmatpush2.bf16.msra.mxu0 0
    %3138 = vmatprep.subr.bf16.mxu0 0
    %3139 = vmatpush2.bf16.msra.mxu0 0
    %3140 = vmatprep.subr.bf16.mxu0 0
    %3141 = vmatpush2.bf16.msra.mxu0 0
    %3142 = vmatprep.subr.bf16.mxu0 0
    %3143 = vmatpush2.bf16.msra.mxu0 0
    %3144 = vmatprep.subr.bf16.mxu0 0
    %3145 = vmatpush2.bf16.msra.mxu0 0
    %3146 = vmatprep.subr.bf16.mxu0 0
    %3147 = vmatpush2.bf16.msra.mxu0 0
    %3148 = vmatprep.mubr.bf16.mxu0 0
    %3149 = vmatmul.mubr.bf16.gmra.mxu0 %v2274
    %v3150 = vpop.f32.mrf.mxu0
    %v3151 = vadd.f32 %v3054, %v3150
    %v3152 = vpop.f32.mrf.mxu0
    %v3153 = vpop.f32.mrf.mxu0
    %v3154 = vadd.f32 %v3057, %v3153
    %v3155 = vpop.f32.mrf.mxu0
    %3156 = vmatprep.mubr.bf16.mxu0 0
    %3157 = vmatmul.mubr.bf16.gmra.mxu0 %v2277
    %v3158 = vpop.f32.mrf.mxu0
    %v3159 = vadd.f32 %v3062, %v3158
    %v3160 = vpop.f32.mrf.mxu0
    %v3161 = vpop.f32.mrf.mxu0
    %v3162 = vadd.f32 %v3065, %v3161
    %v3163 = vpop.f32.mrf.mxu0
    %3164 = vmatprep.mubr.bf16.mxu0 0
    %3165 = vmatmul.mubr.bf16.gmra.mxu0 %v2280
    %v3166 = vpop.f32.mrf.mxu0
    %v3167 = vadd.f32 %v3070, %v3166
    %v3168 = vpop.f32.mrf.mxu0
    %v3169 = vpop.f32.mrf.mxu0
    %v3170 = vadd.f32 %v3073, %v3169
    %v3171 = vpop.f32.mrf.mxu0
    %3172 = vmatprep.mubr.bf16.mxu0 0
    %3173 = vmatmul.mubr.bf16.gmra.mxu0 %v2283
    %v3174 = vpop.f32.mrf.mxu0
    %v3175 = vadd.f32 %v3078, %v3174
    %v3176 = vpop.f32.mrf.mxu0
    %v3177 = vpop.f32.mrf.mxu0
    %v3178 = vadd.f32 %v3081, %v3177
    %v3179 = vpop.f32.mrf.mxu0
    %3180 = vmatprep.mubr.bf16.mxu0 0
    %3181 = vmatmul.mubr.bf16.gmra.mxu0 %v2286
    %v3182 = vpop.f32.mrf.mxu0
    %v3183 = vadd.f32 %v3086, %v3182
    %v3184 = vpop.f32.mrf.mxu0
    %v3185 = vpop.f32.mrf.mxu0
    %v3186 = vadd.f32 %v3089, %v3185
    %v3187 = vpop.f32.mrf.mxu0
    %3188 = vmatprep.mubr.bf16.mxu0 0
    %3189 = vmatmul.mubr.bf16.gmra.mxu0 %v2289
    %v3190 = vpop.f32.mrf.mxu0
    %v3191 = vadd.f32 %v3094, %v3190
    %v3192 = vpop.f32.mrf.mxu0
    %v3193 = vpop.f32.mrf.mxu0
    %v3194 = vadd.f32 %v3097, %v3193
    %v3195 = vpop.f32.mrf.mxu0
    %3196 = vmatprep.mubr.bf16.mxu0 0
    %3197 = vmatmul.mubr.bf16.gmra.mxu0 %v2292
    %v3198 = vpop.f32.mrf.mxu0
    %v3199 = vadd.f32 %v3102, %v3198
    %v3200 = vpop.f32.mrf.mxu0
    %v3201 = vpop.f32.mrf.mxu0
    %v3202 = vadd.f32 %v3105, %v3201
    %v3203 = vpop.f32.mrf.mxu0
    %3204 = vmatprep.mubr.bf16.mxu0 0
    %3205 = vmatmul.mubr.bf16.gmra.mxu0 %v2295
    %v3206 = vpop.f32.mrf.mxu0
    %v3207 = vadd.f32 %v3110, %v3206
    %v3208 = vpop.f32.mrf.mxu0
    %v3209 = vpop.f32.mrf.mxu0
    %v3210 = vadd.f32 %v3113, %v3209
    %v3211 = vpop.f32.mrf.mxu0
    %3212 = vdwg.mxu0
    %v3213 = vmax.f32 %v2941, 0.0
    %v3214 = vmax.f32 %v2943, 0.0
    %v3215 = vmax.f32 %v3151, 0.0
    %v3216 = vmax.f32 %v2945, 0.0
    %v3217 = vmax.f32 %v2947, 0.0
    %v3218 = vmax.f32 %v3154, 0.0
    %v3219 = vmax.f32 %v2951, 0.0
    %v3220 = vmax.f32 %v2953, 0.0
    %v3221 = vmax.f32 %v3159, 0.0
    %v3222 = vmax.f32 %v2955, 0.0
    %v3223 = vmax.f32 %v2957, 0.0
    %v3224 = vmax.f32 %v3162, 0.0
    %v3225 = vmax.f32 %v2961, 0.0
    %v3226 = vmax.f32 %v2963, 0.0
    %v3227 = vmax.f32 %v3167, 0.0
    %v3228 = vmax.f32 %v2965, 0.0
    %v3229 = vmax.f32 %v2967, 0.0
    %v3230 = vmax.f32 %v3170, 0.0
    %v3231 = vmax.f32 %v2971, 0.0
    %v3232 = vmax.f32 %v2973, 0.0
    %v3233 = vmax.f32 %v3175, 0.0
    %v3234 = vmax.f32 %v2975, 0.0
    %v3235 = vmax.f32 %v2977, 0.0
    %v3236 = vmax.f32 %v3178, 0.0
    %v3237 = vmax.f32 %v2981, 0.0
    %v3238 = vmax.f32 %v2983, 0.0
    %v3239 = vmax.f32 %v3183, 0.0
    %v3240 = vmax.f32 %v2985, 0.0
    %v3241 = vmax.f32 %v2987, 0.0
    %v3242 = vmax.f32 %v3186, 0.0
    %v3243 = vmax.f32 %v2991, 0.0
    %v3244 = vmax.f32 %v2993, 0.0
    %v3245 = vmax.f32 %v3191, 0.0
    %v3246 = vmax.f32 %v2995, 0.0
    %v3247 = vmax.f32 %v2997, 0.0
    %v3248 = vmax.f32 %v3194, 0.0
    %v3249 = vmax.f32 %v3001, 0.0
    %v3250 = vmax.f32 %v3003, 0.0
    %v3251 = vmax.f32 %v3199, 0.0
    %v3252 = vmax.f32 %v3005, 0.0
    %v3253 = vmax.f32 %v3007, 0.0
    %v3254 = vmax.f32 %v3202, 0.0
    %v3255 = vmax.f32 %v3011, 0.0
    %v3256 = vmax.f32 %v3013, 0.0
    %v3257 = vmax.f32 %v3207, 0.0
    %v3258 = vmax.f32 %v3015, 0.0
    %v3259 = vmax.f32 %v3017, 0.0
    %v3260 = vmax.f32 %v3210, 0.0
    %v3261 = vpack.c.bf16 %v3216, %v3213
    %v3262 = vpack.c.bf16 %v3217, %v3214
    %v3263 = vpack.c.bf16 %v3218, %v3215
    %v3264 = vpack.c.bf16 %v3222, %v3219
    %v3265 = vpack.c.bf16 %v3223, %v3220
    %v3266 = vpack.c.bf16 %v3224, %v3221
    %v3267 = vpack.c.bf16 %v3228, %v3225
    %v3268 = vpack.c.bf16 %v3229, %v3226
    %v3269 = vpack.c.bf16 %v3230, %v3227
    %v3270 = vpack.c.bf16 %v3234, %v3231
    %v3271 = vpack.c.bf16 %v3235, %v3232
    %v3272 = vpack.c.bf16 %v3236, %v3233
    %v3273 = vpack.c.bf16 %v3240, %v3237
    %v3274 = vpack.c.bf16 %v3241, %v3238
    %v3275 = vpack.c.bf16 %v3242, %v3239
    %v3276 = vpack.c.bf16 %v3246, %v3243
    %v3277 = vpack.c.bf16 %v3247, %v3244
    %v3278 = vpack.c.bf16 %v3248, %v3245
    %v3279 = vpack.c.bf16 %v3252, %v3249
    %v3280 = vpack.c.bf16 %v3253, %v3250
    %v3281 = vpack.c.bf16 %v3254, %v3251
    %v3282 = vpack.c.bf16 %v3258, %v3255
    %v3283 = vpack.c.bf16 %v3259, %v3256
    %v3284 = vpack.c.bf16 %v3260, %v3257
    %v3285 = vld [vmem:[#allocation7] sm:$0xff]
    %v3286 = vld [vmem:[#allocation7 + $0x8] sm:$0xff]
    %v3287 = vld [vmem:[#allocation7 + $0x10] sm:$0xff]
    %v3288 = vld [vmem:[#allocation7 + $0x18] sm:$0xff]
    %v3289 = vld [vmem:[#allocation7 + $0x20] sm:$0xff]
    %v3290 = vld [vmem:[#allocation7 + $0x28] sm:$0xff]
    %v3291 = vld [vmem:[#allocation7 + $0x30] sm:$0xff]
    %v3292 = vld [vmem:[#allocation7 + $0x38] sm:$0xff]
    %v3293 = vld [vmem:[#allocation7 + $0x40] sm:$0xff]
    %v3294 = vld [vmem:[#allocation7 + $0x48] sm:$0xff]
    %v3295 = vld [vmem:[#allocation7 + $0x50] sm:$0xff]
    %v3296 = vld [vmem:[#allocation7 + $0x58] sm:$0xff]
    %v3297 = vld [vmem:[#allocation7 + $0x60] sm:$0xff]
    %v3298 = vld [vmem:[#allocation7 + $0x68] sm:$0xff]
    %v3299 = vld [vmem:[#allocation7 + $0x70] sm:$0xff]
    %v3300 = vld [vmem:[#allocation7 + $0x78] sm:$0xff]
    %v3301 = vld [vmem:[#allocation7 + $0x80] sm:$0xff]
    %v3302 = vld [vmem:[#allocation7 + $0x88] sm:$0xff]
    %v3303 = vld [vmem:[#allocation7 + $0x90] sm:$0xff]
    %v3304 = vld [vmem:[#allocation7 + $0x98] sm:$0xff]
    %v3305 = vld [vmem:[#allocation7 + $0xa0] sm:$0xff]
    %v3306 = vld [vmem:[#allocation7 + $0xa8] sm:$0xff]
    %v3307 = vld [vmem:[#allocation7 + $0xb0] sm:$0xff]
    %v3308 = vld [vmem:[#allocation7 + $0xb8] sm:$0xff]
    %v3309 = vld [vmem:[#allocation7 + $0xc0] sm:$0xff]
    %v3310 = vld [vmem:[#allocation7 + $0xc8] sm:$0xff]
    %v3311 = vld [vmem:[#allocation7 + $0xd0] sm:$0xff]
    %v3312 = vld [vmem:[#allocation7 + $0xd8] sm:$0xff]
    %v3313 = vld [vmem:[#allocation7 + $0xe0] sm:$0xff]
    %v3314 = vld [vmem:[#allocation7 + $0xe8] sm:$0xff]
    %v3315 = vld [vmem:[#allocation7 + $0xf0] sm:$0xff]
    %v3316 = vld [vmem:[#allocation7 + $0xf8] sm:$0xff]
    %v3317 = vld [vmem:[#allocation7 + $0x100] sm:$0xff]
    %v3318 = vld [vmem:[#allocation7 + $0x108] sm:$0xff]
    %v3319 = vld [vmem:[#allocation7 + $0x110] sm:$0xff]
    %v3320 = vld [vmem:[#allocation7 + $0x118] sm:$0xff]
    %v3321 = vld [vmem:[#allocation7 + $0x120] sm:$0xff]
    %v3322 = vld [vmem:[#allocation7 + $0x128] sm:$0xff]
    %v3323 = vld [vmem:[#allocation7 + $0x130] sm:$0xff]
    %v3324 = vld [vmem:[#allocation7 + $0x138] sm:$0xff]
    %v3325 = vld [vmem:[#allocation7 + $0x140] sm:$0xff]
    %v3326 = vld [vmem:[#allocation7 + $0x148] sm:$0xff]
    %v3327 = vld [vmem:[#allocation7 + $0x150] sm:$0xff]
    %v3328 = vld [vmem:[#allocation7 + $0x158] sm:$0xff]
    %v3329 = vld [vmem:[#allocation7 + $0x160] sm:$0xff]
    %v3330 = vld [vmem:[#allocation7 + $0x168] sm:$0xff]
    %v3331 = vld [vmem:[#allocation7 + $0x170] sm:$0xff]
    %v3332 = vld [vmem:[#allocation7 + $0x178] sm:$0xff]
    %v3333 = vld [vmem:[#allocation7 + $0x180] sm:$0xff]
    %v3334 = vld [vmem:[#allocation7 + $0x188] sm:$0xff]
    %v3335 = vld [vmem:[#allocation7 + $0x190] sm:$0xff]
    %v3336 = vld [vmem:[#allocation7 + $0x198] sm:$0xff]
    %v3337 = vld [vmem:[#allocation7 + $0x1a0] sm:$0xff]
    %v3338 = vld [vmem:[#allocation7 + $0x1a8] sm:$0xff]
    %v3339 = vld [vmem:[#allocation7 + $0x1b0] sm:$0xff]
    %v3340 = vld [vmem:[#allocation7 + $0x1b8] sm:$0xff]
    %v3341 = vld [vmem:[#allocation7 + $0x1c0] sm:$0xff]
    %v3342 = vld [vmem:[#allocation7 + $0x1c8] sm:$0xff]
    %v3343 = vld [vmem:[#allocation7 + $0x1d0] sm:$0xff]
    %v3344 = vld [vmem:[#allocation7 + $0x1d8] sm:$0xff]
    %v3345 = vld [vmem:[#allocation7 + $0x1e0] sm:$0xff]
    %v3346 = vld [vmem:[#allocation7 + $0x1e8] sm:$0xff]
    %v3347 = vld [vmem:[#allocation7 + $0x1f0] sm:$0xff]
    %v3348 = vld [vmem:[#allocation7 + $0x1f8] sm:$0xff]
    %v3349 = vld [vmem:[#allocation7 + $0x200] sm:$0xff]
    %v3350 = vld [vmem:[#allocation7 + $0x208] sm:$0xff]
    %v3351 = vld [vmem:[#allocation7 + $0x210] sm:$0xff]
    %v3352 = vld [vmem:[#allocation7 + $0x218] sm:$0xff]
    %v3353 = vld [vmem:[#allocation7 + $0x220] sm:$0xff]
    %v3354 = vld [vmem:[#allocation7 + $0x228] sm:$0xff]
    %v3355 = vld [vmem:[#allocation7 + $0x230] sm:$0xff]
    %v3356 = vld [vmem:[#allocation7 + $0x238] sm:$0xff]
    %v3357 = vld [vmem:[#allocation7 + $0x240] sm:$0xff]
    %v3358 = vld [vmem:[#allocation7 + $0x248] sm:$0xff]
    %v3359 = vld [vmem:[#allocation7 + $0x250] sm:$0xff]
    %v3360 = vld [vmem:[#allocation7 + $0x258] sm:$0xff]
    %v3361 = vld [vmem:[#allocation7 + $0x260] sm:$0xff]
    %v3362 = vld [vmem:[#allocation7 + $0x268] sm:$0xff]
    %v3363 = vld [vmem:[#allocation7 + $0x270] sm:$0xff]
    %v3364 = vld [vmem:[#allocation7 + $0x278] sm:$0xff]
    %v3365 = vld [vmem:[#allocation7 + $0x280] sm:$0xff]
    %v3366 = vld [vmem:[#allocation7 + $0x288] sm:$0xff]
    %v3367 = vld [vmem:[#allocation7 + $0x290] sm:$0xff]
    %v3368 = vld [vmem:[#allocation7 + $0x298] sm:$0xff]
    %v3369 = vld [vmem:[#allocation7 + $0x2a0] sm:$0xff]
    %v3370 = vld [vmem:[#allocation7 + $0x2a8] sm:$0xff]
    %v3371 = vld [vmem:[#allocation7 + $0x2b0] sm:$0xff]
    %v3372 = vld [vmem:[#allocation7 + $0x2b8] sm:$0xff]
    %v3373 = vld [vmem:[#allocation7 + $0x2c0] sm:$0xff]
    %v3374 = vld [vmem:[#allocation7 + $0x2c8] sm:$0xff]
    %v3375 = vld [vmem:[#allocation7 + $0x2d0] sm:$0xff]
    %v3376 = vld [vmem:[#allocation7 + $0x2d8] sm:$0xff]
    %v3377 = vld [vmem:[#allocation7 + $0x2e0] sm:$0xff]
    %v3378 = vld [vmem:[#allocation7 + $0x2e8] sm:$0xff]
    %v3379 = vld [vmem:[#allocation7 + $0x2f0] sm:$0xff]
    %v3380 = vld [vmem:[#allocation7 + $0x2f8] sm:$0xff]
    %v3381 = vld [vmem:[%s1] sm:$0xf]
    %v3382 = vld [vmem:[%s1 + $0x4] sm:$0xf]
    %v3383 = vld [vmem:[%s1 + $0x8] sm:$0xf]
    %v3384 = vld [vmem:[%s1 + $0xc] sm:$0xf]
    %v3385 = vld [vmem:[%s1 + $0x10] sm:$0xf]
    %v3386 = vld [vmem:[%s1 + $0x14] sm:$0xf]
    %v3387 = vld [vmem:[%s1 + $0x18] sm:$0xf]
    %v3388 = vld [vmem:[%s1 + $0x1c] sm:$0xf]
    %v3389 = vld [vmem:[%s1 + $0x20] sm:$0xf]
    %v3390 = vld [vmem:[%s1 + $0x24] sm:$0xf]
    %v3391 = vld [vmem:[%s1 + $0x28] sm:$0xf]
    %v3392 = vld [vmem:[%s1 + $0x2c] sm:$0xf]
    %v3393 = vld [vmem:[%s1 + $0x30] sm:$0xf]
    %v3394 = vld [vmem:[%s1 + $0x34] sm:$0xf]
    %v3395 = vld [vmem:[%s1 + $0x38] sm:$0xf]
    %v3396 = vld [vmem:[%s1 + $0x3c] sm:$0xf]
    %v3397 = vld [vmem:[%s9] sm:$0xff]
    %v3398 = vld [vmem:[%s9 + $0x8] sm:$0xff]
    %v3399 = vld [vmem:[%s9 + $0x10] sm:$0xff]
    %v3400 = vld [vmem:[%s9 + $0x18] sm:$0xff]
    %v3417 = vunpack.c.l.b16 %v3381
    %v3418 = vunpack.c.l.b16 %v3382
    %v3419 = vunpack.c.l.b16 %v3383
    %v3420 = vunpack.c.l.b16 %v3384
    %v3421 = vunpack.c.l.b16 %v3385
    %v3422 = vunpack.c.l.b16 %v3386
    %v3423 = vunpack.c.l.b16 %v3387
    %v3424 = vunpack.c.l.b16 %v3388
    %v3425 = vunpack.c.l.b16 %v3389
    %v3426 = vunpack.c.l.b16 %v3390
    %v3427 = vunpack.c.l.b16 %v3391
    %v3428 = vunpack.c.l.b16 %v3392
    %v3429 = vunpack.c.l.b16 %v3393
    %v3430 = vunpack.c.l.b16 %v3394
    %v3431 = vunpack.c.l.b16 %v3395
    %v3432 = vunpack.c.l.b16 %v3396
    %v3433 = vpack.c.b16 %v3418, %v3417
    %v3434 = vpack.c.b16 %v3420, %v3419
    %v3435 = vpack.c.b16 %v3422, %v3421
    %v3436 = vpack.c.b16 %v3424, %v3423
    %v3437 = vpack.c.b16 %v3426, %v3425
    %v3438 = vpack.c.b16 %v3428, %v3427
    %v3439 = vpack.c.b16 %v3430, %v3429
    %v3440 = vpack.c.b16 %v3432, %v3431
    %v3445 = vunpack.c.l.b16 %v3397
    %v3446 = vunpack.c.h.b16 %v3397
    %v3447 = vunpack.c.l.b16 %v3398
    %v3448 = vunpack.c.h.b16 %v3398
    %v3449 = vunpack.c.l.b16 %v3399
    %v3450 = vunpack.c.h.b16 %v3399
    %v3451 = vunpack.c.l.b16 %v3400
    %v3452 = vunpack.c.h.b16 %v3400
    %v3453 = vpack.c.b16 %v3449, %v3445
    %v3454 = vpack.c.b16 %v3450, %v3446
    %v3455 = vpack.c.b16 %v3451, %v3447
    %v3456 = vpack.c.b16 %v3452, %v3448
    %vm3461 = vcmask 130048
    %v3463 = vsel %vm3461, %v3433, 0
    %v3466 = vsel %vm3461, %v3434, 0
    %v3469 = vsel %vm3461, %v3435, 0
    %v3472 = vsel %vm3461, %v3436, 0
    %v3475 = vsel %vm3461, %v3437, 0
    %v3478 = vsel %vm3461, %v3438, 0
    %v3481 = vsel %vm3461, %v3439, 0
    %v3484 = vsel %vm3461, %v3440, 0
    %3486 = vmatprep.subr.bf16.mxu0 0
    %3487 = vmatpush1.bf16.msra.mxu0 0
    %3488 = vmatprep.subr.bf16.mxu0 0
    %3489 = vmatpush1.bf16.msra.mxu0 0
    %3490 = vmatprep.subr.bf16.mxu0 0
    %3491 = vmatpush1.bf16.msra.mxu0 0
    %3492 = vmatprep.subr.bf16.mxu0 0
    %3493 = vmatpush1.bf16.msra.mxu0 0
    %3494 = vmatprep.subr.bf16.mxu0 0
    %3495 = vmatpush1.bf16.msra.mxu0 0
    %3496 = vmatprep.subr.bf16.mxu0 0
    %3497 = vmatpush1.bf16.msra.mxu0 0
    %3498 = vmatprep.subr.bf16.mxu0 0
    %3499 = vmatpush1.bf16.msra.mxu0 0
    %3500 = vmatprep.subr.bf16.mxu0 %v3454
    %3501 = vmatpush1.bf16.msra.mxu0 %v3453
    %3502 = vmatprep.subr.bf16.mxu0 0
    %3503 = vmatpush2.bf16.msra.mxu0 0
    %3504 = vmatprep.subr.bf16.mxu0 0
    %3505 = vmatpush2.bf16.msra.mxu0 0
    %3506 = vmatprep.subr.bf16.mxu0 0
    %3507 = vmatpush2.bf16.msra.mxu0 0
    %3508 = vmatprep.subr.bf16.mxu0 0
    %3509 = vmatpush2.bf16.msra.mxu0 0
    %3510 = vmatprep.subr.bf16.mxu0 0
    %3511 = vmatpush2.bf16.msra.mxu0 0
    %3512 = vmatprep.subr.bf16.mxu0 0
    %3513 = vmatpush2.bf16.msra.mxu0 0
    %3514 = vmatprep.subr.bf16.mxu0 0
    %3515 = vmatpush2.bf16.msra.mxu0 0
    %3516 = vmatprep.subr.bf16.mxu0 0
    %3517 = vmatpush2.bf16.msra.mxu0 0
    %3518 = vmatprep.mubr.bf16.mxu0 0
    %3519 = vmatmul.mubr.bf16.gmra.mxu0 %v3463
    %v3520 = vpop.f32.mrf.mxu0
    %v3521 = vadd.f32 0.0, %v3520
    %v3522 = vpop.f32.mrf.mxu0
    %v3523 = vadd.f32 0.0, %v3522
    %v3524 = vpop.f32.mrf.mxu0
    %v3525 = vadd.f32 0.0, %v3524
    %v3526 = vpop.f32.mrf.mxu0
    %v3527 = vadd.f32 0.0, %v3526
    %3528 = vmatprep.mubr.bf16.mxu0 0
    %3529 = vmatmul.mubr.bf16.gmra.mxu0 %v3466
    %v3530 = vpop.f32.mrf.mxu0
    %v3531 = vadd.f32 0.0, %v3530
    %v3532 = vpop.f32.mrf.mxu0
    %v3533 = vadd.f32 0.0, %v3532
    %v3534 = vpop.f32.mrf.mxu0
    %v3535 = vadd.f32 0.0, %v3534
    %v3536 = vpop.f32.mrf.mxu0
    %v3537 = vadd.f32 0.0, %v3536
    %3538 = vmatprep.mubr.bf16.mxu0 0
    %3539 = vmatmul.mubr.bf16.gmra.mxu0 %v3469
    %v3540 = vpop.f32.mrf.mxu0
    %v3541 = vadd.f32 0.0, %v3540
    %v3542 = vpop.f32.mrf.mxu0
    %v3543 = vadd.f32 0.0, %v3542
    %v3544 = vpop.f32.mrf.mxu0
    %v3545 = vadd.f32 0.0, %v3544
    %v3546 = vpop.f32.mrf.mxu0
    %v3547 = vadd.f32 0.0, %v3546
    %3548 = vmatprep.mubr.bf16.mxu0 0
    %3549 = vmatmul.mubr.bf16.gmra.mxu0 %v3472
    %v3550 = vpop.f32.mrf.mxu0
    %v3551 = vadd.f32 0.0, %v3550
    %v3552 = vpop.f32.mrf.mxu0
    %v3553 = vadd.f32 0.0, %v3552
    %v3554 = vpop.f32.mrf.mxu0
    %v3555 = vadd.f32 0.0, %v3554
    %v3556 = vpop.f32.mrf.mxu0
    %v3557 = vadd.f32 0.0, %v3556
    %3558 = vmatprep.mubr.bf16.mxu0 0
    %3559 = vmatmul.mubr.bf16.gmra.mxu0 %v3475
    %v3560 = vpop.f32.mrf.mxu0
    %v3561 = vadd.f32 0.0, %v3560
    %v3562 = vpop.f32.mrf.mxu0
    %v3563 = vadd.f32 0.0, %v3562
    %v3564 = vpop.f32.mrf.mxu0
    %v3565 = vadd.f32 0.0, %v3564
    %v3566 = vpop.f32.mrf.mxu0
    %v3567 = vadd.f32 0.0, %v3566
    %3568 = vmatprep.mubr.bf16.mxu0 0
    %3569 = vmatmul.mubr.bf16.gmra.mxu0 %v3478
    %v3570 = vpop.f32.mrf.mxu0
    %v3571 = vadd.f32 0.0, %v3570
    %v3572 = vpop.f32.mrf.mxu0
    %v3573 = vadd.f32 0.0, %v3572
    %v3574 = vpop.f32.mrf.mxu0
    %v3575 = vadd.f32 0.0, %v3574
    %v3576 = vpop.f32.mrf.mxu0
    %v3577 = vadd.f32 0.0, %v3576
    %3578 = vmatprep.mubr.bf16.mxu0 0
    %3579 = vmatmul.mubr.bf16.gmra.mxu0 %v3481
    %v3580 = vpop.f32.mrf.mxu0
    %v3581 = vadd.f32 0.0, %v3580
    %v3582 = vpop.f32.mrf.mxu0
    %v3583 = vadd.f32 0.0, %v3582
    %v3584 = vpop.f32.mrf.mxu0
    %v3585 = vadd.f32 0.0, %v3584
    %v3586 = vpop.f32.mrf.mxu0
    %v3587 = vadd.f32 0.0, %v3586
    %3588 = vmatprep.mubr.bf16.mxu0 0
    %3589 = vmatmul.mubr.bf16.gmra.mxu0 %v3484
    %v3590 = vpop.f32.mrf.mxu0
    %v3591 = vadd.f32 0.0, %v3590
    %v3592 = vpop.f32.mrf.mxu0
    %v3593 = vadd.f32 0.0, %v3592
    %v3594 = vpop.f32.mrf.mxu0
    %v3595 = vadd.f32 0.0, %v3594
    %v3596 = vpop.f32.mrf.mxu0
    %v3597 = vadd.f32 0.0, %v3596
    %3598 = vdwg.mxu0
    %3599 = vmatprep.subr.bf16.mxu0 0
    %3600 = vmatpush1.bf16.msra.mxu0 0
    %3601 = vmatprep.subr.bf16.mxu0 0
    %3602 = vmatpush1.bf16.msra.mxu0 0
    %3603 = vmatprep.subr.bf16.mxu0 0
    %3604 = vmatpush1.bf16.msra.mxu0 0
    %3605 = vmatprep.subr.bf16.mxu0 0
    %3606 = vmatpush1.bf16.msra.mxu0 0
    %3607 = vmatprep.subr.bf16.mxu0 0
    %3608 = vmatpush1.bf16.msra.mxu0 0
    %3609 = vmatprep.subr.bf16.mxu0 0
    %3610 = vmatpush1.bf16.msra.mxu0 0
    %3611 = vmatprep.subr.bf16.mxu0 0
    %3612 = vmatpush1.bf16.msra.mxu0 0
    %3613 = vmatprep.subr.bf16.mxu0 %v3456
    %3614 = vmatpush1.bf16.msra.mxu0 %v3455
    %3615 = vmatprep.subr.bf16.mxu0 0
    %3616 = vmatpush2.bf16.msra.mxu0 0
    %3617 = vmatprep.subr.bf16.mxu0 0
    %3618 = vmatpush2.bf16.msra.mxu0 0
    %3619 = vmatprep.subr.bf16.mxu0 0
    %3620 = vmatpush2.bf16.msra.mxu0 0
    %3621 = vmatprep.subr.bf16.mxu0 0
    %3622 = vmatpush2.bf16.msra.mxu0 0
    %3623 = vmatprep.subr.bf16.mxu0 0
    %3624 = vmatpush2.bf16.msra.mxu0 0
    %3625 = vmatprep.subr.bf16.mxu0 0
    %3626 = vmatpush2.bf16.msra.mxu0 0
    %3627 = vmatprep.subr.bf16.mxu0 0
    %3628 = vmatpush2.bf16.msra.mxu0 0
    %3629 = vmatprep.subr.bf16.mxu0 0
    %3630 = vmatpush2.bf16.msra.mxu0 0
    %3631 = vmatprep.mubr.bf16.mxu0 0
    %3632 = vmatmul.mubr.bf16.gmra.mxu0 %v3463
    %v3633 = vpop.f32.mrf.mxu0
    %v3634 = vadd.f32 0.0, %v3633
    %v3635 = vpop.f32.mrf.mxu0
    %v3636 = vadd.f32 0.0, %v3635
    %v3637 = vpop.f32.mrf.mxu0
    %v3638 = vadd.f32 0.0, %v3637
    %v3639 = vpop.f32.mrf.mxu0
    %v3640 = vadd.f32 0.0, %v3639
    %3641 = vmatprep.mubr.bf16.mxu0 0
    %3642 = vmatmul.mubr.bf16.gmra.mxu0 %v3466
    %v3643 = vpop.f32.mrf.mxu0
    %v3644 = vadd.f32 0.0, %v3643
    %v3645 = vpop.f32.mrf.mxu0
    %v3646 = vadd.f32 0.0, %v3645
    %v3647 = vpop.f32.mrf.mxu0
    %v3648 = vadd.f32 0.0, %v3647
    %v3649 = vpop.f32.mrf.mxu0
    %v3650 = vadd.f32 0.0, %v3649
    %3651 = vmatprep.mubr.bf16.mxu0 0
    %3652 = vmatmul.mubr.bf16.gmra.mxu0 %v3469
    %v3653 = vpop.f32.mrf.mxu0
    %v3654 = vadd.f32 0.0, %v3653
    %v3655 = vpop.f32.mrf.mxu0
    %v3656 = vadd.f32 0.0, %v3655
    %v3657 = vpop.f32.mrf.mxu0
    %v3658 = vadd.f32 0.0, %v3657
    %v3659 = vpop.f32.mrf.mxu0
    %v3660 = vadd.f32 0.0, %v3659
    %3661 = vmatprep.mubr.bf16.mxu0 0
    %3662 = vmatmul.mubr.bf16.gmra.mxu0 %v3472
    %v3663 = vpop.f32.mrf.mxu0
    %v3664 = vadd.f32 0.0, %v3663
    %v3665 = vpop.f32.mrf.mxu0
    %v3666 = vadd.f32 0.0, %v3665
    %v3667 = vpop.f32.mrf.mxu0
    %v3668 = vadd.f32 0.0, %v3667
    %v3669 = vpop.f32.mrf.mxu0
    %v3670 = vadd.f32 0.0, %v3669
    %3671 = vmatprep.mubr.bf16.mxu0 0
    %3672 = vmatmul.mubr.bf16.gmra.mxu0 %v3475
    %v3673 = vpop.f32.mrf.mxu0
    %v3674 = vadd.f32 0.0, %v3673
    %v3675 = vpop.f32.mrf.mxu0
    %v3676 = vadd.f32 0.0, %v3675
    %v3677 = vpop.f32.mrf.mxu0
    %v3678 = vadd.f32 0.0, %v3677
    %v3679 = vpop.f32.mrf.mxu0
    %v3680 = vadd.f32 0.0, %v3679
    %3681 = vmatprep.mubr.bf16.mxu0 0
    %3682 = vmatmul.mubr.bf16.gmra.mxu0 %v3478
    %v3683 = vpop.f32.mrf.mxu0
    %v3684 = vadd.f32 0.0, %v3683
    %v3685 = vpop.f32.mrf.mxu0
    %v3686 = vadd.f32 0.0, %v3685
    %v3687 = vpop.f32.mrf.mxu0
    %v3688 = vadd.f32 0.0, %v3687
    %v3689 = vpop.f32.mrf.mxu0
    %v3690 = vadd.f32 0.0, %v3689
    %3691 = vmatprep.mubr.bf16.mxu0 0
    %3692 = vmatmul.mubr.bf16.gmra.mxu0 %v3481
    %v3693 = vpop.f32.mrf.mxu0
    %v3694 = vadd.f32 0.0, %v3693
    %v3695 = vpop.f32.mrf.mxu0
    %v3696 = vadd.f32 0.0, %v3695
    %v3697 = vpop.f32.mrf.mxu0
    %v3698 = vadd.f32 0.0, %v3697
    %v3699 = vpop.f32.mrf.mxu0
    %v3700 = vadd.f32 0.0, %v3699
    %3701 = vmatprep.mubr.bf16.mxu0 0
    %3702 = vmatmul.mubr.bf16.gmra.mxu0 %v3484
    %v3703 = vpop.f32.mrf.mxu0
    %v3704 = vadd.f32 0.0, %v3703
    %v3705 = vpop.f32.mrf.mxu0
    %v3706 = vadd.f32 0.0, %v3705
    %v3707 = vpop.f32.mrf.mxu0
    %v3708 = vadd.f32 0.0, %v3707
    %v3709 = vpop.f32.mrf.mxu0
    %v3710 = vadd.f32 0.0, %v3709
    %3711 = vdwg.mxu0
    %v3808 = vunpack.c.l.b16 %v3285
    %v3809 = vunpack.c.h.b16 %v3285
    %v3810 = vunpack.c.l.b16 %v3286
    %v3811 = vunpack.c.h.b16 %v3286
    %v3812 = vunpack.c.l.b16 %v3287
    %v3813 = vunpack.c.h.b16 %v3287
    %v3814 = vunpack.c.l.b16 %v3288
    %v3815 = vunpack.c.h.b16 %v3288
    %v3816 = vunpack.c.l.b16 %v3289
    %v3817 = vunpack.c.h.b16 %v3289
    %v3818 = vunpack.c.l.b16 %v3290
    %v3819 = vunpack.c.h.b16 %v3290
    %v3820 = vunpack.c.l.b16 %v3291
    %v3821 = vunpack.c.h.b16 %v3291
    %v3822 = vunpack.c.l.b16 %v3292
    %v3823 = vunpack.c.h.b16 %v3292
    %v3824 = vunpack.c.l.b16 %v3293
    %v3825 = vunpack.c.h.b16 %v3293
    %v3826 = vunpack.c.l.b16 %v3294
    %v3827 = vunpack.c.h.b16 %v3294
    %v3828 = vunpack.c.l.b16 %v3295
    %v3829 = vunpack.c.h.b16 %v3295
    %v3830 = vunpack.c.l.b16 %v3296
    %v3831 = vunpack.c.h.b16 %v3296
    %v3832 = vunpack.c.l.b16 %v3297
    %v3833 = vunpack.c.h.b16 %v3297
    %v3834 = vunpack.c.l.b16 %v3298
    %v3835 = vunpack.c.h.b16 %v3298
    %v3836 = vunpack.c.l.b16 %v3299
    %v3837 = vunpack.c.h.b16 %v3299
    %v3838 = vunpack.c.l.b16 %v3300
    %v3839 = vunpack.c.h.b16 %v3300
    %v3840 = vunpack.c.l.b16 %v3301
    %v3841 = vunpack.c.h.b16 %v3301
    %v3842 = vunpack.c.l.b16 %v3302
    %v3843 = vunpack.c.h.b16 %v3302
    %v3844 = vunpack.c.l.b16 %v3303
    %v3845 = vunpack.c.h.b16 %v3303
    %v3846 = vunpack.c.l.b16 %v3304
    %v3847 = vunpack.c.h.b16 %v3304
    %v3848 = vunpack.c.l.b16 %v3305
    %v3849 = vunpack.c.h.b16 %v3305
    %v3850 = vunpack.c.l.b16 %v3306
    %v3851 = vunpack.c.h.b16 %v3306
    %v3852 = vunpack.c.l.b16 %v3307
    %v3853 = vunpack.c.h.b16 %v3307
    %v3854 = vunpack.c.l.b16 %v3308
    %v3855 = vunpack.c.h.b16 %v3308
    %v3856 = vunpack.c.l.b16 %v3309
    %v3857 = vunpack.c.h.b16 %v3309
    %v3858 = vunpack.c.l.b16 %v3310
    %v3859 = vunpack.c.h.b16 %v3310
    %v3860 = vunpack.c.l.b16 %v3311
    %v3861 = vunpack.c.h.b16 %v3311
    %v3862 = vunpack.c.l.b16 %v3312
    %v3863 = vunpack.c.h.b16 %v3312
    %v3864 = vunpack.c.l.b16 %v3313
    %v3865 = vunpack.c.h.b16 %v3313
    %v3866 = vunpack.c.l.b16 %v3314
    %v3867 = vunpack.c.h.b16 %v3314
    %v3868 = vunpack.c.l.b16 %v3315
    %v3869 = vunpack.c.h.b16 %v3315
    %v3870 = vunpack.c.l.b16 %v3316
    %v3871 = vunpack.c.h.b16 %v3316
    %v3872 = vunpack.c.l.b16 %v3317
    %v3873 = vunpack.c.h.b16 %v3317
    %v3874 = vunpack.c.l.b16 %v3318
    %v3875 = vunpack.c.h.b16 %v3318
    %v3876 = vunpack.c.l.b16 %v3319
    %v3877 = vunpack.c.h.b16 %v3319
    %v3878 = vunpack.c.l.b16 %v3320
    %v3879 = vunpack.c.h.b16 %v3320
    %v3880 = vunpack.c.l.b16 %v3321
    %v3881 = vunpack.c.h.b16 %v3321
    %v3882 = vunpack.c.l.b16 %v3322
    %v3883 = vunpack.c.h.b16 %v3322
    %v3884 = vunpack.c.l.b16 %v3323
    %v3885 = vunpack.c.h.b16 %v3323
    %v3886 = vunpack.c.l.b16 %v3324
    %v3887 = vunpack.c.h.b16 %v3324
    %v3888 = vunpack.c.l.b16 %v3325
    %v3889 = vunpack.c.h.b16 %v3325
    %v3890 = vunpack.c.l.b16 %v3326
    %v3891 = vunpack.c.h.b16 %v3326
    %v3892 = vunpack.c.l.b16 %v3327
    %v3893 = vunpack.c.h.b16 %v3327
    %v3894 = vunpack.c.l.b16 %v3328
    %v3895 = vunpack.c.h.b16 %v3328
    %v3896 = vunpack.c.l.b16 %v3329
    %v3897 = vunpack.c.h.b16 %v3329
    %v3898 = vunpack.c.l.b16 %v3330
    %v3899 = vunpack.c.h.b16 %v3330
    %v3900 = vunpack.c.l.b16 %v3331
    %v3901 = vunpack.c.h.b16 %v3331
    %v3902 = vunpack.c.l.b16 %v3332
    %v3903 = vunpack.c.h.b16 %v3332
    %v3904 = vunpack.c.l.b16 %v3333
    %v3905 = vunpack.c.h.b16 %v3333
    %v3906 = vunpack.c.l.b16 %v3334
    %v3907 = vunpack.c.h.b16 %v3334
    %v3908 = vunpack.c.l.b16 %v3335
    %v3909 = vunpack.c.h.b16 %v3335
    %v3910 = vunpack.c.l.b16 %v3336
    %v3911 = vunpack.c.h.b16 %v3336
    %v3912 = vunpack.c.l.b16 %v3337
    %v3913 = vunpack.c.h.b16 %v3337
    %v3914 = vunpack.c.l.b16 %v3338
    %v3915 = vunpack.c.h.b16 %v3338
    %v3916 = vunpack.c.l.b16 %v3339
    %v3917 = vunpack.c.h.b16 %v3339
    %v3918 = vunpack.c.l.b16 %v3340
    %v3919 = vunpack.c.h.b16 %v3340
    %v3920 = vunpack.c.l.b16 %v3341
    %v3921 = vunpack.c.h.b16 %v3341
    %v3922 = vunpack.c.l.b16 %v3342
    %v3923 = vunpack.c.h.b16 %v3342
    %v3924 = vunpack.c.l.b16 %v3343
    %v3925 = vunpack.c.h.b16 %v3343
    %v3926 = vunpack.c.l.b16 %v3344
    %v3927 = vunpack.c.h.b16 %v3344
    %v3928 = vunpack.c.l.b16 %v3345
    %v3929 = vunpack.c.h.b16 %v3345
    %v3930 = vunpack.c.l.b16 %v3346
    %v3931 = vunpack.c.h.b16 %v3346
    %v3932 = vunpack.c.l.b16 %v3347
    %v3933 = vunpack.c.h.b16 %v3347
    %v3934 = vunpack.c.l.b16 %v3348
    %v3935 = vunpack.c.h.b16 %v3348
    %v3936 = vunpack.c.l.b16 %v3349
    %v3937 = vunpack.c.h.b16 %v3349
    %v3938 = vunpack.c.l.b16 %v3350
    %v3939 = vunpack.c.h.b16 %v3350
    %v3940 = vunpack.c.l.b16 %v3351
    %v3941 = vunpack.c.h.b16 %v3351
    %v3942 = vunpack.c.l.b16 %v3352
    %v3943 = vunpack.c.h.b16 %v3352
    %v3944 = vunpack.c.l.b16 %v3353
    %v3945 = vunpack.c.h.b16 %v3353
    %v3946 = vunpack.c.l.b16 %v3354
    %v3947 = vunpack.c.h.b16 %v3354
    %v3948 = vunpack.c.l.b16 %v3355
    %v3949 = vunpack.c.h.b16 %v3355
    %v3950 = vunpack.c.l.b16 %v3356
    %v3951 = vunpack.c.h.b16 %v3356
    %v3952 = vunpack.c.l.b16 %v3357
    %v3953 = vunpack.c.h.b16 %v3357
    %v3954 = vunpack.c.l.b16 %v3358
    %v3955 = vunpack.c.h.b16 %v3358
    %v3956 = vunpack.c.l.b16 %v3359
    %v3957 = vunpack.c.h.b16 %v3359
    %v3958 = vunpack.c.l.b16 %v3360
    %v3959 = vunpack.c.h.b16 %v3360
    %v3960 = vunpack.c.l.b16 %v3361
    %v3961 = vunpack.c.h.b16 %v3361
    %v3962 = vunpack.c.l.b16 %v3362
    %v3963 = vunpack.c.h.b16 %v3362
    %v3964 = vunpack.c.l.b16 %v3363
    %v3965 = vunpack.c.h.b16 %v3363
    %v3966 = vunpack.c.l.b16 %v3364
    %v3967 = vunpack.c.h.b16 %v3364
    %v3968 = vunpack.c.l.b16 %v3365
    %v3969 = vunpack.c.h.b16 %v3365
    %v3970 = vunpack.c.l.b16 %v3366
    %v3971 = vunpack.c.h.b16 %v3366
    %v3972 = vunpack.c.l.b16 %v3367
    %v3973 = vunpack.c.h.b16 %v3367
    %v3974 = vunpack.c.l.b16 %v3368
    %v3975 = vunpack.c.h.b16 %v3368
    %v3976 = vunpack.c.l.b16 %v3369
    %v3977 = vunpack.c.h.b16 %v3369
    %v3978 = vunpack.c.l.b16 %v3370
    %v3979 = vunpack.c.h.b16 %v3370
    %v3980 = vunpack.c.l.b16 %v3371
    %v3981 = vunpack.c.h.b16 %v3371
    %v3982 = vunpack.c.l.b16 %v3372
    %v3983 = vunpack.c.h.b16 %v3372
    %v3984 = vunpack.c.l.b16 %v3373
    %v3985 = vunpack.c.h.b16 %v3373
    %v3986 = vunpack.c.l.b16 %v3374
    %v3987 = vunpack.c.h.b16 %v3374
    %v3988 = vunpack.c.l.b16 %v3375
    %v3989 = vunpack.c.h.b16 %v3375
    %v3990 = vunpack.c.l.b16 %v3376
    %v3991 = vunpack.c.h.b16 %v3376
    %v3992 = vunpack.c.l.b16 %v3377
    %v3993 = vunpack.c.h.b16 %v3377
    %v3994 = vunpack.c.l.b16 %v3378
    %v3995 = vunpack.c.h.b16 %v3378
    %v3996 = vunpack.c.l.b16 %v3379
    %v3997 = vunpack.c.h.b16 %v3379
    %v3998 = vunpack.c.l.b16 %v3380
    %v3999 = vunpack.c.h.b16 %v3380
    %v4000 = vpack.c.b16 %v3812, %v3808
    %v4001 = vpack.c.b16 %v3813, %v3809
    %v4002 = vpack.c.b16 %v3814, %v3810
    %v4003 = vpack.c.b16 %v3815, %v3811
    %v4004 = vpack.c.b16 %v3820, %v3816
    %v4005 = vpack.c.b16 %v3821, %v3817
    %v4006 = vpack.c.b16 %v3822, %v3818
    %v4007 = vpack.c.b16 %v3823, %v3819
    %v4008 = vpack.c.b16 %v3828, %v3824
    %v4009 = vpack.c.b16 %v3829, %v3825
    %v4010 = vpack.c.b16 %v3830, %v3826
    %v4011 = vpack.c.b16 %v3831, %v3827
    %v4012 = vpack.c.b16 %v3836, %v3832
    %v4013 = vpack.c.b16 %v3837, %v3833
    %v4014 = vpack.c.b16 %v3838, %v3834
    %v4015 = vpack.c.b16 %v3839, %v3835
    %v4016 = vpack.c.b16 %v3844, %v3840
    %v4017 = vpack.c.b16 %v3845, %v3841
    %v4018 = vpack.c.b16 %v3846, %v3842
    %v4019 = vpack.c.b16 %v3847, %v3843
    %v4020 = vpack.c.b16 %v3852, %v3848
    %v4021 = vpack.c.b16 %v3853, %v3849
    %v4022 = vpack.c.b16 %v3854, %v3850
    %v4023 = vpack.c.b16 %v3855, %v3851
    %v4024 = vpack.c.b16 %v3860, %v3856
    %v4025 = vpack.c.b16 %v3861, %v3857
    %v4026 = vpack.c.b16 %v3862, %v3858
    %v4027 = vpack.c.b16 %v3863, %v3859
    %v4028 = vpack.c.b16 %v3868, %v3864
    %v4029 = vpack.c.b16 %v3869, %v3865
    %v4030 = vpack.c.b16 %v3870, %v3866
    %v4031 = vpack.c.b16 %v3871, %v3867
    %v4032 = vpack.c.b16 %v3876, %v3872
    %v4033 = vpack.c.b16 %v3877, %v3873
    %v4034 = vpack.c.b16 %v3878, %v3874
    %v4035 = vpack.c.b16 %v3879, %v3875
    %v4036 = vpack.c.b16 %v3884, %v3880
    %v4037 = vpack.c.b16 %v3885, %v3881
    %v4038 = vpack.c.b16 %v3886, %v3882
    %v4039 = vpack.c.b16 %v3887, %v3883
    %v4040 = vpack.c.b16 %v3892, %v3888
    %v4041 = vpack.c.b16 %v3893, %v3889
    %v4042 = vpack.c.b16 %v3894, %v3890
    %v4043 = vpack.c.b16 %v3895, %v3891
    %v4044 = vpack.c.b16 %v3900, %v3896
    %v4045 = vpack.c.b16 %v3901, %v3897
    %v4046 = vpack.c.b16 %v3902, %v3898
    %v4047 = vpack.c.b16 %v3903, %v3899
    %v4048 = vpack.c.b16 %v3908, %v3904
    %v4049 = vpack.c.b16 %v3909, %v3905
    %v4050 = vpack.c.b16 %v3910, %v3906
    %v4051 = vpack.c.b16 %v3911, %v3907
    %v4052 = vpack.c.b16 %v3916, %v3912
    %v4053 = vpack.c.b16 %v3917, %v3913
    %v4054 = vpack.c.b16 %v3918, %v3914
    %v4055 = vpack.c.b16 %v3919, %v3915
    %v4056 = vpack.c.b16 %v3924, %v3920
    %v4057 = vpack.c.b16 %v3925, %v3921
    %v4058 = vpack.c.b16 %v3926, %v3922
    %v4059 = vpack.c.b16 %v3927, %v3923
    %v4060 = vpack.c.b16 %v3932, %v3928
    %v4061 = vpack.c.b16 %v3933, %v3929
    %v4062 = vpack.c.b16 %v3934, %v3930
    %v4063 = vpack.c.b16 %v3935, %v3931
    %v4064 = vpack.c.b16 %v3940, %v3936
    %v4065 = vpack.c.b16 %v3941, %v3937
    %v4066 = vpack.c.b16 %v3942, %v3938
    %v4067 = vpack.c.b16 %v3943, %v3939
    %v4068 = vpack.c.b16 %v3948, %v3944
    %v4069 = vpack.c.b16 %v3949, %v3945
    %v4070 = vpack.c.b16 %v3950, %v3946
    %v4071 = vpack.c.b16 %v3951, %v3947
    %v4072 = vpack.c.b16 %v3956, %v3952
    %v4073 = vpack.c.b16 %v3957, %v3953
    %v4074 = vpack.c.b16 %v3958, %v3954
    %v4075 = vpack.c.b16 %v3959, %v3955
    %v4076 = vpack.c.b16 %v3964, %v3960
    %v4077 = vpack.c.b16 %v3965, %v3961
    %v4078 = vpack.c.b16 %v3966, %v3962
    %v4079 = vpack.c.b16 %v3967, %v3963
    %v4080 = vpack.c.b16 %v3972, %v3968
    %v4081 = vpack.c.b16 %v3973, %v3969
    %v4082 = vpack.c.b16 %v3974, %v3970
    %v4083 = vpack.c.b16 %v3975, %v3971
    %v4084 = vpack.c.b16 %v3980, %v3976
    %v4085 = vpack.c.b16 %v3981, %v3977
    %v4086 = vpack.c.b16 %v3982, %v3978
    %v4087 = vpack.c.b16 %v3983, %v3979
    %v4088 = vpack.c.b16 %v3988, %v3984
    %v4089 = vpack.c.b16 %v3989, %v3985
    %v4090 = vpack.c.b16 %v3990, %v3986
    %v4091 = vpack.c.b16 %v3991, %v3987
    %v4092 = vpack.c.b16 %v3996, %v3992
    %v4093 = vpack.c.b16 %v3997, %v3993
    %v4094 = vpack.c.b16 %v3998, %v3994
    %v4095 = vpack.c.b16 %v3999, %v3995
    %4192 = vmatprep.subr.bf16.mxu0 %v4029
    %4193 = vmatpush1.bf16.msra.mxu0 %v4028
    %4194 = vmatprep.subr.bf16.mxu0 %v4025
    %4195 = vmatpush1.bf16.msra.mxu0 %v4024
    %4196 = vmatprep.subr.bf16.mxu0 %v4021
    %4197 = vmatpush1.bf16.msra.mxu0 %v4020
    %4198 = vmatprep.subr.bf16.mxu0 %v4017
    %4199 = vmatpush1.bf16.msra.mxu0 %v4016
    %4200 = vmatprep.subr.bf16.mxu0 %v4013
    %4201 = vmatpush1.bf16.msra.mxu0 %v4012
    %4202 = vmatprep.subr.bf16.mxu0 %v4009
    %4203 = vmatpush1.bf16.msra.mxu0 %v4008
    %4204 = vmatprep.subr.bf16.mxu0 %v4005
    %4205 = vmatpush1.bf16.msra.mxu0 %v4004
    %4206 = vmatprep.subr.bf16.mxu0 %v4001
    %4207 = vmatpush1.bf16.msra.mxu0 %v4000
    %4208 = vmatprep.subr.bf16.mxu0 %v4061
    %4209 = vmatpush2.bf16.msra.mxu0 %v4060
    %4210 = vmatprep.subr.bf16.mxu0 %v4057
    %4211 = vmatpush2.bf16.msra.mxu0 %v4056
    %4212 = vmatprep.subr.bf16.mxu0 %v4053
    %4213 = vmatpush2.bf16.msra.mxu0 %v4052
    %4214 = vmatprep.subr.bf16.mxu0 %v4049
    %4215 = vmatpush2.bf16.msra.mxu0 %v4048
    %4216 = vmatprep.subr.bf16.mxu0 %v4045
    %4217 = vmatpush2.bf16.msra.mxu0 %v4044
    %4218 = vmatprep.subr.bf16.mxu0 %v4041
    %4219 = vmatpush2.bf16.msra.mxu0 %v4040
    %4220 = vmatprep.subr.bf16.mxu0 %v4037
    %4221 = vmatpush2.bf16.msra.mxu0 %v4036
    %4222 = vmatprep.subr.bf16.mxu0 %v4033
    %4223 = vmatpush2.bf16.msra.mxu0 %v4032
    %4224 = vmatprep.mubr.bf16.mxu0 %v3262
    %4225 = vmatmul.mubr.bf16.gmra.mxu0 %v3261
    %v4226 = vpop.f32.mrf.mxu0
    %v4227 = vadd.f32 %v3521, %v4226
    %v4228 = vpop.f32.mrf.mxu0
    %v4229 = vadd.f32 %v3523, %v4228
    %v4230 = vpop.f32.mrf.mxu0
    %v4231 = vadd.f32 %v3525, %v4230
    %v4232 = vpop.f32.mrf.mxu0
    %v4233 = vadd.f32 %v3527, %v4232
    %4234 = vmatprep.mubr.bf16.mxu0 %v3265
    %4235 = vmatmul.mubr.bf16.gmra.mxu0 %v3264
    %v4236 = vpop.f32.mrf.mxu0
    %v4237 = vadd.f32 %v3531, %v4236
    %v4238 = vpop.f32.mrf.mxu0
    %v4239 = vadd.f32 %v3533, %v4238
    %v4240 = vpop.f32.mrf.mxu0
    %v4241 = vadd.f32 %v3535, %v4240
    %v4242 = vpop.f32.mrf.mxu0
    %v4243 = vadd.f32 %v3537, %v4242
    %4244 = vmatprep.mubr.bf16.mxu0 %v3268
    %4245 = vmatmul.mubr.bf16.gmra.mxu0 %v3267
    %v4246 = vpop.f32.mrf.mxu0
    %v4247 = vadd.f32 %v3541, %v4246
    %v4248 = vpop.f32.mrf.mxu0
    %v4249 = vadd.f32 %v3543, %v4248
    %v4250 = vpop.f32.mrf.mxu0
    %v4251 = vadd.f32 %v3545, %v4250
    %v4252 = vpop.f32.mrf.mxu0
    %v4253 = vadd.f32 %v3547, %v4252
    %4254 = vmatprep.mubr.bf16.mxu0 %v3271
    %4255 = vmatmul.mubr.bf16.gmra.mxu0 %v3270
    %v4256 = vpop.f32.mrf.mxu0
    %v4257 = vadd.f32 %v3551, %v4256
    %v4258 = vpop.f32.mrf.mxu0
    %v4259 = vadd.f32 %v3553, %v4258
    %v4260 = vpop.f32.mrf.mxu0
    %v4261 = vadd.f32 %v3555, %v4260
    %v4262 = vpop.f32.mrf.mxu0
    %v4263 = vadd.f32 %v3557, %v4262
    %4264 = vmatprep.mubr.bf16.mxu0 %v3274
    %4265 = vmatmul.mubr.bf16.gmra.mxu0 %v3273
    %v4266 = vpop.f32.mrf.mxu0
    %v4267 = vadd.f32 %v3561, %v4266
    %v4268 = vpop.f32.mrf.mxu0
    %v4269 = vadd.f32 %v3563, %v4268
    %v4270 = vpop.f32.mrf.mxu0
    %v4271 = vadd.f32 %v3565, %v4270
    %v4272 = vpop.f32.mrf.mxu0
    %v4273 = vadd.f32 %v3567, %v4272
    %4274 = vmatprep.mubr.bf16.mxu0 %v3277
    %4275 = vmatmul.mubr.bf16.gmra.mxu0 %v3276
    %v4276 = vpop.f32.mrf.mxu0
    %v4277 = vadd.f32 %v3571, %v4276
    %v4278 = vpop.f32.mrf.mxu0
    %v4279 = vadd.f32 %v3573, %v4278
    %v4280 = vpop.f32.mrf.mxu0
    %v4281 = vadd.f32 %v3575, %v4280
    %v4282 = vpop.f32.mrf.mxu0
    %v4283 = vadd.f32 %v3577, %v4282
    %4284 = vmatprep.mubr.bf16.mxu0 %v3280
    %4285 = vmatmul.mubr.bf16.gmra.mxu0 %v3279
    %v4286 = vpop.f32.mrf.mxu0
    %v4287 = vadd.f32 %v3581, %v4286
    %v4288 = vpop.f32.mrf.mxu0
    %v4289 = vadd.f32 %v3583, %v4288
    %v4290 = vpop.f32.mrf.mxu0
    %v4291 = vadd.f32 %v3585, %v4290
    %v4292 = vpop.f32.mrf.mxu0
    %v4293 = vadd.f32 %v3587, %v4292
    %4294 = vmatprep.mubr.bf16.mxu0 %v3283
    %4295 = vmatmul.mubr.bf16.gmra.mxu0 %v3282
    %v4296 = vpop.f32.mrf.mxu0
    %v4297 = vadd.f32 %v3591, %v4296
    %v4298 = vpop.f32.mrf.mxu0
    %v4299 = vadd.f32 %v3593, %v4298
    %v4300 = vpop.f32.mrf.mxu0
    %v4301 = vadd.f32 %v3595, %v4300
    %v4302 = vpop.f32.mrf.mxu0
    %v4303 = vadd.f32 %v3597, %v4302
    %4304 = vdwg.mxu0
    %4305 = vmatprep.subr.bf16.mxu0 %v4093
    %4306 = vmatpush1.bf16.msra.mxu0 %v4092
    %4307 = vmatprep.subr.bf16.mxu0 %v4089
    %4308 = vmatpush1.bf16.msra.mxu0 %v4088
    %4309 = vmatprep.subr.bf16.mxu0 %v4085
    %4310 = vmatpush1.bf16.msra.mxu0 %v4084
    %4311 = vmatprep.subr.bf16.mxu0 %v4081
    %4312 = vmatpush1.bf16.msra.mxu0 %v4080
    %4313 = vmatprep.subr.bf16.mxu0 %v4077
    %4314 = vmatpush1.bf16.msra.mxu0 %v4076
    %4315 = vmatprep.subr.bf16.mxu0 %v4073
    %4316 = vmatpush1.bf16.msra.mxu0 %v4072
    %4317 = vmatprep.subr.bf16.mxu0 %v4069
    %4318 = vmatpush1.bf16.msra.mxu0 %v4068
    %4319 = vmatprep.subr.bf16.mxu0 %v4065
    %4320 = vmatpush1.bf16.msra.mxu0 %v4064
    %4321 = vmatprep.subr.bf16.mxu0 0
    %4322 = vmatpush2.bf16.msra.mxu0 0
    %4323 = vmatprep.subr.bf16.mxu0 0
    %4324 = vmatpush2.bf16.msra.mxu0 0
    %4325 = vmatprep.subr.bf16.mxu0 0
    %4326 = vmatpush2.bf16.msra.mxu0 0
    %4327 = vmatprep.subr.bf16.mxu0 0
    %4328 = vmatpush2.bf16.msra.mxu0 0
    %4329 = vmatprep.subr.bf16.mxu0 0
    %4330 = vmatpush2.bf16.msra.mxu0 0
    %4331 = vmatprep.subr.bf16.mxu0 0
    %4332 = vmatpush2.bf16.msra.mxu0 0
    %4333 = vmatprep.subr.bf16.mxu0 0
    %4334 = vmatpush2.bf16.msra.mxu0 0
    %4335 = vmatprep.subr.bf16.mxu0 0
    %4336 = vmatpush2.bf16.msra.mxu0 0
    %4337 = vmatprep.mubr.bf16.mxu0 0
    %4338 = vmatmul.mubr.bf16.gmra.mxu0 %v3263
    %v4339 = vpop.f32.mrf.mxu0
    %v4340 = vadd.f32 %v4227, %v4339
    %v4341 = vpop.f32.mrf.mxu0
    %v4342 = vadd.f32 %v4229, %v4341
    %v4343 = vpop.f32.mrf.mxu0
    %v4344 = vadd.f32 %v4231, %v4343
    %v4345 = vpop.f32.mrf.mxu0
    %v4346 = vadd.f32 %v4233, %v4345
    %4347 = vmatprep.mubr.bf16.mxu0 0
    %4348 = vmatmul.mubr.bf16.gmra.mxu0 %v3266
    %v4349 = vpop.f32.mrf.mxu0
    %v4350 = vadd.f32 %v4237, %v4349
    %v4351 = vpop.f32.mrf.mxu0
    %v4352 = vadd.f32 %v4239, %v4351
    %v4353 = vpop.f32.mrf.mxu0
    %v4354 = vadd.f32 %v4241, %v4353
    %v4355 = vpop.f32.mrf.mxu0
    %v4356 = vadd.f32 %v4243, %v4355
    %4357 = vmatprep.mubr.bf16.mxu0 0
    %4358 = vmatmul.mubr.bf16.gmra.mxu0 %v3269
    %v4359 = vpop.f32.mrf.mxu0
    %v4360 = vadd.f32 %v4247, %v4359
    %v4361 = vpop.f32.mrf.mxu0
    %v4362 = vadd.f32 %v4249, %v4361
    %v4363 = vpop.f32.mrf.mxu0
    %v4364 = vadd.f32 %v4251, %v4363
    %v4365 = vpop.f32.mrf.mxu0
    %v4366 = vadd.f32 %v4253, %v4365
    %4367 = vmatprep.mubr.bf16.mxu0 0
    %4368 = vmatmul.mubr.bf16.gmra.mxu0 %v3272
    %v4369 = vpop.f32.mrf.mxu0
    %v4370 = vadd.f32 %v4257, %v4369
    %v4371 = vpop.f32.mrf.mxu0
    %v4372 = vadd.f32 %v4259, %v4371
    %v4373 = vpop.f32.mrf.mxu0
    %v4374 = vadd.f32 %v4261, %v4373
    %v4375 = vpop.f32.mrf.mxu0
    %v4376 = vadd.f32 %v4263, %v4375
    %4377 = vmatprep.mubr.bf16.mxu0 0
    %4378 = vmatmul.mubr.bf16.gmra.mxu0 %v3275
    %v4379 = vpop.f32.mrf.mxu0
    %v4380 = vadd.f32 %v4267, %v4379
    %v4381 = vpop.f32.mrf.mxu0
    %v4382 = vadd.f32 %v4269, %v4381
    %v4383 = vpop.f32.mrf.mxu0
    %v4384 = vadd.f32 %v4271, %v4383
    %v4385 = vpop.f32.mrf.mxu0
    %v4386 = vadd.f32 %v4273, %v4385
    %4387 = vmatprep.mubr.bf16.mxu0 0
    %4388 = vmatmul.mubr.bf16.gmra.mxu0 %v3278
    %v4389 = vpop.f32.mrf.mxu0
    %v4390 = vadd.f32 %v4277, %v4389
    %v4391 = vpop.f32.mrf.mxu0
    %v4392 = vadd.f32 %v4279, %v4391
    %v4393 = vpop.f32.mrf.mxu0
    %v4394 = vadd.f32 %v4281, %v4393
    %v4395 = vpop.f32.mrf.mxu0
    %v4396 = vadd.f32 %v4283, %v4395
    %4397 = vmatprep.mubr.bf16.mxu0 0
    %4398 = vmatmul.mubr.bf16.gmra.mxu0 %v3281
    %v4399 = vpop.f32.mrf.mxu0
    %v4400 = vadd.f32 %v4287, %v4399
    %v4401 = vpop.f32.mrf.mxu0
    %v4402 = vadd.f32 %v4289, %v4401
    %v4403 = vpop.f32.mrf.mxu0
    %v4404 = vadd.f32 %v4291, %v4403
    %v4405 = vpop.f32.mrf.mxu0
    %v4406 = vadd.f32 %v4293, %v4405
    %4407 = vmatprep.mubr.bf16.mxu0 0
    %4408 = vmatmul.mubr.bf16.gmra.mxu0 %v3284
    %v4409 = vpop.f32.mrf.mxu0
    %v4410 = vadd.f32 %v4297, %v4409
    %v4411 = vpop.f32.mrf.mxu0
    %v4412 = vadd.f32 %v4299, %v4411
    %v4413 = vpop.f32.mrf.mxu0
    %v4414 = vadd.f32 %v4301, %v4413
    %v4415 = vpop.f32.mrf.mxu0
    %v4416 = vadd.f32 %v4303, %v4415
    %4417 = vdwg.mxu0
    %4418 = vmatprep.subr.bf16.mxu0 %v4031
    %4419 = vmatpush1.bf16.msra.mxu0 %v4030
    %4420 = vmatprep.subr.bf16.mxu0 %v4027
    %4421 = vmatpush1.bf16.msra.mxu0 %v4026
    %4422 = vmatprep.subr.bf16.mxu0 %v4023
    %4423 = vmatpush1.bf16.msra.mxu0 %v4022
    %4424 = vmatprep.subr.bf16.mxu0 %v4019
    %4425 = vmatpush1.bf16.msra.mxu0 %v4018
    %4426 = vmatprep.subr.bf16.mxu0 %v4015
    %4427 = vmatpush1.bf16.msra.mxu0 %v4014
    %4428 = vmatprep.subr.bf16.mxu0 %v4011
    %4429 = vmatpush1.bf16.msra.mxu0 %v4010
    %4430 = vmatprep.subr.bf16.mxu0 %v4007
    %4431 = vmatpush1.bf16.msra.mxu0 %v4006
    %4432 = vmatprep.subr.bf16.mxu0 %v4003
    %4433 = vmatpush1.bf16.msra.mxu0 %v4002
    %4434 = vmatprep.subr.bf16.mxu0 %v4063
    %4435 = vmatpush2.bf16.msra.mxu0 %v4062
    %4436 = vmatprep.subr.bf16.mxu0 %v4059
    %4437 = vmatpush2.bf16.msra.mxu0 %v4058
    %4438 = vmatprep.subr.bf16.mxu0 %v4055
    %4439 = vmatpush2.bf16.msra.mxu0 %v4054
    %4440 = vmatprep.subr.bf16.mxu0 %v4051
    %4441 = vmatpush2.bf16.msra.mxu0 %v4050
    %4442 = vmatprep.subr.bf16.mxu0 %v4047
    %4443 = vmatpush2.bf16.msra.mxu0 %v4046
    %4444 = vmatprep.subr.bf16.mxu0 %v4043
    %4445 = vmatpush2.bf16.msra.mxu0 %v4042
    %4446 = vmatprep.subr.bf16.mxu0 %v4039
    %4447 = vmatpush2.bf16.msra.mxu0 %v4038
    %4448 = vmatprep.subr.bf16.mxu0 %v4035
    %4449 = vmatpush2.bf16.msra.mxu0 %v4034
    %4450 = vmatprep.mubr.bf16.mxu0 %v3262
    %4451 = vmatmul.mubr.bf16.gmra.mxu0 %v3261
    %v4452 = vpop.f32.mrf.mxu0
    %v4453 = vadd.f32 %v3634, %v4452
    %v4454 = vpop.f32.mrf.mxu0
    %v4455 = vadd.f32 %v3636, %v4454
    %v4456 = vpop.f32.mrf.mxu0
    %v4457 = vadd.f32 %v3638, %v4456
    %v4458 = vpop.f32.mrf.mxu0
    %v4459 = vadd.f32 %v3640, %v4458
    %4460 = vmatprep.mubr.bf16.mxu0 %v3265
    %4461 = vmatmul.mubr.bf16.gmra.mxu0 %v3264
    %v4462 = vpop.f32.mrf.mxu0
    %v4463 = vadd.f32 %v3644, %v4462
    %v4464 = vpop.f32.mrf.mxu0
    %v4465 = vadd.f32 %v3646, %v4464
    %v4466 = vpop.f32.mrf.mxu0
    %v4467 = vadd.f32 %v3648, %v4466
    %v4468 = vpop.f32.mrf.mxu0
    %v4469 = vadd.f32 %v3650, %v4468
    %4470 = vmatprep.mubr.bf16.mxu0 %v3268
    %4471 = vmatmul.mubr.bf16.gmra.mxu0 %v3267
    %v4472 = vpop.f32.mrf.mxu0
    %v4473 = vadd.f32 %v3654, %v4472
    %v4474 = vpop.f32.mrf.mxu0
    %v4475 = vadd.f32 %v3656, %v4474
    %v4476 = vpop.f32.mrf.mxu0
    %v4477 = vadd.f32 %v3658, %v4476
    %v4478 = vpop.f32.mrf.mxu0
    %v4479 = vadd.f32 %v3660, %v4478
    %4480 = vmatprep.mubr.bf16.mxu0 %v3271
    %4481 = vmatmul.mubr.bf16.gmra.mxu0 %v3270
    %v4482 = vpop.f32.mrf.mxu0
    %v4483 = vadd.f32 %v3664, %v4482
    %v4484 = vpop.f32.mrf.mxu0
    %v4485 = vadd.f32 %v3666, %v4484
    %v4486 = vpop.f32.mrf.mxu0
    %v4487 = vadd.f32 %v3668, %v4486
    %v4488 = vpop.f32.mrf.mxu0
    %v4489 = vadd.f32 %v3670, %v4488
    %4490 = vmatprep.mubr.bf16.mxu0 %v3274
    %4491 = vmatmul.mubr.bf16.gmra.mxu0 %v3273
    %v4492 = vpop.f32.mrf.mxu0
    %v4493 = vadd.f32 %v3674, %v4492
    %v4494 = vpop.f32.mrf.mxu0
    %v4495 = vadd.f32 %v3676, %v4494
    %v4496 = vpop.f32.mrf.mxu0
    %v4497 = vadd.f32 %v3678, %v4496
    %v4498 = vpop.f32.mrf.mxu0
    %v4499 = vadd.f32 %v3680, %v4498
    %4500 = vmatprep.mubr.bf16.mxu0 %v3277
    %4501 = vmatmul.mubr.bf16.gmra.mxu0 %v3276
    %v4502 = vpop.f32.mrf.mxu0
    %v4503 = vadd.f32 %v3684, %v4502
    %v4504 = vpop.f32.mrf.mxu0
    %v4505 = vadd.f32 %v3686, %v4504
    %v4506 = vpop.f32.mrf.mxu0
    %v4507 = vadd.f32 %v3688, %v4506
    %v4508 = vpop.f32.mrf.mxu0
    %v4509 = vadd.f32 %v3690, %v4508
    %4510 = vmatprep.mubr.bf16.mxu0 %v3280
    %4511 = vmatmul.mubr.bf16.gmra.mxu0 %v3279
    %v4512 = vpop.f32.mrf.mxu0
    %v4513 = vadd.f32 %v3694, %v4512
    %v4514 = vpop.f32.mrf.mxu0
    %v4515 = vadd.f32 %v3696, %v4514
    %v4516 = vpop.f32.mrf.mxu0
    %v4517 = vadd.f32 %v3698, %v4516
    %v4518 = vpop.f32.mrf.mxu0
    %v4519 = vadd.f32 %v3700, %v4518
    %4520 = vmatprep.mubr.bf16.mxu0 %v3283
    %4521 = vmatmul.mubr.bf16.gmra.mxu0 %v3282
    %v4522 = vpop.f32.mrf.mxu0
    %v4523 = vadd.f32 %v3704, %v4522
    %v4524 = vpop.f32.mrf.mxu0
    %v4525 = vadd.f32 %v3706, %v4524
    %v4526 = vpop.f32.mrf.mxu0
    %v4527 = vadd.f32 %v3708, %v4526
    %v4528 = vpop.f32.mrf.mxu0
    %v4529 = vadd.f32 %v3710, %v4528
    %4530 = vdwg.mxu0
    %4531 = vmatprep.subr.bf16.mxu0 %v4095
    %4532 = vmatpush1.bf16.msra.mxu0 %v4094
    %4533 = vmatprep.subr.bf16.mxu0 %v4091
    %4534 = vmatpush1.bf16.msra.mxu0 %v4090
    %4535 = vmatprep.subr.bf16.mxu0 %v4087
    %4536 = vmatpush1.bf16.msra.mxu0 %v4086
    %4537 = vmatprep.subr.bf16.mxu0 %v4083
    %4538 = vmatpush1.bf16.msra.mxu0 %v4082
    %4539 = vmatprep.subr.bf16.mxu0 %v4079
    %4540 = vmatpush1.bf16.msra.mxu0 %v4078
    %4541 = vmatprep.subr.bf16.mxu0 %v4075
    %4542 = vmatpush1.bf16.msra.mxu0 %v4074
    %4543 = vmatprep.subr.bf16.mxu0 %v4071
    %4544 = vmatpush1.bf16.msra.mxu0 %v4070
    %4545 = vmatprep.subr.bf16.mxu0 %v4067
    %4546 = vmatpush1.bf16.msra.mxu0 %v4066
    %4547 = vmatprep.subr.bf16.mxu0 0
    %4548 = vmatpush2.bf16.msra.mxu0 0
    %4549 = vmatprep.subr.bf16.mxu0 0
    %4550 = vmatpush2.bf16.msra.mxu0 0
    %4551 = vmatprep.subr.bf16.mxu0 0
    %4552 = vmatpush2.bf16.msra.mxu0 0
    %4553 = vmatprep.subr.bf16.mxu0 0
    %4554 = vmatpush2.bf16.msra.mxu0 0
    %4555 = vmatprep.subr.bf16.mxu0 0
    %4556 = vmatpush2.bf16.msra.mxu0 0
    %4557 = vmatprep.subr.bf16.mxu0 0
    %4558 = vmatpush2.bf16.msra.mxu0 0
    %4559 = vmatprep.subr.bf16.mxu0 0
    %4560 = vmatpush2.bf16.msra.mxu0 0
    %4561 = vmatprep.subr.bf16.mxu0 0
    %4562 = vmatpush2.bf16.msra.mxu0 0
    %4563 = vmatprep.mubr.bf16.mxu0 0
    %4564 = vmatmul.mubr.bf16.gmra.mxu0 %v3263
    %v4565 = vpop.f32.mrf.mxu0
    %v4566 = vadd.f32 %v4453, %v4565
    %v4567 = vpop.f32.mrf.mxu0
    %v4568 = vadd.f32 %v4455, %v4567
    %v4569 = vpop.f32.mrf.mxu0
    %v4570 = vadd.f32 %v4457, %v4569
    %v4571 = vpop.f32.mrf.mxu0
    %v4572 = vadd.f32 %v4459, %v4571
    %4573 = vmatprep.mubr.bf16.mxu0 0
    %4574 = vmatmul.mubr.bf16.gmra.mxu0 %v3266
    %v4575 = vpop.f32.mrf.mxu0
    %v4576 = vadd.f32 %v4463, %v4575
    %v4577 = vpop.f32.mrf.mxu0
    %v4578 = vadd.f32 %v4465, %v4577
    %v4579 = vpop.f32.mrf.mxu0
    %v4580 = vadd.f32 %v4467, %v4579
    %v4581 = vpop.f32.mrf.mxu0
    %v4582 = vadd.f32 %v4469, %v4581
    %4583 = vmatprep.mubr.bf16.mxu0 0
    %4584 = vmatmul.mubr.bf16.gmra.mxu0 %v3269
    %v4585 = vpop.f32.mrf.mxu0
    %v4586 = vadd.f32 %v4473, %v4585
    %v4587 = vpop.f32.mrf.mxu0
    %v4588 = vadd.f32 %v4475, %v4587
    %v4589 = vpop.f32.mrf.mxu0
    %v4590 = vadd.f32 %v4477, %v4589
    %v4591 = vpop.f32.mrf.mxu0
    %v4592 = vadd.f32 %v4479, %v4591
    %4593 = vmatprep.mubr.bf16.mxu0 0
    %4594 = vmatmul.mubr.bf16.gmra.mxu0 %v3272
    %v4595 = vpop.f32.mrf.mxu0
    %v4596 = vadd.f32 %v4483, %v4595
    %v4597 = vpop.f32.mrf.mxu0
    %v4598 = vadd.f32 %v4485, %v4597
    %v4599 = vpop.f32.mrf.mxu0
    %v4600 = vadd.f32 %v4487, %v4599
    %v4601 = vpop.f32.mrf.mxu0
    %v4602 = vadd.f32 %v4489, %v4601
    %4603 = vmatprep.mubr.bf16.mxu0 0
    %4604 = vmatmul.mubr.bf16.gmra.mxu0 %v3275
    %v4605 = vpop.f32.mrf.mxu0
    %v4606 = vadd.f32 %v4493, %v4605
    %v4607 = vpop.f32.mrf.mxu0
    %v4608 = vadd.f32 %v4495, %v4607
    %v4609 = vpop.f32.mrf.mxu0
    %v4610 = vadd.f32 %v4497, %v4609
    %v4611 = vpop.f32.mrf.mxu0
    %v4612 = vadd.f32 %v4499, %v4611
    %4613 = vmatprep.mubr.bf16.mxu0 0
    %4614 = vmatmul.mubr.bf16.gmra.mxu0 %v3278
    %v4615 = vpop.f32.mrf.mxu0
    %v4616 = vadd.f32 %v4503, %v4615
    %v4617 = vpop.f32.mrf.mxu0
    %v4618 = vadd.f32 %v4505, %v4617
    %v4619 = vpop.f32.mrf.mxu0
    %v4620 = vadd.f32 %v4507, %v4619
    %v4621 = vpop.f32.mrf.mxu0
    %v4622 = vadd.f32 %v4509, %v4621
    %4623 = vmatprep.mubr.bf16.mxu0 0
    %4624 = vmatmul.mubr.bf16.gmra.mxu0 %v3281
    %v4625 = vpop.f32.mrf.mxu0
    %v4626 = vadd.f32 %v4513, %v4625
    %v4627 = vpop.f32.mrf.mxu0
    %v4628 = vadd.f32 %v4515, %v4627
    %v4629 = vpop.f32.mrf.mxu0
    %v4630 = vadd.f32 %v4517, %v4629
    %v4631 = vpop.f32.mrf.mxu0
    %v4632 = vadd.f32 %v4519, %v4631
    %4633 = vmatprep.mubr.bf16.mxu0 0
    %4634 = vmatmul.mubr.bf16.gmra.mxu0 %v3284
    %v4635 = vpop.f32.mrf.mxu0
    %v4636 = vadd.f32 %v4523, %v4635
    %v4637 = vpop.f32.mrf.mxu0
    %v4638 = vadd.f32 %v4525, %v4637
    %v4639 = vpop.f32.mrf.mxu0
    %v4640 = vadd.f32 %v4527, %v4639
    %v4641 = vpop.f32.mrf.mxu0
    %v4642 = vadd.f32 %v4529, %v4641
    %4643 = vdwg.mxu0
    %v4644 = vld [vmem:[%s14] sm:$0xf]
    %v4646 = vlaneseq
    %v4647 = vshrl.u32 %v4646, 7
    %v4648 = vsub.s32 0, %v4647
    %v4649 = vrot.slane %v4644, %v4648
    %v4650 = vlaneseq
    %v4651 = vshrl.u32 %v4650, 7
    %v4652 = vsub.s32 1, %v4651
    %v4653 = vrot.slane %v4644, %v4652
    %v4654 = vlaneseq
    %v4655 = vshrl.u32 %v4654, 7
    %v4656 = vsub.s32 2, %v4655
    %v4657 = vrot.slane %v4644, %v4656
    %v4658 = vlaneseq
    %v4659 = vshrl.u32 %v4658, 7
    %v4660 = vsub.s32 3, %v4659
    %v4661 = vrot.slane %v4644, %v4660
    %v4666 = vadd.f32 %v4340, %v4649
    %v4667 = vadd.f32 %v4342, %v4653
    %v4668 = vadd.f32 %v4566, %v4657
    %v4669 = vadd.f32 %v4568, %v4661
    %v4670 = vadd.f32 %v4344, %v4649
    %v4671 = vadd.f32 %v4346, %v4653
    %v4672 = vadd.f32 %v4570, %v4657
    %v4673 = vadd.f32 %v4572, %v4661
    %v4674 = vadd.f32 %v4350, %v4649
    %v4675 = vadd.f32 %v4352, %v4653
    %v4676 = vadd.f32 %v4576, %v4657
    %v4677 = vadd.f32 %v4578, %v4661
    %v4678 = vadd.f32 %v4354, %v4649
    %v4679 = vadd.f32 %v4356, %v4653
    %v4680 = vadd.f32 %v4580, %v4657
    %v4681 = vadd.f32 %v4582, %v4661
    %v4682 = vadd.f32 %v4360, %v4649
    %v4683 = vadd.f32 %v4362, %v4653
    %v4684 = vadd.f32 %v4586, %v4657
    %v4685 = vadd.f32 %v4588, %v4661
    %v4686 = vadd.f32 %v4364, %v4649
    %v4687 = vadd.f32 %v4366, %v4653
    %v4688 = vadd.f32 %v4590, %v4657
    %v4689 = vadd.f32 %v4592, %v4661
    %v4690 = vadd.f32 %v4370, %v4649
    %v4691 = vadd.f32 %v4372, %v4653
    %v4692 = vadd.f32 %v4596, %v4657
    %v4693 = vadd.f32 %v4598, %v4661
    %v4694 = vadd.f32 %v4374, %v4649
    %v4695 = vadd.f32 %v4376, %v4653
    %v4696 = vadd.f32 %v4600, %v4657
    %v4697 = vadd.f32 %v4602, %v4661
    %v4698 = vadd.f32 %v4380, %v4649
    %v4699 = vadd.f32 %v4382, %v4653
    %v4700 = vadd.f32 %v4606, %v4657
    %v4701 = vadd.f32 %v4608, %v4661
    %v4702 = vadd.f32 %v4384, %v4649
    %v4703 = vadd.f32 %v4386, %v4653
    %v4704 = vadd.f32 %v4610, %v4657
    %v4705 = vadd.f32 %v4612, %v4661
    %v4706 = vadd.f32 %v4390, %v4649
    %v4707 = vadd.f32 %v4392, %v4653
    %v4708 = vadd.f32 %v4616, %v4657
    %v4709 = vadd.f32 %v4618, %v4661
    %v4710 = vadd.f32 %v4394, %v4649
    %v4711 = vadd.f32 %v4396, %v4653
    %v4712 = vadd.f32 %v4620, %v4657
    %v4713 = vadd.f32 %v4622, %v4661
    %v4714 = vadd.f32 %v4400, %v4649
    %v4715 = vadd.f32 %v4402, %v4653
    %v4716 = vadd.f32 %v4626, %v4657
    %v4717 = vadd.f32 %v4628, %v4661
    %v4718 = vadd.f32 %v4404, %v4649
    %v4719 = vadd.f32 %v4406, %v4653
    %v4720 = vadd.f32 %v4630, %v4657
    %v4721 = vadd.f32 %v4632, %v4661
    %v4722 = vadd.f32 %v4410, %v4649
    %v4723 = vadd.f32 %v4412, %v4653
    %v4724 = vadd.f32 %v4636, %v4657
    %v4725 = vadd.f32 %v4638, %v4661
    %v4726 = vadd.f32 %v4414, %v4649
    %v4727 = vadd.f32 %v4416, %v4653
    %v4728 = vadd.f32 %v4640, %v4657
    %v4729 = vadd.f32 %v4642, %v4661
    %v4730 = vmax.f32 %v4666, 0.0
    %v4731 = vmax.f32 %v4667, 0.0
    %v4732 = vmax.f32 %v4668, 0.0
    %v4733 = vmax.f32 %v4669, 0.0
    %v4734 = vmax.f32 %v4670, 0.0
    %v4735 = vmax.f32 %v4671, 0.0
    %v4736 = vmax.f32 %v4672, 0.0
    %v4737 = vmax.f32 %v4673, 0.0
    %v4738 = vmax.f32 %v4674, 0.0
    %v4739 = vmax.f32 %v4675, 0.0
    %v4740 = vmax.f32 %v4676, 0.0
    %v4741 = vmax.f32 %v4677, 0.0
    %v4742 = vmax.f32 %v4678, 0.0
    %v4743 = vmax.f32 %v4679, 0.0
    %v4744 = vmax.f32 %v4680, 0.0
    %v4745 = vmax.f32 %v4681, 0.0
    %v4746 = vmax.f32 %v4682, 0.0
    %v4747 = vmax.f32 %v4683, 0.0
    %v4748 = vmax.f32 %v4684, 0.0
    %v4749 = vmax.f32 %v4685, 0.0
    %v4750 = vmax.f32 %v4686, 0.0
    %v4751 = vmax.f32 %v4687, 0.0
    %v4752 = vmax.f32 %v4688, 0.0
    %v4753 = vmax.f32 %v4689, 0.0
    %v4754 = vmax.f32 %v4690, 0.0
    %v4755 = vmax.f32 %v4691, 0.0
    %v4756 = vmax.f32 %v4692, 0.0
    %v4757 = vmax.f32 %v4693, 0.0
    %v4758 = vmax.f32 %v4694, 0.0
    %v4759 = vmax.f32 %v4695, 0.0
    %v4760 = vmax.f32 %v4696, 0.0
    %v4761 = vmax.f32 %v4697, 0.0
    %v4762 = vmax.f32 %v4698, 0.0
    %v4763 = vmax.f32 %v4699, 0.0
    %v4764 = vmax.f32 %v4700, 0.0
    %v4765 = vmax.f32 %v4701, 0.0
    %v4766 = vmax.f32 %v4702, 0.0
    %v4767 = vmax.f32 %v4703, 0.0
    %v4768 = vmax.f32 %v4704, 0.0
    %v4769 = vmax.f32 %v4705, 0.0
    %v4770 = vmax.f32 %v4706, 0.0
    %v4771 = vmax.f32 %v4707, 0.0
    %v4772 = vmax.f32 %v4708, 0.0
    %v4773 = vmax.f32 %v4709, 0.0
    %v4774 = vmax.f32 %v4710, 0.0
    %v4775 = vmax.f32 %v4711, 0.0
    %v4776 = vmax.f32 %v4712, 0.0
    %v4777 = vmax.f32 %v4713, 0.0
    %v4778 = vmax.f32 %v4714, 0.0
    %v4779 = vmax.f32 %v4715, 0.0
    %v4780 = vmax.f32 %v4716, 0.0
    %v4781 = vmax.f32 %v4717, 0.0
    %v4782 = vmax.f32 %v4718, 0.0
    %v4783 = vmax.f32 %v4719, 0.0
    %v4784 = vmax.f32 %v4720, 0.0
    %v4785 = vmax.f32 %v4721, 0.0
    %v4786 = vmax.f32 %v4722, 0.0
    %v4787 = vmax.f32 %v4723, 0.0
    %v4788 = vmax.f32 %v4724, 0.0
    %v4789 = vmax.f32 %v4725, 0.0
    %v4790 = vmax.f32 %v4726, 0.0
    %v4791 = vmax.f32 %v4727, 0.0
    %v4792 = vmax.f32 %v4728, 0.0
    %v4793 = vmax.f32 %v4729, 0.0
    %v4794 = vpack.c.bf16 %v4734, %v4730
    %v4795 = vpack.c.bf16 %v4735, %v4731
    %v4796 = vpack.c.bf16 %v4736, %v4732
    %v4797 = vpack.c.bf16 %v4737, %v4733
    %v4798 = vpack.c.bf16 %v4742, %v4738
    %v4799 = vpack.c.bf16 %v4743, %v4739
    %v4800 = vpack.c.bf16 %v4744, %v4740
    %v4801 = vpack.c.bf16 %v4745, %v4741
    %v4802 = vpack.c.bf16 %v4750, %v4746
    %v4803 = vpack.c.bf16 %v4751, %v4747
    %v4804 = vpack.c.bf16 %v4752, %v4748
    %v4805 = vpack.c.bf16 %v4753, %v4749
    %v4806 = vpack.c.bf16 %v4758, %v4754
    %v4807 = vpack.c.bf16 %v4759, %v4755
    %v4808 = vpack.c.bf16 %v4760, %v4756
    %v4809 = vpack.c.bf16 %v4761, %v4757
    %v4810 = vpack.c.bf16 %v4766, %v4762
    %v4811 = vpack.c.bf16 %v4767, %v4763
    %v4812 = vpack.c.bf16 %v4768, %v4764
    %v4813 = vpack.c.bf16 %v4769, %v4765
    %v4814 = vpack.c.bf16 %v4774, %v4770
    %v4815 = vpack.c.bf16 %v4775, %v4771
    %v4816 = vpack.c.bf16 %v4776, %v4772
    %v4817 = vpack.c.bf16 %v4777, %v4773
    %v4818 = vpack.c.bf16 %v4782, %v4778
    %v4819 = vpack.c.bf16 %v4783, %v4779
    %v4820 = vpack.c.bf16 %v4784, %v4780
    %v4821 = vpack.c.bf16 %v4785, %v4781
    %v4822 = vpack.c.bf16 %v4790, %v4786
    %v4823 = vpack.c.bf16 %v4791, %v4787
    %v4824 = vpack.c.bf16 %v4792, %v4788
    %v4825 = vpack.c.bf16 %v4793, %v4789
    %v4826 = vld [vmem:[#allocation9] sm:$0xff]
    %v4827 = vld [vmem:[#allocation9 + $0x8] sm:$0xff]
    %v4828 = vld [vmem:[#allocation9 + $0x10] sm:$0xff]
    %v4829 = vld [vmem:[#allocation9 + $0x18] sm:$0xff]
    %v4830 = vld [vmem:[#allocation9 + $0x20] sm:$0xff]
    %v4831 = vld [vmem:[#allocation9 + $0x28] sm:$0xff]
    %v4832 = vld [vmem:[#allocation9 + $0x30] sm:$0xff]
    %v4833 = vld [vmem:[#allocation9 + $0x38] sm:$0xff]
    %v4834 = vld [vmem:[#allocation9 + $0x40] sm:$0xff]
    %v4835 = vld [vmem:[#allocation9 + $0x48] sm:$0xff]
    %v4836 = vld [vmem:[#allocation9 + $0x50] sm:$0xff]
    %v4837 = vld [vmem:[#allocation9 + $0x58] sm:$0xff]
    %v4838 = vld [vmem:[#allocation9 + $0x60] sm:$0xff]
    %v4839 = vld [vmem:[#allocation9 + $0x68] sm:$0xff]
    %v4840 = vld [vmem:[#allocation9 + $0x70] sm:$0xff]
    %v4841 = vld [vmem:[#allocation9 + $0x78] sm:$0xff]
    %v4842 = vld [vmem:[#allocation9 + $0x80] sm:$0xff]
    %v4843 = vld [vmem:[#allocation9 + $0x88] sm:$0xff]
    %v4844 = vld [vmem:[#allocation9 + $0x90] sm:$0xff]
    %v4845 = vld [vmem:[#allocation9 + $0x98] sm:$0xff]
    %v4846 = vld [vmem:[#allocation9 + $0xa0] sm:$0xff]
    %v4847 = vld [vmem:[#allocation9 + $0xa8] sm:$0xff]
    %v4848 = vld [vmem:[#allocation9 + $0xb0] sm:$0xff]
    %v4849 = vld [vmem:[#allocation9 + $0xb8] sm:$0xff]
    %v4850 = vld [vmem:[#allocation9 + $0xc0] sm:$0xff]
    %v4851 = vld [vmem:[#allocation9 + $0xc8] sm:$0xff]
    %v4852 = vld [vmem:[#allocation9 + $0xd0] sm:$0xff]
    %v4853 = vld [vmem:[#allocation9 + $0xd8] sm:$0xff]
    %v4854 = vld [vmem:[#allocation9 + $0xe0] sm:$0xff]
    %v4855 = vld [vmem:[#allocation9 + $0xe8] sm:$0xff]
    %v4856 = vld [vmem:[#allocation9 + $0xf0] sm:$0xff]
    %v4857 = vld [vmem:[#allocation9 + $0xf8] sm:$0xff]
    %v4858 = vld [vmem:[#allocation9 + $0x100] sm:$0xff]
    %v4859 = vld [vmem:[#allocation9 + $0x108] sm:$0xff]
    %v4860 = vld [vmem:[#allocation9 + $0x110] sm:$0xff]
    %v4861 = vld [vmem:[#allocation9 + $0x118] sm:$0xff]
    %v4862 = vld [vmem:[#allocation9 + $0x120] sm:$0xff]
    %v4863 = vld [vmem:[#allocation9 + $0x128] sm:$0xff]
    %v4864 = vld [vmem:[#allocation9 + $0x130] sm:$0xff]
    %v4865 = vld [vmem:[#allocation9 + $0x138] sm:$0xff]
    %v4866 = vld [vmem:[#allocation9 + $0x140] sm:$0xff]
    %v4867 = vld [vmem:[#allocation9 + $0x148] sm:$0xff]
    %v4868 = vld [vmem:[#allocation9 + $0x150] sm:$0xff]
    %v4869 = vld [vmem:[#allocation9 + $0x158] sm:$0xff]
    %v4870 = vld [vmem:[#allocation9 + $0x160] sm:$0xff]
    %v4871 = vld [vmem:[#allocation9 + $0x168] sm:$0xff]
    %v4872 = vld [vmem:[#allocation9 + $0x170] sm:$0xff]
    %v4873 = vld [vmem:[#allocation9 + $0x178] sm:$0xff]
    %v4874 = vld [vmem:[#allocation9 + $0x180] sm:$0xff]
    %v4875 = vld [vmem:[#allocation9 + $0x188] sm:$0xff]
    %v4876 = vld [vmem:[#allocation9 + $0x190] sm:$0xff]
    %v4877 = vld [vmem:[#allocation9 + $0x198] sm:$0xff]
    %v4878 = vld [vmem:[#allocation9 + $0x1a0] sm:$0xff]
    %v4879 = vld [vmem:[#allocation9 + $0x1a8] sm:$0xff]
    %v4880 = vld [vmem:[#allocation9 + $0x1b0] sm:$0xff]
    %v4881 = vld [vmem:[#allocation9 + $0x1b8] sm:$0xff]
    %v4882 = vld [vmem:[#allocation9 + $0x1c0] sm:$0xff]
    %v4883 = vld [vmem:[#allocation9 + $0x1c8] sm:$0xff]
    %v4884 = vld [vmem:[#allocation9 + $0x1d0] sm:$0xff]
    %v4885 = vld [vmem:[#allocation9 + $0x1d8] sm:$0xff]
    %v4886 = vld [vmem:[#allocation9 + $0x1e0] sm:$0xff]
    %v4887 = vld [vmem:[#allocation9 + $0x1e8] sm:$0xff]
    %v4888 = vld [vmem:[#allocation9 + $0x1f0] sm:$0xff]
    %v4889 = vld [vmem:[#allocation9 + $0x1f8] sm:$0xff]
    %v4890 = vld [vmem:[#allocation9 + $0x200] sm:$0xff]
    %v4891 = vld [vmem:[#allocation9 + $0x208] sm:$0xff]
    %v4892 = vld [vmem:[#allocation9 + $0x210] sm:$0xff]
    %v4893 = vld [vmem:[#allocation9 + $0x218] sm:$0xff]
    %v4894 = vld [vmem:[#allocation9 + $0x220] sm:$0xff]
    %v4895 = vld [vmem:[#allocation9 + $0x228] sm:$0xff]
    %v4896 = vld [vmem:[#allocation9 + $0x230] sm:$0xff]
    %v4897 = vld [vmem:[#allocation9 + $0x238] sm:$0xff]
    %v4898 = vld [vmem:[#allocation9 + $0x240] sm:$0xff]
    %v4899 = vld [vmem:[#allocation9 + $0x248] sm:$0xff]
    %v4900 = vld [vmem:[#allocation9 + $0x250] sm:$0xff]
    %v4901 = vld [vmem:[#allocation9 + $0x258] sm:$0xff]
    %v4902 = vld [vmem:[#allocation9 + $0x260] sm:$0xff]
    %v4903 = vld [vmem:[#allocation9 + $0x268] sm:$0xff]
    %v4904 = vld [vmem:[#allocation9 + $0x270] sm:$0xff]
    %v4905 = vld [vmem:[#allocation9 + $0x278] sm:$0xff]
    %v4906 = vld [vmem:[#allocation9 + $0x280] sm:$0xff]
    %v4907 = vld [vmem:[#allocation9 + $0x288] sm:$0xff]
    %v4908 = vld [vmem:[#allocation9 + $0x290] sm:$0xff]
    %v4909 = vld [vmem:[#allocation9 + $0x298] sm:$0xff]
    %v4910 = vld [vmem:[#allocation9 + $0x2a0] sm:$0xff]
    %v4911 = vld [vmem:[#allocation9 + $0x2a8] sm:$0xff]
    %v4912 = vld [vmem:[#allocation9 + $0x2b0] sm:$0xff]
    %v4913 = vld [vmem:[#allocation9 + $0x2b8] sm:$0xff]
    %v4914 = vld [vmem:[#allocation9 + $0x2c0] sm:$0xff]
    %v4915 = vld [vmem:[#allocation9 + $0x2c8] sm:$0xff]
    %v4916 = vld [vmem:[#allocation9 + $0x2d0] sm:$0xff]
    %v4917 = vld [vmem:[#allocation9 + $0x2d8] sm:$0xff]
    %v4918 = vld [vmem:[#allocation9 + $0x2e0] sm:$0xff]
    %v4919 = vld [vmem:[#allocation9 + $0x2e8] sm:$0xff]
    %v4920 = vld [vmem:[#allocation9 + $0x2f0] sm:$0xff]
    %v4921 = vld [vmem:[#allocation9 + $0x2f8] sm:$0xff]
    %v4922 = vld [vmem:[#allocation9 + $0x300] sm:$0xff]
    %v4923 = vld [vmem:[#allocation9 + $0x308] sm:$0xff]
    %v4924 = vld [vmem:[#allocation9 + $0x310] sm:$0xff]
    %v4925 = vld [vmem:[#allocation9 + $0x318] sm:$0xff]
    %v4926 = vld [vmem:[#allocation9 + $0x320] sm:$0xff]
    %v4927 = vld [vmem:[#allocation9 + $0x328] sm:$0xff]
    %v4928 = vld [vmem:[#allocation9 + $0x330] sm:$0xff]
    %v4929 = vld [vmem:[#allocation9 + $0x338] sm:$0xff]
    %v4930 = vld [vmem:[#allocation9 + $0x340] sm:$0xff]
    %v4931 = vld [vmem:[#allocation9 + $0x348] sm:$0xff]
    %v4932 = vld [vmem:[#allocation9 + $0x350] sm:$0xff]
    %v4933 = vld [vmem:[#allocation9 + $0x358] sm:$0xff]
    %v4934 = vld [vmem:[#allocation9 + $0x360] sm:$0xff]
    %v4935 = vld [vmem:[#allocation9 + $0x368] sm:$0xff]
    %v4936 = vld [vmem:[#allocation9 + $0x370] sm:$0xff]
    %v4937 = vld [vmem:[#allocation9 + $0x378] sm:$0xff]
    %v4938 = vld [vmem:[#allocation9 + $0x380] sm:$0xff]
    %v4939 = vld [vmem:[#allocation9 + $0x388] sm:$0xff]
    %v4940 = vld [vmem:[#allocation9 + $0x390] sm:$0xff]
    %v4941 = vld [vmem:[#allocation9 + $0x398] sm:$0xff]
    %v4942 = vld [vmem:[#allocation9 + $0x3a0] sm:$0xff]
    %v4943 = vld [vmem:[#allocation9 + $0x3a8] sm:$0xff]
    %v4944 = vld [vmem:[#allocation9 + $0x3b0] sm:$0xff]
    %v4945 = vld [vmem:[#allocation9 + $0x3b8] sm:$0xff]
    %v4946 = vld [vmem:[#allocation9 + $0x3c0] sm:$0xff]
    %v4947 = vld [vmem:[#allocation9 + $0x3c8] sm:$0xff]
    %v4948 = vld [vmem:[#allocation9 + $0x3d0] sm:$0xff]
    %v4949 = vld [vmem:[#allocation9 + $0x3d8] sm:$0xff]
    %v4950 = vld [vmem:[#allocation9 + $0x3e0] sm:$0xff]
    %v4951 = vld [vmem:[#allocation9 + $0x3e8] sm:$0xff]
    %v4952 = vld [vmem:[#allocation9 + $0x3f0] sm:$0xff]
    %v4953 = vld [vmem:[#allocation9 + $0x3f8] sm:$0xff]
    %v4954 = vld [vmem:[%s15] sm:$0xf]
    %v4956 = vlaneseq
    %v4957 = vshrl.u32 %v4956, 7
    %v4958 = vsub.s32 0, %v4957
    %v4959 = vrot.slane %v4954, %v4958
    %v4960 = vlaneseq
    %v4961 = vshrl.u32 %v4960, 7
    %v4962 = vsub.s32 1, %v4961
    %v4963 = vrot.slane %v4954, %v4962
    %v4964 = vlaneseq
    %v4965 = vshrl.u32 %v4964, 7
    %v4966 = vsub.s32 2, %v4965
    %v4967 = vrot.slane %v4954, %v4966
    %v4968 = vlaneseq
    %v4969 = vshrl.u32 %v4968, 7
    %v4970 = vsub.s32 3, %v4969
    %v4971 = vrot.slane %v4954, %v4970
    %v5104 = vunpack.c.l.b16 %v4826
    %v5105 = vunpack.c.h.b16 %v4826
    %v5106 = vunpack.c.l.b16 %v4827
    %v5107 = vunpack.c.h.b16 %v4827
    %v5108 = vunpack.c.l.b16 %v4828
    %v5109 = vunpack.c.h.b16 %v4828
    %v5110 = vunpack.c.l.b16 %v4829
    %v5111 = vunpack.c.h.b16 %v4829
    %v5112 = vunpack.c.l.b16 %v4830
    %v5113 = vunpack.c.h.b16 %v4830
    %v5114 = vunpack.c.l.b16 %v4831
    %v5115 = vunpack.c.h.b16 %v4831
    %v5116 = vunpack.c.l.b16 %v4832
    %v5117 = vunpack.c.h.b16 %v4832
    %v5118 = vunpack.c.l.b16 %v4833
    %v5119 = vunpack.c.h.b16 %v4833
    %v5120 = vunpack.c.l.b16 %v4834
    %v5121 = vunpack.c.h.b16 %v4834
    %v5122 = vunpack.c.l.b16 %v4835
    %v5123 = vunpack.c.h.b16 %v4835
    %v5124 = vunpack.c.l.b16 %v4836
    %v5125 = vunpack.c.h.b16 %v4836
    %v5126 = vunpack.c.l.b16 %v4837
    %v5127 = vunpack.c.h.b16 %v4837
    %v5128 = vunpack.c.l.b16 %v4838
    %v5129 = vunpack.c.h.b16 %v4838
    %v5130 = vunpack.c.l.b16 %v4839
    %v5131 = vunpack.c.h.b16 %v4839
    %v5132 = vunpack.c.l.b16 %v4840
    %v5133 = vunpack.c.h.b16 %v4840
    %v5134 = vunpack.c.l.b16 %v4841
    %v5135 = vunpack.c.h.b16 %v4841
    %v5136 = vunpack.c.l.b16 %v4842
    %v5137 = vunpack.c.h.b16 %v4842
    %v5138 = vunpack.c.l.b16 %v4843
    %v5139 = vunpack.c.h.b16 %v4843
    %v5140 = vunpack.c.l.b16 %v4844
    %v5141 = vunpack.c.h.b16 %v4844
    %v5142 = vunpack.c.l.b16 %v4845
    %v5143 = vunpack.c.h.b16 %v4845
    %v5144 = vunpack.c.l.b16 %v4846
    %v5145 = vunpack.c.h.b16 %v4846
    %v5146 = vunpack.c.l.b16 %v4847
    %v5147 = vunpack.c.h.b16 %v4847
    %v5148 = vunpack.c.l.b16 %v4848
    %v5149 = vunpack.c.h.b16 %v4848
    %v5150 = vunpack.c.l.b16 %v4849
    %v5151 = vunpack.c.h.b16 %v4849
    %v5152 = vunpack.c.l.b16 %v4850
    %v5153 = vunpack.c.h.b16 %v4850
    %v5154 = vunpack.c.l.b16 %v4851
    %v5155 = vunpack.c.h.b16 %v4851
    %v5156 = vunpack.c.l.b16 %v4852
    %v5157 = vunpack.c.h.b16 %v4852
    %v5158 = vunpack.c.l.b16 %v4853
    %v5159 = vunpack.c.h.b16 %v4853
    %v5160 = vunpack.c.l.b16 %v4854
    %v5161 = vunpack.c.h.b16 %v4854
    %v5162 = vunpack.c.l.b16 %v4855
    %v5163 = vunpack.c.h.b16 %v4855
    %v5164 = vunpack.c.l.b16 %v4856
    %v5165 = vunpack.c.h.b16 %v4856
    %v5166 = vunpack.c.l.b16 %v4857
    %v5167 = vunpack.c.h.b16 %v4857
    %v5168 = vunpack.c.l.b16 %v4858
    %v5169 = vunpack.c.h.b16 %v4858
    %v5170 = vunpack.c.l.b16 %v4859
    %v5171 = vunpack.c.h.b16 %v4859
    %v5172 = vunpack.c.l.b16 %v4860
    %v5173 = vunpack.c.h.b16 %v4860
    %v5174 = vunpack.c.l.b16 %v4861
    %v5175 = vunpack.c.h.b16 %v4861
    %v5176 = vunpack.c.l.b16 %v4862
    %v5177 = vunpack.c.h.b16 %v4862
    %v5178 = vunpack.c.l.b16 %v4863
    %v5179 = vunpack.c.h.b16 %v4863
    %v5180 = vunpack.c.l.b16 %v4864
    %v5181 = vunpack.c.h.b16 %v4864
    %v5182 = vunpack.c.l.b16 %v4865
    %v5183 = vunpack.c.h.b16 %v4865
    %v5184 = vunpack.c.l.b16 %v4866
    %v5185 = vunpack.c.h.b16 %v4866
    %v5186 = vunpack.c.l.b16 %v4867
    %v5187 = vunpack.c.h.b16 %v4867
    %v5188 = vunpack.c.l.b16 %v4868
    %v5189 = vunpack.c.h.b16 %v4868
    %v5190 = vunpack.c.l.b16 %v4869
    %v5191 = vunpack.c.h.b16 %v4869
    %v5192 = vunpack.c.l.b16 %v4870
    %v5193 = vunpack.c.h.b16 %v4870
    %v5194 = vunpack.c.l.b16 %v4871
    %v5195 = vunpack.c.h.b16 %v4871
    %v5196 = vunpack.c.l.b16 %v4872
    %v5197 = vunpack.c.h.b16 %v4872
    %v5198 = vunpack.c.l.b16 %v4873
    %v5199 = vunpack.c.h.b16 %v4873
    %v5200 = vunpack.c.l.b16 %v4874
    %v5201 = vunpack.c.h.b16 %v4874
    %v5202 = vunpack.c.l.b16 %v4875
    %v5203 = vunpack.c.h.b16 %v4875
    %v5204 = vunpack.c.l.b16 %v4876
    %v5205 = vunpack.c.h.b16 %v4876
    %v5206 = vunpack.c.l.b16 %v4877
    %v5207 = vunpack.c.h.b16 %v4877
    %v5208 = vunpack.c.l.b16 %v4878
    %v5209 = vunpack.c.h.b16 %v4878
    %v5210 = vunpack.c.l.b16 %v4879
    %v5211 = vunpack.c.h.b16 %v4879
    %v5212 = vunpack.c.l.b16 %v4880
    %v5213 = vunpack.c.h.b16 %v4880
    %v5214 = vunpack.c.l.b16 %v4881
    %v5215 = vunpack.c.h.b16 %v4881
    %v5216 = vunpack.c.l.b16 %v4882
    %v5217 = vunpack.c.h.b16 %v4882
    %v5218 = vunpack.c.l.b16 %v4883
    %v5219 = vunpack.c.h.b16 %v4883
    %v5220 = vunpack.c.l.b16 %v4884
    %v5221 = vunpack.c.h.b16 %v4884
    %v5222 = vunpack.c.l.b16 %v4885
    %v5223 = vunpack.c.h.b16 %v4885
    %v5224 = vunpack.c.l.b16 %v4886
    %v5225 = vunpack.c.h.b16 %v4886
    %v5226 = vunpack.c.l.b16 %v4887
    %v5227 = vunpack.c.h.b16 %v4887
    %v5228 = vunpack.c.l.b16 %v4888
    %v5229 = vunpack.c.h.b16 %v4888
    %v5230 = vunpack.c.l.b16 %v4889
    %v5231 = vunpack.c.h.b16 %v4889
    %v5232 = vunpack.c.l.b16 %v4890
    %v5233 = vunpack.c.h.b16 %v4890
    %v5234 = vunpack.c.l.b16 %v4891
    %v5235 = vunpack.c.h.b16 %v4891
    %v5236 = vunpack.c.l.b16 %v4892
    %v5237 = vunpack.c.h.b16 %v4892
    %v5238 = vunpack.c.l.b16 %v4893
    %v5239 = vunpack.c.h.b16 %v4893
    %v5240 = vunpack.c.l.b16 %v4894
    %v5241 = vunpack.c.h.b16 %v4894
    %v5242 = vunpack.c.l.b16 %v4895
    %v5243 = vunpack.c.h.b16 %v4895
    %v5244 = vunpack.c.l.b16 %v4896
    %v5245 = vunpack.c.h.b16 %v4896
    %v5246 = vunpack.c.l.b16 %v4897
    %v5247 = vunpack.c.h.b16 %v4897
    %v5248 = vunpack.c.l.b16 %v4898
    %v5249 = vunpack.c.h.b16 %v4898
    %v5250 = vunpack.c.l.b16 %v4899
    %v5251 = vunpack.c.h.b16 %v4899
    %v5252 = vunpack.c.l.b16 %v4900
    %v5253 = vunpack.c.h.b16 %v4900
    %v5254 = vunpack.c.l.b16 %v4901
    %v5255 = vunpack.c.h.b16 %v4901
    %v5256 = vunpack.c.l.b16 %v4902
    %v5257 = vunpack.c.h.b16 %v4902
    %v5258 = vunpack.c.l.b16 %v4903
    %v5259 = vunpack.c.h.b16 %v4903
    %v5260 = vunpack.c.l.b16 %v4904
    %v5261 = vunpack.c.h.b16 %v4904
    %v5262 = vunpack.c.l.b16 %v4905
    %v5263 = vunpack.c.h.b16 %v4905
    %v5264 = vunpack.c.l.b16 %v4906
    %v5265 = vunpack.c.h.b16 %v4906
    %v5266 = vunpack.c.l.b16 %v4907
    %v5267 = vunpack.c.h.b16 %v4907
    %v5268 = vunpack.c.l.b16 %v4908
    %v5269 = vunpack.c.h.b16 %v4908
    %v5270 = vunpack.c.l.b16 %v4909
    %v5271 = vunpack.c.h.b16 %v4909
    %v5272 = vunpack.c.l.b16 %v4910
    %v5273 = vunpack.c.h.b16 %v4910
    %v5274 = vunpack.c.l.b16 %v4911
    %v5275 = vunpack.c.h.b16 %v4911
    %v5276 = vunpack.c.l.b16 %v4912
    %v5277 = vunpack.c.h.b16 %v4912
    %v5278 = vunpack.c.l.b16 %v4913
    %v5279 = vunpack.c.h.b16 %v4913
    %v5280 = vunpack.c.l.b16 %v4914
    %v5281 = vunpack.c.h.b16 %v4914
    %v5282 = vunpack.c.l.b16 %v4915
    %v5283 = vunpack.c.h.b16 %v4915
    %v5284 = vunpack.c.l.b16 %v4916
    %v5285 = vunpack.c.h.b16 %v4916
    %v5286 = vunpack.c.l.b16 %v4917
    %v5287 = vunpack.c.h.b16 %v4917
    %v5288 = vunpack.c.l.b16 %v4918
    %v5289 = vunpack.c.h.b16 %v4918
    %v5290 = vunpack.c.l.b16 %v4919
    %v5291 = vunpack.c.h.b16 %v4919
    %v5292 = vunpack.c.l.b16 %v4920
    %v5293 = vunpack.c.h.b16 %v4920
    %v5294 = vunpack.c.l.b16 %v4921
    %v5295 = vunpack.c.h.b16 %v4921
    %v5296 = vunpack.c.l.b16 %v4922
    %v5297 = vunpack.c.h.b16 %v4922
    %v5298 = vunpack.c.l.b16 %v4923
    %v5299 = vunpack.c.h.b16 %v4923
    %v5300 = vunpack.c.l.b16 %v4924
    %v5301 = vunpack.c.h.b16 %v4924
    %v5302 = vunpack.c.l.b16 %v4925
    %v5303 = vunpack.c.h.b16 %v4925
    %v5304 = vunpack.c.l.b16 %v4926
    %v5305 = vunpack.c.h.b16 %v4926
    %v5306 = vunpack.c.l.b16 %v4927
    %v5307 = vunpack.c.h.b16 %v4927
    %v5308 = vunpack.c.l.b16 %v4928
    %v5309 = vunpack.c.h.b16 %v4928
    %v5310 = vunpack.c.l.b16 %v4929
    %v5311 = vunpack.c.h.b16 %v4929
    %v5312 = vunpack.c.l.b16 %v4930
    %v5313 = vunpack.c.h.b16 %v4930
    %v5314 = vunpack.c.l.b16 %v4931
    %v5315 = vunpack.c.h.b16 %v4931
    %v5316 = vunpack.c.l.b16 %v4932
    %v5317 = vunpack.c.h.b16 %v4932
    %v5318 = vunpack.c.l.b16 %v4933
    %v5319 = vunpack.c.h.b16 %v4933
    %v5320 = vunpack.c.l.b16 %v4934
    %v5321 = vunpack.c.h.b16 %v4934
    %v5322 = vunpack.c.l.b16 %v4935
    %v5323 = vunpack.c.h.b16 %v4935
    %v5324 = vunpack.c.l.b16 %v4936
    %v5325 = vunpack.c.h.b16 %v4936
    %v5326 = vunpack.c.l.b16 %v4937
    %v5327 = vunpack.c.h.b16 %v4937
    %v5328 = vunpack.c.l.b16 %v4938
    %v5329 = vunpack.c.h.b16 %v4938
    %v5330 = vunpack.c.l.b16 %v4939
    %v5331 = vunpack.c.h.b16 %v4939
    %v5332 = vunpack.c.l.b16 %v4940
    %v5333 = vunpack.c.h.b16 %v4940
    %v5334 = vunpack.c.l.b16 %v4941
    %v5335 = vunpack.c.h.b16 %v4941
    %v5336 = vunpack.c.l.b16 %v4942
    %v5337 = vunpack.c.h.b16 %v4942
    %v5338 = vunpack.c.l.b16 %v4943
    %v5339 = vunpack.c.h.b16 %v4943
    %v5340 = vunpack.c.l.b16 %v4944
    %v5341 = vunpack.c.h.b16 %v4944
    %v5342 = vunpack.c.l.b16 %v4945
    %v5343 = vunpack.c.h.b16 %v4945
    %v5344 = vunpack.c.l.b16 %v4946
    %v5345 = vunpack.c.h.b16 %v4946
    %v5346 = vunpack.c.l.b16 %v4947
    %v5347 = vunpack.c.h.b16 %v4947
    %v5348 = vunpack.c.l.b16 %v4948
    %v5349 = vunpack.c.h.b16 %v4948
    %v5350 = vunpack.c.l.b16 %v4949
    %v5351 = vunpack.c.h.b16 %v4949
    %v5352 = vunpack.c.l.b16 %v4950
    %v5353 = vunpack.c.h.b16 %v4950
    %v5354 = vunpack.c.l.b16 %v4951
    %v5355 = vunpack.c.h.b16 %v4951
    %v5356 = vunpack.c.l.b16 %v4952
    %v5357 = vunpack.c.h.b16 %v4952
    %v5358 = vunpack.c.l.b16 %v4953
    %v5359 = vunpack.c.h.b16 %v4953
    %v5360 = vpack.c.b16 %v5108, %v5104
    %v5361 = vpack.c.b16 %v5109, %v5105
    %v5362 = vpack.c.b16 %v5110, %v5106
    %v5363 = vpack.c.b16 %v5111, %v5107
    %v5364 = vpack.c.b16 %v5116, %v5112
    %v5365 = vpack.c.b16 %v5117, %v5113
    %v5366 = vpack.c.b16 %v5118, %v5114
    %v5367 = vpack.c.b16 %v5119, %v5115
    %v5368 = vpack.c.b16 %v5124, %v5120
    %v5369 = vpack.c.b16 %v5125, %v5121
    %v5370 = vpack.c.b16 %v5126, %v5122
    %v5371 = vpack.c.b16 %v5127, %v5123
    %v5372 = vpack.c.b16 %v5132, %v5128
    %v5373 = vpack.c.b16 %v5133, %v5129
    %v5374 = vpack.c.b16 %v5134, %v5130
    %v5375 = vpack.c.b16 %v5135, %v5131
    %v5376 = vpack.c.b16 %v5140, %v5136
    %v5377 = vpack.c.b16 %v5141, %v5137
    %v5378 = vpack.c.b16 %v5142, %v5138
    %v5379 = vpack.c.b16 %v5143, %v5139
    %v5380 = vpack.c.b16 %v5148, %v5144
    %v5381 = vpack.c.b16 %v5149, %v5145
    %v5382 = vpack.c.b16 %v5150, %v5146
    %v5383 = vpack.c.b16 %v5151, %v5147
    %v5384 = vpack.c.b16 %v5156, %v5152
    %v5385 = vpack.c.b16 %v5157, %v5153
    %v5386 = vpack.c.b16 %v5158, %v5154
    %v5387 = vpack.c.b16 %v5159, %v5155
    %v5388 = vpack.c.b16 %v5164, %v5160
    %v5389 = vpack.c.b16 %v5165, %v5161
    %v5390 = vpack.c.b16 %v5166, %v5162
    %v5391 = vpack.c.b16 %v5167, %v5163
    %v5392 = vpack.c.b16 %v5172, %v5168
    %v5393 = vpack.c.b16 %v5173, %v5169
    %v5394 = vpack.c.b16 %v5174, %v5170
    %v5395 = vpack.c.b16 %v5175, %v5171
    %v5396 = vpack.c.b16 %v5180, %v5176
    %v5397 = vpack.c.b16 %v5181, %v5177
    %v5398 = vpack.c.b16 %v5182, %v5178
    %v5399 = vpack.c.b16 %v5183, %v5179
    %v5400 = vpack.c.b16 %v5188, %v5184
    %v5401 = vpack.c.b16 %v5189, %v5185
    %v5402 = vpack.c.b16 %v5190, %v5186
    %v5403 = vpack.c.b16 %v5191, %v5187
    %v5404 = vpack.c.b16 %v5196, %v5192
    %v5405 = vpack.c.b16 %v5197, %v5193
    %v5406 = vpack.c.b16 %v5198, %v5194
    %v5407 = vpack.c.b16 %v5199, %v5195
    %v5408 = vpack.c.b16 %v5204, %v5200
    %v5409 = vpack.c.b16 %v5205, %v5201
    %v5410 = vpack.c.b16 %v5206, %v5202
    %v5411 = vpack.c.b16 %v5207, %v5203
    %v5412 = vpack.c.b16 %v5212, %v5208
    %v5413 = vpack.c.b16 %v5213, %v5209
    %v5414 = vpack.c.b16 %v5214, %v5210
    %v5415 = vpack.c.b16 %v5215, %v5211
    %v5416 = vpack.c.b16 %v5220, %v5216
    %v5417 = vpack.c.b16 %v5221, %v5217
    %v5418 = vpack.c.b16 %v5222, %v5218
    %v5419 = vpack.c.b16 %v5223, %v5219
    %v5420 = vpack.c.b16 %v5228, %v5224
    %v5421 = vpack.c.b16 %v5229, %v5225
    %v5422 = vpack.c.b16 %v5230, %v5226
    %v5423 = vpack.c.b16 %v5231, %v5227
    %v5424 = vpack.c.b16 %v5236, %v5232
    %v5425 = vpack.c.b16 %v5237, %v5233
    %v5426 = vpack.c.b16 %v5238, %v5234
    %v5427 = vpack.c.b16 %v5239, %v5235
    %v5428 = vpack.c.b16 %v5244, %v5240
    %v5429 = vpack.c.b16 %v5245, %v5241
    %v5430 = vpack.c.b16 %v5246, %v5242
    %v5431 = vpack.c.b16 %v5247, %v5243
    %v5432 = vpack.c.b16 %v5252, %v5248
    %v5433 = vpack.c.b16 %v5253, %v5249
    %v5434 = vpack.c.b16 %v5254, %v5250
    %v5435 = vpack.c.b16 %v5255, %v5251
    %v5436 = vpack.c.b16 %v5260, %v5256
    %v5437 = vpack.c.b16 %v5261, %v5257
    %v5438 = vpack.c.b16 %v5262, %v5258
    %v5439 = vpack.c.b16 %v5263, %v5259
    %v5440 = vpack.c.b16 %v5268, %v5264
    %v5441 = vpack.c.b16 %v5269, %v5265
    %v5442 = vpack.c.b16 %v5270, %v5266
    %v5443 = vpack.c.b16 %v5271, %v5267
    %v5444 = vpack.c.b16 %v5276, %v5272
    %v5445 = vpack.c.b16 %v5277, %v5273
    %v5446 = vpack.c.b16 %v5278, %v5274
    %v5447 = vpack.c.b16 %v5279, %v5275
    %v5448 = vpack.c.b16 %v5284, %v5280
    %v5449 = vpack.c.b16 %v5285, %v5281
    %v5450 = vpack.c.b16 %v5286, %v5282
    %v5451 = vpack.c.b16 %v5287, %v5283
    %v5452 = vpack.c.b16 %v5292, %v5288
    %v5453 = vpack.c.b16 %v5293, %v5289
    %v5454 = vpack.c.b16 %v5294, %v5290
    %v5455 = vpack.c.b16 %v5295, %v5291
    %v5456 = vpack.c.b16 %v5300, %v5296
    %v5457 = vpack.c.b16 %v5301, %v5297
    %v5458 = vpack.c.b16 %v5302, %v5298
    %v5459 = vpack.c.b16 %v5303, %v5299
    %v5460 = vpack.c.b16 %v5308, %v5304
    %v5461 = vpack.c.b16 %v5309, %v5305
    %v5462 = vpack.c.b16 %v5310, %v5306
    %v5463 = vpack.c.b16 %v5311, %v5307
    %v5464 = vpack.c.b16 %v5316, %v5312
    %v5465 = vpack.c.b16 %v5317, %v5313
    %v5466 = vpack.c.b16 %v5318, %v5314
    %v5467 = vpack.c.b16 %v5319, %v5315
    %v5468 = vpack.c.b16 %v5324, %v5320
    %v5469 = vpack.c.b16 %v5325, %v5321
    %v5470 = vpack.c.b16 %v5326, %v5322
    %v5471 = vpack.c.b16 %v5327, %v5323
    %v5472 = vpack.c.b16 %v5332, %v5328
    %v5473 = vpack.c.b16 %v5333, %v5329
    %v5474 = vpack.c.b16 %v5334, %v5330
    %v5475 = vpack.c.b16 %v5335, %v5331
    %v5476 = vpack.c.b16 %v5340, %v5336
    %v5477 = vpack.c.b16 %v5341, %v5337
    %v5478 = vpack.c.b16 %v5342, %v5338
    %v5479 = vpack.c.b16 %v5343, %v5339
    %v5480 = vpack.c.b16 %v5348, %v5344
    %v5481 = vpack.c.b16 %v5349, %v5345
    %v5482 = vpack.c.b16 %v5350, %v5346
    %v5483 = vpack.c.b16 %v5351, %v5347
    %v5484 = vpack.c.b16 %v5356, %v5352
    %v5485 = vpack.c.b16 %v5357, %v5353
    %v5486 = vpack.c.b16 %v5358, %v5354
    %v5487 = vpack.c.b16 %v5359, %v5355
    %5616 = vmatprep.subr.bf16.mxu0 %v5389
    %5617 = vmatpush1.bf16.msra.mxu0 %v5388
    %5618 = vmatprep.subr.bf16.mxu0 %v5385
    %5619 = vmatpush1.bf16.msra.mxu0 %v5384
    %5620 = vmatprep.subr.bf16.mxu0 %v5381
    %5621 = vmatpush1.bf16.msra.mxu0 %v5380
    %5622 = vmatprep.subr.bf16.mxu0 %v5377
    %5623 = vmatpush1.bf16.msra.mxu0 %v5376
    %5624 = vmatprep.subr.bf16.mxu0 %v5373
    %5625 = vmatpush1.bf16.msra.mxu0 %v5372
    %5626 = vmatprep.subr.bf16.mxu0 %v5369
    %5627 = vmatpush1.bf16.msra.mxu0 %v5368
    %5628 = vmatprep.subr.bf16.mxu0 %v5365
    %5629 = vmatpush1.bf16.msra.mxu0 %v5364
    %5630 = vmatprep.subr.bf16.mxu0 %v5361
    %5631 = vmatpush1.bf16.msra.mxu0 %v5360
    %5632 = vmatprep.subr.bf16.mxu0 %v5421
    %5633 = vmatpush2.bf16.msra.mxu0 %v5420
    %5634 = vmatprep.subr.bf16.mxu0 %v5417
    %5635 = vmatpush2.bf16.msra.mxu0 %v5416
    %5636 = vmatprep.subr.bf16.mxu0 %v5413
    %5637 = vmatpush2.bf16.msra.mxu0 %v5412
    %5638 = vmatprep.subr.bf16.mxu0 %v5409
    %5639 = vmatpush2.bf16.msra.mxu0 %v5408
    %5640 = vmatprep.subr.bf16.mxu0 %v5405
    %5641 = vmatpush2.bf16.msra.mxu0 %v5404
    %5642 = vmatprep.subr.bf16.mxu0 %v5401
    %5643 = vmatpush2.bf16.msra.mxu0 %v5400
    %5644 = vmatprep.subr.bf16.mxu0 %v5397
    %5645 = vmatpush2.bf16.msra.mxu0 %v5396
    %5646 = vmatprep.subr.bf16.mxu0 %v5393
    %5647 = vmatpush2.bf16.msra.mxu0 %v5392
    %5648 = vmatprep.mubr.bf16.mxu0 %v4795
    %5649 = vmatmul.mubr.bf16.gmra.mxu0 %v4794
    %v5650 = vpop.f32.mrf.mxu0
    %v5651 = vadd.f32 %v4959, %v5650
    %v5652 = vpop.f32.mrf.mxu0
    %v5653 = vadd.f32 %v4963, %v5652
    %v5654 = vpop.f32.mrf.mxu0
    %v5655 = vadd.f32 %v4959, %v5654
    %v5656 = vpop.f32.mrf.mxu0
    %v5657 = vadd.f32 %v4963, %v5656
    %5658 = vmatprep.mubr.bf16.mxu0 %v4799
    %5659 = vmatmul.mubr.bf16.gmra.mxu0 %v4798
    %v5660 = vpop.f32.mrf.mxu0
    %v5661 = vadd.f32 %v4959, %v5660
    %v5662 = vpop.f32.mrf.mxu0
    %v5663 = vadd.f32 %v4963, %v5662
    %v5664 = vpop.f32.mrf.mxu0
    %v5665 = vadd.f32 %v4959, %v5664
    %v5666 = vpop.f32.mrf.mxu0
    %v5667 = vadd.f32 %v4963, %v5666
    %5668 = vmatprep.mubr.bf16.mxu0 %v4803
    %5669 = vmatmul.mubr.bf16.gmra.mxu0 %v4802
    %v5670 = vpop.f32.mrf.mxu0
    %v5671 = vadd.f32 %v4959, %v5670
    %v5672 = vpop.f32.mrf.mxu0
    %v5673 = vadd.f32 %v4963, %v5672
    %v5674 = vpop.f32.mrf.mxu0
    %v5675 = vadd.f32 %v4959, %v5674
    %v5676 = vpop.f32.mrf.mxu0
    %v5677 = vadd.f32 %v4963, %v5676
    %5678 = vmatprep.mubr.bf16.mxu0 %v4807
    %5679 = vmatmul.mubr.bf16.gmra.mxu0 %v4806
    %v5680 = vpop.f32.mrf.mxu0
    %v5681 = vadd.f32 %v4959, %v5680
    %v5682 = vpop.f32.mrf.mxu0
    %v5683 = vadd.f32 %v4963, %v5682
    %v5684 = vpop.f32.mrf.mxu0
    %v5685 = vadd.f32 %v4959, %v5684
    %v5686 = vpop.f32.mrf.mxu0
    %v5687 = vadd.f32 %v4963, %v5686
    %5688 = vmatprep.mubr.bf16.mxu0 %v4811
    %5689 = vmatmul.mubr.bf16.gmra.mxu0 %v4810
    %v5690 = vpop.f32.mrf.mxu0
    %v5691 = vadd.f32 %v4959, %v5690
    %v5692 = vpop.f32.mrf.mxu0
    %v5693 = vadd.f32 %v4963, %v5692
    %v5694 = vpop.f32.mrf.mxu0
    %v5695 = vadd.f32 %v4959, %v5694
    %v5696 = vpop.f32.mrf.mxu0
    %v5697 = vadd.f32 %v4963, %v5696
    %5698 = vmatprep.mubr.bf16.mxu0 %v4815
    %5699 = vmatmul.mubr.bf16.gmra.mxu0 %v4814
    %v5700 = vpop.f32.mrf.mxu0
    %v5701 = vadd.f32 %v4959, %v5700
    %v5702 = vpop.f32.mrf.mxu0
    %v5703 = vadd.f32 %v4963, %v5702
    %v5704 = vpop.f32.mrf.mxu0
    %v5705 = vadd.f32 %v4959, %v5704
    %v5706 = vpop.f32.mrf.mxu0
    %v5707 = vadd.f32 %v4963, %v5706
    %5708 = vmatprep.mubr.bf16.mxu0 %v4819
    %5709 = vmatmul.mubr.bf16.gmra.mxu0 %v4818
    %v5710 = vpop.f32.mrf.mxu0
    %v5711 = vadd.f32 %v4959, %v5710
    %v5712 = vpop.f32.mrf.mxu0
    %v5713 = vadd.f32 %v4963, %v5712
    %v5714 = vpop.f32.mrf.mxu0
    %v5715 = vadd.f32 %v4959, %v5714
    %v5716 = vpop.f32.mrf.mxu0
    %v5717 = vadd.f32 %v4963, %v5716
    %5718 = vmatprep.mubr.bf16.mxu0 %v4823
    %5719 = vmatmul.mubr.bf16.gmra.mxu0 %v4822
    %v5720 = vpop.f32.mrf.mxu0
    %v5721 = vadd.f32 %v4959, %v5720
    %v5722 = vpop.f32.mrf.mxu0
    %v5723 = vadd.f32 %v4963, %v5722
    %v5724 = vpop.f32.mrf.mxu0
    %v5725 = vadd.f32 %v4959, %v5724
    %v5726 = vpop.f32.mrf.mxu0
    %v5727 = vadd.f32 %v4963, %v5726
    %5728 = vdwg.mxu0
    %5729 = vmatprep.subr.bf16.mxu0 %v5453
    %5730 = vmatpush1.bf16.msra.mxu0 %v5452
    %5731 = vmatprep.subr.bf16.mxu0 %v5449
    %5732 = vmatpush1.bf16.msra.mxu0 %v5448
    %5733 = vmatprep.subr.bf16.mxu0 %v5445
    %5734 = vmatpush1.bf16.msra.mxu0 %v5444
    %5735 = vmatprep.subr.bf16.mxu0 %v5441
    %5736 = vmatpush1.bf16.msra.mxu0 %v5440
    %5737 = vmatprep.subr.bf16.mxu0 %v5437
    %5738 = vmatpush1.bf16.msra.mxu0 %v5436
    %5739 = vmatprep.subr.bf16.mxu0 %v5433
    %5740 = vmatpush1.bf16.msra.mxu0 %v5432
    %5741 = vmatprep.subr.bf16.mxu0 %v5429
    %5742 = vmatpush1.bf16.msra.mxu0 %v5428
    %5743 = vmatprep.subr.bf16.mxu0 %v5425
    %5744 = vmatpush1.bf16.msra.mxu0 %v5424
    %5745 = vmatprep.subr.bf16.mxu0 %v5485
    %5746 = vmatpush2.bf16.msra.mxu0 %v5484
    %5747 = vmatprep.subr.bf16.mxu0 %v5481
    %5748 = vmatpush2.bf16.msra.mxu0 %v5480
    %5749 = vmatprep.subr.bf16.mxu0 %v5477
    %5750 = vmatpush2.bf16.msra.mxu0 %v5476
    %5751 = vmatprep.subr.bf16.mxu0 %v5473
    %5752 = vmatpush2.bf16.msra.mxu0 %v5472
    %5753 = vmatprep.subr.bf16.mxu0 %v5469
    %5754 = vmatpush2.bf16.msra.mxu0 %v5468
    %5755 = vmatprep.subr.bf16.mxu0 %v5465
    %5756 = vmatpush2.bf16.msra.mxu0 %v5464
    %5757 = vmatprep.subr.bf16.mxu0 %v5461
    %5758 = vmatpush2.bf16.msra.mxu0 %v5460
    %5759 = vmatprep.subr.bf16.mxu0 %v5457
    %5760 = vmatpush2.bf16.msra.mxu0 %v5456
    %5761 = vmatprep.mubr.bf16.mxu0 %v4797
    %5762 = vmatmul.mubr.bf16.gmra.mxu0 %v4796
    %v5763 = vpop.f32.mrf.mxu0
    %v5764 = vadd.f32 %v5651, %v5763
    %v5765 = vpop.f32.mrf.mxu0
    %v5766 = vadd.f32 %v5653, %v5765
    %v5767 = vpop.f32.mrf.mxu0
    %v5768 = vadd.f32 %v5655, %v5767
    %v5769 = vpop.f32.mrf.mxu0
    %v5770 = vadd.f32 %v5657, %v5769
    %5771 = vmatprep.mubr.bf16.mxu0 %v4801
    %5772 = vmatmul.mubr.bf16.gmra.mxu0 %v4800
    %v5773 = vpop.f32.mrf.mxu0
    %v5774 = vadd.f32 %v5661, %v5773
    %v5775 = vpop.f32.mrf.mxu0
    %v5776 = vadd.f32 %v5663, %v5775
    %v5777 = vpop.f32.mrf.mxu0
    %v5778 = vadd.f32 %v5665, %v5777
    %v5779 = vpop.f32.mrf.mxu0
    %v5780 = vadd.f32 %v5667, %v5779
    %5781 = vmatprep.mubr.bf16.mxu0 %v4805
    %5782 = vmatmul.mubr.bf16.gmra.mxu0 %v4804
    %v5783 = vpop.f32.mrf.mxu0
    %v5784 = vadd.f32 %v5671, %v5783
    %v5785 = vpop.f32.mrf.mxu0
    %v5786 = vadd.f32 %v5673, %v5785
    %v5787 = vpop.f32.mrf.mxu0
    %v5788 = vadd.f32 %v5675, %v5787
    %v5789 = vpop.f32.mrf.mxu0
    %v5790 = vadd.f32 %v5677, %v5789
    %5791 = vmatprep.mubr.bf16.mxu0 %v4809
    %5792 = vmatmul.mubr.bf16.gmra.mxu0 %v4808
    %v5793 = vpop.f32.mrf.mxu0
    %v5794 = vadd.f32 %v5681, %v5793
    %v5795 = vpop.f32.mrf.mxu0
    %v5796 = vadd.f32 %v5683, %v5795
    %v5797 = vpop.f32.mrf.mxu0
    %v5798 = vadd.f32 %v5685, %v5797
    %v5799 = vpop.f32.mrf.mxu0
    %v5800 = vadd.f32 %v5687, %v5799
    %5801 = vmatprep.mubr.bf16.mxu0 %v4813
    %5802 = vmatmul.mubr.bf16.gmra.mxu0 %v4812
    %v5803 = vpop.f32.mrf.mxu0
    %v5804 = vadd.f32 %v5691, %v5803
    %v5805 = vpop.f32.mrf.mxu0
    %v5806 = vadd.f32 %v5693, %v5805
    %v5807 = vpop.f32.mrf.mxu0
    %v5808 = vadd.f32 %v5695, %v5807
    %v5809 = vpop.f32.mrf.mxu0
    %v5810 = vadd.f32 %v5697, %v5809
    %5811 = vmatprep.mubr.bf16.mxu0 %v4817
    %5812 = vmatmul.mubr.bf16.gmra.mxu0 %v4816
    %v5813 = vpop.f32.mrf.mxu0
    %v5814 = vadd.f32 %v5701, %v5813
    %v5815 = vpop.f32.mrf.mxu0
    %v5816 = vadd.f32 %v5703, %v5815
    %v5817 = vpop.f32.mrf.mxu0
    %v5818 = vadd.f32 %v5705, %v5817
    %v5819 = vpop.f32.mrf.mxu0
    %v5820 = vadd.f32 %v5707, %v5819
    %5821 = vmatprep.mubr.bf16.mxu0 %v4821
    %5822 = vmatmul.mubr.bf16.gmra.mxu0 %v4820
    %v5823 = vpop.f32.mrf.mxu0
    %v5824 = vadd.f32 %v5711, %v5823
    %v5825 = vpop.f32.mrf.mxu0
    %v5826 = vadd.f32 %v5713, %v5825
    %v5827 = vpop.f32.mrf.mxu0
    %v5828 = vadd.f32 %v5715, %v5827
    %v5829 = vpop.f32.mrf.mxu0
    %v5830 = vadd.f32 %v5717, %v5829
    %5831 = vmatprep.mubr.bf16.mxu0 %v4825
    %5832 = vmatmul.mubr.bf16.gmra.mxu0 %v4824
    %v5833 = vpop.f32.mrf.mxu0
    %v5834 = vadd.f32 %v5721, %v5833
    %v5835 = vpop.f32.mrf.mxu0
    %v5836 = vadd.f32 %v5723, %v5835
    %v5837 = vpop.f32.mrf.mxu0
    %v5838 = vadd.f32 %v5725, %v5837
    %v5839 = vpop.f32.mrf.mxu0
    %v5840 = vadd.f32 %v5727, %v5839
    %5841 = vdwg.mxu0
    %5842 = vmatprep.subr.bf16.mxu0 %v5391
    %5843 = vmatpush1.bf16.msra.mxu0 %v5390
    %5844 = vmatprep.subr.bf16.mxu0 %v5387
    %5845 = vmatpush1.bf16.msra.mxu0 %v5386
    %5846 = vmatprep.subr.bf16.mxu0 %v5383
    %5847 = vmatpush1.bf16.msra.mxu0 %v5382
    %5848 = vmatprep.subr.bf16.mxu0 %v5379
    %5849 = vmatpush1.bf16.msra.mxu0 %v5378
    %5850 = vmatprep.subr.bf16.mxu0 %v5375
    %5851 = vmatpush1.bf16.msra.mxu0 %v5374
    %5852 = vmatprep.subr.bf16.mxu0 %v5371
    %5853 = vmatpush1.bf16.msra.mxu0 %v5370
    %5854 = vmatprep.subr.bf16.mxu0 %v5367
    %5855 = vmatpush1.bf16.msra.mxu0 %v5366
    %5856 = vmatprep.subr.bf16.mxu0 %v5363
    %5857 = vmatpush1.bf16.msra.mxu0 %v5362
    %5858 = vmatprep.subr.bf16.mxu0 %v5423
    %5859 = vmatpush2.bf16.msra.mxu0 %v5422
    %5860 = vmatprep.subr.bf16.mxu0 %v5419
    %5861 = vmatpush2.bf16.msra.mxu0 %v5418
    %5862 = vmatprep.subr.bf16.mxu0 %v5415
    %5863 = vmatpush2.bf16.msra.mxu0 %v5414
    %5864 = vmatprep.subr.bf16.mxu0 %v5411
    %5865 = vmatpush2.bf16.msra.mxu0 %v5410
    %5866 = vmatprep.subr.bf16.mxu0 %v5407
    %5867 = vmatpush2.bf16.msra.mxu0 %v5406
    %5868 = vmatprep.subr.bf16.mxu0 %v5403
    %5869 = vmatpush2.bf16.msra.mxu0 %v5402
    %5870 = vmatprep.subr.bf16.mxu0 %v5399
    %5871 = vmatpush2.bf16.msra.mxu0 %v5398
    %5872 = vmatprep.subr.bf16.mxu0 %v5395
    %5873 = vmatpush2.bf16.msra.mxu0 %v5394
    %5874 = vmatprep.mubr.bf16.mxu0 %v4795
    %5875 = vmatmul.mubr.bf16.gmra.mxu0 %v4794
    %v5876 = vpop.f32.mrf.mxu0
    %v5877 = vadd.f32 %v4967, %v5876
    %v5878 = vpop.f32.mrf.mxu0
    %v5879 = vadd.f32 %v4971, %v5878
    %v5880 = vpop.f32.mrf.mxu0
    %v5881 = vadd.f32 %v4967, %v5880
    %v5882 = vpop.f32.mrf.mxu0
    %v5883 = vadd.f32 %v4971, %v5882
    %5884 = vmatprep.mubr.bf16.mxu0 %v4799
    %5885 = vmatmul.mubr.bf16.gmra.mxu0 %v4798
    %v5886 = vpop.f32.mrf.mxu0
    %v5887 = vadd.f32 %v4967, %v5886
    %v5888 = vpop.f32.mrf.mxu0
    %v5889 = vadd.f32 %v4971, %v5888
    %v5890 = vpop.f32.mrf.mxu0
    %v5891 = vadd.f32 %v4967, %v5890
    %v5892 = vpop.f32.mrf.mxu0
    %v5893 = vadd.f32 %v4971, %v5892
    %5894 = vmatprep.mubr.bf16.mxu0 %v4803
    %5895 = vmatmul.mubr.bf16.gmra.mxu0 %v4802
    %v5896 = vpop.f32.mrf.mxu0
    %v5897 = vadd.f32 %v4967, %v5896
    %v5898 = vpop.f32.mrf.mxu0
    %v5899 = vadd.f32 %v4971, %v5898
    %v5900 = vpop.f32.mrf.mxu0
    %v5901 = vadd.f32 %v4967, %v5900
    %v5902 = vpop.f32.mrf.mxu0
    %v5903 = vadd.f32 %v4971, %v5902
    %5904 = vmatprep.mubr.bf16.mxu0 %v4807
    %5905 = vmatmul.mubr.bf16.gmra.mxu0 %v4806
    %v5906 = vpop.f32.mrf.mxu0
    %v5907 = vadd.f32 %v4967, %v5906
    %v5908 = vpop.f32.mrf.mxu0
    %v5909 = vadd.f32 %v4971, %v5908
    %v5910 = vpop.f32.mrf.mxu0
    %v5911 = vadd.f32 %v4967, %v5910
    %v5912 = vpop.f32.mrf.mxu0
    %v5913 = vadd.f32 %v4971, %v5912
    %5914 = vmatprep.mubr.bf16.mxu0 %v4811
    %5915 = vmatmul.mubr.bf16.gmra.mxu0 %v4810
    %v5916 = vpop.f32.mrf.mxu0
    %v5917 = vadd.f32 %v4967, %v5916
    %v5918 = vpop.f32.mrf.mxu0
    %v5919 = vadd.f32 %v4971, %v5918
    %v5920 = vpop.f32.mrf.mxu0
    %v5921 = vadd.f32 %v4967, %v5920
    %v5922 = vpop.f32.mrf.mxu0
    %v5923 = vadd.f32 %v4971, %v5922
    %5924 = vmatprep.mubr.bf16.mxu0 %v4815
    %5925 = vmatmul.mubr.bf16.gmra.mxu0 %v4814
    %v5926 = vpop.f32.mrf.mxu0
    %v5927 = vadd.f32 %v4967, %v5926
    %v5928 = vpop.f32.mrf.mxu0
    %v5929 = vadd.f32 %v4971, %v5928
    %v5930 = vpop.f32.mrf.mxu0
    %v5931 = vadd.f32 %v4967, %v5930
    %v5932 = vpop.f32.mrf.mxu0
    %v5933 = vadd.f32 %v4971, %v5932
    %5934 = vmatprep.mubr.bf16.mxu0 %v4819
    %5935 = vmatmul.mubr.bf16.gmra.mxu0 %v4818
    %v5936 = vpop.f32.mrf.mxu0
    %v5937 = vadd.f32 %v4967, %v5936
    %v5938 = vpop.f32.mrf.mxu0
    %v5939 = vadd.f32 %v4971, %v5938
    %v5940 = vpop.f32.mrf.mxu0
    %v5941 = vadd.f32 %v4967, %v5940
    %v5942 = vpop.f32.mrf.mxu0
    %v5943 = vadd.f32 %v4971, %v5942
    %5944 = vmatprep.mubr.bf16.mxu0 %v4823
    %5945 = vmatmul.mubr.bf16.gmra.mxu0 %v4822
    %v5946 = vpop.f32.mrf.mxu0
    %v5947 = vadd.f32 %v4967, %v5946
    %v5948 = vpop.f32.mrf.mxu0
    %v5949 = vadd.f32 %v4971, %v5948
    %v5950 = vpop.f32.mrf.mxu0
    %v5951 = vadd.f32 %v4967, %v5950
    %v5952 = vpop.f32.mrf.mxu0
    %v5953 = vadd.f32 %v4971, %v5952
    %5954 = vdwg.mxu0
    %5955 = vmatprep.subr.bf16.mxu0 %v5455
    %5956 = vmatpush1.bf16.msra.mxu0 %v5454
    %5957 = vmatprep.subr.bf16.mxu0 %v5451
    %5958 = vmatpush1.bf16.msra.mxu0 %v5450
    %5959 = vmatprep.subr.bf16.mxu0 %v5447
    %5960 = vmatpush1.bf16.msra.mxu0 %v5446
    %5961 = vmatprep.subr.bf16.mxu0 %v5443
    %5962 = vmatpush1.bf16.msra.mxu0 %v5442
    %5963 = vmatprep.subr.bf16.mxu0 %v5439
    %5964 = vmatpush1.bf16.msra.mxu0 %v5438
    %5965 = vmatprep.subr.bf16.mxu0 %v5435
    %5966 = vmatpush1.bf16.msra.mxu0 %v5434
    %5967 = vmatprep.subr.bf16.mxu0 %v5431
    %5968 = vmatpush1.bf16.msra.mxu0 %v5430
    %5969 = vmatprep.subr.bf16.mxu0 %v5427
    %5970 = vmatpush1.bf16.msra.mxu0 %v5426
    %5971 = vmatprep.subr.bf16.mxu0 %v5487
    %5972 = vmatpush2.bf16.msra.mxu0 %v5486
    %5973 = vmatprep.subr.bf16.mxu0 %v5483
    %5974 = vmatpush2.bf16.msra.mxu0 %v5482
    %5975 = vmatprep.subr.bf16.mxu0 %v5479
    %5976 = vmatpush2.bf16.msra.mxu0 %v5478
    %5977 = vmatprep.subr.bf16.mxu0 %v5475
    %5978 = vmatpush2.bf16.msra.mxu0 %v5474
    %5979 = vmatprep.subr.bf16.mxu0 %v5471
    %5980 = vmatpush2.bf16.msra.mxu0 %v5470
    %5981 = vmatprep.subr.bf16.mxu0 %v5467
    %5982 = vmatpush2.bf16.msra.mxu0 %v5466
    %5983 = vmatprep.subr.bf16.mxu0 %v5463
    %5984 = vmatpush2.bf16.msra.mxu0 %v5462
    %5985 = vmatprep.subr.bf16.mxu0 %v5459
    %5986 = vmatpush2.bf16.msra.mxu0 %v5458
    %5987 = vmatprep.mubr.bf16.mxu0 %v4797
    %5988 = vmatmul.mubr.bf16.gmra.mxu0 %v4796
    %v5989 = vpop.f32.mrf.mxu0
    %v5990 = vadd.f32 %v5877, %v5989
    %v5991 = vpop.f32.mrf.mxu0
    %v5992 = vadd.f32 %v5879, %v5991
    %v5993 = vpop.f32.mrf.mxu0
    %v5994 = vadd.f32 %v5881, %v5993
    %v5995 = vpop.f32.mrf.mxu0
    %v5996 = vadd.f32 %v5883, %v5995
    %5997 = vmatprep.mubr.bf16.mxu0 %v4801
    %5998 = vmatmul.mubr.bf16.gmra.mxu0 %v4800
    %v5999 = vpop.f32.mrf.mxu0
    %v6000 = vadd.f32 %v5887, %v5999
    %v6001 = vpop.f32.mrf.mxu0
    %v6002 = vadd.f32 %v5889, %v6001
    %v6003 = vpop.f32.mrf.mxu0
    %v6004 = vadd.f32 %v5891, %v6003
    %v6005 = vpop.f32.mrf.mxu0
    %v6006 = vadd.f32 %v5893, %v6005
    %6007 = vmatprep.mubr.bf16.mxu0 %v4805
    %6008 = vmatmul.mubr.bf16.gmra.mxu0 %v4804
    %v6009 = vpop.f32.mrf.mxu0
    %v6010 = vadd.f32 %v5897, %v6009
    %v6011 = vpop.f32.mrf.mxu0
    %v6012 = vadd.f32 %v5899, %v6011
    %v6013 = vpop.f32.mrf.mxu0
    %v6014 = vadd.f32 %v5901, %v6013
    %v6015 = vpop.f32.mrf.mxu0
    %v6016 = vadd.f32 %v5903, %v6015
    %6017 = vmatprep.mubr.bf16.mxu0 %v4809
    %6018 = vmatmul.mubr.bf16.gmra.mxu0 %v4808
    %v6019 = vpop.f32.mrf.mxu0
    %v6020 = vadd.f32 %v5907, %v6019
    %v6021 = vpop.f32.mrf.mxu0
    %v6022 = vadd.f32 %v5909, %v6021
    %v6023 = vpop.f32.mrf.mxu0
    %v6024 = vadd.f32 %v5911, %v6023
    %v6025 = vpop.f32.mrf.mxu0
    %v6026 = vadd.f32 %v5913, %v6025
    %6027 = vmatprep.mubr.bf16.mxu0 %v4813
    %6028 = vmatmul.mubr.bf16.gmra.mxu0 %v4812
    %v6029 = vpop.f32.mrf.mxu0
    %v6030 = vadd.f32 %v5917, %v6029
    %v6031 = vpop.f32.mrf.mxu0
    %v6032 = vadd.f32 %v5919, %v6031
    %v6033 = vpop.f32.mrf.mxu0
    %v6034 = vadd.f32 %v5921, %v6033
    %v6035 = vpop.f32.mrf.mxu0
    %v6036 = vadd.f32 %v5923, %v6035
    %6037 = vmatprep.mubr.bf16.mxu0 %v4817
    %6038 = vmatmul.mubr.bf16.gmra.mxu0 %v4816
    %v6039 = vpop.f32.mrf.mxu0
    %v6040 = vadd.f32 %v5927, %v6039
    %v6041 = vpop.f32.mrf.mxu0
    %v6042 = vadd.f32 %v5929, %v6041
    %v6043 = vpop.f32.mrf.mxu0
    %v6044 = vadd.f32 %v5931, %v6043
    %v6045 = vpop.f32.mrf.mxu0
    %v6046 = vadd.f32 %v5933, %v6045
    %6047 = vmatprep.mubr.bf16.mxu0 %v4821
    %6048 = vmatmul.mubr.bf16.gmra.mxu0 %v4820
    %v6049 = vpop.f32.mrf.mxu0
    %v6050 = vadd.f32 %v5937, %v6049
    %v6051 = vpop.f32.mrf.mxu0
    %v6052 = vadd.f32 %v5939, %v6051
    %v6053 = vpop.f32.mrf.mxu0
    %v6054 = vadd.f32 %v5941, %v6053
    %v6055 = vpop.f32.mrf.mxu0
    %v6056 = vadd.f32 %v5943, %v6055
    %6057 = vmatprep.mubr.bf16.mxu0 %v4825
    %6058 = vmatmul.mubr.bf16.gmra.mxu0 %v4824
    %v6059 = vpop.f32.mrf.mxu0
    %v6060 = vadd.f32 %v5947, %v6059
    %v6061 = vpop.f32.mrf.mxu0
    %v6062 = vadd.f32 %v5949, %v6061
    %v6063 = vpop.f32.mrf.mxu0
    %v6064 = vadd.f32 %v5951, %v6063
    %v6065 = vpop.f32.mrf.mxu0
    %v6066 = vadd.f32 %v5953, %v6065
    %6067 = vdwg.mxu0
    %v6068 = vmax.f32 %v5764, 0.0
    %v6069 = vmax.f32 %v5766, 0.0
    %v6070 = vmax.f32 %v5990, 0.0
    %v6071 = vmax.f32 %v5992, 0.0
    %v6072 = vmax.f32 %v5768, 0.0
    %v6073 = vmax.f32 %v5770, 0.0
    %v6074 = vmax.f32 %v5994, 0.0
    %v6075 = vmax.f32 %v5996, 0.0
    %v6076 = vmax.f32 %v5774, 0.0
    %v6077 = vmax.f32 %v5776, 0.0
    %v6078 = vmax.f32 %v6000, 0.0
    %v6079 = vmax.f32 %v6002, 0.0
    %v6080 = vmax.f32 %v5778, 0.0
    %v6081 = vmax.f32 %v5780, 0.0
    %v6082 = vmax.f32 %v6004, 0.0
    %v6083 = vmax.f32 %v6006, 0.0
    %v6084 = vmax.f32 %v5784, 0.0
    %v6085 = vmax.f32 %v5786, 0.0
    %v6086 = vmax.f32 %v6010, 0.0
    %v6087 = vmax.f32 %v6012, 0.0
    %v6088 = vmax.f32 %v5788, 0.0
    %v6089 = vmax.f32 %v5790, 0.0
    %v6090 = vmax.f32 %v6014, 0.0
    %v6091 = vmax.f32 %v6016, 0.0
    %v6092 = vmax.f32 %v5794, 0.0
    %v6093 = vmax.f32 %v5796, 0.0
    %v6094 = vmax.f32 %v6020, 0.0
    %v6095 = vmax.f32 %v6022, 0.0
    %v6096 = vmax.f32 %v5798, 0.0
    %v6097 = vmax.f32 %v5800, 0.0
    %v6098 = vmax.f32 %v6024, 0.0
    %v6099 = vmax.f32 %v6026, 0.0
    %v6100 = vmax.f32 %v5804, 0.0
    %v6101 = vmax.f32 %v5806, 0.0
    %v6102 = vmax.f32 %v6030, 0.0
    %v6103 = vmax.f32 %v6032, 0.0
    %v6104 = vmax.f32 %v5808, 0.0
    %v6105 = vmax.f32 %v5810, 0.0
    %v6106 = vmax.f32 %v6034, 0.0
    %v6107 = vmax.f32 %v6036, 0.0
    %v6108 = vmax.f32 %v5814, 0.0
    %v6109 = vmax.f32 %v5816, 0.0
    %v6110 = vmax.f32 %v6040, 0.0
    %v6111 = vmax.f32 %v6042, 0.0
    %v6112 = vmax.f32 %v5818, 0.0
    %v6113 = vmax.f32 %v5820, 0.0
    %v6114 = vmax.f32 %v6044, 0.0
    %v6115 = vmax.f32 %v6046, 0.0
    %v6116 = vmax.f32 %v5824, 0.0
    %v6117 = vmax.f32 %v5826, 0.0
    %v6118 = vmax.f32 %v6050, 0.0
    %v6119 = vmax.f32 %v6052, 0.0
    %v6120 = vmax.f32 %v5828, 0.0
    %v6121 = vmax.f32 %v5830, 0.0
    %v6122 = vmax.f32 %v6054, 0.0
    %v6123 = vmax.f32 %v6056, 0.0
    %v6124 = vmax.f32 %v5834, 0.0
    %v6125 = vmax.f32 %v5836, 0.0
    %v6126 = vmax.f32 %v6060, 0.0
    %v6127 = vmax.f32 %v6062, 0.0
    %v6128 = vmax.f32 %v5838, 0.0
    %v6129 = vmax.f32 %v5840, 0.0
    %v6130 = vmax.f32 %v6064, 0.0
    %v6131 = vmax.f32 %v6066, 0.0
    %v6132 = vpack.c.bf16 %v6072, %v6068
    %v6133 = vpack.c.bf16 %v6073, %v6069
    %v6134 = vpack.c.bf16 %v6074, %v6070
    %v6135 = vpack.c.bf16 %v6075, %v6071
    %v6136 = vpack.c.bf16 %v6080, %v6076
    %v6137 = vpack.c.bf16 %v6081, %v6077
    %v6138 = vpack.c.bf16 %v6082, %v6078
    %v6139 = vpack.c.bf16 %v6083, %v6079
    %v6140 = vpack.c.bf16 %v6088, %v6084
    %v6141 = vpack.c.bf16 %v6089, %v6085
    %v6142 = vpack.c.bf16 %v6090, %v6086
    %v6143 = vpack.c.bf16 %v6091, %v6087
    %v6144 = vpack.c.bf16 %v6096, %v6092
    %v6145 = vpack.c.bf16 %v6097, %v6093
    %v6146 = vpack.c.bf16 %v6098, %v6094
    %v6147 = vpack.c.bf16 %v6099, %v6095
    %v6148 = vpack.c.bf16 %v6104, %v6100
    %v6149 = vpack.c.bf16 %v6105, %v6101
    %v6150 = vpack.c.bf16 %v6106, %v6102
    %v6151 = vpack.c.bf16 %v6107, %v6103
    %v6152 = vpack.c.bf16 %v6112, %v6108
    %v6153 = vpack.c.bf16 %v6113, %v6109
    %v6154 = vpack.c.bf16 %v6114, %v6110
    %v6155 = vpack.c.bf16 %v6115, %v6111
    %v6156 = vpack.c.bf16 %v6120, %v6116
    %v6157 = vpack.c.bf16 %v6121, %v6117
    %v6158 = vpack.c.bf16 %v6122, %v6118
    %v6159 = vpack.c.bf16 %v6123, %v6119
    %v6160 = vpack.c.bf16 %v6128, %v6124
    %v6161 = vpack.c.bf16 %v6129, %v6125
    %v6162 = vpack.c.bf16 %v6130, %v6126
    %v6163 = vpack.c.bf16 %v6131, %v6127
    %v6164 = vld [vmem:[#allocation10] sm:$0xff]
    %v6165 = vld [vmem:[#allocation10 + $0x8] sm:$0xff]
    %v6166 = vld [vmem:[#allocation10 + $0x10] sm:$0xff]
    %v6167 = vld [vmem:[#allocation10 + $0x18] sm:$0xff]
    %v6168 = vld [vmem:[#allocation10 + $0x20] sm:$0xff]
    %v6169 = vld [vmem:[#allocation10 + $0x28] sm:$0xff]
    %v6170 = vld [vmem:[#allocation10 + $0x30] sm:$0xff]
    %v6171 = vld [vmem:[#allocation10 + $0x38] sm:$0xff]
    %v6172 = vld [vmem:[#allocation10 + $0x40] sm:$0xff]
    %v6173 = vld [vmem:[#allocation10 + $0x48] sm:$0xff]
    %v6174 = vld [vmem:[#allocation10 + $0x50] sm:$0xff]
    %v6175 = vld [vmem:[#allocation10 + $0x58] sm:$0xff]
    %v6176 = vld [vmem:[#allocation10 + $0x60] sm:$0xff]
    %v6177 = vld [vmem:[#allocation10 + $0x68] sm:$0xff]
    %v6178 = vld [vmem:[#allocation10 + $0x70] sm:$0xff]
    %v6179 = vld [vmem:[#allocation10 + $0x78] sm:$0xff]
    %v6180 = vld [vmem:[#allocation10 + $0x80] sm:$0xff]
    %v6181 = vld [vmem:[#allocation10 + $0x88] sm:$0xff]
    %v6182 = vld [vmem:[#allocation10 + $0x90] sm:$0xff]
    %v6183 = vld [vmem:[#allocation10 + $0x98] sm:$0xff]
    %v6184 = vld [vmem:[#allocation10 + $0xa0] sm:$0xff]
    %v6185 = vld [vmem:[#allocation10 + $0xa8] sm:$0xff]
    %v6186 = vld [vmem:[#allocation10 + $0xb0] sm:$0xff]
    %v6187 = vld [vmem:[#allocation10 + $0xb8] sm:$0xff]
    %v6188 = vld [vmem:[#allocation10 + $0xc0] sm:$0xff]
    %v6189 = vld [vmem:[#allocation10 + $0xc8] sm:$0xff]
    %v6190 = vld [vmem:[#allocation10 + $0xd0] sm:$0xff]
    %v6191 = vld [vmem:[#allocation10 + $0xd8] sm:$0xff]
    %v6192 = vld [vmem:[#allocation10 + $0xe0] sm:$0xff]
    %v6193 = vld [vmem:[#allocation10 + $0xe8] sm:$0xff]
    %v6194 = vld [vmem:[#allocation10 + $0xf0] sm:$0xff]
    %v6195 = vld [vmem:[#allocation10 + $0xf8] sm:$0xff]
    %v6196 = vld [vmem:[#allocation10 + $0x100] sm:$0xff]
    %v6197 = vld [vmem:[#allocation10 + $0x108] sm:$0xff]
    %v6198 = vld [vmem:[#allocation10 + $0x110] sm:$0xff]
    %v6199 = vld [vmem:[#allocation10 + $0x118] sm:$0xff]
    %v6200 = vld [vmem:[#allocation10 + $0x120] sm:$0xff]
    %v6201 = vld [vmem:[#allocation10 + $0x128] sm:$0xff]
    %v6202 = vld [vmem:[#allocation10 + $0x130] sm:$0xff]
    %v6203 = vld [vmem:[#allocation10 + $0x138] sm:$0xff]
    %v6204 = vld [vmem:[#allocation10 + $0x140] sm:$0xff]
    %v6205 = vld [vmem:[#allocation10 + $0x148] sm:$0xff]
    %v6206 = vld [vmem:[#allocation10 + $0x150] sm:$0xff]
    %v6207 = vld [vmem:[#allocation10 + $0x158] sm:$0xff]
    %v6208 = vld [vmem:[#allocation10 + $0x160] sm:$0xff]
    %v6209 = vld [vmem:[#allocation10 + $0x168] sm:$0xff]
    %v6210 = vld [vmem:[#allocation10 + $0x170] sm:$0xff]
    %v6211 = vld [vmem:[#allocation10 + $0x178] sm:$0xff]
    %v6212 = vld [vmem:[#allocation10 + $0x180] sm:$0xff]
    %v6213 = vld [vmem:[#allocation10 + $0x188] sm:$0xff]
    %v6214 = vld [vmem:[#allocation10 + $0x190] sm:$0xff]
    %v6215 = vld [vmem:[#allocation10 + $0x198] sm:$0xff]
    %v6216 = vld [vmem:[#allocation10 + $0x1a0] sm:$0xff]
    %v6217 = vld [vmem:[#allocation10 + $0x1a8] sm:$0xff]
    %v6218 = vld [vmem:[#allocation10 + $0x1b0] sm:$0xff]
    %v6219 = vld [vmem:[#allocation10 + $0x1b8] sm:$0xff]
    %v6220 = vld [vmem:[#allocation10 + $0x1c0] sm:$0xff]
    %v6221 = vld [vmem:[#allocation10 + $0x1c8] sm:$0xff]
    %v6222 = vld [vmem:[#allocation10 + $0x1d0] sm:$0xff]
    %v6223 = vld [vmem:[#allocation10 + $0x1d8] sm:$0xff]
    %v6224 = vld [vmem:[#allocation10 + $0x1e0] sm:$0xff]
    %v6225 = vld [vmem:[#allocation10 + $0x1e8] sm:$0xff]
    %v6226 = vld [vmem:[#allocation10 + $0x1f0] sm:$0xff]
    %v6227 = vld [vmem:[#allocation10 + $0x1f8] sm:$0xff]
    %v6228 = vld [vmem:[#allocation10 + $0x200] sm:$0xff]
    %v6229 = vld [vmem:[#allocation10 + $0x208] sm:$0xff]
    %v6230 = vld [vmem:[#allocation10 + $0x210] sm:$0xff]
    %v6231 = vld [vmem:[#allocation10 + $0x218] sm:$0xff]
    %v6232 = vld [vmem:[#allocation10 + $0x220] sm:$0xff]
    %v6233 = vld [vmem:[#allocation10 + $0x228] sm:$0xff]
    %v6234 = vld [vmem:[#allocation10 + $0x230] sm:$0xff]
    %v6235 = vld [vmem:[#allocation10 + $0x238] sm:$0xff]
    %v6236 = vld [vmem:[#allocation10 + $0x240] sm:$0xff]
    %v6237 = vld [vmem:[#allocation10 + $0x248] sm:$0xff]
    %v6238 = vld [vmem:[#allocation10 + $0x250] sm:$0xff]
    %v6239 = vld [vmem:[#allocation10 + $0x258] sm:$0xff]
    %v6240 = vld [vmem:[#allocation10 + $0x260] sm:$0xff]
    %v6241 = vld [vmem:[#allocation10 + $0x268] sm:$0xff]
    %v6242 = vld [vmem:[#allocation10 + $0x270] sm:$0xff]
    %v6243 = vld [vmem:[#allocation10 + $0x278] sm:$0xff]
    %v6244 = vld [vmem:[#allocation10 + $0x280] sm:$0xff]
    %v6245 = vld [vmem:[#allocation10 + $0x288] sm:$0xff]
    %v6246 = vld [vmem:[#allocation10 + $0x290] sm:$0xff]
    %v6247 = vld [vmem:[#allocation10 + $0x298] sm:$0xff]
    %v6248 = vld [vmem:[#allocation10 + $0x2a0] sm:$0xff]
    %v6249 = vld [vmem:[#allocation10 + $0x2a8] sm:$0xff]
    %v6250 = vld [vmem:[#allocation10 + $0x2b0] sm:$0xff]
    %v6251 = vld [vmem:[#allocation10 + $0x2b8] sm:$0xff]
    %v6252 = vld [vmem:[#allocation10 + $0x2c0] sm:$0xff]
    %v6253 = vld [vmem:[#allocation10 + $0x2c8] sm:$0xff]
    %v6254 = vld [vmem:[#allocation10 + $0x2d0] sm:$0xff]
    %v6255 = vld [vmem:[#allocation10 + $0x2d8] sm:$0xff]
    %v6256 = vld [vmem:[#allocation10 + $0x2e0] sm:$0xff]
    %v6257 = vld [vmem:[#allocation10 + $0x2e8] sm:$0xff]
    %v6258 = vld [vmem:[#allocation10 + $0x2f0] sm:$0xff]
    %v6259 = vld [vmem:[#allocation10 + $0x2f8] sm:$0xff]
    %v6260 = vld [vmem:[#allocation10 + $0x300] sm:$0xff]
    %v6261 = vld [vmem:[#allocation10 + $0x308] sm:$0xff]
    %v6262 = vld [vmem:[#allocation10 + $0x310] sm:$0xff]
    %v6263 = vld [vmem:[#allocation10 + $0x318] sm:$0xff]
    %v6264 = vld [vmem:[#allocation10 + $0x320] sm:$0xff]
    %v6265 = vld [vmem:[#allocation10 + $0x328] sm:$0xff]
    %v6266 = vld [vmem:[#allocation10 + $0x330] sm:$0xff]
    %v6267 = vld [vmem:[#allocation10 + $0x338] sm:$0xff]
    %v6268 = vld [vmem:[#allocation10 + $0x340] sm:$0xff]
    %v6269 = vld [vmem:[#allocation10 + $0x348] sm:$0xff]
    %v6270 = vld [vmem:[#allocation10 + $0x350] sm:$0xff]
    %v6271 = vld [vmem:[#allocation10 + $0x358] sm:$0xff]
    %v6272 = vld [vmem:[#allocation10 + $0x360] sm:$0xff]
    %v6273 = vld [vmem:[#allocation10 + $0x368] sm:$0xff]
    %v6274 = vld [vmem:[#allocation10 + $0x370] sm:$0xff]
    %v6275 = vld [vmem:[#allocation10 + $0x378] sm:$0xff]
    %v6276 = vld [vmem:[#allocation10 + $0x380] sm:$0xff]
    %v6277 = vld [vmem:[#allocation10 + $0x388] sm:$0xff]
    %v6278 = vld [vmem:[#allocation10 + $0x390] sm:$0xff]
    %v6279 = vld [vmem:[#allocation10 + $0x398] sm:$0xff]
    %v6280 = vld [vmem:[#allocation10 + $0x3a0] sm:$0xff]
    %v6281 = vld [vmem:[#allocation10 + $0x3a8] sm:$0xff]
    %v6282 = vld [vmem:[#allocation10 + $0x3b0] sm:$0xff]
    %v6283 = vld [vmem:[#allocation10 + $0x3b8] sm:$0xff]
    %v6284 = vld [vmem:[#allocation10 + $0x3c0] sm:$0xff]
    %v6285 = vld [vmem:[#allocation10 + $0x3c8] sm:$0xff]
    %v6286 = vld [vmem:[#allocation10 + $0x3d0] sm:$0xff]
    %v6287 = vld [vmem:[#allocation10 + $0x3d8] sm:$0xff]
    %v6288 = vld [vmem:[#allocation10 + $0x3e0] sm:$0xff]
    %v6289 = vld [vmem:[#allocation10 + $0x3e8] sm:$0xff]
    %v6290 = vld [vmem:[#allocation10 + $0x3f0] sm:$0xff]
    %v6291 = vld [vmem:[#allocation10 + $0x3f8] sm:$0xff]
    %v6292 = vld [vmem:[%s16] sm:$0xf]
    %v6294 = vlaneseq
    %v6295 = vshrl.u32 %v6294, 7
    %v6296 = vsub.s32 0, %v6295
    %v6297 = vrot.slane %v6292, %v6296
    %v6298 = vlaneseq
    %v6299 = vshrl.u32 %v6298, 7
    %v6300 = vsub.s32 1, %v6299
    %v6301 = vrot.slane %v6292, %v6300
    %v6302 = vlaneseq
    %v6303 = vshrl.u32 %v6302, 7
    %v6304 = vsub.s32 2, %v6303
    %v6305 = vrot.slane %v6292, %v6304
    %v6306 = vlaneseq
    %v6307 = vshrl.u32 %v6306, 7
    %v6308 = vsub.s32 3, %v6307
    %v6309 = vrot.slane %v6292, %v6308
    %v6442 = vunpack.c.l.b16 %v6164
    %v6443 = vunpack.c.h.b16 %v6164
    %v6444 = vunpack.c.l.b16 %v6165
    %v6445 = vunpack.c.h.b16 %v6165
    %v6446 = vunpack.c.l.b16 %v6166
    %v6447 = vunpack.c.h.b16 %v6166
    %v6448 = vunpack.c.l.b16 %v6167
    %v6449 = vunpack.c.h.b16 %v6167
    %v6450 = vunpack.c.l.b16 %v6168
    %v6451 = vunpack.c.h.b16 %v6168
    %v6452 = vunpack.c.l.b16 %v6169
    %v6453 = vunpack.c.h.b16 %v6169
    %v6454 = vunpack.c.l.b16 %v6170
    %v6455 = vunpack.c.h.b16 %v6170
    %v6456 = vunpack.c.l.b16 %v6171
    %v6457 = vunpack.c.h.b16 %v6171
    %v6458 = vunpack.c.l.b16 %v6172
    %v6459 = vunpack.c.h.b16 %v6172
    %v6460 = vunpack.c.l.b16 %v6173
    %v6461 = vunpack.c.h.b16 %v6173
    %v6462 = vunpack.c.l.b16 %v6174
    %v6463 = vunpack.c.h.b16 %v6174
    %v6464 = vunpack.c.l.b16 %v6175
    %v6465 = vunpack.c.h.b16 %v6175
    %v6466 = vunpack.c.l.b16 %v6176
    %v6467 = vunpack.c.h.b16 %v6176
    %v6468 = vunpack.c.l.b16 %v6177
    %v6469 = vunpack.c.h.b16 %v6177
    %v6470 = vunpack.c.l.b16 %v6178
    %v6471 = vunpack.c.h.b16 %v6178
    %v6472 = vunpack.c.l.b16 %v6179
    %v6473 = vunpack.c.h.b16 %v6179
    %v6474 = vunpack.c.l.b16 %v6180
    %v6475 = vunpack.c.h.b16 %v6180
    %v6476 = vunpack.c.l.b16 %v6181
    %v6477 = vunpack.c.h.b16 %v6181
    %v6478 = vunpack.c.l.b16 %v6182
    %v6479 = vunpack.c.h.b16 %v6182
    %v6480 = vunpack.c.l.b16 %v6183
    %v6481 = vunpack.c.h.b16 %v6183
    %v6482 = vunpack.c.l.b16 %v6184
    %v6483 = vunpack.c.h.b16 %v6184
    %v6484 = vunpack.c.l.b16 %v6185
    %v6485 = vunpack.c.h.b16 %v6185
    %v6486 = vunpack.c.l.b16 %v6186
    %v6487 = vunpack.c.h.b16 %v6186
    %v6488 = vunpack.c.l.b16 %v6187
    %v6489 = vunpack.c.h.b16 %v6187
    %v6490 = vunpack.c.l.b16 %v6188
    %v6491 = vunpack.c.h.b16 %v6188
    %v6492 = vunpack.c.l.b16 %v6189
    %v6493 = vunpack.c.h.b16 %v6189
    %v6494 = vunpack.c.l.b16 %v6190
    %v6495 = vunpack.c.h.b16 %v6190
    %v6496 = vunpack.c.l.b16 %v6191
    %v6497 = vunpack.c.h.b16 %v6191
    %v6498 = vunpack.c.l.b16 %v6192
    %v6499 = vunpack.c.h.b16 %v6192
    %v6500 = vunpack.c.l.b16 %v6193
    %v6501 = vunpack.c.h.b16 %v6193
    %v6502 = vunpack.c.l.b16 %v6194
    %v6503 = vunpack.c.h.b16 %v6194
    %v6504 = vunpack.c.l.b16 %v6195
    %v6505 = vunpack.c.h.b16 %v6195
    %v6506 = vunpack.c.l.b16 %v6196
    %v6507 = vunpack.c.h.b16 %v6196
    %v6508 = vunpack.c.l.b16 %v6197
    %v6509 = vunpack.c.h.b16 %v6197
    %v6510 = vunpack.c.l.b16 %v6198
    %v6511 = vunpack.c.h.b16 %v6198
    %v6512 = vunpack.c.l.b16 %v6199
    %v6513 = vunpack.c.h.b16 %v6199
    %v6514 = vunpack.c.l.b16 %v6200
    %v6515 = vunpack.c.h.b16 %v6200
    %v6516 = vunpack.c.l.b16 %v6201
    %v6517 = vunpack.c.h.b16 %v6201
    %v6518 = vunpack.c.l.b16 %v6202
    %v6519 = vunpack.c.h.b16 %v6202
    %v6520 = vunpack.c.l.b16 %v6203
    %v6521 = vunpack.c.h.b16 %v6203
    %v6522 = vunpack.c.l.b16 %v6204
    %v6523 = vunpack.c.h.b16 %v6204
    %v6524 = vunpack.c.l.b16 %v6205
    %v6525 = vunpack.c.h.b16 %v6205
    %v6526 = vunpack.c.l.b16 %v6206
    %v6527 = vunpack.c.h.b16 %v6206
    %v6528 = vunpack.c.l.b16 %v6207
    %v6529 = vunpack.c.h.b16 %v6207
    %v6530 = vunpack.c.l.b16 %v6208
    %v6531 = vunpack.c.h.b16 %v6208
    %v6532 = vunpack.c.l.b16 %v6209
    %v6533 = vunpack.c.h.b16 %v6209
    %v6534 = vunpack.c.l.b16 %v6210
    %v6535 = vunpack.c.h.b16 %v6210
    %v6536 = vunpack.c.l.b16 %v6211
    %v6537 = vunpack.c.h.b16 %v6211
    %v6538 = vunpack.c.l.b16 %v6212
    %v6539 = vunpack.c.h.b16 %v6212
    %v6540 = vunpack.c.l.b16 %v6213
    %v6541 = vunpack.c.h.b16 %v6213
    %v6542 = vunpack.c.l.b16 %v6214
    %v6543 = vunpack.c.h.b16 %v6214
    %v6544 = vunpack.c.l.b16 %v6215
    %v6545 = vunpack.c.h.b16 %v6215
    %v6546 = vunpack.c.l.b16 %v6216
    %v6547 = vunpack.c.h.b16 %v6216
    %v6548 = vunpack.c.l.b16 %v6217
    %v6549 = vunpack.c.h.b16 %v6217
    %v6550 = vunpack.c.l.b16 %v6218
    %v6551 = vunpack.c.h.b16 %v6218
    %v6552 = vunpack.c.l.b16 %v6219
    %v6553 = vunpack.c.h.b16 %v6219
    %v6554 = vunpack.c.l.b16 %v6220
    %v6555 = vunpack.c.h.b16 %v6220
    %v6556 = vunpack.c.l.b16 %v6221
    %v6557 = vunpack.c.h.b16 %v6221
    %v6558 = vunpack.c.l.b16 %v6222
    %v6559 = vunpack.c.h.b16 %v6222
    %v6560 = vunpack.c.l.b16 %v6223
    %v6561 = vunpack.c.h.b16 %v6223
    %v6562 = vunpack.c.l.b16 %v6224
    %v6563 = vunpack.c.h.b16 %v6224
    %v6564 = vunpack.c.l.b16 %v6225
    %v6565 = vunpack.c.h.b16 %v6225
    %v6566 = vunpack.c.l.b16 %v6226
    %v6567 = vunpack.c.h.b16 %v6226
    %v6568 = vunpack.c.l.b16 %v6227
    %v6569 = vunpack.c.h.b16 %v6227
    %v6570 = vunpack.c.l.b16 %v6228
    %v6571 = vunpack.c.h.b16 %v6228
    %v6572 = vunpack.c.l.b16 %v6229
    %v6573 = vunpack.c.h.b16 %v6229
    %v6574 = vunpack.c.l.b16 %v6230
    %v6575 = vunpack.c.h.b16 %v6230
    %v6576 = vunpack.c.l.b16 %v6231
    %v6577 = vunpack.c.h.b16 %v6231
    %v6578 = vunpack.c.l.b16 %v6232
    %v6579 = vunpack.c.h.b16 %v6232
    %v6580 = vunpack.c.l.b16 %v6233
    %v6581 = vunpack.c.h.b16 %v6233
    %v6582 = vunpack.c.l.b16 %v6234
    %v6583 = vunpack.c.h.b16 %v6234
    %v6584 = vunpack.c.l.b16 %v6235
    %v6585 = vunpack.c.h.b16 %v6235
    %v6586 = vunpack.c.l.b16 %v6236
    %v6587 = vunpack.c.h.b16 %v6236
    %v6588 = vunpack.c.l.b16 %v6237
    %v6589 = vunpack.c.h.b16 %v6237
    %v6590 = vunpack.c.l.b16 %v6238
    %v6591 = vunpack.c.h.b16 %v6238
    %v6592 = vunpack.c.l.b16 %v6239
    %v6593 = vunpack.c.h.b16 %v6239
    %v6594 = vunpack.c.l.b16 %v6240
    %v6595 = vunpack.c.h.b16 %v6240
    %v6596 = vunpack.c.l.b16 %v6241
    %v6597 = vunpack.c.h.b16 %v6241
    %v6598 = vunpack.c.l.b16 %v6242
    %v6599 = vunpack.c.h.b16 %v6242
    %v6600 = vunpack.c.l.b16 %v6243
    %v6601 = vunpack.c.h.b16 %v6243
    %v6602 = vunpack.c.l.b16 %v6244
    %v6603 = vunpack.c.h.b16 %v6244
    %v6604 = vunpack.c.l.b16 %v6245
    %v6605 = vunpack.c.h.b16 %v6245
    %v6606 = vunpack.c.l.b16 %v6246
    %v6607 = vunpack.c.h.b16 %v6246
    %v6608 = vunpack.c.l.b16 %v6247
    %v6609 = vunpack.c.h.b16 %v6247
    %v6610 = vunpack.c.l.b16 %v6248
    %v6611 = vunpack.c.h.b16 %v6248
    %v6612 = vunpack.c.l.b16 %v6249
    %v6613 = vunpack.c.h.b16 %v6249
    %v6614 = vunpack.c.l.b16 %v6250
    %v6615 = vunpack.c.h.b16 %v6250
    %v6616 = vunpack.c.l.b16 %v6251
    %v6617 = vunpack.c.h.b16 %v6251
    %v6618 = vunpack.c.l.b16 %v6252
    %v6619 = vunpack.c.h.b16 %v6252
    %v6620 = vunpack.c.l.b16 %v6253
    %v6621 = vunpack.c.h.b16 %v6253
    %v6622 = vunpack.c.l.b16 %v6254
    %v6623 = vunpack.c.h.b16 %v6254
    %v6624 = vunpack.c.l.b16 %v6255
    %v6625 = vunpack.c.h.b16 %v6255
    %v6626 = vunpack.c.l.b16 %v6256
    %v6627 = vunpack.c.h.b16 %v6256
    %v6628 = vunpack.c.l.b16 %v6257
    %v6629 = vunpack.c.h.b16 %v6257
    %v6630 = vunpack.c.l.b16 %v6258
    %v6631 = vunpack.c.h.b16 %v6258
    %v6632 = vunpack.c.l.b16 %v6259
    %v6633 = vunpack.c.h.b16 %v6259
    %v6634 = vunpack.c.l.b16 %v6260
    %v6635 = vunpack.c.h.b16 %v6260
    %v6636 = vunpack.c.l.b16 %v6261
    %v6637 = vunpack.c.h.b16 %v6261
    %v6638 = vunpack.c.l.b16 %v6262
    %v6639 = vunpack.c.h.b16 %v6262
    %v6640 = vunpack.c.l.b16 %v6263
    %v6641 = vunpack.c.h.b16 %v6263
    %v6642 = vunpack.c.l.b16 %v6264
    %v6643 = vunpack.c.h.b16 %v6264
    %v6644 = vunpack.c.l.b16 %v6265
    %v6645 = vunpack.c.h.b16 %v6265
    %v6646 = vunpack.c.l.b16 %v6266
    %v6647 = vunpack.c.h.b16 %v6266
    %v6648 = vunpack.c.l.b16 %v6267
    %v6649 = vunpack.c.h.b16 %v6267
    %v6650 = vunpack.c.l.b16 %v6268
    %v6651 = vunpack.c.h.b16 %v6268
    %v6652 = vunpack.c.l.b16 %v6269
    %v6653 = vunpack.c.h.b16 %v6269
    %v6654 = vunpack.c.l.b16 %v6270
    %v6655 = vunpack.c.h.b16 %v6270
    %v6656 = vunpack.c.l.b16 %v6271
    %v6657 = vunpack.c.h.b16 %v6271
    %v6658 = vunpack.c.l.b16 %v6272
    %v6659 = vunpack.c.h.b16 %v6272
    %v6660 = vunpack.c.l.b16 %v6273
    %v6661 = vunpack.c.h.b16 %v6273
    %v6662 = vunpack.c.l.b16 %v6274
    %v6663 = vunpack.c.h.b16 %v6274
    %v6664 = vunpack.c.l.b16 %v6275
    %v6665 = vunpack.c.h.b16 %v6275
    %v6666 = vunpack.c.l.b16 %v6276
    %v6667 = vunpack.c.h.b16 %v6276
    %v6668 = vunpack.c.l.b16 %v6277
    %v6669 = vunpack.c.h.b16 %v6277
    %v6670 = vunpack.c.l.b16 %v6278
    %v6671 = vunpack.c.h.b16 %v6278
    %v6672 = vunpack.c.l.b16 %v6279
    %v6673 = vunpack.c.h.b16 %v6279
    %v6674 = vunpack.c.l.b16 %v6280
    %v6675 = vunpack.c.h.b16 %v6280
    %v6676 = vunpack.c.l.b16 %v6281
    %v6677 = vunpack.c.h.b16 %v6281
    %v6678 = vunpack.c.l.b16 %v6282
    %v6679 = vunpack.c.h.b16 %v6282
    %v6680 = vunpack.c.l.b16 %v6283
    %v6681 = vunpack.c.h.b16 %v6283
    %v6682 = vunpack.c.l.b16 %v6284
    %v6683 = vunpack.c.h.b16 %v6284
    %v6684 = vunpack.c.l.b16 %v6285
    %v6685 = vunpack.c.h.b16 %v6285
    %v6686 = vunpack.c.l.b16 %v6286
    %v6687 = vunpack.c.h.b16 %v6286
    %v6688 = vunpack.c.l.b16 %v6287
    %v6689 = vunpack.c.h.b16 %v6287
    %v6690 = vunpack.c.l.b16 %v6288
    %v6691 = vunpack.c.h.b16 %v6288
    %v6692 = vunpack.c.l.b16 %v6289
    %v6693 = vunpack.c.h.b16 %v6289
    %v6694 = vunpack.c.l.b16 %v6290
    %v6695 = vunpack.c.h.b16 %v6290
    %v6696 = vunpack.c.l.b16 %v6291
    %v6697 = vunpack.c.h.b16 %v6291
    %v6698 = vpack.c.b16 %v6446, %v6442
    %v6699 = vpack.c.b16 %v6447, %v6443
    %v6700 = vpack.c.b16 %v6448, %v6444
    %v6701 = vpack.c.b16 %v6449, %v6445
    %v6702 = vpack.c.b16 %v6454, %v6450
    %v6703 = vpack.c.b16 %v6455, %v6451
    %v6704 = vpack.c.b16 %v6456, %v6452
    %v6705 = vpack.c.b16 %v6457, %v6453
    %v6706 = vpack.c.b16 %v6462, %v6458
    %v6707 = vpack.c.b16 %v6463, %v6459
    %v6708 = vpack.c.b16 %v6464, %v6460
    %v6709 = vpack.c.b16 %v6465, %v6461
    %v6710 = vpack.c.b16 %v6470, %v6466
    %v6711 = vpack.c.b16 %v6471, %v6467
    %v6712 = vpack.c.b16 %v6472, %v6468
    %v6713 = vpack.c.b16 %v6473, %v6469
    %v6714 = vpack.c.b16 %v6478, %v6474
    %v6715 = vpack.c.b16 %v6479, %v6475
    %v6716 = vpack.c.b16 %v6480, %v6476
    %v6717 = vpack.c.b16 %v6481, %v6477
    %v6718 = vpack.c.b16 %v6486, %v6482
    %v6719 = vpack.c.b16 %v6487, %v6483
    %v6720 = vpack.c.b16 %v6488, %v6484
    %v6721 = vpack.c.b16 %v6489, %v6485
    %v6722 = vpack.c.b16 %v6494, %v6490
    %v6723 = vpack.c.b16 %v6495, %v6491
    %v6724 = vpack.c.b16 %v6496, %v6492
    %v6725 = vpack.c.b16 %v6497, %v6493
    %v6726 = vpack.c.b16 %v6502, %v6498
    %v6727 = vpack.c.b16 %v6503, %v6499
    %v6728 = vpack.c.b16 %v6504, %v6500
    %v6729 = vpack.c.b16 %v6505, %v6501
    %v6730 = vpack.c.b16 %v6510, %v6506
    %v6731 = vpack.c.b16 %v6511, %v6507
    %v6732 = vpack.c.b16 %v6512, %v6508
    %v6733 = vpack.c.b16 %v6513, %v6509
    %v6734 = vpack.c.b16 %v6518, %v6514
    %v6735 = vpack.c.b16 %v6519, %v6515
    %v6736 = vpack.c.b16 %v6520, %v6516
    %v6737 = vpack.c.b16 %v6521, %v6517
    %v6738 = vpack.c.b16 %v6526, %v6522
    %v6739 = vpack.c.b16 %v6527, %v6523
    %v6740 = vpack.c.b16 %v6528, %v6524
    %v6741 = vpack.c.b16 %v6529, %v6525
    %v6742 = vpack.c.b16 %v6534, %v6530
    %v6743 = vpack.c.b16 %v6535, %v6531
    %v6744 = vpack.c.b16 %v6536, %v6532
    %v6745 = vpack.c.b16 %v6537, %v6533
    %v6746 = vpack.c.b16 %v6542, %v6538
    %v6747 = vpack.c.b16 %v6543, %v6539
    %v6748 = vpack.c.b16 %v6544, %v6540
    %v6749 = vpack.c.b16 %v6545, %v6541
    %v6750 = vpack.c.b16 %v6550, %v6546
    %v6751 = vpack.c.b16 %v6551, %v6547
    %v6752 = vpack.c.b16 %v6552, %v6548
    %v6753 = vpack.c.b16 %v6553, %v6549
    %v6754 = vpack.c.b16 %v6558, %v6554
    %v6755 = vpack.c.b16 %v6559, %v6555
    %v6756 = vpack.c.b16 %v6560, %v6556
    %v6757 = vpack.c.b16 %v6561, %v6557
    %v6758 = vpack.c.b16 %v6566, %v6562
    %v6759 = vpack.c.b16 %v6567, %v6563
    %v6760 = vpack.c.b16 %v6568, %v6564
    %v6761 = vpack.c.b16 %v6569, %v6565
    %v6762 = vpack.c.b16 %v6574, %v6570
    %v6763 = vpack.c.b16 %v6575, %v6571
    %v6764 = vpack.c.b16 %v6576, %v6572
    %v6765 = vpack.c.b16 %v6577, %v6573
    %v6766 = vpack.c.b16 %v6582, %v6578
    %v6767 = vpack.c.b16 %v6583, %v6579
    %v6768 = vpack.c.b16 %v6584, %v6580
    %v6769 = vpack.c.b16 %v6585, %v6581
    %v6770 = vpack.c.b16 %v6590, %v6586
    %v6771 = vpack.c.b16 %v6591, %v6587
    %v6772 = vpack.c.b16 %v6592, %v6588
    %v6773 = vpack.c.b16 %v6593, %v6589
    %v6774 = vpack.c.b16 %v6598, %v6594
    %v6775 = vpack.c.b16 %v6599, %v6595
    %v6776 = vpack.c.b16 %v6600, %v6596
    %v6777 = vpack.c.b16 %v6601, %v6597
    %v6778 = vpack.c.b16 %v6606, %v6602
    %v6779 = vpack.c.b16 %v6607, %v6603
    %v6780 = vpack.c.b16 %v6608, %v6604
    %v6781 = vpack.c.b16 %v6609, %v6605
    %v6782 = vpack.c.b16 %v6614, %v6610
    %v6783 = vpack.c.b16 %v6615, %v6611
    %v6784 = vpack.c.b16 %v6616, %v6612
    %v6785 = vpack.c.b16 %v6617, %v6613
    %v6786 = vpack.c.b16 %v6622, %v6618
    %v6787 = vpack.c.b16 %v6623, %v6619
    %v6788 = vpack.c.b16 %v6624, %v6620
    %v6789 = vpack.c.b16 %v6625, %v6621
    %v6790 = vpack.c.b16 %v6630, %v6626
    %v6791 = vpack.c.b16 %v6631, %v6627
    %v6792 = vpack.c.b16 %v6632, %v6628
    %v6793 = vpack.c.b16 %v6633, %v6629
    %v6794 = vpack.c.b16 %v6638, %v6634
    %v6795 = vpack.c.b16 %v6639, %v6635
    %v6796 = vpack.c.b16 %v6640, %v6636
    %v6797 = vpack.c.b16 %v6641, %v6637
    %v6798 = vpack.c.b16 %v6646, %v6642
    %v6799 = vpack.c.b16 %v6647, %v6643
    %v6800 = vpack.c.b16 %v6648, %v6644
    %v6801 = vpack.c.b16 %v6649, %v6645
    %v6802 = vpack.c.b16 %v6654, %v6650
    %v6803 = vpack.c.b16 %v6655, %v6651
    %v6804 = vpack.c.b16 %v6656, %v6652
    %v6805 = vpack.c.b16 %v6657, %v6653
    %v6806 = vpack.c.b16 %v6662, %v6658
    %v6807 = vpack.c.b16 %v6663, %v6659
    %v6808 = vpack.c.b16 %v6664, %v6660
    %v6809 = vpack.c.b16 %v6665, %v6661
    %v6810 = vpack.c.b16 %v6670, %v6666
    %v6811 = vpack.c.b16 %v6671, %v6667
    %v6812 = vpack.c.b16 %v6672, %v6668
    %v6813 = vpack.c.b16 %v6673, %v6669
    %v6814 = vpack.c.b16 %v6678, %v6674
    %v6815 = vpack.c.b16 %v6679, %v6675
    %v6816 = vpack.c.b16 %v6680, %v6676
    %v6817 = vpack.c.b16 %v6681, %v6677
    %v6818 = vpack.c.b16 %v6686, %v6682
    %v6819 = vpack.c.b16 %v6687, %v6683
    %v6820 = vpack.c.b16 %v6688, %v6684
    %v6821 = vpack.c.b16 %v6689, %v6685
    %v6822 = vpack.c.b16 %v6694, %v6690
    %v6823 = vpack.c.b16 %v6695, %v6691
    %v6824 = vpack.c.b16 %v6696, %v6692
    %v6825 = vpack.c.b16 %v6697, %v6693
    %6954 = vmatprep.subr.bf16.mxu0 %v6727
    %6955 = vmatpush1.bf16.msra.mxu0 %v6726
    %6956 = vmatprep.subr.bf16.mxu0 %v6723
    %6957 = vmatpush1.bf16.msra.mxu0 %v6722
    %6958 = vmatprep.subr.bf16.mxu0 %v6719
    %6959 = vmatpush1.bf16.msra.mxu0 %v6718
    %6960 = vmatprep.subr.bf16.mxu0 %v6715
    %6961 = vmatpush1.bf16.msra.mxu0 %v6714
    %6962 = vmatprep.subr.bf16.mxu0 %v6711
    %6963 = vmatpush1.bf16.msra.mxu0 %v6710
    %6964 = vmatprep.subr.bf16.mxu0 %v6707
    %6965 = vmatpush1.bf16.msra.mxu0 %v6706
    %6966 = vmatprep.subr.bf16.mxu0 %v6703
    %6967 = vmatpush1.bf16.msra.mxu0 %v6702
    %6968 = vmatprep.subr.bf16.mxu0 %v6699
    %6969 = vmatpush1.bf16.msra.mxu0 %v6698
    %6970 = vmatprep.subr.bf16.mxu0 %v6759
    %6971 = vmatpush2.bf16.msra.mxu0 %v6758
    %6972 = vmatprep.subr.bf16.mxu0 %v6755
    %6973 = vmatpush2.bf16.msra.mxu0 %v6754
    %6974 = vmatprep.subr.bf16.mxu0 %v6751
    %6975 = vmatpush2.bf16.msra.mxu0 %v6750
    %6976 = vmatprep.subr.bf16.mxu0 %v6747
    %6977 = vmatpush2.bf16.msra.mxu0 %v6746
    %6978 = vmatprep.subr.bf16.mxu0 %v6743
    %6979 = vmatpush2.bf16.msra.mxu0 %v6742
    %6980 = vmatprep.subr.bf16.mxu0 %v6739
    %6981 = vmatpush2.bf16.msra.mxu0 %v6738
    %6982 = vmatprep.subr.bf16.mxu0 %v6735
    %6983 = vmatpush2.bf16.msra.mxu0 %v6734
    %6984 = vmatprep.subr.bf16.mxu0 %v6731
    %6985 = vmatpush2.bf16.msra.mxu0 %v6730
    %6986 = vmatprep.mubr.bf16.mxu0 %v6133
    %6987 = vmatmul.mubr.bf16.gmra.mxu0 %v6132
    %v6988 = vpop.f32.mrf.mxu0
    %v6989 = vadd.f32 %v6297, %v6988
    %v6990 = vpop.f32.mrf.mxu0
    %v6991 = vadd.f32 %v6301, %v6990
    %v6992 = vpop.f32.mrf.mxu0
    %v6993 = vadd.f32 %v6297, %v6992
    %v6994 = vpop.f32.mrf.mxu0
    %v6995 = vadd.f32 %v6301, %v6994
    %6996 = vmatprep.mubr.bf16.mxu0 %v6137
    %6997 = vmatmul.mubr.bf16.gmra.mxu0 %v6136
    %v6998 = vpop.f32.mrf.mxu0
    %v6999 = vadd.f32 %v6297, %v6998
    %v7000 = vpop.f32.mrf.mxu0
    %v7001 = vadd.f32 %v6301, %v7000
    %v7002 = vpop.f32.mrf.mxu0
    %v7003 = vadd.f32 %v6297, %v7002
    %v7004 = vpop.f32.mrf.mxu0
    %v7005 = vadd.f32 %v6301, %v7004
    %7006 = vmatprep.mubr.bf16.mxu0 %v6141
    %7007 = vmatmul.mubr.bf16.gmra.mxu0 %v6140
    %v7008 = vpop.f32.mrf.mxu0
    %v7009 = vadd.f32 %v6297, %v7008
    %v7010 = vpop.f32.mrf.mxu0
    %v7011 = vadd.f32 %v6301, %v7010
    %v7012 = vpop.f32.mrf.mxu0
    %v7013 = vadd.f32 %v6297, %v7012
    %v7014 = vpop.f32.mrf.mxu0
    %v7015 = vadd.f32 %v6301, %v7014
    %7016 = vmatprep.mubr.bf16.mxu0 %v6145
    %7017 = vmatmul.mubr.bf16.gmra.mxu0 %v6144
    %v7018 = vpop.f32.mrf.mxu0
    %v7019 = vadd.f32 %v6297, %v7018
    %v7020 = vpop.f32.mrf.mxu0
    %v7021 = vadd.f32 %v6301, %v7020
    %v7022 = vpop.f32.mrf.mxu0
    %v7023 = vadd.f32 %v6297, %v7022
    %v7024 = vpop.f32.mrf.mxu0
    %v7025 = vadd.f32 %v6301, %v7024
    %7026 = vmatprep.mubr.bf16.mxu0 %v6149
    %7027 = vmatmul.mubr.bf16.gmra.mxu0 %v6148
    %v7028 = vpop.f32.mrf.mxu0
    %v7029 = vadd.f32 %v6297, %v7028
    %v7030 = vpop.f32.mrf.mxu0
    %v7031 = vadd.f32 %v6301, %v7030
    %v7032 = vpop.f32.mrf.mxu0
    %v7033 = vadd.f32 %v6297, %v7032
    %v7034 = vpop.f32.mrf.mxu0
    %v7035 = vadd.f32 %v6301, %v7034
    %7036 = vmatprep.mubr.bf16.mxu0 %v6153
    %7037 = vmatmul.mubr.bf16.gmra.mxu0 %v6152
    %v7038 = vpop.f32.mrf.mxu0
    %v7039 = vadd.f32 %v6297, %v7038
    %v7040 = vpop.f32.mrf.mxu0
    %v7041 = vadd.f32 %v6301, %v7040
    %v7042 = vpop.f32.mrf.mxu0
    %v7043 = vadd.f32 %v6297, %v7042
    %v7044 = vpop.f32.mrf.mxu0
    %v7045 = vadd.f32 %v6301, %v7044
    %7046 = vmatprep.mubr.bf16.mxu0 %v6157
    %7047 = vmatmul.mubr.bf16.gmra.mxu0 %v6156
    %v7048 = vpop.f32.mrf.mxu0
    %v7049 = vadd.f32 %v6297, %v7048
    %v7050 = vpop.f32.mrf.mxu0
    %v7051 = vadd.f32 %v6301, %v7050
    %v7052 = vpop.f32.mrf.mxu0
    %v7053 = vadd.f32 %v6297, %v7052
    %v7054 = vpop.f32.mrf.mxu0
    %v7055 = vadd.f32 %v6301, %v7054
    %7056 = vmatprep.mubr.bf16.mxu0 %v6161
    %7057 = vmatmul.mubr.bf16.gmra.mxu0 %v6160
    %v7058 = vpop.f32.mrf.mxu0
    %v7059 = vadd.f32 %v6297, %v7058
    %v7060 = vpop.f32.mrf.mxu0
    %v7061 = vadd.f32 %v6301, %v7060
    %v7062 = vpop.f32.mrf.mxu0
    %v7063 = vadd.f32 %v6297, %v7062
    %v7064 = vpop.f32.mrf.mxu0
    %v7065 = vadd.f32 %v6301, %v7064
    %7066 = vdwg.mxu0
    %7067 = vmatprep.subr.bf16.mxu0 %v6791
    %7068 = vmatpush1.bf16.msra.mxu0 %v6790
    %7069 = vmatprep.subr.bf16.mxu0 %v6787
    %7070 = vmatpush1.bf16.msra.mxu0 %v6786
    %7071 = vmatprep.subr.bf16.mxu0 %v6783
    %7072 = vmatpush1.bf16.msra.mxu0 %v6782
    %7073 = vmatprep.subr.bf16.mxu0 %v6779
    %7074 = vmatpush1.bf16.msra.mxu0 %v6778
    %7075 = vmatprep.subr.bf16.mxu0 %v6775
    %7076 = vmatpush1.bf16.msra.mxu0 %v6774
    %7077 = vmatprep.subr.bf16.mxu0 %v6771
    %7078 = vmatpush1.bf16.msra.mxu0 %v6770
    %7079 = vmatprep.subr.bf16.mxu0 %v6767
    %7080 = vmatpush1.bf16.msra.mxu0 %v6766
    %7081 = vmatprep.subr.bf16.mxu0 %v6763
    %7082 = vmatpush1.bf16.msra.mxu0 %v6762
    %7083 = vmatprep.subr.bf16.mxu0 %v6823
    %7084 = vmatpush2.bf16.msra.mxu0 %v6822
    %7085 = vmatprep.subr.bf16.mxu0 %v6819
    %7086 = vmatpush2.bf16.msra.mxu0 %v6818
    %7087 = vmatprep.subr.bf16.mxu0 %v6815
    %7088 = vmatpush2.bf16.msra.mxu0 %v6814
    %7089 = vmatprep.subr.bf16.mxu0 %v6811
    %7090 = vmatpush2.bf16.msra.mxu0 %v6810
    %7091 = vmatprep.subr.bf16.mxu0 %v6807
    %7092 = vmatpush2.bf16.msra.mxu0 %v6806
    %7093 = vmatprep.subr.bf16.mxu0 %v6803
    %7094 = vmatpush2.bf16.msra.mxu0 %v6802
    %7095 = vmatprep.subr.bf16.mxu0 %v6799
    %7096 = vmatpush2.bf16.msra.mxu0 %v6798
    %7097 = vmatprep.subr.bf16.mxu0 %v6795
    %7098 = vmatpush2.bf16.msra.mxu0 %v6794
    %7099 = vmatprep.mubr.bf16.mxu0 %v6135
    %7100 = vmatmul.mubr.bf16.gmra.mxu0 %v6134
    %v7101 = vpop.f32.mrf.mxu0
    %v7102 = vadd.f32 %v6989, %v7101
    %v7103 = vpop.f32.mrf.mxu0
    %v7104 = vadd.f32 %v6991, %v7103
    %v7105 = vpop.f32.mrf.mxu0
    %v7106 = vadd.f32 %v6993, %v7105
    %v7107 = vpop.f32.mrf.mxu0
    %v7108 = vadd.f32 %v6995, %v7107
    %7109 = vmatprep.mubr.bf16.mxu0 %v6139
    %7110 = vmatmul.mubr.bf16.gmra.mxu0 %v6138
    %v7111 = vpop.f32.mrf.mxu0
    %v7112 = vadd.f32 %v6999, %v7111
    %v7113 = vpop.f32.mrf.mxu0
    %v7114 = vadd.f32 %v7001, %v7113
    %v7115 = vpop.f32.mrf.mxu0
    %v7116 = vadd.f32 %v7003, %v7115
    %v7117 = vpop.f32.mrf.mxu0
    %v7118 = vadd.f32 %v7005, %v7117
    %7119 = vmatprep.mubr.bf16.mxu0 %v6143
    %7120 = vmatmul.mubr.bf16.gmra.mxu0 %v6142
    %v7121 = vpop.f32.mrf.mxu0
    %v7122 = vadd.f32 %v7009, %v7121
    %v7123 = vpop.f32.mrf.mxu0
    %v7124 = vadd.f32 %v7011, %v7123
    %v7125 = vpop.f32.mrf.mxu0
    %v7126 = vadd.f32 %v7013, %v7125
    %v7127 = vpop.f32.mrf.mxu0
    %v7128 = vadd.f32 %v7015, %v7127
    %7129 = vmatprep.mubr.bf16.mxu0 %v6147
    %7130 = vmatmul.mubr.bf16.gmra.mxu0 %v6146
    %v7131 = vpop.f32.mrf.mxu0
    %v7132 = vadd.f32 %v7019, %v7131
    %v7133 = vpop.f32.mrf.mxu0
    %v7134 = vadd.f32 %v7021, %v7133
    %v7135 = vpop.f32.mrf.mxu0
    %v7136 = vadd.f32 %v7023, %v7135
    %v7137 = vpop.f32.mrf.mxu0
    %v7138 = vadd.f32 %v7025, %v7137
    %7139 = vmatprep.mubr.bf16.mxu0 %v6151
    %7140 = vmatmul.mubr.bf16.gmra.mxu0 %v6150
    %v7141 = vpop.f32.mrf.mxu0
    %v7142 = vadd.f32 %v7029, %v7141
    %v7143 = vpop.f32.mrf.mxu0
    %v7144 = vadd.f32 %v7031, %v7143
    %v7145 = vpop.f32.mrf.mxu0
    %v7146 = vadd.f32 %v7033, %v7145
    %v7147 = vpop.f32.mrf.mxu0
    %v7148 = vadd.f32 %v7035, %v7147
    %7149 = vmatprep.mubr.bf16.mxu0 %v6155
    %7150 = vmatmul.mubr.bf16.gmra.mxu0 %v6154
    %v7151 = vpop.f32.mrf.mxu0
    %v7152 = vadd.f32 %v7039, %v7151
    %v7153 = vpop.f32.mrf.mxu0
    %v7154 = vadd.f32 %v7041, %v7153
    %v7155 = vpop.f32.mrf.mxu0
    %v7156 = vadd.f32 %v7043, %v7155
    %v7157 = vpop.f32.mrf.mxu0
    %v7158 = vadd.f32 %v7045, %v7157
    %7159 = vmatprep.mubr.bf16.mxu0 %v6159
    %7160 = vmatmul.mubr.bf16.gmra.mxu0 %v6158
    %v7161 = vpop.f32.mrf.mxu0
    %v7162 = vadd.f32 %v7049, %v7161
    %v7163 = vpop.f32.mrf.mxu0
    %v7164 = vadd.f32 %v7051, %v7163
    %v7165 = vpop.f32.mrf.mxu0
    %v7166 = vadd.f32 %v7053, %v7165
    %v7167 = vpop.f32.mrf.mxu0
    %v7168 = vadd.f32 %v7055, %v7167
    %7169 = vmatprep.mubr.bf16.mxu0 %v6163
    %7170 = vmatmul.mubr.bf16.gmra.mxu0 %v6162
    %v7171 = vpop.f32.mrf.mxu0
    %v7172 = vadd.f32 %v7059, %v7171
    %v7173 = vpop.f32.mrf.mxu0
    %v7174 = vadd.f32 %v7061, %v7173
    %v7175 = vpop.f32.mrf.mxu0
    %v7176 = vadd.f32 %v7063, %v7175
    %v7177 = vpop.f32.mrf.mxu0
    %v7178 = vadd.f32 %v7065, %v7177
    %7179 = vdwg.mxu0
    %7180 = vmatprep.subr.bf16.mxu0 %v6729
    %7181 = vmatpush1.bf16.msra.mxu0 %v6728
    %7182 = vmatprep.subr.bf16.mxu0 %v6725
    %7183 = vmatpush1.bf16.msra.mxu0 %v6724
    %7184 = vmatprep.subr.bf16.mxu0 %v6721
    %7185 = vmatpush1.bf16.msra.mxu0 %v6720
    %7186 = vmatprep.subr.bf16.mxu0 %v6717
    %7187 = vmatpush1.bf16.msra.mxu0 %v6716
    %7188 = vmatprep.subr.bf16.mxu0 %v6713
    %7189 = vmatpush1.bf16.msra.mxu0 %v6712
    %7190 = vmatprep.subr.bf16.mxu0 %v6709
    %7191 = vmatpush1.bf16.msra.mxu0 %v6708
    %7192 = vmatprep.subr.bf16.mxu0 %v6705
    %7193 = vmatpush1.bf16.msra.mxu0 %v6704
    %7194 = vmatprep.subr.bf16.mxu0 %v6701
    %7195 = vmatpush1.bf16.msra.mxu0 %v6700
    %7196 = vmatprep.subr.bf16.mxu0 %v6761
    %7197 = vmatpush2.bf16.msra.mxu0 %v6760
    %7198 = vmatprep.subr.bf16.mxu0 %v6757
    %7199 = vmatpush2.bf16.msra.mxu0 %v6756
    %7200 = vmatprep.subr.bf16.mxu0 %v6753
    %7201 = vmatpush2.bf16.msra.mxu0 %v6752
    %7202 = vmatprep.subr.bf16.mxu0 %v6749
    %7203 = vmatpush2.bf16.msra.mxu0 %v6748
    %7204 = vmatprep.subr.bf16.mxu0 %v6745
    %7205 = vmatpush2.bf16.msra.mxu0 %v6744
    %7206 = vmatprep.subr.bf16.mxu0 %v6741
    %7207 = vmatpush2.bf16.msra.mxu0 %v6740
    %7208 = vmatprep.subr.bf16.mxu0 %v6737
    %7209 = vmatpush2.bf16.msra.mxu0 %v6736
    %7210 = vmatprep.subr.bf16.mxu0 %v6733
    %7211 = vmatpush2.bf16.msra.mxu0 %v6732
    %7212 = vmatprep.mubr.bf16.mxu0 %v6133
    %7213 = vmatmul.mubr.bf16.gmra.mxu0 %v6132
    %v7214 = vpop.f32.mrf.mxu0
    %v7215 = vadd.f32 %v6305, %v7214
    %v7216 = vpop.f32.mrf.mxu0
    %v7217 = vadd.f32 %v6309, %v7216
    %v7218 = vpop.f32.mrf.mxu0
    %v7219 = vadd.f32 %v6305, %v7218
    %v7220 = vpop.f32.mrf.mxu0
    %v7221 = vadd.f32 %v6309, %v7220
    %7222 = vmatprep.mubr.bf16.mxu0 %v6137
    %7223 = vmatmul.mubr.bf16.gmra.mxu0 %v6136
    %v7224 = vpop.f32.mrf.mxu0
    %v7225 = vadd.f32 %v6305, %v7224
    %v7226 = vpop.f32.mrf.mxu0
    %v7227 = vadd.f32 %v6309, %v7226
    %v7228 = vpop.f32.mrf.mxu0
    %v7229 = vadd.f32 %v6305, %v7228
    %v7230 = vpop.f32.mrf.mxu0
    %v7231 = vadd.f32 %v6309, %v7230
    %7232 = vmatprep.mubr.bf16.mxu0 %v6141
    %7233 = vmatmul.mubr.bf16.gmra.mxu0 %v6140
    %v7234 = vpop.f32.mrf.mxu0
    %v7235 = vadd.f32 %v6305, %v7234
    %v7236 = vpop.f32.mrf.mxu0
    %v7237 = vadd.f32 %v6309, %v7236
    %v7238 = vpop.f32.mrf.mxu0
    %v7239 = vadd.f32 %v6305, %v7238
    %v7240 = vpop.f32.mrf.mxu0
    %v7241 = vadd.f32 %v6309, %v7240
    %7242 = vmatprep.mubr.bf16.mxu0 %v6145
    %7243 = vmatmul.mubr.bf16.gmra.mxu0 %v6144
    %v7244 = vpop.f32.mrf.mxu0
    %v7245 = vadd.f32 %v6305, %v7244
    %v7246 = vpop.f32.mrf.mxu0
    %v7247 = vadd.f32 %v6309, %v7246
    %v7248 = vpop.f32.mrf.mxu0
    %v7249 = vadd.f32 %v6305, %v7248
    %v7250 = vpop.f32.mrf.mxu0
    %v7251 = vadd.f32 %v6309, %v7250
    %7252 = vmatprep.mubr.bf16.mxu0 %v6149
    %7253 = vmatmul.mubr.bf16.gmra.mxu0 %v6148
    %v7254 = vpop.f32.mrf.mxu0
    %v7255 = vadd.f32 %v6305, %v7254
    %v7256 = vpop.f32.mrf.mxu0
    %v7257 = vadd.f32 %v6309, %v7256
    %v7258 = vpop.f32.mrf.mxu0
    %v7259 = vadd.f32 %v6305, %v7258
    %v7260 = vpop.f32.mrf.mxu0
    %v7261 = vadd.f32 %v6309, %v7260
    %7262 = vmatprep.mubr.bf16.mxu0 %v6153
    %7263 = vmatmul.mubr.bf16.gmra.mxu0 %v6152
    %v7264 = vpop.f32.mrf.mxu0
    %v7265 = vadd.f32 %v6305, %v7264
    %v7266 = vpop.f32.mrf.mxu0
    %v7267 = vadd.f32 %v6309, %v7266
    %v7268 = vpop.f32.mrf.mxu0
    %v7269 = vadd.f32 %v6305, %v7268
    %v7270 = vpop.f32.mrf.mxu0
    %v7271 = vadd.f32 %v6309, %v7270
    %7272 = vmatprep.mubr.bf16.mxu0 %v6157
    %7273 = vmatmul.mubr.bf16.gmra.mxu0 %v6156
    %v7274 = vpop.f32.mrf.mxu0
    %v7275 = vadd.f32 %v6305, %v7274
    %v7276 = vpop.f32.mrf.mxu0
    %v7277 = vadd.f32 %v6309, %v7276
    %v7278 = vpop.f32.mrf.mxu0
    %v7279 = vadd.f32 %v6305, %v7278
    %v7280 = vpop.f32.mrf.mxu0
    %v7281 = vadd.f32 %v6309, %v7280
    %7282 = vmatprep.mubr.bf16.mxu0 %v6161
    %7283 = vmatmul.mubr.bf16.gmra.mxu0 %v6160
    %v7284 = vpop.f32.mrf.mxu0
    %v7285 = vadd.f32 %v6305, %v7284
    %v7286 = vpop.f32.mrf.mxu0
    %v7287 = vadd.f32 %v6309, %v7286
    %v7288 = vpop.f32.mrf.mxu0
    %v7289 = vadd.f32 %v6305, %v7288
    %v7290 = vpop.f32.mrf.mxu0
    %v7291 = vadd.f32 %v6309, %v7290
    %7292 = vdwg.mxu0
    %7293 = vmatprep.subr.bf16.mxu0 %v6793
    %7294 = vmatpush1.bf16.msra.mxu0 %v6792
    %7295 = vmatprep.subr.bf16.mxu0 %v6789
    %7296 = vmatpush1.bf16.msra.mxu0 %v6788
    %7297 = vmatprep.subr.bf16.mxu0 %v6785
    %7298 = vmatpush1.bf16.msra.mxu0 %v6784
    %7299 = vmatprep.subr.bf16.mxu0 %v6781
    %7300 = vmatpush1.bf16.msra.mxu0 %v6780
    %7301 = vmatprep.subr.bf16.mxu0 %v6777
    %7302 = vmatpush1.bf16.msra.mxu0 %v6776
    %7303 = vmatprep.subr.bf16.mxu0 %v6773
    %7304 = vmatpush1.bf16.msra.mxu0 %v6772
    %7305 = vmatprep.subr.bf16.mxu0 %v6769
    %7306 = vmatpush1.bf16.msra.mxu0 %v6768
    %7307 = vmatprep.subr.bf16.mxu0 %v6765
    %7308 = vmatpush1.bf16.msra.mxu0 %v6764
    %7309 = vmatprep.subr.bf16.mxu0 %v6825
    %7310 = vmatpush2.bf16.msra.mxu0 %v6824
    %7311 = vmatprep.subr.bf16.mxu0 %v6821
    %7312 = vmatpush2.bf16.msra.mxu0 %v6820
    %7313 = vmatprep.subr.bf16.mxu0 %v6817
    %7314 = vmatpush2.bf16.msra.mxu0 %v6816
    %7315 = vmatprep.subr.bf16.mxu0 %v6813
    %7316 = vmatpush2.bf16.msra.mxu0 %v6812
    %7317 = vmatprep.subr.bf16.mxu0 %v6809
    %7318 = vmatpush2.bf16.msra.mxu0 %v6808
    %7319 = vmatprep.subr.bf16.mxu0 %v6805
    %7320 = vmatpush2.bf16.msra.mxu0 %v6804
    %7321 = vmatprep.subr.bf16.mxu0 %v6801
    %7322 = vmatpush2.bf16.msra.mxu0 %v6800
    %7323 = vmatprep.subr.bf16.mxu0 %v6797
    %7324 = vmatpush2.bf16.msra.mxu0 %v6796
    %7325 = vmatprep.mubr.bf16.mxu0 %v6135
    %7326 = vmatmul.mubr.bf16.gmra.mxu0 %v6134
    %v7327 = vpop.f32.mrf.mxu0
    %v7328 = vadd.f32 %v7215, %v7327
    %v7329 = vpop.f32.mrf.mxu0
    %v7330 = vadd.f32 %v7217, %v7329
    %v7331 = vpop.f32.mrf.mxu0
    %v7332 = vadd.f32 %v7219, %v7331
    %v7333 = vpop.f32.mrf.mxu0
    %v7334 = vadd.f32 %v7221, %v7333
    %7335 = vmatprep.mubr.bf16.mxu0 %v6139
    %7336 = vmatmul.mubr.bf16.gmra.mxu0 %v6138
    %v7337 = vpop.f32.mrf.mxu0
    %v7338 = vadd.f32 %v7225, %v7337
    %v7339 = vpop.f32.mrf.mxu0
    %v7340 = vadd.f32 %v7227, %v7339
    %v7341 = vpop.f32.mrf.mxu0
    %v7342 = vadd.f32 %v7229, %v7341
    %v7343 = vpop.f32.mrf.mxu0
    %v7344 = vadd.f32 %v7231, %v7343
    %7345 = vmatprep.mubr.bf16.mxu0 %v6143
    %7346 = vmatmul.mubr.bf16.gmra.mxu0 %v6142
    %v7347 = vpop.f32.mrf.mxu0
    %v7348 = vadd.f32 %v7235, %v7347
    %v7349 = vpop.f32.mrf.mxu0
    %v7350 = vadd.f32 %v7237, %v7349
    %v7351 = vpop.f32.mrf.mxu0
    %v7352 = vadd.f32 %v7239, %v7351
    %v7353 = vpop.f32.mrf.mxu0
    %v7354 = vadd.f32 %v7241, %v7353
    %7355 = vmatprep.mubr.bf16.mxu0 %v6147
    %7356 = vmatmul.mubr.bf16.gmra.mxu0 %v6146
    %v7357 = vpop.f32.mrf.mxu0
    %v7358 = vadd.f32 %v7245, %v7357
    %v7359 = vpop.f32.mrf.mxu0
    %v7360 = vadd.f32 %v7247, %v7359
    %v7361 = vpop.f32.mrf.mxu0
    %v7362 = vadd.f32 %v7249, %v7361
    %v7363 = vpop.f32.mrf.mxu0
    %v7364 = vadd.f32 %v7251, %v7363
    %7365 = vmatprep.mubr.bf16.mxu0 %v6151
    %7366 = vmatmul.mubr.bf16.gmra.mxu0 %v6150
    %v7367 = vpop.f32.mrf.mxu0
    %v7368 = vadd.f32 %v7255, %v7367
    %v7369 = vpop.f32.mrf.mxu0
    %v7370 = vadd.f32 %v7257, %v7369
    %v7371 = vpop.f32.mrf.mxu0
    %v7372 = vadd.f32 %v7259, %v7371
    %v7373 = vpop.f32.mrf.mxu0
    %v7374 = vadd.f32 %v7261, %v7373
    %7375 = vmatprep.mubr.bf16.mxu0 %v6155
    %7376 = vmatmul.mubr.bf16.gmra.mxu0 %v6154
    %v7377 = vpop.f32.mrf.mxu0
    %v7378 = vadd.f32 %v7265, %v7377
    %v7379 = vpop.f32.mrf.mxu0
    %v7380 = vadd.f32 %v7267, %v7379
    %v7381 = vpop.f32.mrf.mxu0
    %v7382 = vadd.f32 %v7269, %v7381
    %v7383 = vpop.f32.mrf.mxu0
    %v7384 = vadd.f32 %v7271, %v7383
    %7385 = vmatprep.mubr.bf16.mxu0 %v6159
    %7386 = vmatmul.mubr.bf16.gmra.mxu0 %v6158
    %v7387 = vpop.f32.mrf.mxu0
    %v7388 = vadd.f32 %v7275, %v7387
    %v7389 = vpop.f32.mrf.mxu0
    %v7390 = vadd.f32 %v7277, %v7389
    %v7391 = vpop.f32.mrf.mxu0
    %v7392 = vadd.f32 %v7279, %v7391
    %v7393 = vpop.f32.mrf.mxu0
    %v7394 = vadd.f32 %v7281, %v7393
    %7395 = vmatprep.mubr.bf16.mxu0 %v6163
    %7396 = vmatmul.mubr.bf16.gmra.mxu0 %v6162
    %v7397 = vpop.f32.mrf.mxu0
    %v7398 = vadd.f32 %v7285, %v7397
    %v7399 = vpop.f32.mrf.mxu0
    %v7400 = vadd.f32 %v7287, %v7399
    %v7401 = vpop.f32.mrf.mxu0
    %v7402 = vadd.f32 %v7289, %v7401
    %v7403 = vpop.f32.mrf.mxu0
    %v7404 = vadd.f32 %v7291, %v7403
    %7405 = vdwg.mxu0
    %v7406 = vmax.f32 %v7102, 0.0
    %v7407 = vmax.f32 %v7104, 0.0
    %v7408 = vmax.f32 %v7328, 0.0
    %v7409 = vmax.f32 %v7330, 0.0
    %v7410 = vmax.f32 %v7106, 0.0
    %v7411 = vmax.f32 %v7108, 0.0
    %v7412 = vmax.f32 %v7332, 0.0
    %v7413 = vmax.f32 %v7334, 0.0
    %v7414 = vmax.f32 %v7112, 0.0
    %v7415 = vmax.f32 %v7114, 0.0
    %v7416 = vmax.f32 %v7338, 0.0
    %v7417 = vmax.f32 %v7340, 0.0
    %v7418 = vmax.f32 %v7116, 0.0
    %v7419 = vmax.f32 %v7118, 0.0
    %v7420 = vmax.f32 %v7342, 0.0
    %v7421 = vmax.f32 %v7344, 0.0
    %v7422 = vmax.f32 %v7122, 0.0
    %v7423 = vmax.f32 %v7124, 0.0
    %v7424 = vmax.f32 %v7348, 0.0
    %v7425 = vmax.f32 %v7350, 0.0
    %v7426 = vmax.f32 %v7126, 0.0
    %v7427 = vmax.f32 %v7128, 0.0
    %v7428 = vmax.f32 %v7352, 0.0
    %v7429 = vmax.f32 %v7354, 0.0
    %v7430 = vmax.f32 %v7132, 0.0
    %v7431 = vmax.f32 %v7134, 0.0
    %v7432 = vmax.f32 %v7358, 0.0
    %v7433 = vmax.f32 %v7360, 0.0
    %v7434 = vmax.f32 %v7136, 0.0
    %v7435 = vmax.f32 %v7138, 0.0
    %v7436 = vmax.f32 %v7362, 0.0
    %v7437 = vmax.f32 %v7364, 0.0
    %v7438 = vmax.f32 %v7142, 0.0
    %v7439 = vmax.f32 %v7144, 0.0
    %v7440 = vmax.f32 %v7368, 0.0
    %v7441 = vmax.f32 %v7370, 0.0
    %v7442 = vmax.f32 %v7146, 0.0
    %v7443 = vmax.f32 %v7148, 0.0
    %v7444 = vmax.f32 %v7372, 0.0
    %v7445 = vmax.f32 %v7374, 0.0
    %v7446 = vmax.f32 %v7152, 0.0
    %v7447 = vmax.f32 %v7154, 0.0
    %v7448 = vmax.f32 %v7378, 0.0
    %v7449 = vmax.f32 %v7380, 0.0
    %v7450 = vmax.f32 %v7156, 0.0
    %v7451 = vmax.f32 %v7158, 0.0
    %v7452 = vmax.f32 %v7382, 0.0
    %v7453 = vmax.f32 %v7384, 0.0
    %v7454 = vmax.f32 %v7162, 0.0
    %v7455 = vmax.f32 %v7164, 0.0
    %v7456 = vmax.f32 %v7388, 0.0
    %v7457 = vmax.f32 %v7390, 0.0
    %v7458 = vmax.f32 %v7166, 0.0
    %v7459 = vmax.f32 %v7168, 0.0
    %v7460 = vmax.f32 %v7392, 0.0
    %v7461 = vmax.f32 %v7394, 0.0
    %v7462 = vmax.f32 %v7172, 0.0
    %v7463 = vmax.f32 %v7174, 0.0
    %v7464 = vmax.f32 %v7398, 0.0
    %v7465 = vmax.f32 %v7400, 0.0
    %v7466 = vmax.f32 %v7176, 0.0
    %v7467 = vmax.f32 %v7178, 0.0
    %v7468 = vmax.f32 %v7402, 0.0
    %v7469 = vmax.f32 %v7404, 0.0
    %v7470 = vpack.c.bf16 %v7410, %v7406
    %v7471 = vpack.c.bf16 %v7411, %v7407
    %v7472 = vpack.c.bf16 %v7412, %v7408
    %v7473 = vpack.c.bf16 %v7413, %v7409
    %v7474 = vpack.c.bf16 %v7418, %v7414
    %v7475 = vpack.c.bf16 %v7419, %v7415
    %v7476 = vpack.c.bf16 %v7420, %v7416
    %v7477 = vpack.c.bf16 %v7421, %v7417
    %v7478 = vpack.c.bf16 %v7426, %v7422
    %v7479 = vpack.c.bf16 %v7427, %v7423
    %v7480 = vpack.c.bf16 %v7428, %v7424
    %v7481 = vpack.c.bf16 %v7429, %v7425
    %v7482 = vpack.c.bf16 %v7434, %v7430
    %v7483 = vpack.c.bf16 %v7435, %v7431
    %v7484 = vpack.c.bf16 %v7436, %v7432
    %v7485 = vpack.c.bf16 %v7437, %v7433
    %v7486 = vpack.c.bf16 %v7442, %v7438
    %v7487 = vpack.c.bf16 %v7443, %v7439
    %v7488 = vpack.c.bf16 %v7444, %v7440
    %v7489 = vpack.c.bf16 %v7445, %v7441
    %v7490 = vpack.c.bf16 %v7450, %v7446
    %v7491 = vpack.c.bf16 %v7451, %v7447
    %v7492 = vpack.c.bf16 %v7452, %v7448
    %v7493 = vpack.c.bf16 %v7453, %v7449
    %v7494 = vpack.c.bf16 %v7458, %v7454
    %v7495 = vpack.c.bf16 %v7459, %v7455
    %v7496 = vpack.c.bf16 %v7460, %v7456
    %v7497 = vpack.c.bf16 %v7461, %v7457
    %v7498 = vpack.c.bf16 %v7466, %v7462
    %v7499 = vpack.c.bf16 %v7467, %v7463
    %v7500 = vpack.c.bf16 %v7468, %v7464
    %v7501 = vpack.c.bf16 %v7469, %v7465
    %v7502 = vld [vmem:[#allocation12] sm:$0xff]
    %v7503 = vld [vmem:[#allocation12 + $0x8] sm:$0xff]
    %v7504 = vld [vmem:[#allocation12 + $0x10] sm:$0xff]
    %v7505 = vld [vmem:[#allocation12 + $0x18] sm:$0xff]
    %v7506 = vld [vmem:[#allocation12 + $0x20] sm:$0xff]
    %v7507 = vld [vmem:[#allocation12 + $0x28] sm:$0xff]
    %v7508 = vld [vmem:[#allocation12 + $0x30] sm:$0xff]
    %v7509 = vld [vmem:[#allocation12 + $0x38] sm:$0xff]
    %v7510 = vld [vmem:[#allocation12 + $0x40] sm:$0xff]
    %v7511 = vld [vmem:[#allocation12 + $0x48] sm:$0xff]
    %v7512 = vld [vmem:[#allocation12 + $0x50] sm:$0xff]
    %v7513 = vld [vmem:[#allocation12 + $0x58] sm:$0xff]
    %v7514 = vld [vmem:[#allocation12 + $0x60] sm:$0xff]
    %v7515 = vld [vmem:[#allocation12 + $0x68] sm:$0xff]
    %v7516 = vld [vmem:[#allocation12 + $0x70] sm:$0xff]
    %v7517 = vld [vmem:[#allocation12 + $0x78] sm:$0xff]
    %v7518 = vld [vmem:[#allocation12 + $0x80] sm:$0xff]
    %v7519 = vld [vmem:[#allocation12 + $0x88] sm:$0xff]
    %v7520 = vld [vmem:[#allocation12 + $0x90] sm:$0xff]
    %v7521 = vld [vmem:[#allocation12 + $0x98] sm:$0xff]
    %v7522 = vld [vmem:[#allocation12 + $0xa0] sm:$0xff]
    %v7523 = vld [vmem:[#allocation12 + $0xa8] sm:$0xff]
    %v7524 = vld [vmem:[#allocation12 + $0xb0] sm:$0xff]
    %v7525 = vld [vmem:[#allocation12 + $0xb8] sm:$0xff]
    %v7526 = vld [vmem:[#allocation12 + $0xc0] sm:$0xff]
    %v7527 = vld [vmem:[#allocation12 + $0xc8] sm:$0xff]
    %v7528 = vld [vmem:[#allocation12 + $0xd0] sm:$0xff]
    %v7529 = vld [vmem:[#allocation12 + $0xd8] sm:$0xff]
    %v7530 = vld [vmem:[#allocation12 + $0xe0] sm:$0xff]
    %v7531 = vld [vmem:[#allocation12 + $0xe8] sm:$0xff]
    %v7532 = vld [vmem:[#allocation12 + $0xf0] sm:$0xff]
    %v7533 = vld [vmem:[#allocation12 + $0xf8] sm:$0xff]
    %v7534 = vld [vmem:[#allocation12 + $0x100] sm:$0xff]
    %v7535 = vld [vmem:[#allocation12 + $0x108] sm:$0xff]
    %v7536 = vld [vmem:[#allocation12 + $0x110] sm:$0xff]
    %v7537 = vld [vmem:[#allocation12 + $0x118] sm:$0xff]
    %v7538 = vld [vmem:[#allocation12 + $0x120] sm:$0xff]
    %v7539 = vld [vmem:[#allocation12 + $0x128] sm:$0xff]
    %v7540 = vld [vmem:[#allocation12 + $0x130] sm:$0xff]
    %v7541 = vld [vmem:[#allocation12 + $0x138] sm:$0xff]
    %v7542 = vld [vmem:[#allocation12 + $0x140] sm:$0xff]
    %v7543 = vld [vmem:[#allocation12 + $0x148] sm:$0xff]
    %v7544 = vld [vmem:[#allocation12 + $0x150] sm:$0xff]
    %v7545 = vld [vmem:[#allocation12 + $0x158] sm:$0xff]
    %v7546 = vld [vmem:[#allocation12 + $0x160] sm:$0xff]
    %v7547 = vld [vmem:[#allocation12 + $0x168] sm:$0xff]
    %v7548 = vld [vmem:[#allocation12 + $0x170] sm:$0xff]
    %v7549 = vld [vmem:[#allocation12 + $0x178] sm:$0xff]
    %v7550 = vld [vmem:[#allocation12 + $0x180] sm:$0xff]
    %v7551 = vld [vmem:[#allocation12 + $0x188] sm:$0xff]
    %v7552 = vld [vmem:[#allocation12 + $0x190] sm:$0xff]
    %v7553 = vld [vmem:[#allocation12 + $0x198] sm:$0xff]
    %v7554 = vld [vmem:[#allocation12 + $0x1a0] sm:$0xff]
    %v7555 = vld [vmem:[#allocation12 + $0x1a8] sm:$0xff]
    %v7556 = vld [vmem:[#allocation12 + $0x1b0] sm:$0xff]
    %v7557 = vld [vmem:[#allocation12 + $0x1b8] sm:$0xff]
    %v7558 = vld [vmem:[#allocation12 + $0x1c0] sm:$0xff]
    %v7559 = vld [vmem:[#allocation12 + $0x1c8] sm:$0xff]
    %v7560 = vld [vmem:[#allocation12 + $0x1d0] sm:$0xff]
    %v7561 = vld [vmem:[#allocation12 + $0x1d8] sm:$0xff]
    %v7562 = vld [vmem:[#allocation12 + $0x1e0] sm:$0xff]
    %v7563 = vld [vmem:[#allocation12 + $0x1e8] sm:$0xff]
    %v7564 = vld [vmem:[#allocation12 + $0x1f0] sm:$0xff]
    %v7565 = vld [vmem:[#allocation12 + $0x1f8] sm:$0xff]
    %v7566 = vld [vmem:[#allocation12 + $0x200] sm:$0xff]
    %v7567 = vld [vmem:[#allocation12 + $0x208] sm:$0xff]
    %v7568 = vld [vmem:[#allocation12 + $0x210] sm:$0xff]
    %v7569 = vld [vmem:[#allocation12 + $0x218] sm:$0xff]
    %v7570 = vld [vmem:[#allocation12 + $0x220] sm:$0xff]
    %v7571 = vld [vmem:[#allocation12 + $0x228] sm:$0xff]
    %v7572 = vld [vmem:[#allocation12 + $0x230] sm:$0xff]
    %v7573 = vld [vmem:[#allocation12 + $0x238] sm:$0xff]
    %v7574 = vld [vmem:[#allocation12 + $0x240] sm:$0xff]
    %v7575 = vld [vmem:[#allocation12 + $0x248] sm:$0xff]
    %v7576 = vld [vmem:[#allocation12 + $0x250] sm:$0xff]
    %v7577 = vld [vmem:[#allocation12 + $0x258] sm:$0xff]
    %v7578 = vld [vmem:[#allocation12 + $0x260] sm:$0xff]
    %v7579 = vld [vmem:[#allocation12 + $0x268] sm:$0xff]
    %v7580 = vld [vmem:[#allocation12 + $0x270] sm:$0xff]
    %v7581 = vld [vmem:[#allocation12 + $0x278] sm:$0xff]
    %v7582 = vld [vmem:[#allocation12 + $0x280] sm:$0xff]
    %v7583 = vld [vmem:[#allocation12 + $0x288] sm:$0xff]
    %v7584 = vld [vmem:[#allocation12 + $0x290] sm:$0xff]
    %v7585 = vld [vmem:[#allocation12 + $0x298] sm:$0xff]
    %v7586 = vld [vmem:[#allocation12 + $0x2a0] sm:$0xff]
    %v7587 = vld [vmem:[#allocation12 + $0x2a8] sm:$0xff]
    %v7588 = vld [vmem:[#allocation12 + $0x2b0] sm:$0xff]
    %v7589 = vld [vmem:[#allocation12 + $0x2b8] sm:$0xff]
    %v7590 = vld [vmem:[#allocation12 + $0x2c0] sm:$0xff]
    %v7591 = vld [vmem:[#allocation12 + $0x2c8] sm:$0xff]
    %v7592 = vld [vmem:[#allocation12 + $0x2d0] sm:$0xff]
    %v7593 = vld [vmem:[#allocation12 + $0x2d8] sm:$0xff]
    %v7594 = vld [vmem:[#allocation12 + $0x2e0] sm:$0xff]
    %v7595 = vld [vmem:[#allocation12 + $0x2e8] sm:$0xff]
    %v7596 = vld [vmem:[#allocation12 + $0x2f0] sm:$0xff]
    %v7597 = vld [vmem:[#allocation12 + $0x2f8] sm:$0xff]
    %v7598 = vld [vmem:[#allocation12 + $0x300] sm:$0xff]
    %v7599 = vld [vmem:[#allocation12 + $0x308] sm:$0xff]
    %v7600 = vld [vmem:[#allocation12 + $0x310] sm:$0xff]
    %v7601 = vld [vmem:[#allocation12 + $0x318] sm:$0xff]
    %v7602 = vld [vmem:[#allocation12 + $0x320] sm:$0xff]
    %v7603 = vld [vmem:[#allocation12 + $0x328] sm:$0xff]
    %v7604 = vld [vmem:[#allocation12 + $0x330] sm:$0xff]
    %v7605 = vld [vmem:[#allocation12 + $0x338] sm:$0xff]
    %v7606 = vld [vmem:[#allocation12 + $0x340] sm:$0xff]
    %v7607 = vld [vmem:[#allocation12 + $0x348] sm:$0xff]
    %v7608 = vld [vmem:[#allocation12 + $0x350] sm:$0xff]
    %v7609 = vld [vmem:[#allocation12 + $0x358] sm:$0xff]
    %v7610 = vld [vmem:[#allocation12 + $0x360] sm:$0xff]
    %v7611 = vld [vmem:[#allocation12 + $0x368] sm:$0xff]
    %v7612 = vld [vmem:[#allocation12 + $0x370] sm:$0xff]
    %v7613 = vld [vmem:[#allocation12 + $0x378] sm:$0xff]
    %v7614 = vld [vmem:[#allocation12 + $0x380] sm:$0xff]
    %v7615 = vld [vmem:[#allocation12 + $0x388] sm:$0xff]
    %v7616 = vld [vmem:[#allocation12 + $0x390] sm:$0xff]
    %v7617 = vld [vmem:[#allocation12 + $0x398] sm:$0xff]
    %v7618 = vld [vmem:[#allocation12 + $0x3a0] sm:$0xff]
    %v7619 = vld [vmem:[#allocation12 + $0x3a8] sm:$0xff]
    %v7620 = vld [vmem:[#allocation12 + $0x3b0] sm:$0xff]
    %v7621 = vld [vmem:[#allocation12 + $0x3b8] sm:$0xff]
    %v7622 = vld [vmem:[#allocation12 + $0x3c0] sm:$0xff]
    %v7623 = vld [vmem:[#allocation12 + $0x3c8] sm:$0xff]
    %v7624 = vld [vmem:[#allocation12 + $0x3d0] sm:$0xff]
    %v7625 = vld [vmem:[#allocation12 + $0x3d8] sm:$0xff]
    %v7626 = vld [vmem:[#allocation12 + $0x3e0] sm:$0xff]
    %v7627 = vld [vmem:[#allocation12 + $0x3e8] sm:$0xff]
    %v7628 = vld [vmem:[#allocation12 + $0x3f0] sm:$0xff]
    %v7629 = vld [vmem:[#allocation12 + $0x3f8] sm:$0xff]
    %v7630 = vld [vmem:[%s17] sm:$0xf]
    %v7632 = vlaneseq
    %v7633 = vshrl.u32 %v7632, 7
    %v7634 = vsub.s32 0, %v7633
    %v7635 = vrot.slane %v7630, %v7634
    %v7636 = vlaneseq
    %v7637 = vshrl.u32 %v7636, 7
    %v7638 = vsub.s32 1, %v7637
    %v7639 = vrot.slane %v7630, %v7638
    %v7640 = vlaneseq
    %v7641 = vshrl.u32 %v7640, 7
    %v7642 = vsub.s32 2, %v7641
    %v7643 = vrot.slane %v7630, %v7642
    %v7644 = vlaneseq
    %v7645 = vshrl.u32 %v7644, 7
    %v7646 = vsub.s32 3, %v7645
    %v7647 = vrot.slane %v7630, %v7646
    %v7780 = vunpack.c.l.b16 %v7502
    %v7781 = vunpack.c.h.b16 %v7502
    %v7782 = vunpack.c.l.b16 %v7503
    %v7783 = vunpack.c.h.b16 %v7503
    %v7784 = vunpack.c.l.b16 %v7504
    %v7785 = vunpack.c.h.b16 %v7504
    %v7786 = vunpack.c.l.b16 %v7505
    %v7787 = vunpack.c.h.b16 %v7505
    %v7788 = vunpack.c.l.b16 %v7506
    %v7789 = vunpack.c.h.b16 %v7506
    %v7790 = vunpack.c.l.b16 %v7507
    %v7791 = vunpack.c.h.b16 %v7507
    %v7792 = vunpack.c.l.b16 %v7508
    %v7793 = vunpack.c.h.b16 %v7508
    %v7794 = vunpack.c.l.b16 %v7509
    %v7795 = vunpack.c.h.b16 %v7509
    %v7796 = vunpack.c.l.b16 %v7510
    %v7797 = vunpack.c.h.b16 %v7510
    %v7798 = vunpack.c.l.b16 %v7511
    %v7799 = vunpack.c.h.b16 %v7511
    %v7800 = vunpack.c.l.b16 %v7512
    %v7801 = vunpack.c.h.b16 %v7512
    %v7802 = vunpack.c.l.b16 %v7513
    %v7803 = vunpack.c.h.b16 %v7513
    %v7804 = vunpack.c.l.b16 %v7514
    %v7805 = vunpack.c.h.b16 %v7514
    %v7806 = vunpack.c.l.b16 %v7515
    %v7807 = vunpack.c.h.b16 %v7515
    %v7808 = vunpack.c.l.b16 %v7516
    %v7809 = vunpack.c.h.b16 %v7516
    %v7810 = vunpack.c.l.b16 %v7517
    %v7811 = vunpack.c.h.b16 %v7517
    %v7812 = vunpack.c.l.b16 %v7518
    %v7813 = vunpack.c.h.b16 %v7518
    %v7814 = vunpack.c.l.b16 %v7519
    %v7815 = vunpack.c.h.b16 %v7519
    %v7816 = vunpack.c.l.b16 %v7520
    %v7817 = vunpack.c.h.b16 %v7520
    %v7818 = vunpack.c.l.b16 %v7521
    %v7819 = vunpack.c.h.b16 %v7521
    %v7820 = vunpack.c.l.b16 %v7522
    %v7821 = vunpack.c.h.b16 %v7522
    %v7822 = vunpack.c.l.b16 %v7523
    %v7823 = vunpack.c.h.b16 %v7523
    %v7824 = vunpack.c.l.b16 %v7524
    %v7825 = vunpack.c.h.b16 %v7524
    %v7826 = vunpack.c.l.b16 %v7525
    %v7827 = vunpack.c.h.b16 %v7525
    %v7828 = vunpack.c.l.b16 %v7526
    %v7829 = vunpack.c.h.b16 %v7526
    %v7830 = vunpack.c.l.b16 %v7527
    %v7831 = vunpack.c.h.b16 %v7527
    %v7832 = vunpack.c.l.b16 %v7528
    %v7833 = vunpack.c.h.b16 %v7528
    %v7834 = vunpack.c.l.b16 %v7529
    %v7835 = vunpack.c.h.b16 %v7529
    %v7836 = vunpack.c.l.b16 %v7530
    %v7837 = vunpack.c.h.b16 %v7530
    %v7838 = vunpack.c.l.b16 %v7531
    %v7839 = vunpack.c.h.b16 %v7531
    %v7840 = vunpack.c.l.b16 %v7532
    %v7841 = vunpack.c.h.b16 %v7532
    %v7842 = vunpack.c.l.b16 %v7533
    %v7843 = vunpack.c.h.b16 %v7533
    %v7844 = vunpack.c.l.b16 %v7534
    %v7845 = vunpack.c.h.b16 %v7534
    %v7846 = vunpack.c.l.b16 %v7535
    %v7847 = vunpack.c.h.b16 %v7535
    %v7848 = vunpack.c.l.b16 %v7536
    %v7849 = vunpack.c.h.b16 %v7536
    %v7850 = vunpack.c.l.b16 %v7537
    %v7851 = vunpack.c.h.b16 %v7537
    %v7852 = vunpack.c.l.b16 %v7538
    %v7853 = vunpack.c.h.b16 %v7538
    %v7854 = vunpack.c.l.b16 %v7539
    %v7855 = vunpack.c.h.b16 %v7539
    %v7856 = vunpack.c.l.b16 %v7540
    %v7857 = vunpack.c.h.b16 %v7540
    %v7858 = vunpack.c.l.b16 %v7541
    %v7859 = vunpack.c.h.b16 %v7541
    %v7860 = vunpack.c.l.b16 %v7542
    %v7861 = vunpack.c.h.b16 %v7542
    %v7862 = vunpack.c.l.b16 %v7543
    %v7863 = vunpack.c.h.b16 %v7543
    %v7864 = vunpack.c.l.b16 %v7544
    %v7865 = vunpack.c.h.b16 %v7544
    %v7866 = vunpack.c.l.b16 %v7545
    %v7867 = vunpack.c.h.b16 %v7545
    %v7868 = vunpack.c.l.b16 %v7546
    %v7869 = vunpack.c.h.b16 %v7546
    %v7870 = vunpack.c.l.b16 %v7547
    %v7871 = vunpack.c.h.b16 %v7547
    %v7872 = vunpack.c.l.b16 %v7548
    %v7873 = vunpack.c.h.b16 %v7548
    %v7874 = vunpack.c.l.b16 %v7549
    %v7875 = vunpack.c.h.b16 %v7549
    %v7876 = vunpack.c.l.b16 %v7550
    %v7877 = vunpack.c.h.b16 %v7550
    %v7878 = vunpack.c.l.b16 %v7551
    %v7879 = vunpack.c.h.b16 %v7551
    %v7880 = vunpack.c.l.b16 %v7552
    %v7881 = vunpack.c.h.b16 %v7552
    %v7882 = vunpack.c.l.b16 %v7553
    %v7883 = vunpack.c.h.b16 %v7553
    %v7884 = vunpack.c.l.b16 %v7554
    %v7885 = vunpack.c.h.b16 %v7554
    %v7886 = vunpack.c.l.b16 %v7555
    %v7887 = vunpack.c.h.b16 %v7555
    %v7888 = vunpack.c.l.b16 %v7556
    %v7889 = vunpack.c.h.b16 %v7556
    %v7890 = vunpack.c.l.b16 %v7557
    %v7891 = vunpack.c.h.b16 %v7557
    %v7892 = vunpack.c.l.b16 %v7558
    %v7893 = vunpack.c.h.b16 %v7558
    %v7894 = vunpack.c.l.b16 %v7559
    %v7895 = vunpack.c.h.b16 %v7559
    %v7896 = vunpack.c.l.b16 %v7560
    %v7897 = vunpack.c.h.b16 %v7560
    %v7898 = vunpack.c.l.b16 %v7561
    %v7899 = vunpack.c.h.b16 %v7561
    %v7900 = vunpack.c.l.b16 %v7562
    %v7901 = vunpack.c.h.b16 %v7562
    %v7902 = vunpack.c.l.b16 %v7563
    %v7903 = vunpack.c.h.b16 %v7563
    %v7904 = vunpack.c.l.b16 %v7564
    %v7905 = vunpack.c.h.b16 %v7564
    %v7906 = vunpack.c.l.b16 %v7565
    %v7907 = vunpack.c.h.b16 %v7565
    %v7908 = vunpack.c.l.b16 %v7566
    %v7909 = vunpack.c.h.b16 %v7566
    %v7910 = vunpack.c.l.b16 %v7567
    %v7911 = vunpack.c.h.b16 %v7567
    %v7912 = vunpack.c.l.b16 %v7568
    %v7913 = vunpack.c.h.b16 %v7568
    %v7914 = vunpack.c.l.b16 %v7569
    %v7915 = vunpack.c.h.b16 %v7569
    %v7916 = vunpack.c.l.b16 %v7570
    %v7917 = vunpack.c.h.b16 %v7570
    %v7918 = vunpack.c.l.b16 %v7571
    %v7919 = vunpack.c.h.b16 %v7571
    %v7920 = vunpack.c.l.b16 %v7572
    %v7921 = vunpack.c.h.b16 %v7572
    %v7922 = vunpack.c.l.b16 %v7573
    %v7923 = vunpack.c.h.b16 %v7573
    %v7924 = vunpack.c.l.b16 %v7574
    %v7925 = vunpack.c.h.b16 %v7574
    %v7926 = vunpack.c.l.b16 %v7575
    %v7927 = vunpack.c.h.b16 %v7575
    %v7928 = vunpack.c.l.b16 %v7576
    %v7929 = vunpack.c.h.b16 %v7576
    %v7930 = vunpack.c.l.b16 %v7577
    %v7931 = vunpack.c.h.b16 %v7577
    %v7932 = vunpack.c.l.b16 %v7578
    %v7933 = vunpack.c.h.b16 %v7578
    %v7934 = vunpack.c.l.b16 %v7579
    %v7935 = vunpack.c.h.b16 %v7579
    %v7936 = vunpack.c.l.b16 %v7580
    %v7937 = vunpack.c.h.b16 %v7580
    %v7938 = vunpack.c.l.b16 %v7581
    %v7939 = vunpack.c.h.b16 %v7581
    %v7940 = vunpack.c.l.b16 %v7582
    %v7941 = vunpack.c.h.b16 %v7582
    %v7942 = vunpack.c.l.b16 %v7583
    %v7943 = vunpack.c.h.b16 %v7583
    %v7944 = vunpack.c.l.b16 %v7584
    %v7945 = vunpack.c.h.b16 %v7584
    %v7946 = vunpack.c.l.b16 %v7585
    %v7947 = vunpack.c.h.b16 %v7585
    %v7948 = vunpack.c.l.b16 %v7586
    %v7949 = vunpack.c.h.b16 %v7586
    %v7950 = vunpack.c.l.b16 %v7587
    %v7951 = vunpack.c.h.b16 %v7587
    %v7952 = vunpack.c.l.b16 %v7588
    %v7953 = vunpack.c.h.b16 %v7588
    %v7954 = vunpack.c.l.b16 %v7589
    %v7955 = vunpack.c.h.b16 %v7589
    %v7956 = vunpack.c.l.b16 %v7590
    %v7957 = vunpack.c.h.b16 %v7590
    %v7958 = vunpack.c.l.b16 %v7591
    %v7959 = vunpack.c.h.b16 %v7591
    %v7960 = vunpack.c.l.b16 %v7592
    %v7961 = vunpack.c.h.b16 %v7592
    %v7962 = vunpack.c.l.b16 %v7593
    %v7963 = vunpack.c.h.b16 %v7593
    %v7964 = vunpack.c.l.b16 %v7594
    %v7965 = vunpack.c.h.b16 %v7594
    %v7966 = vunpack.c.l.b16 %v7595
    %v7967 = vunpack.c.h.b16 %v7595
    %v7968 = vunpack.c.l.b16 %v7596
    %v7969 = vunpack.c.h.b16 %v7596
    %v7970 = vunpack.c.l.b16 %v7597
    %v7971 = vunpack.c.h.b16 %v7597
    %v7972 = vunpack.c.l.b16 %v7598
    %v7973 = vunpack.c.h.b16 %v7598
    %v7974 = vunpack.c.l.b16 %v7599
    %v7975 = vunpack.c.h.b16 %v7599
    %v7976 = vunpack.c.l.b16 %v7600
    %v7977 = vunpack.c.h.b16 %v7600
    %v7978 = vunpack.c.l.b16 %v7601
    %v7979 = vunpack.c.h.b16 %v7601
    %v7980 = vunpack.c.l.b16 %v7602
    %v7981 = vunpack.c.h.b16 %v7602
    %v7982 = vunpack.c.l.b16 %v7603
    %v7983 = vunpack.c.h.b16 %v7603
    %v7984 = vunpack.c.l.b16 %v7604
    %v7985 = vunpack.c.h.b16 %v7604
    %v7986 = vunpack.c.l.b16 %v7605
    %v7987 = vunpack.c.h.b16 %v7605
    %v7988 = vunpack.c.l.b16 %v7606
    %v7989 = vunpack.c.h.b16 %v7606
    %v7990 = vunpack.c.l.b16 %v7607
    %v7991 = vunpack.c.h.b16 %v7607
    %v7992 = vunpack.c.l.b16 %v7608
    %v7993 = vunpack.c.h.b16 %v7608
    %v7994 = vunpack.c.l.b16 %v7609
    %v7995 = vunpack.c.h.b16 %v7609
    %v7996 = vunpack.c.l.b16 %v7610
    %v7997 = vunpack.c.h.b16 %v7610
    %v7998 = vunpack.c.l.b16 %v7611
    %v7999 = vunpack.c.h.b16 %v7611
    %v8000 = vunpack.c.l.b16 %v7612
    %v8001 = vunpack.c.h.b16 %v7612
    %v8002 = vunpack.c.l.b16 %v7613
    %v8003 = vunpack.c.h.b16 %v7613
    %v8004 = vunpack.c.l.b16 %v7614
    %v8005 = vunpack.c.h.b16 %v7614
    %v8006 = vunpack.c.l.b16 %v7615
    %v8007 = vunpack.c.h.b16 %v7615
    %v8008 = vunpack.c.l.b16 %v7616
    %v8009 = vunpack.c.h.b16 %v7616
    %v8010 = vunpack.c.l.b16 %v7617
    %v8011 = vunpack.c.h.b16 %v7617
    %v8012 = vunpack.c.l.b16 %v7618
    %v8013 = vunpack.c.h.b16 %v7618
    %v8014 = vunpack.c.l.b16 %v7619
    %v8015 = vunpack.c.h.b16 %v7619
    %v8016 = vunpack.c.l.b16 %v7620
    %v8017 = vunpack.c.h.b16 %v7620
    %v8018 = vunpack.c.l.b16 %v7621
    %v8019 = vunpack.c.h.b16 %v7621
    %v8020 = vunpack.c.l.b16 %v7622
    %v8021 = vunpack.c.h.b16 %v7622
    %v8022 = vunpack.c.l.b16 %v7623
    %v8023 = vunpack.c.h.b16 %v7623
    %v8024 = vunpack.c.l.b16 %v7624
    %v8025 = vunpack.c.h.b16 %v7624
    %v8026 = vunpack.c.l.b16 %v7625
    %v8027 = vunpack.c.h.b16 %v7625
    %v8028 = vunpack.c.l.b16 %v7626
    %v8029 = vunpack.c.h.b16 %v7626
    %v8030 = vunpack.c.l.b16 %v7627
    %v8031 = vunpack.c.h.b16 %v7627
    %v8032 = vunpack.c.l.b16 %v7628
    %v8033 = vunpack.c.h.b16 %v7628
    %v8034 = vunpack.c.l.b16 %v7629
    %v8035 = vunpack.c.h.b16 %v7629
    %v8036 = vpack.c.b16 %v7784, %v7780
    %v8037 = vpack.c.b16 %v7785, %v7781
    %v8038 = vpack.c.b16 %v7786, %v7782
    %v8039 = vpack.c.b16 %v7787, %v7783
    %v8040 = vpack.c.b16 %v7792, %v7788
    %v8041 = vpack.c.b16 %v7793, %v7789
    %v8042 = vpack.c.b16 %v7794, %v7790
    %v8043 = vpack.c.b16 %v7795, %v7791
    %v8044 = vpack.c.b16 %v7800, %v7796
    %v8045 = vpack.c.b16 %v7801, %v7797
    %v8046 = vpack.c.b16 %v7802, %v7798
    %v8047 = vpack.c.b16 %v7803, %v7799
    %v8048 = vpack.c.b16 %v7808, %v7804
    %v8049 = vpack.c.b16 %v7809, %v7805
    %v8050 = vpack.c.b16 %v7810, %v7806
    %v8051 = vpack.c.b16 %v7811, %v7807
    %v8052 = vpack.c.b16 %v7816, %v7812
    %v8053 = vpack.c.b16 %v7817, %v7813
    %v8054 = vpack.c.b16 %v7818, %v7814
    %v8055 = vpack.c.b16 %v7819, %v7815
    %v8056 = vpack.c.b16 %v7824, %v7820
    %v8057 = vpack.c.b16 %v7825, %v7821
    %v8058 = vpack.c.b16 %v7826, %v7822
    %v8059 = vpack.c.b16 %v7827, %v7823
    %v8060 = vpack.c.b16 %v7832, %v7828
    %v8061 = vpack.c.b16 %v7833, %v7829
    %v8062 = vpack.c.b16 %v7834, %v7830
    %v8063 = vpack.c.b16 %v7835, %v7831
    %v8064 = vpack.c.b16 %v7840, %v7836
    %v8065 = vpack.c.b16 %v7841, %v7837
    %v8066 = vpack.c.b16 %v7842, %v7838
    %v8067 = vpack.c.b16 %v7843, %v7839
    %v8068 = vpack.c.b16 %v7848, %v7844
    %v8069 = vpack.c.b16 %v7849, %v7845
    %v8070 = vpack.c.b16 %v7850, %v7846
    %v8071 = vpack.c.b16 %v7851, %v7847
    %v8072 = vpack.c.b16 %v7856, %v7852
    %v8073 = vpack.c.b16 %v7857, %v7853
    %v8074 = vpack.c.b16 %v7858, %v7854
    %v8075 = vpack.c.b16 %v7859, %v7855
    %v8076 = vpack.c.b16 %v7864, %v7860
    %v8077 = vpack.c.b16 %v7865, %v7861
    %v8078 = vpack.c.b16 %v7866, %v7862
    %v8079 = vpack.c.b16 %v7867, %v7863
    %v8080 = vpack.c.b16 %v7872, %v7868
    %v8081 = vpack.c.b16 %v7873, %v7869
    %v8082 = vpack.c.b16 %v7874, %v7870
    %v8083 = vpack.c.b16 %v7875, %v7871
    %v8084 = vpack.c.b16 %v7880, %v7876
    %v8085 = vpack.c.b16 %v7881, %v7877
    %v8086 = vpack.c.b16 %v7882, %v7878
    %v8087 = vpack.c.b16 %v7883, %v7879
    %v8088 = vpack.c.b16 %v7888, %v7884
    %v8089 = vpack.c.b16 %v7889, %v7885
    %v8090 = vpack.c.b16 %v7890, %v7886
    %v8091 = vpack.c.b16 %v7891, %v7887
    %v8092 = vpack.c.b16 %v7896, %v7892
    %v8093 = vpack.c.b16 %v7897, %v7893
    %v8094 = vpack.c.b16 %v7898, %v7894
    %v8095 = vpack.c.b16 %v7899, %v7895
    %v8096 = vpack.c.b16 %v7904, %v7900
    %v8097 = vpack.c.b16 %v7905, %v7901
    %v8098 = vpack.c.b16 %v7906, %v7902
    %v8099 = vpack.c.b16 %v7907, %v7903
    %v8100 = vpack.c.b16 %v7912, %v7908
    %v8101 = vpack.c.b16 %v7913, %v7909
    %v8102 = vpack.c.b16 %v7914, %v7910
    %v8103 = vpack.c.b16 %v7915, %v7911
    %v8104 = vpack.c.b16 %v7920, %v7916
    %v8105 = vpack.c.b16 %v7921, %v7917
    %v8106 = vpack.c.b16 %v7922, %v7918
    %v8107 = vpack.c.b16 %v7923, %v7919
    %v8108 = vpack.c.b16 %v7928, %v7924
    %v8109 = vpack.c.b16 %v7929, %v7925
    %v8110 = vpack.c.b16 %v7930, %v7926
    %v8111 = vpack.c.b16 %v7931, %v7927
    %v8112 = vpack.c.b16 %v7936, %v7932
    %v8113 = vpack.c.b16 %v7937, %v7933
    %v8114 = vpack.c.b16 %v7938, %v7934
    %v8115 = vpack.c.b16 %v7939, %v7935
    %v8116 = vpack.c.b16 %v7944, %v7940
    %v8117 = vpack.c.b16 %v7945, %v7941
    %v8118 = vpack.c.b16 %v7946, %v7942
    %v8119 = vpack.c.b16 %v7947, %v7943
    %v8120 = vpack.c.b16 %v7952, %v7948
    %v8121 = vpack.c.b16 %v7953, %v7949
    %v8122 = vpack.c.b16 %v7954, %v7950
    %v8123 = vpack.c.b16 %v7955, %v7951
    %v8124 = vpack.c.b16 %v7960, %v7956
    %v8125 = vpack.c.b16 %v7961, %v7957
    %v8126 = vpack.c.b16 %v7962, %v7958
    %v8127 = vpack.c.b16 %v7963, %v7959
    %v8128 = vpack.c.b16 %v7968, %v7964
    %v8129 = vpack.c.b16 %v7969, %v7965
    %v8130 = vpack.c.b16 %v7970, %v7966
    %v8131 = vpack.c.b16 %v7971, %v7967
    %v8132 = vpack.c.b16 %v7976, %v7972
    %v8133 = vpack.c.b16 %v7977, %v7973
    %v8134 = vpack.c.b16 %v7978, %v7974
    %v8135 = vpack.c.b16 %v7979, %v7975
    %v8136 = vpack.c.b16 %v7984, %v7980
    %v8137 = vpack.c.b16 %v7985, %v7981
    %v8138 = vpack.c.b16 %v7986, %v7982
    %v8139 = vpack.c.b16 %v7987, %v7983
    %v8140 = vpack.c.b16 %v7992, %v7988
    %v8141 = vpack.c.b16 %v7993, %v7989
    %v8142 = vpack.c.b16 %v7994, %v7990
    %v8143 = vpack.c.b16 %v7995, %v7991
    %v8144 = vpack.c.b16 %v8000, %v7996
    %v8145 = vpack.c.b16 %v8001, %v7997
    %v8146 = vpack.c.b16 %v8002, %v7998
    %v8147 = vpack.c.b16 %v8003, %v7999
    %v8148 = vpack.c.b16 %v8008, %v8004
    %v8149 = vpack.c.b16 %v8009, %v8005
    %v8150 = vpack.c.b16 %v8010, %v8006
    %v8151 = vpack.c.b16 %v8011, %v8007
    %v8152 = vpack.c.b16 %v8016, %v8012
    %v8153 = vpack.c.b16 %v8017, %v8013
    %v8154 = vpack.c.b16 %v8018, %v8014
    %v8155 = vpack.c.b16 %v8019, %v8015
    %v8156 = vpack.c.b16 %v8024, %v8020
    %v8157 = vpack.c.b16 %v8025, %v8021
    %v8158 = vpack.c.b16 %v8026, %v8022
    %v8159 = vpack.c.b16 %v8027, %v8023
    %v8160 = vpack.c.b16 %v8032, %v8028
    %v8161 = vpack.c.b16 %v8033, %v8029
    %v8162 = vpack.c.b16 %v8034, %v8030
    %v8163 = vpack.c.b16 %v8035, %v8031
    %8292 = vmatprep.subr.bf16.mxu0 %v8065
    %8293 = vmatpush1.bf16.msra.mxu0 %v8064
    %8294 = vmatprep.subr.bf16.mxu0 %v8061
    %8295 = vmatpush1.bf16.msra.mxu0 %v8060
    %8296 = vmatprep.subr.bf16.mxu0 %v8057
    %8297 = vmatpush1.bf16.msra.mxu0 %v8056
    %8298 = vmatprep.subr.bf16.mxu0 %v8053
    %8299 = vmatpush1.bf16.msra.mxu0 %v8052
    %8300 = vmatprep.subr.bf16.mxu0 %v8049
    %8301 = vmatpush1.bf16.msra.mxu0 %v8048
    %8302 = vmatprep.subr.bf16.mxu0 %v8045
    %8303 = vmatpush1.bf16.msra.mxu0 %v8044
    %8304 = vmatprep.subr.bf16.mxu0 %v8041
    %8305 = vmatpush1.bf16.msra.mxu0 %v8040
    %8306 = vmatprep.subr.bf16.mxu0 %v8037
    %8307 = vmatpush1.bf16.msra.mxu0 %v8036
    %8308 = vmatprep.subr.bf16.mxu0 %v8097
    %8309 = vmatpush2.bf16.msra.mxu0 %v8096
    %8310 = vmatprep.subr.bf16.mxu0 %v8093
    %8311 = vmatpush2.bf16.msra.mxu0 %v8092
    %8312 = vmatprep.subr.bf16.mxu0 %v8089
    %8313 = vmatpush2.bf16.msra.mxu0 %v8088
    %8314 = vmatprep.subr.bf16.mxu0 %v8085
    %8315 = vmatpush2.bf16.msra.mxu0 %v8084
    %8316 = vmatprep.subr.bf16.mxu0 %v8081
    %8317 = vmatpush2.bf16.msra.mxu0 %v8080
    %8318 = vmatprep.subr.bf16.mxu0 %v8077
    %8319 = vmatpush2.bf16.msra.mxu0 %v8076
    %8320 = vmatprep.subr.bf16.mxu0 %v8073
    %8321 = vmatpush2.bf16.msra.mxu0 %v8072
    %8322 = vmatprep.subr.bf16.mxu0 %v8069
    %8323 = vmatpush2.bf16.msra.mxu0 %v8068
    %8324 = vmatprep.mubr.bf16.mxu0 %v7471
    %8325 = vmatmul.mubr.bf16.gmra.mxu0 %v7470
    %v8326 = vpop.f32.mrf.mxu0
    %v8327 = vadd.f32 %v7635, %v8326
    %v8328 = vpop.f32.mrf.mxu0
    %v8329 = vadd.f32 %v7639, %v8328
    %v8330 = vpop.f32.mrf.mxu0
    %v8331 = vadd.f32 %v7635, %v8330
    %v8332 = vpop.f32.mrf.mxu0
    %v8333 = vadd.f32 %v7639, %v8332
    %8334 = vmatprep.mubr.bf16.mxu0 %v7475
    %8335 = vmatmul.mubr.bf16.gmra.mxu0 %v7474
    %v8336 = vpop.f32.mrf.mxu0
    %v8337 = vadd.f32 %v7635, %v8336
    %v8338 = vpop.f32.mrf.mxu0
    %v8339 = vadd.f32 %v7639, %v8338
    %v8340 = vpop.f32.mrf.mxu0
    %v8341 = vadd.f32 %v7635, %v8340
    %v8342 = vpop.f32.mrf.mxu0
    %v8343 = vadd.f32 %v7639, %v8342
    %8344 = vmatprep.mubr.bf16.mxu0 %v7479
    %8345 = vmatmul.mubr.bf16.gmra.mxu0 %v7478
    %v8346 = vpop.f32.mrf.mxu0
    %v8347 = vadd.f32 %v7635, %v8346
    %v8348 = vpop.f32.mrf.mxu0
    %v8349 = vadd.f32 %v7639, %v8348
    %v8350 = vpop.f32.mrf.mxu0
    %v8351 = vadd.f32 %v7635, %v8350
    %v8352 = vpop.f32.mrf.mxu0
    %v8353 = vadd.f32 %v7639, %v8352
    %8354 = vmatprep.mubr.bf16.mxu0 %v7483
    %8355 = vmatmul.mubr.bf16.gmra.mxu0 %v7482
    %v8356 = vpop.f32.mrf.mxu0
    %v8357 = vadd.f32 %v7635, %v8356
    %v8358 = vpop.f32.mrf.mxu0
    %v8359 = vadd.f32 %v7639, %v8358
    %v8360 = vpop.f32.mrf.mxu0
    %v8361 = vadd.f32 %v7635, %v8360
    %v8362 = vpop.f32.mrf.mxu0
    %v8363 = vadd.f32 %v7639, %v8362
    %8364 = vmatprep.mubr.bf16.mxu0 %v7487
    %8365 = vmatmul.mubr.bf16.gmra.mxu0 %v7486
    %v8366 = vpop.f32.mrf.mxu0
    %v8367 = vadd.f32 %v7635, %v8366
    %v8368 = vpop.f32.mrf.mxu0
    %v8369 = vadd.f32 %v7639, %v8368
    %v8370 = vpop.f32.mrf.mxu0
    %v8371 = vadd.f32 %v7635, %v8370
    %v8372 = vpop.f32.mrf.mxu0
    %v8373 = vadd.f32 %v7639, %v8372
    %8374 = vmatprep.mubr.bf16.mxu0 %v7491
    %8375 = vmatmul.mubr.bf16.gmra.mxu0 %v7490
    %v8376 = vpop.f32.mrf.mxu0
    %v8377 = vadd.f32 %v7635, %v8376
    %v8378 = vpop.f32.mrf.mxu0
    %v8379 = vadd.f32 %v7639, %v8378
    %v8380 = vpop.f32.mrf.mxu0
    %v8381 = vadd.f32 %v7635, %v8380
    %v8382 = vpop.f32.mrf.mxu0
    %v8383 = vadd.f32 %v7639, %v8382
    %8384 = vmatprep.mubr.bf16.mxu0 %v7495
    %8385 = vmatmul.mubr.bf16.gmra.mxu0 %v7494
    %v8386 = vpop.f32.mrf.mxu0
    %v8387 = vadd.f32 %v7635, %v8386
    %v8388 = vpop.f32.mrf.mxu0
    %v8389 = vadd.f32 %v7639, %v8388
    %v8390 = vpop.f32.mrf.mxu0
    %v8391 = vadd.f32 %v7635, %v8390
    %v8392 = vpop.f32.mrf.mxu0
    %v8393 = vadd.f32 %v7639, %v8392
    %8394 = vmatprep.mubr.bf16.mxu0 %v7499
    %8395 = vmatmul.mubr.bf16.gmra.mxu0 %v7498
    %v8396 = vpop.f32.mrf.mxu0
    %v8397 = vadd.f32 %v7635, %v8396
    %v8398 = vpop.f32.mrf.mxu0
    %v8399 = vadd.f32 %v7639, %v8398
    %v8400 = vpop.f32.mrf.mxu0
    %v8401 = vadd.f32 %v7635, %v8400
    %v8402 = vpop.f32.mrf.mxu0
    %v8403 = vadd.f32 %v7639, %v8402
    %8404 = vdwg.mxu0
    %8405 = vmatprep.subr.bf16.mxu0 %v8129
    %8406 = vmatpush1.bf16.msra.mxu0 %v8128
    %8407 = vmatprep.subr.bf16.mxu0 %v8125
    %8408 = vmatpush1.bf16.msra.mxu0 %v8124
    %8409 = vmatprep.subr.bf16.mxu0 %v8121
    %8410 = vmatpush1.bf16.msra.mxu0 %v8120
    %8411 = vmatprep.subr.bf16.mxu0 %v8117
    %8412 = vmatpush1.bf16.msra.mxu0 %v8116
    %8413 = vmatprep.subr.bf16.mxu0 %v8113
    %8414 = vmatpush1.bf16.msra.mxu0 %v8112
    %8415 = vmatprep.subr.bf16.mxu0 %v8109
    %8416 = vmatpush1.bf16.msra.mxu0 %v8108
    %8417 = vmatprep.subr.bf16.mxu0 %v8105
    %8418 = vmatpush1.bf16.msra.mxu0 %v8104
    %8419 = vmatprep.subr.bf16.mxu0 %v8101
    %8420 = vmatpush1.bf16.msra.mxu0 %v8100
    %8421 = vmatprep.subr.bf16.mxu0 %v8161
    %8422 = vmatpush2.bf16.msra.mxu0 %v8160
    %8423 = vmatprep.subr.bf16.mxu0 %v8157
    %8424 = vmatpush2.bf16.msra.mxu0 %v8156
    %8425 = vmatprep.subr.bf16.mxu0 %v8153
    %8426 = vmatpush2.bf16.msra.mxu0 %v8152
    %8427 = vmatprep.subr.bf16.mxu0 %v8149
    %8428 = vmatpush2.bf16.msra.mxu0 %v8148
    %8429 = vmatprep.subr.bf16.mxu0 %v8145
    %8430 = vmatpush2.bf16.msra.mxu0 %v8144
    %8431 = vmatprep.subr.bf16.mxu0 %v8141
    %8432 = vmatpush2.bf16.msra.mxu0 %v8140
    %8433 = vmatprep.subr.bf16.mxu0 %v8137
    %8434 = vmatpush2.bf16.msra.mxu0 %v8136
    %8435 = vmatprep.subr.bf16.mxu0 %v8133
    %8436 = vmatpush2.bf16.msra.mxu0 %v8132
    %8437 = vmatprep.mubr.bf16.mxu0 %v7473
    %8438 = vmatmul.mubr.bf16.gmra.mxu0 %v7472
    %v8439 = vpop.f32.mrf.mxu0
    %v8440 = vadd.f32 %v8327, %v8439
    %v8441 = vpop.f32.mrf.mxu0
    %v8442 = vadd.f32 %v8329, %v8441
    %v8443 = vpop.f32.mrf.mxu0
    %v8444 = vadd.f32 %v8331, %v8443
    %v8445 = vpop.f32.mrf.mxu0
    %v8446 = vadd.f32 %v8333, %v8445
    %8447 = vmatprep.mubr.bf16.mxu0 %v7477
    %8448 = vmatmul.mubr.bf16.gmra.mxu0 %v7476
    %v8449 = vpop.f32.mrf.mxu0
    %v8450 = vadd.f32 %v8337, %v8449
    %v8451 = vpop.f32.mrf.mxu0
    %v8452 = vadd.f32 %v8339, %v8451
    %v8453 = vpop.f32.mrf.mxu0
    %v8454 = vadd.f32 %v8341, %v8453
    %v8455 = vpop.f32.mrf.mxu0
    %v8456 = vadd.f32 %v8343, %v8455
    %8457 = vmatprep.mubr.bf16.mxu0 %v7481
    %8458 = vmatmul.mubr.bf16.gmra.mxu0 %v7480
    %v8459 = vpop.f32.mrf.mxu0
    %v8460 = vadd.f32 %v8347, %v8459
    %v8461 = vpop.f32.mrf.mxu0
    %v8462 = vadd.f32 %v8349, %v8461
    %v8463 = vpop.f32.mrf.mxu0
    %v8464 = vadd.f32 %v8351, %v8463
    %v8465 = vpop.f32.mrf.mxu0
    %v8466 = vadd.f32 %v8353, %v8465
    %8467 = vmatprep.mubr.bf16.mxu0 %v7485
    %8468 = vmatmul.mubr.bf16.gmra.mxu0 %v7484
    %v8469 = vpop.f32.mrf.mxu0
    %v8470 = vadd.f32 %v8357, %v8469
    %v8471 = vpop.f32.mrf.mxu0
    %v8472 = vadd.f32 %v8359, %v8471
    %v8473 = vpop.f32.mrf.mxu0
    %v8474 = vadd.f32 %v8361, %v8473
    %v8475 = vpop.f32.mrf.mxu0
    %v8476 = vadd.f32 %v8363, %v8475
    %8477 = vmatprep.mubr.bf16.mxu0 %v7489
    %8478 = vmatmul.mubr.bf16.gmra.mxu0 %v7488
    %v8479 = vpop.f32.mrf.mxu0
    %v8480 = vadd.f32 %v8367, %v8479
    %v8481 = vpop.f32.mrf.mxu0
    %v8482 = vadd.f32 %v8369, %v8481
    %v8483 = vpop.f32.mrf.mxu0
    %v8484 = vadd.f32 %v8371, %v8483
    %v8485 = vpop.f32.mrf.mxu0
    %v8486 = vadd.f32 %v8373, %v8485
    %8487 = vmatprep.mubr.bf16.mxu0 %v7493
    %8488 = vmatmul.mubr.bf16.gmra.mxu0 %v7492
    %v8489 = vpop.f32.mrf.mxu0
    %v8490 = vadd.f32 %v8377, %v8489
    %v8491 = vpop.f32.mrf.mxu0
    %v8492 = vadd.f32 %v8379, %v8491
    %v8493 = vpop.f32.mrf.mxu0
    %v8494 = vadd.f32 %v8381, %v8493
    %v8495 = vpop.f32.mrf.mxu0
    %v8496 = vadd.f32 %v8383, %v8495
    %8497 = vmatprep.mubr.bf16.mxu0 %v7497
    %8498 = vmatmul.mubr.bf16.gmra.mxu0 %v7496
    %v8499 = vpop.f32.mrf.mxu0
    %v8500 = vadd.f32 %v8387, %v8499
    %v8501 = vpop.f32.mrf.mxu0
    %v8502 = vadd.f32 %v8389, %v8501
    %v8503 = vpop.f32.mrf.mxu0
    %v8504 = vadd.f32 %v8391, %v8503
    %v8505 = vpop.f32.mrf.mxu0
    %v8506 = vadd.f32 %v8393, %v8505
    %8507 = vmatprep.mubr.bf16.mxu0 %v7501
    %8508 = vmatmul.mubr.bf16.gmra.mxu0 %v7500
    %v8509 = vpop.f32.mrf.mxu0
    %v8510 = vadd.f32 %v8397, %v8509
    %v8511 = vpop.f32.mrf.mxu0
    %v8512 = vadd.f32 %v8399, %v8511
    %v8513 = vpop.f32.mrf.mxu0
    %v8514 = vadd.f32 %v8401, %v8513
    %v8515 = vpop.f32.mrf.mxu0
    %v8516 = vadd.f32 %v8403, %v8515
    %8517 = vdwg.mxu0
    %8518 = vmatprep.subr.bf16.mxu0 %v8067
    %8519 = vmatpush1.bf16.msra.mxu0 %v8066
    %8520 = vmatprep.subr.bf16.mxu0 %v8063
    %8521 = vmatpush1.bf16.msra.mxu0 %v8062
    %8522 = vmatprep.subr.bf16.mxu0 %v8059
    %8523 = vmatpush1.bf16.msra.mxu0 %v8058
    %8524 = vmatprep.subr.bf16.mxu0 %v8055
    %8525 = vmatpush1.bf16.msra.mxu0 %v8054
    %8526 = vmatprep.subr.bf16.mxu0 %v8051
    %8527 = vmatpush1.bf16.msra.mxu0 %v8050
    %8528 = vmatprep.subr.bf16.mxu0 %v8047
    %8529 = vmatpush1.bf16.msra.mxu0 %v8046
    %8530 = vmatprep.subr.bf16.mxu0 %v8043
    %8531 = vmatpush1.bf16.msra.mxu0 %v8042
    %8532 = vmatprep.subr.bf16.mxu0 %v8039
    %8533 = vmatpush1.bf16.msra.mxu0 %v8038
    %8534 = vmatprep.subr.bf16.mxu0 %v8099
    %8535 = vmatpush2.bf16.msra.mxu0 %v8098
    %8536 = vmatprep.subr.bf16.mxu0 %v8095
    %8537 = vmatpush2.bf16.msra.mxu0 %v8094
    %8538 = vmatprep.subr.bf16.mxu0 %v8091
    %8539 = vmatpush2.bf16.msra.mxu0 %v8090
    %8540 = vmatprep.subr.bf16.mxu0 %v8087
    %8541 = vmatpush2.bf16.msra.mxu0 %v8086
    %8542 = vmatprep.subr.bf16.mxu0 %v8083
    %8543 = vmatpush2.bf16.msra.mxu0 %v8082
    %8544 = vmatprep.subr.bf16.mxu0 %v8079
    %8545 = vmatpush2.bf16.msra.mxu0 %v8078
    %8546 = vmatprep.subr.bf16.mxu0 %v8075
    %8547 = vmatpush2.bf16.msra.mxu0 %v8074
    %8548 = vmatprep.subr.bf16.mxu0 %v8071
    %8549 = vmatpush2.bf16.msra.mxu0 %v8070
    %8550 = vmatprep.mubr.bf16.mxu0 %v7471
    %8551 = vmatmul.mubr.bf16.gmra.mxu0 %v7470
    %v8552 = vpop.f32.mrf.mxu0
    %v8553 = vadd.f32 %v7643, %v8552
    %v8554 = vpop.f32.mrf.mxu0
    %v8555 = vadd.f32 %v7647, %v8554
    %v8556 = vpop.f32.mrf.mxu0
    %v8557 = vadd.f32 %v7643, %v8556
    %v8558 = vpop.f32.mrf.mxu0
    %v8559 = vadd.f32 %v7647, %v8558
    %8560 = vmatprep.mubr.bf16.mxu0 %v7475
    %8561 = vmatmul.mubr.bf16.gmra.mxu0 %v7474
    %v8562 = vpop.f32.mrf.mxu0
    %v8563 = vadd.f32 %v7643, %v8562
    %v8564 = vpop.f32.mrf.mxu0
    %v8565 = vadd.f32 %v7647, %v8564
    %v8566 = vpop.f32.mrf.mxu0
    %v8567 = vadd.f32 %v7643, %v8566
    %v8568 = vpop.f32.mrf.mxu0
    %v8569 = vadd.f32 %v7647, %v8568
    %8570 = vmatprep.mubr.bf16.mxu0 %v7479
    %8571 = vmatmul.mubr.bf16.gmra.mxu0 %v7478
    %v8572 = vpop.f32.mrf.mxu0
    %v8573 = vadd.f32 %v7643, %v8572
    %v8574 = vpop.f32.mrf.mxu0
    %v8575 = vadd.f32 %v7647, %v8574
    %v8576 = vpop.f32.mrf.mxu0
    %v8577 = vadd.f32 %v7643, %v8576
    %v8578 = vpop.f32.mrf.mxu0
    %v8579 = vadd.f32 %v7647, %v8578
    %8580 = vmatprep.mubr.bf16.mxu0 %v7483
    %8581 = vmatmul.mubr.bf16.gmra.mxu0 %v7482
    %v8582 = vpop.f32.mrf.mxu0
    %v8583 = vadd.f32 %v7643, %v8582
    %v8584 = vpop.f32.mrf.mxu0
    %v8585 = vadd.f32 %v7647, %v8584
    %v8586 = vpop.f32.mrf.mxu0
    %v8587 = vadd.f32 %v7643, %v8586
    %v8588 = vpop.f32.mrf.mxu0
    %v8589 = vadd.f32 %v7647, %v8588
    %8590 = vmatprep.mubr.bf16.mxu0 %v7487
    %8591 = vmatmul.mubr.bf16.gmra.mxu0 %v7486
    %v8592 = vpop.f32.mrf.mxu0
    %v8593 = vadd.f32 %v7643, %v8592
    %v8594 = vpop.f32.mrf.mxu0
    %v8595 = vadd.f32 %v7647, %v8594
    %v8596 = vpop.f32.mrf.mxu0
    %v8597 = vadd.f32 %v7643, %v8596
    %v8598 = vpop.f32.mrf.mxu0
    %v8599 = vadd.f32 %v7647, %v8598
    %8600 = vmatprep.mubr.bf16.mxu0 %v7491
    %8601 = vmatmul.mubr.bf16.gmra.mxu0 %v7490
    %v8602 = vpop.f32.mrf.mxu0
    %v8603 = vadd.f32 %v7643, %v8602
    %v8604 = vpop.f32.mrf.mxu0
    %v8605 = vadd.f32 %v7647, %v8604
    %v8606 = vpop.f32.mrf.mxu0
    %v8607 = vadd.f32 %v7643, %v8606
    %v8608 = vpop.f32.mrf.mxu0
    %v8609 = vadd.f32 %v7647, %v8608
    %8610 = vmatprep.mubr.bf16.mxu0 %v7495
    %8611 = vmatmul.mubr.bf16.gmra.mxu0 %v7494
    %v8612 = vpop.f32.mrf.mxu0
    %v8613 = vadd.f32 %v7643, %v8612
    %v8614 = vpop.f32.mrf.mxu0
    %v8615 = vadd.f32 %v7647, %v8614
    %v8616 = vpop.f32.mrf.mxu0
    %v8617 = vadd.f32 %v7643, %v8616
    %v8618 = vpop.f32.mrf.mxu0
    %v8619 = vadd.f32 %v7647, %v8618
    %8620 = vmatprep.mubr.bf16.mxu0 %v7499
    %8621 = vmatmul.mubr.bf16.gmra.mxu0 %v7498
    %v8622 = vpop.f32.mrf.mxu0
    %v8623 = vadd.f32 %v7643, %v8622
    %v8624 = vpop.f32.mrf.mxu0
    %v8625 = vadd.f32 %v7647, %v8624
    %v8626 = vpop.f32.mrf.mxu0
    %v8627 = vadd.f32 %v7643, %v8626
    %v8628 = vpop.f32.mrf.mxu0
    %v8629 = vadd.f32 %v7647, %v8628
    %8630 = vdwg.mxu0
    %8631 = vmatprep.subr.bf16.mxu0 %v8131
    %8632 = vmatpush1.bf16.msra.mxu0 %v8130
    %8633 = vmatprep.subr.bf16.mxu0 %v8127
    %8634 = vmatpush1.bf16.msra.mxu0 %v8126
    %8635 = vmatprep.subr.bf16.mxu0 %v8123
    %8636 = vmatpush1.bf16.msra.mxu0 %v8122
    %8637 = vmatprep.subr.bf16.mxu0 %v8119
    %8638 = vmatpush1.bf16.msra.mxu0 %v8118
    %8639 = vmatprep.subr.bf16.mxu0 %v8115
    %8640 = vmatpush1.bf16.msra.mxu0 %v8114
    %8641 = vmatprep.subr.bf16.mxu0 %v8111
    %8642 = vmatpush1.bf16.msra.mxu0 %v8110
    %8643 = vmatprep.subr.bf16.mxu0 %v8107
    %8644 = vmatpush1.bf16.msra.mxu0 %v8106
    %8645 = vmatprep.subr.bf16.mxu0 %v8103
    %8646 = vmatpush1.bf16.msra.mxu0 %v8102
    %8647 = vmatprep.subr.bf16.mxu0 %v8163
    %8648 = vmatpush2.bf16.msra.mxu0 %v8162
    %8649 = vmatprep.subr.bf16.mxu0 %v8159
    %8650 = vmatpush2.bf16.msra.mxu0 %v8158
    %8651 = vmatprep.subr.bf16.mxu0 %v8155
    %8652 = vmatpush2.bf16.msra.mxu0 %v8154
    %8653 = vmatprep.subr.bf16.mxu0 %v8151
    %8654 = vmatpush2.bf16.msra.mxu0 %v8150
    %8655 = vmatprep.subr.bf16.mxu0 %v8147
    %8656 = vmatpush2.bf16.msra.mxu0 %v8146
    %8657 = vmatprep.subr.bf16.mxu0 %v8143
    %8658 = vmatpush2.bf16.msra.mxu0 %v8142
    %8659 = vmatprep.subr.bf16.mxu0 %v8139
    %8660 = vmatpush2.bf16.msra.mxu0 %v8138
    %8661 = vmatprep.subr.bf16.mxu0 %v8135
    %8662 = vmatpush2.bf16.msra.mxu0 %v8134
    %8663 = vmatprep.mubr.bf16.mxu0 %v7473
    %8664 = vmatmul.mubr.bf16.gmra.mxu0 %v7472
    %v8665 = vpop.f32.mrf.mxu0
    %v8666 = vadd.f32 %v8553, %v8665
    %v8667 = vpop.f32.mrf.mxu0
    %v8668 = vadd.f32 %v8555, %v8667
    %v8669 = vpop.f32.mrf.mxu0
    %v8670 = vadd.f32 %v8557, %v8669
    %v8671 = vpop.f32.mrf.mxu0
    %v8672 = vadd.f32 %v8559, %v8671
    %8673 = vmatprep.mubr.bf16.mxu0 %v7477
    %8674 = vmatmul.mubr.bf16.gmra.mxu0 %v7476
    %v8675 = vpop.f32.mrf.mxu0
    %v8676 = vadd.f32 %v8563, %v8675
    %v8677 = vpop.f32.mrf.mxu0
    %v8678 = vadd.f32 %v8565, %v8677
    %v8679 = vpop.f32.mrf.mxu0
    %v8680 = vadd.f32 %v8567, %v8679
    %v8681 = vpop.f32.mrf.mxu0
    %v8682 = vadd.f32 %v8569, %v8681
    %8683 = vmatprep.mubr.bf16.mxu0 %v7481
    %8684 = vmatmul.mubr.bf16.gmra.mxu0 %v7480
    %v8685 = vpop.f32.mrf.mxu0
    %v8686 = vadd.f32 %v8573, %v8685
    %v8687 = vpop.f32.mrf.mxu0
    %v8688 = vadd.f32 %v8575, %v8687
    %v8689 = vpop.f32.mrf.mxu0
    %v8690 = vadd.f32 %v8577, %v8689
    %v8691 = vpop.f32.mrf.mxu0
    %v8692 = vadd.f32 %v8579, %v8691
    %8693 = vmatprep.mubr.bf16.mxu0 %v7485
    %8694 = vmatmul.mubr.bf16.gmra.mxu0 %v7484
    %v8695 = vpop.f32.mrf.mxu0
    %v8696 = vadd.f32 %v8583, %v8695
    %v8697 = vpop.f32.mrf.mxu0
    %v8698 = vadd.f32 %v8585, %v8697
    %v8699 = vpop.f32.mrf.mxu0
    %v8700 = vadd.f32 %v8587, %v8699
    %v8701 = vpop.f32.mrf.mxu0
    %v8702 = vadd.f32 %v8589, %v8701
    %8703 = vmatprep.mubr.bf16.mxu0 %v7489
    %8704 = vmatmul.mubr.bf16.gmra.mxu0 %v7488
    %v8705 = vpop.f32.mrf.mxu0
    %v8706 = vadd.f32 %v8593, %v8705
    %v8707 = vpop.f32.mrf.mxu0
    %v8708 = vadd.f32 %v8595, %v8707
    %v8709 = vpop.f32.mrf.mxu0
    %v8710 = vadd.f32 %v8597, %v8709
    %v8711 = vpop.f32.mrf.mxu0
    %v8712 = vadd.f32 %v8599, %v8711
    %8713 = vmatprep.mubr.bf16.mxu0 %v7493
    %8714 = vmatmul.mubr.bf16.gmra.mxu0 %v7492
    %v8715 = vpop.f32.mrf.mxu0
    %v8716 = vadd.f32 %v8603, %v8715
    %v8717 = vpop.f32.mrf.mxu0
    %v8718 = vadd.f32 %v8605, %v8717
    %v8719 = vpop.f32.mrf.mxu0
    %v8720 = vadd.f32 %v8607, %v8719
    %v8721 = vpop.f32.mrf.mxu0
    %v8722 = vadd.f32 %v8609, %v8721
    %8723 = vmatprep.mubr.bf16.mxu0 %v7497
    %8724 = vmatmul.mubr.bf16.gmra.mxu0 %v7496
    %v8725 = vpop.f32.mrf.mxu0
    %v8726 = vadd.f32 %v8613, %v8725
    %v8727 = vpop.f32.mrf.mxu0
    %v8728 = vadd.f32 %v8615, %v8727
    %v8729 = vpop.f32.mrf.mxu0
    %v8730 = vadd.f32 %v8617, %v8729
    %v8731 = vpop.f32.mrf.mxu0
    %v8732 = vadd.f32 %v8619, %v8731
    %8733 = vmatprep.mubr.bf16.mxu0 %v7501
    %8734 = vmatmul.mubr.bf16.gmra.mxu0 %v7500
    %v8735 = vpop.f32.mrf.mxu0
    %v8736 = vadd.f32 %v8623, %v8735
    %v8737 = vpop.f32.mrf.mxu0
    %v8738 = vadd.f32 %v8625, %v8737
    %v8739 = vpop.f32.mrf.mxu0
    %v8740 = vadd.f32 %v8627, %v8739
    %v8741 = vpop.f32.mrf.mxu0
    %v8742 = vadd.f32 %v8629, %v8741
    %8743 = vdwg.mxu0
    %v8744 = vmax.f32 %v8440, 0.0
    %v8745 = vmax.f32 %v8442, 0.0
    %v8746 = vmax.f32 %v8666, 0.0
    %v8747 = vmax.f32 %v8668, 0.0
    %v8748 = vmax.f32 %v8444, 0.0
    %v8749 = vmax.f32 %v8446, 0.0
    %v8750 = vmax.f32 %v8670, 0.0
    %v8751 = vmax.f32 %v8672, 0.0
    %v8752 = vmax.f32 %v8450, 0.0
    %v8753 = vmax.f32 %v8452, 0.0
    %v8754 = vmax.f32 %v8676, 0.0
    %v8755 = vmax.f32 %v8678, 0.0
    %v8756 = vmax.f32 %v8454, 0.0
    %v8757 = vmax.f32 %v8456, 0.0
    %v8758 = vmax.f32 %v8680, 0.0
    %v8759 = vmax.f32 %v8682, 0.0
    %v8760 = vmax.f32 %v8460, 0.0
    %v8761 = vmax.f32 %v8462, 0.0
    %v8762 = vmax.f32 %v8686, 0.0
    %v8763 = vmax.f32 %v8688, 0.0
    %v8764 = vmax.f32 %v8464, 0.0
    %v8765 = vmax.f32 %v8466, 0.0
    %v8766 = vmax.f32 %v8690, 0.0
    %v8767 = vmax.f32 %v8692, 0.0
    %v8768 = vmax.f32 %v8470, 0.0
    %v8769 = vmax.f32 %v8472, 0.0
    %v8770 = vmax.f32 %v8696, 0.0
    %v8771 = vmax.f32 %v8698, 0.0
    %v8772 = vmax.f32 %v8474, 0.0
    %v8773 = vmax.f32 %v8476, 0.0
    %v8774 = vmax.f32 %v8700, 0.0
    %v8775 = vmax.f32 %v8702, 0.0
    %v8776 = vmax.f32 %v8480, 0.0
    %v8777 = vmax.f32 %v8482, 0.0
    %v8778 = vmax.f32 %v8706, 0.0
    %v8779 = vmax.f32 %v8708, 0.0
    %v8780 = vmax.f32 %v8484, 0.0
    %v8781 = vmax.f32 %v8486, 0.0
    %v8782 = vmax.f32 %v8710, 0.0
    %v8783 = vmax.f32 %v8712, 0.0
    %v8784 = vmax.f32 %v8490, 0.0
    %v8785 = vmax.f32 %v8492, 0.0
    %v8786 = vmax.f32 %v8716, 0.0
    %v8787 = vmax.f32 %v8718, 0.0
    %v8788 = vmax.f32 %v8494, 0.0
    %v8789 = vmax.f32 %v8496, 0.0
    %v8790 = vmax.f32 %v8720, 0.0
    %v8791 = vmax.f32 %v8722, 0.0
    %v8792 = vmax.f32 %v8500, 0.0
    %v8793 = vmax.f32 %v8502, 0.0
    %v8794 = vmax.f32 %v8726, 0.0
    %v8795 = vmax.f32 %v8728, 0.0
    %v8796 = vmax.f32 %v8504, 0.0
    %v8797 = vmax.f32 %v8506, 0.0
    %v8798 = vmax.f32 %v8730, 0.0
    %v8799 = vmax.f32 %v8732, 0.0
    %v8800 = vmax.f32 %v8510, 0.0
    %v8801 = vmax.f32 %v8512, 0.0
    %v8802 = vmax.f32 %v8736, 0.0
    %v8803 = vmax.f32 %v8738, 0.0
    %v8804 = vmax.f32 %v8514, 0.0
    %v8805 = vmax.f32 %v8516, 0.0
    %v8806 = vmax.f32 %v8740, 0.0
    %v8807 = vmax.f32 %v8742, 0.0
    %v8808 = vpack.c.bf16 %v8748, %v8744
    %v8809 = vpack.c.bf16 %v8749, %v8745
    %v8810 = vpack.c.bf16 %v8750, %v8746
    %v8811 = vpack.c.bf16 %v8751, %v8747
    %v8812 = vpack.c.bf16 %v8756, %v8752
    %v8813 = vpack.c.bf16 %v8757, %v8753
    %v8814 = vpack.c.bf16 %v8758, %v8754
    %v8815 = vpack.c.bf16 %v8759, %v8755
    %v8816 = vpack.c.bf16 %v8764, %v8760
    %v8817 = vpack.c.bf16 %v8765, %v8761
    %v8818 = vpack.c.bf16 %v8766, %v8762
    %v8819 = vpack.c.bf16 %v8767, %v8763
    %v8820 = vpack.c.bf16 %v8772, %v8768
    %v8821 = vpack.c.bf16 %v8773, %v8769
    %v8822 = vpack.c.bf16 %v8774, %v8770
    %v8823 = vpack.c.bf16 %v8775, %v8771
    %v8824 = vpack.c.bf16 %v8780, %v8776
    %v8825 = vpack.c.bf16 %v8781, %v8777
    %v8826 = vpack.c.bf16 %v8782, %v8778
    %v8827 = vpack.c.bf16 %v8783, %v8779
    %v8828 = vpack.c.bf16 %v8788, %v8784
    %v8829 = vpack.c.bf16 %v8789, %v8785
    %v8830 = vpack.c.bf16 %v8790, %v8786
    %v8831 = vpack.c.bf16 %v8791, %v8787
    %v8832 = vpack.c.bf16 %v8796, %v8792
    %v8833 = vpack.c.bf16 %v8797, %v8793
    %v8834 = vpack.c.bf16 %v8798, %v8794
    %v8835 = vpack.c.bf16 %v8799, %v8795
    %v8836 = vpack.c.bf16 %v8804, %v8800
    %v8837 = vpack.c.bf16 %v8805, %v8801
    %v8838 = vpack.c.bf16 %v8806, %v8802
    %v8839 = vpack.c.bf16 %v8807, %v8803
    %v8840 = vld [vmem:[%s13] sm:$0xf]
    %v8841 = vld [vmem:[%s13 + $0x4] sm:$0xf]
    %v8842 = vld [vmem:[%s13 + $0x8] sm:$0xf]
    %v8843 = vld [vmem:[%s13 + $0xc] sm:$0xf]
    %v8844 = vld [vmem:[%s13 + $0x10] sm:$0xf]
    %v8845 = vld [vmem:[%s13 + $0x14] sm:$0xf]
    %v8846 = vld [vmem:[%s13 + $0x18] sm:$0xf]
    %v8847 = vld [vmem:[%s13 + $0x1c] sm:$0xf]
    %v8848 = vld [vmem:[%s13 + $0x20] sm:$0xf]
    %v8849 = vld [vmem:[%s13 + $0x24] sm:$0xf]
    %v8850 = vld [vmem:[%s13 + $0x28] sm:$0xf]
    %v8851 = vld [vmem:[%s13 + $0x2c] sm:$0xf]
    %v8852 = vld [vmem:[%s13 + $0x30] sm:$0xf]
    %v8853 = vld [vmem:[%s13 + $0x34] sm:$0xf]
    %v8854 = vld [vmem:[%s13 + $0x38] sm:$0xf]
    %v8855 = vld [vmem:[%s13 + $0x3c] sm:$0xf]
    %v8856 = vld [vmem:[%s13 + $0x40] sm:$0xf]
    %v8857 = vld [vmem:[%s13 + $0x44] sm:$0xf]
    %v8858 = vld [vmem:[%s13 + $0x48] sm:$0xf]
    %v8859 = vld [vmem:[%s13 + $0x4c] sm:$0xf]
    %v8860 = vld [vmem:[%s13 + $0x50] sm:$0xf]
    %v8861 = vld [vmem:[%s13 + $0x54] sm:$0xf]
    %v8862 = vld [vmem:[%s13 + $0x58] sm:$0xf]
    %v8863 = vld [vmem:[%s13 + $0x5c] sm:$0xf]
    %v8864 = vld [vmem:[%s13 + $0x60] sm:$0xf]
    %v8865 = vld [vmem:[%s13 + $0x64] sm:$0xf]
    %v8866 = vld [vmem:[%s13 + $0x68] sm:$0xf]
    %v8867 = vld [vmem:[%s13 + $0x6c] sm:$0xf]
    %v8868 = vld [vmem:[%s13 + $0x70] sm:$0xf]
    %v8869 = vld [vmem:[%s13 + $0x74] sm:$0xf]
    %v8870 = vld [vmem:[%s13 + $0x78] sm:$0xf]
    %v8871 = vld [vmem:[%s13 + $0x7c] sm:$0xf]
    %v8872 = vld [vmem:[%s13 + $0x80] sm:$0xf]
    %v8873 = vld [vmem:[%s13 + $0x84] sm:$0xf]
    %v8874 = vld [vmem:[%s13 + $0x88] sm:$0xf]
    %v8875 = vld [vmem:[%s13 + $0x8c] sm:$0xf]
    %v8876 = vld [vmem:[%s13 + $0x90] sm:$0xf]
    %v8877 = vld [vmem:[%s13 + $0x94] sm:$0xf]
    %v8878 = vld [vmem:[%s13 + $0x98] sm:$0xf]
    %v8879 = vld [vmem:[%s13 + $0x9c] sm:$0xf]
    %v8880 = vld [vmem:[%s13 + $0xa0] sm:$0xf]
    %v8881 = vld [vmem:[%s13 + $0xa4] sm:$0xf]
    %v8882 = vld [vmem:[%s13 + $0xa8] sm:$0xf]
    %v8883 = vld [vmem:[%s13 + $0xac] sm:$0xf]
    %v8884 = vld [vmem:[%s13 + $0xb0] sm:$0xf]
    %v8885 = vld [vmem:[%s13 + $0xb4] sm:$0xf]
    %v8886 = vld [vmem:[%s13 + $0xb8] sm:$0xf]
    %v8887 = vld [vmem:[%s13 + $0xbc] sm:$0xf]
    %v8888 = vld [vmem:[%s13 + $0xc0] sm:$0xf]
    %v8889 = vld [vmem:[%s13 + $0xc4] sm:$0xf]
    %v8890 = vld [vmem:[%s13 + $0xc8] sm:$0xf]
    %v8891 = vld [vmem:[%s13 + $0xcc] sm:$0xf]
    %v8892 = vld [vmem:[%s13 + $0xd0] sm:$0xf]
    %v8893 = vld [vmem:[%s13 + $0xd4] sm:$0xf]
    %v8894 = vld [vmem:[%s13 + $0xd8] sm:$0xf]
    %v8895 = vld [vmem:[%s13 + $0xdc] sm:$0xf]
    %v8896 = vld [vmem:[%s13 + $0xe0] sm:$0xf]
    %v8897 = vld [vmem:[%s13 + $0xe4] sm:$0xf]
    %v8898 = vld [vmem:[%s13 + $0xe8] sm:$0xf]
    %v8899 = vld [vmem:[%s13 + $0xec] sm:$0xf]
    %v8900 = vld [vmem:[%s13 + $0xf0] sm:$0xf]
    %v8901 = vld [vmem:[%s13 + $0xf4] sm:$0xf]
    %v8902 = vld [vmem:[%s13 + $0xf8] sm:$0xf]
    %v8903 = vld [vmem:[%s13 + $0xfc] sm:$0xf]
    %v8904 = vld [vmem:[%s18] sm:$0x1]
    %v8906 = vlaneseq
    %v8907 = vshrl.u32 %v8906, 7
    %v8908 = vsub.s32 0, %v8907
    %v8909 = vrot.slane %v8904, %v8908
    %v8975 = vunpack.c.l.b16 %v8840
    %v8976 = vunpack.c.l.b16 %v8841
    %v8977 = vunpack.c.l.b16 %v8842
    %v8978 = vunpack.c.l.b16 %v8843
    %v8979 = vunpack.c.l.b16 %v8844
    %v8980 = vunpack.c.l.b16 %v8845
    %v8981 = vunpack.c.l.b16 %v8846
    %v8982 = vunpack.c.l.b16 %v8847
    %v8983 = vunpack.c.l.b16 %v8848
    %v8984 = vunpack.c.l.b16 %v8849
    %v8985 = vunpack.c.l.b16 %v8850
    %v8986 = vunpack.c.l.b16 %v8851
    %v8987 = vunpack.c.l.b16 %v8852
    %v8988 = vunpack.c.l.b16 %v8853
    %v8989 = vunpack.c.l.b16 %v8854
    %v8990 = vunpack.c.l.b16 %v8855
    %v8991 = vunpack.c.l.b16 %v8856
    %v8992 = vunpack.c.l.b16 %v8857
    %v8993 = vunpack.c.l.b16 %v8858
    %v8994 = vunpack.c.l.b16 %v8859
    %v8995 = vunpack.c.l.b16 %v8860
    %v8996 = vunpack.c.l.b16 %v8861
    %v8997 = vunpack.c.l.b16 %v8862
    %v8998 = vunpack.c.l.b16 %v8863
    %v8999 = vunpack.c.l.b16 %v8864
    %v9000 = vunpack.c.l.b16 %v8865
    %v9001 = vunpack.c.l.b16 %v8866
    %v9002 = vunpack.c.l.b16 %v8867
    %v9003 = vunpack.c.l.b16 %v8868
    %v9004 = vunpack.c.l.b16 %v8869
    %v9005 = vunpack.c.l.b16 %v8870
    %v9006 = vunpack.c.l.b16 %v8871
    %v9007 = vunpack.c.l.b16 %v8872
    %v9008 = vunpack.c.l.b16 %v8873
    %v9009 = vunpack.c.l.b16 %v8874
    %v9010 = vunpack.c.l.b16 %v8875
    %v9011 = vunpack.c.l.b16 %v8876
    %v9012 = vunpack.c.l.b16 %v8877
    %v9013 = vunpack.c.l.b16 %v8878
    %v9014 = vunpack.c.l.b16 %v8879
    %v9015 = vunpack.c.l.b16 %v8880
    %v9016 = vunpack.c.l.b16 %v8881
    %v9017 = vunpack.c.l.b16 %v8882
    %v9018 = vunpack.c.l.b16 %v8883
    %v9019 = vunpack.c.l.b16 %v8884
    %v9020 = vunpack.c.l.b16 %v8885
    %v9021 = vunpack.c.l.b16 %v8886
    %v9022 = vunpack.c.l.b16 %v8887
    %v9023 = vunpack.c.l.b16 %v8888
    %v9024 = vunpack.c.l.b16 %v8889
    %v9025 = vunpack.c.l.b16 %v8890
    %v9026 = vunpack.c.l.b16 %v8891
    %v9027 = vunpack.c.l.b16 %v8892
    %v9028 = vunpack.c.l.b16 %v8893
    %v9029 = vunpack.c.l.b16 %v8894
    %v9030 = vunpack.c.l.b16 %v8895
    %v9031 = vunpack.c.l.b16 %v8896
    %v9032 = vunpack.c.l.b16 %v8897
    %v9033 = vunpack.c.l.b16 %v8898
    %v9034 = vunpack.c.l.b16 %v8899
    %v9035 = vunpack.c.l.b16 %v8900
    %v9036 = vunpack.c.l.b16 %v8901
    %v9037 = vunpack.c.l.b16 %v8902
    %v9038 = vunpack.c.l.b16 %v8903
    %v9039 = vpack.c.b16 %v8976, %v8975
    %v9040 = vpack.c.b16 %v8978, %v8977
    %v9041 = vpack.c.b16 %v8980, %v8979
    %v9042 = vpack.c.b16 %v8982, %v8981
    %v9043 = vpack.c.b16 %v8984, %v8983
    %v9044 = vpack.c.b16 %v8986, %v8985
    %v9045 = vpack.c.b16 %v8988, %v8987
    %v9046 = vpack.c.b16 %v8990, %v8989
    %v9047 = vpack.c.b16 %v8992, %v8991
    %v9048 = vpack.c.b16 %v8994, %v8993
    %v9049 = vpack.c.b16 %v8996, %v8995
    %v9050 = vpack.c.b16 %v8998, %v8997
    %v9051 = vpack.c.b16 %v9000, %v8999
    %v9052 = vpack.c.b16 %v9002, %v9001
    %v9053 = vpack.c.b16 %v9004, %v9003
    %v9054 = vpack.c.b16 %v9006, %v9005
    %v9055 = vpack.c.b16 %v9008, %v9007
    %v9056 = vpack.c.b16 %v9010, %v9009
    %v9057 = vpack.c.b16 %v9012, %v9011
    %v9058 = vpack.c.b16 %v9014, %v9013
    %v9059 = vpack.c.b16 %v9016, %v9015
    %v9060 = vpack.c.b16 %v9018, %v9017
    %v9061 = vpack.c.b16 %v9020, %v9019
    %v9062 = vpack.c.b16 %v9022, %v9021
    %v9063 = vpack.c.b16 %v9024, %v9023
    %v9064 = vpack.c.b16 %v9026, %v9025
    %v9065 = vpack.c.b16 %v9028, %v9027
    %v9066 = vpack.c.b16 %v9030, %v9029
    %v9067 = vpack.c.b16 %v9032, %v9031
    %v9068 = vpack.c.b16 %v9034, %v9033
    %v9069 = vpack.c.b16 %v9036, %v9035
    %v9070 = vpack.c.b16 %v9038, %v9037
    %9103 = vmatprep.subr.bf16.mxu0 0
    %9104 = vmatpush1.bf16.msra.mxu0 %v9046
    %9105 = vmatprep.subr.bf16.mxu0 0
    %9106 = vmatpush1.bf16.msra.mxu0 %v9045
    %9107 = vmatprep.subr.bf16.mxu0 0
    %9108 = vmatpush1.bf16.msra.mxu0 %v9044
    %9109 = vmatprep.subr.bf16.mxu0 0
    %9110 = vmatpush1.bf16.msra.mxu0 %v9043
    %9111 = vmatprep.subr.bf16.mxu0 0
    %9112 = vmatpush1.bf16.msra.mxu0 %v9042
    %9113 = vmatprep.subr.bf16.mxu0 0
    %9114 = vmatpush1.bf16.msra.mxu0 %v9041
    %9115 = vmatprep.subr.bf16.mxu0 0
    %9116 = vmatpush1.bf16.msra.mxu0 %v9040
    %9117 = vmatprep.subr.bf16.mxu0 0
    %9118 = vmatpush1.bf16.msra.mxu0 %v9039
    %9119 = vmatprep.subr.bf16.mxu0 0
    %9120 = vmatpush2.bf16.msra.mxu0 %v9054
    %9121 = vmatprep.subr.bf16.mxu0 0
    %9122 = vmatpush2.bf16.msra.mxu0 %v9053
    %9123 = vmatprep.subr.bf16.mxu0 0
    %9124 = vmatpush2.bf16.msra.mxu0 %v9052
    %9125 = vmatprep.subr.bf16.mxu0 0
    %9126 = vmatpush2.bf16.msra.mxu0 %v9051
    %9127 = vmatprep.subr.bf16.mxu0 0
    %9128 = vmatpush2.bf16.msra.mxu0 %v9050
    %9129 = vmatprep.subr.bf16.mxu0 0
    %9130 = vmatpush2.bf16.msra.mxu0 %v9049
    %9131 = vmatprep.subr.bf16.mxu0 0
    %9132 = vmatpush2.bf16.msra.mxu0 %v9048
    %9133 = vmatprep.subr.bf16.mxu0 0
    %9134 = vmatpush2.bf16.msra.mxu0 %v9047
    %9135 = vmatprep.mubr.bf16.mxu0 %v8809
    %9136 = vmatmul.mubr.bf16.gmra.mxu0 %v8808
    %v9137 = vpop.f32.mrf.mxu0
    %v9138 = vadd.f32 %v8909, %v9137
    %v9139 = vpop.f32.mrf.mxu0
    %v9140 = vpop.f32.mrf.mxu0
    %v9141 = vadd.f32 %v8909, %v9140
    %v9142 = vpop.f32.mrf.mxu0
    %9143 = vmatprep.mubr.bf16.mxu0 %v8813
    %9144 = vmatmul.mubr.bf16.gmra.mxu0 %v8812
    %v9145 = vpop.f32.mrf.mxu0
    %v9146 = vadd.f32 %v8909, %v9145
    %v9147 = vpop.f32.mrf.mxu0
    %v9148 = vpop.f32.mrf.mxu0
    %v9149 = vadd.f32 %v8909, %v9148
    %v9150 = vpop.f32.mrf.mxu0
    %9151 = vmatprep.mubr.bf16.mxu0 %v8817
    %9152 = vmatmul.mubr.bf16.gmra.mxu0 %v8816
    %v9153 = vpop.f32.mrf.mxu0
    %v9154 = vadd.f32 %v8909, %v9153
    %v9155 = vpop.f32.mrf.mxu0
    %v9156 = vpop.f32.mrf.mxu0
    %v9157 = vadd.f32 %v8909, %v9156
    %v9158 = vpop.f32.mrf.mxu0
    %9159 = vmatprep.mubr.bf16.mxu0 %v8821
    %9160 = vmatmul.mubr.bf16.gmra.mxu0 %v8820
    %v9161 = vpop.f32.mrf.mxu0
    %v9162 = vadd.f32 %v8909, %v9161
    %v9163 = vpop.f32.mrf.mxu0
    %v9164 = vpop.f32.mrf.mxu0
    %v9165 = vadd.f32 %v8909, %v9164
    %v9166 = vpop.f32.mrf.mxu0
    %9167 = vmatprep.mubr.bf16.mxu0 %v8825
    %9168 = vmatmul.mubr.bf16.gmra.mxu0 %v8824
    %v9169 = vpop.f32.mrf.mxu0
    %v9170 = vadd.f32 %v8909, %v9169
    %v9171 = vpop.f32.mrf.mxu0
    %v9172 = vpop.f32.mrf.mxu0
    %v9173 = vadd.f32 %v8909, %v9172
    %v9174 = vpop.f32.mrf.mxu0
    %9175 = vmatprep.mubr.bf16.mxu0 %v8829
    %9176 = vmatmul.mubr.bf16.gmra.mxu0 %v8828
    %v9177 = vpop.f32.mrf.mxu0
    %v9178 = vadd.f32 %v8909, %v9177
    %v9179 = vpop.f32.mrf.mxu0
    %v9180 = vpop.f32.mrf.mxu0
    %v9181 = vadd.f32 %v8909, %v9180
    %v9182 = vpop.f32.mrf.mxu0
    %9183 = vmatprep.mubr.bf16.mxu0 %v8833
    %9184 = vmatmul.mubr.bf16.gmra.mxu0 %v8832
    %v9185 = vpop.f32.mrf.mxu0
    %v9186 = vadd.f32 %v8909, %v9185
    %v9187 = vpop.f32.mrf.mxu0
    %v9188 = vpop.f32.mrf.mxu0
    %v9189 = vadd.f32 %v8909, %v9188
    %v9190 = vpop.f32.mrf.mxu0
    %9191 = vmatprep.mubr.bf16.mxu0 %v8837
    %9192 = vmatmul.mubr.bf16.gmra.mxu0 %v8836
    %v9193 = vpop.f32.mrf.mxu0
    %v9194 = vadd.f32 %v8909, %v9193
    %v9195 = vpop.f32.mrf.mxu0
    %v9196 = vpop.f32.mrf.mxu0
    %v9197 = vadd.f32 %v8909, %v9196
    %v9198 = vpop.f32.mrf.mxu0
    %9199 = vdwg.mxu0
    %9200 = vmatprep.subr.bf16.mxu0 0
    %9201 = vmatpush1.bf16.msra.mxu0 %v9062
    %9202 = vmatprep.subr.bf16.mxu0 0
    %9203 = vmatpush1.bf16.msra.mxu0 %v9061
    %9204 = vmatprep.subr.bf16.mxu0 0
    %9205 = vmatpush1.bf16.msra.mxu0 %v9060
    %9206 = vmatprep.subr.bf16.mxu0 0
    %9207 = vmatpush1.bf16.msra.mxu0 %v9059
    %9208 = vmatprep.subr.bf16.mxu0 0
    %9209 = vmatpush1.bf16.msra.mxu0 %v9058
    %9210 = vmatprep.subr.bf16.mxu0 0
    %9211 = vmatpush1.bf16.msra.mxu0 %v9057
    %9212 = vmatprep.subr.bf16.mxu0 0
    %9213 = vmatpush1.bf16.msra.mxu0 %v9056
    %9214 = vmatprep.subr.bf16.mxu0 0
    %9215 = vmatpush1.bf16.msra.mxu0 %v9055
    %9216 = vmatprep.subr.bf16.mxu0 0
    %9217 = vmatpush2.bf16.msra.mxu0 %v9070
    %9218 = vmatprep.subr.bf16.mxu0 0
    %9219 = vmatpush2.bf16.msra.mxu0 %v9069
    %9220 = vmatprep.subr.bf16.mxu0 0
    %9221 = vmatpush2.bf16.msra.mxu0 %v9068
    %9222 = vmatprep.subr.bf16.mxu0 0
    %9223 = vmatpush2.bf16.msra.mxu0 %v9067
    %9224 = vmatprep.subr.bf16.mxu0 0
    %9225 = vmatpush2.bf16.msra.mxu0 %v9066
    %9226 = vmatprep.subr.bf16.mxu0 0
    %9227 = vmatpush2.bf16.msra.mxu0 %v9065
    %9228 = vmatprep.subr.bf16.mxu0 0
    %9229 = vmatpush2.bf16.msra.mxu0 %v9064
    %9230 = vmatprep.subr.bf16.mxu0 0
    %9231 = vmatpush2.bf16.msra.mxu0 %v9063
    %9232 = vmatprep.mubr.bf16.mxu0 %v8811
    %9233 = vmatmul.mubr.bf16.gmra.mxu0 %v8810
    %v9234 = vpop.f32.mrf.mxu0
    %v9235 = vadd.f32 %v9138, %v9234
    %v9236 = vpop.f32.mrf.mxu0
    %v9237 = vpop.f32.mrf.mxu0
    %v9238 = vadd.f32 %v9141, %v9237
    %v9239 = vpop.f32.mrf.mxu0
    %9240 = vmatprep.mubr.bf16.mxu0 %v8815
    %9241 = vmatmul.mubr.bf16.gmra.mxu0 %v8814
    %v9242 = vpop.f32.mrf.mxu0
    %v9243 = vadd.f32 %v9146, %v9242
    %v9244 = vpop.f32.mrf.mxu0
    %v9245 = vpop.f32.mrf.mxu0
    %v9246 = vadd.f32 %v9149, %v9245
    %v9247 = vpop.f32.mrf.mxu0
    %9248 = vmatprep.mubr.bf16.mxu0 %v8819
    %9249 = vmatmul.mubr.bf16.gmra.mxu0 %v8818
    %v9250 = vpop.f32.mrf.mxu0
    %v9251 = vadd.f32 %v9154, %v9250
    %v9252 = vpop.f32.mrf.mxu0
    %v9253 = vpop.f32.mrf.mxu0
    %v9254 = vadd.f32 %v9157, %v9253
    %v9255 = vpop.f32.mrf.mxu0
    %9256 = vmatprep.mubr.bf16.mxu0 %v8823
    %9257 = vmatmul.mubr.bf16.gmra.mxu0 %v8822
    %v9258 = vpop.f32.mrf.mxu0
    %v9259 = vadd.f32 %v9162, %v9258
    %v9260 = vpop.f32.mrf.mxu0
    %v9261 = vpop.f32.mrf.mxu0
    %v9262 = vadd.f32 %v9165, %v9261
    %v9263 = vpop.f32.mrf.mxu0
    %9264 = vmatprep.mubr.bf16.mxu0 %v8827
    %9265 = vmatmul.mubr.bf16.gmra.mxu0 %v8826
    %v9266 = vpop.f32.mrf.mxu0
    %v9267 = vadd.f32 %v9170, %v9266
    %v9268 = vpop.f32.mrf.mxu0
    %v9269 = vpop.f32.mrf.mxu0
    %v9270 = vadd.f32 %v9173, %v9269
    %v9271 = vpop.f32.mrf.mxu0
    %9272 = vmatprep.mubr.bf16.mxu0 %v8831
    %9273 = vmatmul.mubr.bf16.gmra.mxu0 %v8830
    %v9274 = vpop.f32.mrf.mxu0
    %v9275 = vadd.f32 %v9178, %v9274
    %v9276 = vpop.f32.mrf.mxu0
    %v9277 = vpop.f32.mrf.mxu0
    %v9278 = vadd.f32 %v9181, %v9277
    %v9279 = vpop.f32.mrf.mxu0
    %9280 = vmatprep.mubr.bf16.mxu0 %v8835
    %9281 = vmatmul.mubr.bf16.gmra.mxu0 %v8834
    %v9282 = vpop.f32.mrf.mxu0
    %v9283 = vadd.f32 %v9186, %v9282
    %v9284 = vpop.f32.mrf.mxu0
    %v9285 = vpop.f32.mrf.mxu0
    %v9286 = vadd.f32 %v9189, %v9285
    %v9287 = vpop.f32.mrf.mxu0
    %9288 = vmatprep.mubr.bf16.mxu0 %v8839
    %9289 = vmatmul.mubr.bf16.gmra.mxu0 %v8838
    %v9290 = vpop.f32.mrf.mxu0
    %v9291 = vadd.f32 %v9194, %v9290
    %v9292 = vpop.f32.mrf.mxu0
    %v9293 = vpop.f32.mrf.mxu0
    %v9294 = vadd.f32 %v9197, %v9293
    %v9295 = vpop.f32.mrf.mxu0
    %9296 = vdwg.mxu0
    %9297 = vmax.xlane.f32.xlu0 %v9235
    %v9298 = vpop.xlane.xlu0 %9297
    %9299 = vmax.xlane.f32.xlu0 %v9238
    %v9300 = vpop.xlane.xlu0 %9299
    %9301 = vmax.xlane.f32.xlu0 %v9243
    %v9302 = vpop.xlane.xlu0 %9301
    %9303 = vmax.xlane.f32.xlu0 %v9246
    %v9304 = vpop.xlane.xlu0 %9303
    %9305 = vmax.xlane.f32.xlu0 %v9251
    %v9306 = vpop.xlane.xlu0 %9305
    %9307 = vmax.xlane.f32.xlu0 %v9254
    %v9308 = vpop.xlane.xlu0 %9307
    %9309 = vmax.xlane.f32.xlu0 %v9259
    %v9310 = vpop.xlane.xlu0 %9309
    %9311 = vmax.xlane.f32.xlu0 %v9262
    %v9312 = vpop.xlane.xlu0 %9311
    %9313 = vmax.xlane.f32.xlu0 %v9267
    %v9314 = vpop.xlane.xlu0 %9313
    %9315 = vmax.xlane.f32.xlu0 %v9270
    %v9316 = vpop.xlane.xlu0 %9315
    %9317 = vmax.xlane.f32.xlu0 %v9275
    %v9318 = vpop.xlane.xlu0 %9317
    %9319 = vmax.xlane.f32.xlu0 %v9278
    %v9320 = vpop.xlane.xlu0 %9319
    %9321 = vmax.xlane.f32.xlu0 %v9283
    %v9322 = vpop.xlane.xlu0 %9321
    %9323 = vmax.xlane.f32.xlu0 %v9286
    %v9324 = vpop.xlane.xlu0 %9323
    %9325 = vmax.xlane.f32.xlu0 %v9291
    %v9326 = vpop.xlane.xlu0 %9325
    %9327 = vmax.xlane.f32.xlu0 %v9294
    %v9328 = vpop.xlane.xlu0 %9327
    %v9329 = vsub.f32 %v9235, %v9298
    %v9330 = vsub.f32 %v9238, %v9300
    %v9331 = vsub.f32 %v9243, %v9302
    %v9332 = vsub.f32 %v9246, %v9304
    %v9333 = vsub.f32 %v9251, %v9306
    %v9334 = vsub.f32 %v9254, %v9308
    %v9335 = vsub.f32 %v9259, %v9310
    %v9336 = vsub.f32 %v9262, %v9312
    %v9337 = vsub.f32 %v9267, %v9314
    %v9338 = vsub.f32 %v9270, %v9316
    %v9339 = vsub.f32 %v9275, %v9318
    %v9340 = vsub.f32 %v9278, %v9320
    %v9341 = vsub.f32 %v9283, %v9322
    %v9342 = vsub.f32 %v9286, %v9324
    %v9343 = vsub.f32 %v9291, %v9326
    %v9344 = vsub.f32 %v9294, %v9328
    %v9345 = vmul.f32 %v9329, 1.442695
    %v9346 = vpow.pop %v9345
    %v9347 = vmul.f32 %v9330, 1.442695
    %v9348 = vpow.pop %v9347
    %v9349 = vmul.f32 %v9331, 1.442695
    %v9350 = vpow.pop %v9349
    %v9351 = vmul.f32 %v9332, 1.442695
    %v9352 = vpow.pop %v9351
    %v9353 = vmul.f32 %v9333, 1.442695
    %v9354 = vpow.pop %v9353
    %v9355 = vmul.f32 %v9334, 1.442695
    %v9356 = vpow.pop %v9355
    %v9357 = vmul.f32 %v9335, 1.442695
    %v9358 = vpow.pop %v9357
    %v9359 = vmul.f32 %v9336, 1.442695
    %v9360 = vpow.pop %v9359
    %v9361 = vmul.f32 %v9337, 1.442695
    %v9362 = vpow.pop %v9361
    %v9363 = vmul.f32 %v9338, 1.442695
    %v9364 = vpow.pop %v9363
    %v9365 = vmul.f32 %v9339, 1.442695
    %v9366 = vpow.pop %v9365
    %v9367 = vmul.f32 %v9340, 1.442695
    %v9368 = vpow.pop %v9367
    %v9369 = vmul.f32 %v9341, 1.442695
    %v9370 = vpow.pop %v9369
    %v9371 = vmul.f32 %v9342, 1.442695
    %v9372 = vpow.pop %v9371
    %v9373 = vmul.f32 %v9343, 1.442695
    %v9374 = vpow.pop %v9373
    %v9375 = vmul.f32 %v9344, 1.442695
    %v9376 = vpow.pop %v9375
    %9377 = vadd.xlane.f32.xlu0 %v9346
    %v9378 = vpop.xlane.xlu0 %9377
    %9379 = vadd.xlane.f32.xlu0 %v9348
    %v9380 = vpop.xlane.xlu0 %9379
    %9381 = vadd.xlane.f32.xlu0 %v9350
    %v9382 = vpop.xlane.xlu0 %9381
    %9383 = vadd.xlane.f32.xlu0 %v9352
    %v9384 = vpop.xlane.xlu0 %9383
    %9385 = vadd.xlane.f32.xlu0 %v9354
    %v9386 = vpop.xlane.xlu0 %9385
    %9387 = vadd.xlane.f32.xlu0 %v9356
    %v9388 = vpop.xlane.xlu0 %9387
    %9389 = vadd.xlane.f32.xlu0 %v9358
    %v9390 = vpop.xlane.xlu0 %9389
    %9391 = vadd.xlane.f32.xlu0 %v9360
    %v9392 = vpop.xlane.xlu0 %9391
    %9393 = vadd.xlane.f32.xlu0 %v9362
    %v9394 = vpop.xlane.xlu0 %9393
    %9395 = vadd.xlane.f32.xlu0 %v9364
    %v9396 = vpop.xlane.xlu0 %9395
    %9397 = vadd.xlane.f32.xlu0 %v9366
    %v9398 = vpop.xlane.xlu0 %9397
    %9399 = vadd.xlane.f32.xlu0 %v9368
    %v9400 = vpop.xlane.xlu0 %9399
    %9401 = vadd.xlane.f32.xlu0 %v9370
    %v9402 = vpop.xlane.xlu0 %9401
    %9403 = vadd.xlane.f32.xlu0 %v9372
    %v9404 = vpop.xlane.xlu0 %9403
    %9405 = vadd.xlane.f32.xlu0 %v9374
    %v9406 = vpop.xlane.xlu0 %9405
    %9407 = vadd.xlane.f32.xlu0 %v9376
    %v9408 = vpop.xlane.xlu0 %9407
    %v9409 = vrcp.pop %v9378
    %v9410 = vmul.f32 %v9346, %v9409
    %v9411 = vrcp.pop %v9380
    %v9412 = vmul.f32 %v9348, %v9411
    %v9413 = vrcp.pop %v9382
    %v9414 = vmul.f32 %v9350, %v9413
    %v9415 = vrcp.pop %v9384
    %v9416 = vmul.f32 %v9352, %v9415
    %v9417 = vrcp.pop %v9386
    %v9418 = vmul.f32 %v9354, %v9417
    %v9419 = vrcp.pop %v9388
    %v9420 = vmul.f32 %v9356, %v9419
    %v9421 = vrcp.pop %v9390
    %v9422 = vmul.f32 %v9358, %v9421
    %v9423 = vrcp.pop %v9392
    %v9424 = vmul.f32 %v9360, %v9423
    %v9425 = vrcp.pop %v9394
    %v9426 = vmul.f32 %v9362, %v9425
    %v9427 = vrcp.pop %v9396
    %v9428 = vmul.f32 %v9364, %v9427
    %v9429 = vrcp.pop %v9398
    %v9430 = vmul.f32 %v9366, %v9429
    %v9431 = vrcp.pop %v9400
    %v9432 = vmul.f32 %v9368, %v9431
    %v9433 = vrcp.pop %v9402
    %v9434 = vmul.f32 %v9370, %v9433
    %v9435 = vrcp.pop %v9404
    %v9436 = vmul.f32 %v9372, %v9435
    %v9437 = vrcp.pop %v9406
    %v9438 = vmul.f32 %v9374, %v9437
    %v9439 = vrcp.pop %v9408
    %v9440 = vmul.f32 %v9376, %v9439
    %9441 = vst [vmem:[%s19] sm:$0xff] %v9410
    %9442 = vst [vmem:[%s19 + $0x8] sm:$0xff] %v9412
    %9443 = vst [vmem:[%s19 + $0x10] sm:$0xff] %v9414
    %9444 = vst [vmem:[%s19 + $0x18] sm:$0xff] %v9416
    %9445 = vst [vmem:[%s19 + $0x20] sm:$0xff] %v9418
    %9446 = vst [vmem:[%s19 + $0x28] sm:$0xff] %v9420
    %9447 = vst [vmem:[%s19 + $0x30] sm:$0xff] %v9422
    %9448 = vst [vmem:[%s19 + $0x38] sm:$0xff] %v9424
    %9449 = vst [vmem:[%s19 + $0x40] sm:$0xff] %v9426
    %9450 = vst [vmem:[%s19 + $0x48] sm:$0xff] %v9428
    %9451 = vst [vmem:[%s19 + $0x50] sm:$0xff] %v9430
    %9452 = vst [vmem:[%s19 + $0x58] sm:$0xff] %v9432
    %9453 = vst [vmem:[%s19 + $0x60] sm:$0xff] %v9434
    %9454 = vst [vmem:[%s19 + $0x68] sm:$0xff] %v9436
    %9455 = vst [vmem:[%s19 + $0x70] sm:$0xff] %v9438
    %9456 = vst [vmem:[%s19 + $0x78] sm:$0xff] %v9440
    // Predicated region
    $region106: #{dqn_forward.1} parent=1 // pred_check
      _
    $region107: #{dqn_forward.1} parent=1 // pred_check_branch
      %9458 = sbr.rel (0) target = $region109
    $region108: #{dqn_forward.1} parent=1 // pred_region
      _
    $region109: #{dqn_forward.1} parent=1 // pred_fallthru
      _
    // Predicated region
    $region110: #{dqn_forward.1} parent=1 // pred_check
      _
    $region111: #{dqn_forward.1} parent=1 // pred_check_branch
      %9460 = sbr.rel (0) target = $region113
    $region112: #{dqn_forward.1} parent=1 // pred_region
      _
    $region113: #{dqn_forward.1} parent=1 // pred_fallthru
      _
    %9461 = vsyncpa [#allocation3], 1
    %9462 = vsyncpa [#allocation5], 1
    %9463 = vsyncpa [#allocation8], 1
    %9464 = vsyncpa [#allocation11], 1

</llo_original>
